<compile_context>
chip_gen: v7x
topology: tpu7x:2x2x1
jax: 0.10.0
libtpu: 0.0.40
codegen_flags: <defaults>
</compile_context>

<pallas_src>
import jax
import jax.numpy as jnp
from jax.experimental import pallas as pl
from jax.experimental.pallas import tpu as pltpu


# ----------------------------------------------------------------------------
# Fused kernel: conv1-3 + max over points + fc1-3 (+identity), per batch.
# ----------------------------------------------------------------------------
def _stnkd_fused_kernel(x_ref,
                        w1_ref, b1_ref, w2_ref, b2_ref, w3_ref, b3_ref,
                        w4_ref, b4_ref, w5_ref, b5_ref, w6_ref, b6_ref,
                        o_ref, acc_ref):
    nj = pl.program_id(1)

    @pl.when(nj == 0)
    def _():
        # relu outputs are >= 0, so 0 is a valid identity for the running max.
        acc_ref[...] = jnp.zeros_like(acc_ref)

    x = x_ref[0]                                                    # (TN, k) bf16

    # conv1 -> relu            (bn1 affine folded into W2/b2)
    h = jnp.dot(x, w1_ref[...], preferred_element_type=jnp.float32)
    h = jnp.maximum(h + b1_ref[...], 0.0)
    # conv2 -> relu            (bn2 affine folded into W3/b3)
    h = jnp.dot(h.astype(jnp.bfloat16), w2_ref[...],
                preferred_element_type=jnp.float32)
    h = jnp.maximum(h + b2_ref[...], 0.0)
    # conv3 -> relu            (bn3 affine folded past the max into W4/b4)
    h = jnp.dot(h.astype(jnp.bfloat16), w3_ref[...],
                preferred_element_type=jnp.float32)
    h = jnp.maximum(h + b3_ref[...], 0.0)                           # (TN, 1024)

    # running max over the point axis, resident in VMEM scratch
    acc_ref[...] = jnp.maximum(acc_ref[...], jnp.max(h, axis=0, keepdims=True))

    # fc stack fused into the last-point-step epilogue (no HBM round trip of g)
    @pl.when(nj == pl.num_programs(1) - 1)
    def _():
        g = acc_ref[...].astype(jnp.bfloat16)                       # (1, 1024)
        # fc1 -> relu          (bn4 affine folded into W5/b5)
        f = jnp.dot(g, w4_ref[...], preferred_element_type=jnp.float32)
        f = jnp.maximum(f + b4_ref[...], 0.0)
        # fc2 -> relu          (bn5 affine folded into W6/b6)
        f = jnp.dot(f.astype(jnp.bfloat16), w5_ref[...],
                    preferred_element_type=jnp.float32)
        f = jnp.maximum(f + b5_ref[...], 0.0)
        # fc3 (+ I_k folded into the bias)
        f = jnp.dot(f.astype(jnp.bfloat16), w6_ref[...],
                    preferred_element_type=jnp.float32)
        o_ref[...] = (f + b6_ref[...]).reshape(o_ref.shape).astype(o_ref.dtype)


def _pick_point_tile(n, cap=2048):
    """Largest multiple-of-8 divisor of n that is <= cap; else the whole axis."""
    cand = min(n, cap)
    cand -= cand % 8
    while cand >= 8:
        if n % cand == 0:
            return cand
        cand -= 8
    return n


def stnkd_forward(params, x, *, tile_cap=2048):
    """x: (B, k, N) in PyTorch NCW layout.  Returns (B, k, k)."""
    B, K, N = x.shape
    kk = params["l6"][0].shape[1]

    # One fused XLA pass: NCW -> NWC layout change + bf16 cast (halves input DMA).
    x_bnk = jnp.transpose(x, (0, 2, 1)).astype(jnp.bfloat16)

    TN = _pick_point_tile(N, tile_cap)
    n_steps = N // TN

    def _const(b, n):
        return (0, 0)

    args = [x_bnk]
    in_specs = [pl.BlockSpec((1, TN, K), lambda b, n: (b, n, 0))]
    for name in ("l1", "l2", "l3", "l4", "l5", "l6"):
        w, b = params[name]
        args += [w, b]
        in_specs += [pl.BlockSpec(w.shape, _const),
                     pl.BlockSpec(b.shape, _const)]

    out = pl.pallas_call(
        _stnkd_fused_kernel,
        grid=(B, n_steps),
        in_specs=in_specs,
        out_specs=pl.BlockSpec((1, 1, kk), lambda b, n: (b, 0, 0)),
        out_shape=jax.ShapeDtypeStruct((B, 1, kk), jnp.float32),
        scratch_shapes=[pltpu.VMEM((1, 1024), jnp.float32)],
        compiler_params=pltpu.CompilerParams(
            dimension_semantics=("parallel", "arbitrary"),
            vmem_limit_bytes=32 * 1024 * 1024),
    )(*args)
    return out.reshape(B, K, K)


# ----------------------------------------------------------------------------
# Deterministic synthetic parameters (no checkpoint load) + host-side folding.
# ----------------------------------------------------------------------------
def init_stnkd_raw_params(key, k=64):
    """PyTorch-style (cin, cout) weights + eval-mode BN stats, all f32."""
    dims = [("conv1", k, 64), ("conv2", 64, 128), ("conv3", 128, 1024),
            ("fc1", 1024, 512), ("fc2", 512, 256), ("fc3", 256, k * k)]
    bns = [("bn1", 64), ("bn2", 128), ("bn3", 1024), ("bn4", 512), ("bn5", 256)]
    keys = jax.random.split(key, len(dims) + len(bns))
    raw = {}
    for kk_, (name, cin, cout) in zip(keys[:len(dims)], dims):
        kw, kb = jax.random.split(kk_)
        bound = 1.0 / (cin ** 0.5)
        raw[name] = (
            jax.random.uniform(kw, (cin, cout), jnp.float32, -bound, bound),
            jax.random.uniform(kb, (cout,), jnp.float32, -bound, bound))
    for kk_, (name, c) in zip(keys[len(dims):], bns):
        k1, k2, k3, k4 = jax.random.split(kk_, 4)
        gamma = jax.random.uniform(k1, (c,), jnp.float32, 0.75, 1.25)
        beta = jax.random.normal(k2, (c,), jnp.float32) * 0.1
        mean = jax.random.normal(k3, (c,), jnp.float32) * 0.1
        var = jax.random.uniform(k4, (c,), jnp.float32, 0.9, 1.1)
        raw[name] = (gamma, beta, mean, var)
    return raw


def fold_stnkd_params(raw, k, eps=1e-5):
    """Fold eval-mode BN affines forward into the next layer and I_k into fc3."""
    def affine(name):
        g, b, m, v = raw[name]
        s = g / jnp.sqrt(v + eps)
        return s, b - m * s

    s1, t1 = affine("bn1")
    s2, t2 = affine("bn2")
    s3, t3 = affine("bn3")
    s4, t4 = affine("bn4")
    s5, t5 = affine("bn5")

    # Commuting bn3 past the max requires a non-negative per-channel scale.
    if not bool(jnp.all(s3 > 0)):
        raise NotImplementedError(
            "bn3 gamma must be positive to commute the affine past the max; "
            "TODO(synk): add an in-kernel bn3 fallback for negative gammas.")

    w1, b1 = raw["conv1"]
    w2, b2 = raw["conv2"]
    w3, b3 = raw["conv3"]
    w4, b4 = raw["fc1"]
    w5, b5 = raw["fc2"]
    w6, b6 = raw["fc3"]

    folded = {
        "l1": (w1, b1),
        "l2": (s1[:, None] * w2, b2 + t1 @ w2),
        "l3": (s2[:, None] * w3, b3 + t2 @ w3),
        "l4": (s3[:, None] * w4, b4 + t3 @ w4),            # bn3 moved past the max
        "l5": (s4[:, None] * w5, b5 + t4 @ w5),
        "l6": (s5[:, None] * w6,
               b6 + t5 @ w6 + jnp.eye(k, dtype=jnp.float32).reshape(-1)),
    }
    return {name: (w.astype(jnp.bfloat16), b.reshape(1, -1).astype(jnp.float32))
            for name, (w, b) in folded.items()}


# ----------------------------------------------------------------------------
# Pure-JAX reference (unfused, unfolded) for a correctness check.
# ----------------------------------------------------------------------------
def stnkd_reference(raw, x, k, eps=1e-5):
    def bn(h, name):
        g, b, m, v = raw[name]
        return (h - m) / jnp.sqrt(v + eps) * g + b

    h = jnp.transpose(x, (0, 2, 1)).astype(jnp.float32)            # (B, N, k)
    h = bn(jax.nn.relu(h @ raw["conv1"][0] + raw["conv1"][1]), "bn1")
    h = bn(jax.nn.relu(h @ raw["conv2"][0] + raw["conv2"][1]), "bn2")
    h = bn(jax.nn.relu(h @ raw["conv3"][0] + raw["conv3"][1]), "bn3")
    g = jnp.max(h, axis=1)                                         # (B, 1024)
    g = bn(jax.nn.relu(g @ raw["fc1"][0] + raw["fc1"][1]), "bn4")
    g = bn(jax.nn.relu(g @ raw["fc2"][0] + raw["fc2"][1]), "bn5")
    g = g @ raw["fc3"][0] + raw["fc3"][1]
    g = g + jnp.eye(k, dtype=jnp.float32).reshape(1, -1)
    return g.reshape(x.shape[0], k, k)


# ----------------------------------------------------------------------------
if __name__ == "__main__":
    key = jax.random.PRNGKey(0)
    kx, kp = jax.random.split(key)

    B, K, N = 2, 64, 512          # STNkd default k=64; 2 clouds, 512 points
    x = jax.random.normal(kx, (B, K, N), jnp.float32)
    raw = init_stnkd_raw_params(kp, k=K)
    params = fold_stnkd_params(raw, k=K)

    fwd = jax.jit(stnkd_forward)
    out = fwd(params, x)
    jax.block_until_ready(out)

    assert out.shape == (B, K, K), out.shape
    assert bool(jnp.all(jnp.isfinite(out)))

    ref = stnkd_reference(raw, x, K)
    max_err = float(jnp.max(jnp.abs(out - ref)))
    assert max_err < 0.1, f"max abs error vs reference: {max_err}"

    print("KERNEL_OK")
</pallas_src>

<mosaic_0001>
module attributes {stable_mosaic.version = 11 : i64} {
  func.func @_stnkd_fused_kernel(%arg0: i32, %arg1: i32, %arg2: memref<1x512x64xbf16, #tpu.memory_space<vmem>>, %arg3: memref<64x64xbf16, #tpu.memory_space<vmem>>, %arg4: memref<1x64xf32, #tpu.memory_space<vmem>>, %arg5: memref<64x128xbf16, #tpu.memory_space<vmem>>, %arg6: memref<1x128xf32, #tpu.memory_space<vmem>>, %arg7: memref<128x1024xbf16, #tpu.memory_space<vmem>>, %arg8: memref<1x1024xf32, #tpu.memory_space<vmem>>, %arg9: memref<1024x512xbf16, #tpu.memory_space<vmem>>, %arg10: memref<1x512xf32, #tpu.memory_space<vmem>>, %arg11: memref<512x256xbf16, #tpu.memory_space<vmem>>, %arg12: memref<1x256xf32, #tpu.memory_space<vmem>>, %arg13: memref<256x4096xbf16, #tpu.memory_space<vmem>>, %arg14: memref<1x4096xf32, #tpu.memory_space<vmem>>, %arg15: memref<1x1x4096xf32, #tpu.memory_space<vmem>>, %arg16: memref<1x1024xf32, #tpu.memory_space<vmem>>) attributes {dimension_semantics = [#tpu.dimension_semantics<parallel>, #tpu.dimension_semantics<arbitrary>], iteration_bounds = array<i64: 2, 1>, scalar_prefetch = 0 : i64, scratch_operands = 1 : i64, tpu.core_type = #tpu.core_type<tc>, window_params = [{transform_indices = @transform_0, window_bounds = array<i64: 1, 512, 64>}, {pipeline_mode = #tpu.pipeline_mode<synchronous>, transform_indices = @transform_1, window_bounds = array<i64: 64, 64>}, {pipeline_mode = #tpu.pipeline_mode<synchronous>, transform_indices = @transform_2, window_bounds = array<i64: 1, 64>}, {pipeline_mode = #tpu.pipeline_mode<synchronous>, transform_indices = @transform_3, window_bounds = array<i64: 64, 128>}, {pipeline_mode = #tpu.pipeline_mode<synchronous>, transform_indices = @transform_4, window_bounds = array<i64: 1, 128>}, {pipeline_mode = #tpu.pipeline_mode<synchronous>, transform_indices = @transform_5, window_bounds = array<i64: 128, 1024>}, {pipeline_mode = #tpu.pipeline_mode<synchronous>, transform_indices = @transform_6, window_bounds = array<i64: 1, 1024>}, {pipeline_mode = #tpu.pipeline_mode<synchronous>, transform_indices = @transform_7, window_bounds = array<i64: 1024, 512>}, {pipeline_mode = #tpu.pipeline_mode<synchronous>, transform_indices = @transform_8, window_bounds = array<i64: 1, 512>}, {pipeline_mode = #tpu.pipeline_mode<synchronous>, transform_indices = @transform_9, window_bounds = array<i64: 512, 256>}, {pipeline_mode = #tpu.pipeline_mode<synchronous>, transform_indices = @transform_10, window_bounds = array<i64: 1, 256>}, {pipeline_mode = #tpu.pipeline_mode<synchronous>, transform_indices = @transform_11, window_bounds = array<i64: 256, 4096>}, {pipeline_mode = #tpu.pipeline_mode<synchronous>, transform_indices = @transform_12, window_bounds = array<i64: 1, 4096>}, {transform_indices = @transform_13, window_bounds = array<i64: 1, 1, 4096>}]} {
    %c0_i32 = arith.constant 0 : i32
    %0 = arith.cmpi eq, %arg1, %c0_i32 : i32
    %1 = arith.extui %0 : i1 to i32
    %c0_i32_0 = arith.constant 0 : i32
    %2 = arith.cmpi ne, %1, %c0_i32_0 : i32
    scf.if %2 {
      %cst_27 = arith.constant 0.000000e+00 : f32
      %36 = vector.broadcast %cst_27 : f32 to vector<1x1024xf32>
      %c0_28 = arith.constant 0 : index
      %c0_29 = arith.constant 0 : index
      %37 = vector.load %arg16[%c0_28, %c0_29] : memref<1x1024xf32, #tpu.memory_space<vmem>>, vector<1x1024xf32>
      tpu.vector_store %arg16[%c0_28, %c0_29], %36 {strides = array<i32>} : memref<1x1024xf32, #tpu.memory_space<vmem>>, vector<1x1024xf32>,
    } else {
    }
    %c0 = arith.constant 0 : index
    %c0_1 = arith.constant 0 : index
    %c0_2 = arith.constant 0 : index
    %3 = vector.load %arg2[%c0, %c0_1, %c0_2] : memref<1x512x64xbf16, #tpu.memory_space<vmem>>, vector<1x512x64xbf16>
    %4 = vector.shape_cast %3 : vector<1x512x64xbf16> to vector<512x64xbf16>
    %c0_3 = arith.constant 0 : index
    %c0_4 = arith.constant 0 : index
    %5 = vector.load %arg3[%c0_3, %c0_4] : memref<64x64xbf16, #tpu.memory_space<vmem>>, vector<64x64xbf16>
    %cst = arith.constant dense<0.000000e+00> : vector<512x64xf32>
    %6 = tpu.matmul %4, %5, %cst {dimension_numbers = #tpu.dot_dimension_numbers<[1], [0], [0], [1], [0, 0, 1, 1], [], []>} : vector<512x64xbf16>, vector<64x64xbf16>, vector<512x64xf32> -> vector<512x64xf32>
    %c0_5 = arith.constant 0 : index
    %c0_6 = arith.constant 0 : index
    %7 = vector.load %arg4[%c0_5, %c0_6] : memref<1x64xf32, #tpu.memory_space<vmem>>, vector<1x64xf32>
    %8 = vector.broadcast %7 : vector<1x64xf32> to vector<512x64xf32>
    %9 = arith.addf %6, %8 : vector<512x64xf32>
    %cst_7 = arith.constant 0.000000e+00 : f32
    %10 = vector.broadcast %cst_7 : f32 to vector<512x64xf32>
    %11 = arith.maximumf %9, %10 : vector<512x64xf32>
    %12 = arith.truncf %11 : vector<512x64xf32> to vector<512x64xbf16>
    %c0_8 = arith.constant 0 : index
    %c0_9 = arith.constant 0 : index
    %13 = vector.load %arg5[%c0_8, %c0_9] : memref<64x128xbf16, #tpu.memory_space<vmem>>, vector<64x128xbf16>
    %cst_10 = arith.constant dense<0.000000e+00> : vector<512x128xf32>
    %14 = tpu.matmul %12, %13, %cst_10 {dimension_numbers = #tpu.dot_dimension_numbers<[1], [0], [0], [1], [0, 0, 1, 1], [], []>} : vector<512x64xbf16>, vector<64x128xbf16>, vector<512x128xf32> -> vector<512x128xf32>
    %c0_11 = arith.constant 0 : index
    %c0_12 = arith.constant 0 : index
    %15 = vector.load %arg6[%c0_11, %c0_12] : memref<1x128xf32, #tpu.memory_space<vmem>>, vector<1x128xf32>
    %16 = vector.broadcast %15 : vector<1x128xf32> to vector<512x128xf32>
    %17 = arith.addf %14, %16 : vector<512x128xf32>
    %cst_13 = arith.constant 0.000000e+00 : f32
    %18 = vector.broadcast %cst_13 : f32 to vector<512x128xf32>
    %19 = arith.maximumf %17, %18 : vector<512x128xf32>
    %20 = arith.truncf %19 : vector<512x128xf32> to vector<512x128xbf16>
    %c0_14 = arith.constant 0 : index
    %c0_15 = arith.constant 0 : index
    %21 = vector.load %arg7[%c0_14, %c0_15] : memref<128x1024xbf16, #tpu.memory_space<vmem>>, vector<128x1024xbf16>
    %cst_16 = arith.constant dense<0.000000e+00> : vector<512x1024xf32>
    %22 = tpu.matmul %20, %21, %cst_16 {dimension_numbers = #tpu.dot_dimension_numbers<[1], [0], [0], [1], [0, 0, 1, 1], [], []>} : vector<512x128xbf16>, vector<128x1024xbf16>, vector<512x1024xf32> -> vector<512x1024xf32>
    %c0_17 = arith.constant 0 : index
    %c0_18 = arith.constant 0 : index
    %23 = vector.load %arg8[%c0_17, %c0_18] : memref<1x1024xf32, #tpu.memory_space<vmem>>, vector<1x1024xf32>
    %24 = vector.broadcast %23 : vector<1x1024xf32> to vector<512x1024xf32>
    %25 = arith.addf %22, %24 : vector<512x1024xf32>
    %cst_19 = arith.constant 0.000000e+00 : f32
    %26 = vector.broadcast %cst_19 : f32 to vector<512x1024xf32>
    %27 = arith.maximumf %25, %26 : vector<512x1024xf32>
    %c0_20 = arith.constant 0 : index
    %c0_21 = arith.constant 0 : index
    %28 = vector.load %arg16[%c0_20, %c0_21] : memref<1x1024xf32, #tpu.memory_space<vmem>>, vector<1x1024xf32>
    %cst_22 = arith.constant dense<0xFF800000> : vector<1024xf32>
    %29 = vector.multi_reduction <maximumf>, %27, %cst_22 [0] : vector<512x1024xf32> to vector<1024xf32>
    %30 = vector.shape_cast %29 : vector<1024xf32> to vector<1x1024xf32>
    %31 = arith.maximumf %28, %30 : vector<1x1024xf32>
    %c0_23 = arith.constant 0 : index
    %c0_24 = arith.constant 0 : index
    %32 = vector.load %arg16[%c0_23, %c0_24] : memref<1x1024xf32, #tpu.memory_space<vmem>>, vector<1x1024xf32>
    tpu.vector_store %arg16[%c0_23, %c0_24], %31 {strides = array<i32>} : memref<1x1024xf32, #tpu.memory_space<vmem>>, vector<1x1024xf32>,
    %c0_i32_25 = arith.constant 0 : i32
    %33 = arith.cmpi eq, %arg1, %c0_i32_25 : i32
    %34 = arith.extui %33 : i1 to i32
    %c0_i32_26 = arith.constant 0 : i32
    %35 = arith.cmpi ne, %34, %c0_i32_26 : i32
    scf.if %35 {
      %c0_27 = arith.constant 0 : index
      %c0_28 = arith.constant 0 : index
      %36 = vector.load %arg16[%c0_27, %c0_28] : memref<1x1024xf32, #tpu.memory_space<vmem>>, vector<1x1024xf32>
      %37 = arith.truncf %36 : vector<1x1024xf32> to vector<1x1024xbf16>
      %c0_29 = arith.constant 0 : index
      %c0_30 = arith.constant 0 : index
      %38 = vector.load %arg9[%c0_29, %c0_30] : memref<1024x512xbf16, #tpu.memory_space<vmem>>, vector<1024x512xbf16>
      %cst_31 = arith.constant dense<0.000000e+00> : vector<1x512xf32>
      %39 = tpu.matmul %37, %38, %cst_31 {dimension_numbers = #tpu.dot_dimension_numbers<[1], [0], [0], [1], [0, 0, 1, 1], [], []>} : vector<1x1024xbf16>, vector<1024x512xbf16>, vector<1x512xf32> -> vector<1x512xf32>
      %c0_32 = arith.constant 0 : index
      %c0_33 = arith.constant 0 : index
      %40 = vector.load %arg10[%c0_32, %c0_33] : memref<1x512xf32, #tpu.memory_space<vmem>>, vector<1x512xf32>
      %41 = arith.addf %39, %40 : vector<1x512xf32>
      %cst_34 = arith.constant 0.000000e+00 : f32
      %42 = vector.broadcast %cst_34 : f32 to vector<1x512xf32>
      %43 = arith.maximumf %41, %42 : vector<1x512xf32>
      %44 = arith.truncf %43 : vector<1x512xf32> to vector<1x512xbf16>
      %c0_35 = arith.constant 0 : index
      %c0_36 = arith.constant 0 : index
      %45 = vector.load %arg11[%c0_35, %c0_36] : memref<512x256xbf16, #tpu.memory_space<vmem>>, vector<512x256xbf16>
      %cst_37 = arith.constant dense<0.000000e+00> : vector<1x256xf32>
      %46 = tpu.matmul %44, %45, %cst_37 {dimension_numbers = #tpu.dot_dimension_numbers<[1], [0], [0], [1], [0, 0, 1, 1], [], []>} : vector<1x512xbf16>, vector<512x256xbf16>, vector<1x256xf32> -> vector<1x256xf32>
      %c0_38 = arith.constant 0 : index
      %c0_39 = arith.constant 0 : index
      %47 = vector.load %arg12[%c0_38, %c0_39] : memref<1x256xf32, #tpu.memory_space<vmem>>, vector<1x256xf32>
      %48 = arith.addf %46, %47 : vector<1x256xf32>
      %cst_40 = arith.constant 0.000000e+00 : f32
      %49 = vector.broadcast %cst_40 : f32 to vector<1x256xf32>
      %50 = arith.maximumf %48, %49 : vector<1x256xf32>
      %51 = arith.truncf %50 : vector<1x256xf32> to vector<1x256xbf16>
      %c0_41 = arith.constant 0 : index
      %c0_42 = arith.constant 0 : index
      %52 = vector.load %arg13[%c0_41, %c0_42] : memref<256x4096xbf16, #tpu.memory_space<vmem>>, vector<256x4096xbf16>
      %cst_43 = arith.constant dense<0.000000e+00> : vector<1x4096xf32>
      %53 = tpu.matmul %51, %52, %cst_43 {dimension_numbers = #tpu.dot_dimension_numbers<[1], [0], [0], [1], [0, 0, 1, 1], [], []>} : vector<1x256xbf16>, vector<256x4096xbf16>, vector<1x4096xf32> -> vector<1x4096xf32>
      %c0_44 = arith.constant 0 : index
      %c0_45 = arith.constant 0 : index
      %54 = vector.load %arg14[%c0_44, %c0_45] : memref<1x4096xf32, #tpu.memory_space<vmem>>, vector<1x4096xf32>
      %55 = arith.addf %53, %54 : vector<1x4096xf32>
      %56 = vector.shape_cast %55 : vector<1x4096xf32> to vector<1x1x4096xf32>
      %c0_46 = arith.constant 0 : index
      %c0_47 = arith.constant 0 : index
      %c0_48 = arith.constant 0 : index
      %57 = vector.load %arg15[%c0_46, %c0_47, %c0_48] : memref<1x1x4096xf32, #tpu.memory_space<vmem>>, vector<1x1x4096xf32>
      tpu.vector_store %arg15[%c0_46, %c0_47, %c0_48], %56 {strides = array<i32>} : memref<1x1x4096xf32, #tpu.memory_space<vmem>>, vector<1x1x4096xf32>,
    } else {
    }
    return
  }
  func.func @transform_0(%arg0: i32, %arg1: i32) -> (i32, i32, i32) {
    %c0_i32 = arith.constant 0 : i32
    %c0_i32_0 = arith.constant 0 : i32
    return %arg0, %arg1, %c0_i32 : i32, i32, i32
  }
  func.func @transform_1(%arg0: i32, %arg1: i32) -> (i32, i32) {
    %c0_i32 = arith.constant 0 : i32
    %c0_i32_0 = arith.constant 0 : i32
    %c0_i32_1 = arith.constant 0 : i32
    return %c0_i32, %c0_i32_0 : i32, i32
  }
  func.func @transform_2(%arg0: i32, %arg1: i32) -> (i32, i32) {
    %c0_i32 = arith.constant 0 : i32
    %c0_i32_0 = arith.constant 0 : i32
    %c0_i32_1 = arith.constant 0 : i32
    return %c0_i32, %c0_i32_0 : i32, i32
  }
  func.func @transform_3(%arg0: i32, %arg1: i32) -> (i32, i32) {
    %c0_i32 = arith.constant 0 : i32
    %c0_i32_0 = arith.constant 0 : i32
    %c0_i32_1 = arith.constant 0 : i32
    return %c0_i32, %c0_i32_0 : i32, i32
  }
  func.func @transform_4(%arg0: i32, %arg1: i32) -> (i32, i32) {
    %c0_i32 = arith.constant 0 : i32
    %c0_i32_0 = arith.constant 0 : i32
    %c0_i32_1 = arith.constant 0 : i32
    return %c0_i32, %c0_i32_0 : i32, i32
  }
  func.func @transform_5(%arg0: i32, %arg1: i32) -> (i32, i32) {
    %c0_i32 = arith.constant 0 : i32
    %c0_i32_0 = arith.constant 0 : i32
    %c0_i32_1 = arith.constant 0 : i32
    return %c0_i32, %c0_i32_0 : i32, i32
  }
  func.func @transform_6(%arg0: i32, %arg1: i32) -> (i32, i32) {
    %c0_i32 = arith.constant 0 : i32
    %c0_i32_0 = arith.constant 0 : i32
    %c0_i32_1 = arith.constant 0 : i32
    return %c0_i32, %c0_i32_0 : i32, i32
  }
  func.func @transform_7(%arg0: i32, %arg1: i32) -> (i32, i32) {
    %c0_i32 = arith.constant 0 : i32
    %c0_i32_0 = arith.constant 0 : i32
    %c0_i32_1 = arith.constant 0 : i32
    return %c0_i32, %c0_i32_0 : i32, i32
  }
  func.func @transform_8(%arg0: i32, %arg1: i32) -> (i32, i32) {
    %c0_i32 = arith.constant 0 : i32
    %c0_i32_0 = arith.constant 0 : i32
    %c0_i32_1 = arith.constant 0 : i32
    return %c0_i32, %c0_i32_0 : i32, i32
  }
  func.func @transform_9(%arg0: i32, %arg1: i32) -> (i32, i32) {
    %c0_i32 = arith.constant 0 : i32
    %c0_i32_0 = arith.constant 0 : i32
    %c0_i32_1 = arith.constant 0 : i32
    return %c0_i32, %c0_i32_0 : i32, i32
  }
  func.func @transform_10(%arg0: i32, %arg1: i32) -> (i32, i32) {
    %c0_i32 = arith.constant 0 : i32
    %c0_i32_0 = arith.constant 0 : i32
    %c0_i32_1 = arith.constant 0 : i32
    return %c0_i32, %c0_i32_0 : i32, i32
  }
  func.func @transform_11(%arg0: i32, %arg1: i32) -> (i32, i32) {
    %c0_i32 = arith.constant 0 : i32
    %c0_i32_0 = arith.constant 0 : i32
    %c0_i32_1 = arith.constant 0 : i32
    return %c0_i32, %c0_i32_0 : i32, i32
  }
  func.func @transform_12(%arg0: i32, %arg1: i32) -> (i32, i32) {
    %c0_i32 = arith.constant 0 : i32
    %c0_i32_0 = arith.constant 0 : i32
    %c0_i32_1 = arith.constant 0 : i32
    return %c0_i32, %c0_i32_0 : i32, i32
  }
  func.func @transform_13(%arg0: i32, %arg1: i32) -> (i32, i32, i32) {
    %c0_i32 = arith.constant 0 : i32
    %c0_i32_0 = arith.constant 0 : i32
    %c0_i32_1 = arith.constant 0 : i32
    return %arg0, %c0_i32, %c0_i32_0 : i32, i32, i32
  }
}

</mosaic_0001>

<llo_original>
// kernel: stnkd_forward.1
$region0: #{stnkd_forward.1}
  #allocation0 [shape = 'u32[]', space=smem, size = 0x4, offset = 0x4, fixed_abs, tag = 'smem constant byte address 0x4 - core index']
  #allocation1 [shape = 'u32[144,128]{1,0:T(1,128)}', space=vmem, size = 0x12000, scoped, tag = 'internal scratch']
  #allocation2 [shape = 'f32[1,1024]{1,0:T(1,128)}', space=vmem, size = 0x1000, scoped, tag = 'scratch operand']
  %s0 = inlined_call_operand.vmem [shape: bf16[2,512,64], index: 0, kind: input, shape index: {}]
  %s1 = inlined_call_operand.hbm [shape: bf16[64,64], index: 1, kind: input, shape index: {}]
  %s2 = inlined_call_operand.hbm [shape: f32[1,64], index: 2, kind: input, shape index: {}]
  %s3 = inlined_call_operand.hbm [shape: bf16[64,128], index: 3, kind: input, shape index: {}]
  %s4 = inlined_call_operand.hbm [shape: f32[1,128], index: 4, kind: input, shape index: {}]
  %s5 = inlined_call_operand.hbm [shape: bf16[128,1024], index: 5, kind: input, shape index: {}]
  %s6 = inlined_call_operand.hbm [shape: f32[1,1024], index: 6, kind: input, shape index: {}]
  %s7 = inlined_call_operand.hbm [shape: bf16[1024,512], index: 7, kind: input, shape index: {}]
  %s8 = inlined_call_operand.hbm [shape: f32[1,512], index: 8, kind: input, shape index: {}]
  %s9 = inlined_call_operand.hbm [shape: bf16[512,256], index: 9, kind: input, shape index: {}]
  %s10 = inlined_call_operand.hbm [shape: f32[1,256], index: 10, kind: input, shape index: {}]
  %s11 = inlined_call_operand.hbm [shape: bf16[256,4096], index: 11, kind: input, shape index: {}]
  %s12 = inlined_call_operand.hbm [shape: f32[1,4096], index: 12, kind: input, shape index: {}]
  %s13 = inlined_call_operand.vmem [shape: f32[2,1,4096], index: 13, kind: output, shape index: {}]
  %s14 = sld [smem:[#allocation0]]
  $region141: #{stnkd_forward.1} parent=0
    _
  %s16 = ssub.s32 1, %s14
  %s17 = scalar_select 0, %s16, %s14
  $region1: #{stnkd_forward.1} parent=0
    #allocation3 [shape = 'u8[16384]{0}', space=vmem, size = 0x4000, scoped, tag = 'input window, operand 1, single buffered']
    #allocation4 [shape = 's32[2]{0}', space=sflag, size = 0x8, scoped, tag = 'scoped memory for stnkd_forward.1']
    #allocation5 [shape = 'u8[512]{0}', space=vmem, size = 0x400, scoped, tag = 'input window, operand 2, single buffered']
    #allocation6 [shape = 's32[1]{0}', space=sflag, size = 0x4, scoped, tag = 'scoped memory for stnkd_forward.1']
    #allocation7 [shape = 'u8[16384]{0}', space=vmem, size = 0x4000, scoped, tag = 'input window, operand 3, single buffered']
    #allocation8 [shape = 'u8[512]{0}', space=vmem, size = 0x400, scoped, tag = 'input window, operand 4, single buffered']
    #allocation9 [shape = 's32[1]{0}', space=sflag, size = 0x4, scoped, tag = 'scoped memory for stnkd_forward.1']
    #allocation10 [shape = 'u8[262144]{0}', space=vmem, size = 0x40000, scoped, tag = 'input window, operand 5, single buffered']
    #allocation11 [shape = 'u8[4096]{0}', space=vmem, size = 0x1000, scoped, tag = 'input window, operand 6, single buffered']
    #allocation12 [shape = 's32[1]{0}', space=sflag, size = 0x4, scoped, tag = 'scoped memory for stnkd_forward.1']
    #allocation13 [shape = 'u8[1048576]{0}', space=vmem, size = 0x100000, scoped, tag = 'input window, operand 7, single buffered']
    #allocation14 [shape = 'u8[2048]{0}', space=vmem, size = 0x800, scoped, tag = 'input window, operand 8, single buffered']
    #allocation15 [shape = 's32[1]{0}', space=sflag, size = 0x4, scoped, tag = 'scoped memory for stnkd_forward.1']
    #allocation16 [shape = 'u8[262144]{0}', space=vmem, size = 0x40000, scoped, tag = 'input window, operand 9, single buffered']
    #allocation17 [shape = 'u8[1024]{0}', space=vmem, size = 0x400, scoped, tag = 'input window, operand 10, single buffered']
    #allocation18 [shape = 's32[1]{0}', space=sflag, size = 0x4, scoped, tag = 'scoped memory for stnkd_forward.1']
    #allocation19 [shape = 'u8[2097152]{0}', space=vmem, size = 0x200000, scoped, tag = 'input window, operand 11, single buffered']
    #allocation20 [shape = 'u8[16384]{0}', space=vmem, size = 0x4000, scoped, tag = 'input window, operand 12, single buffered']
    #allocation21 [shape = 's32[1]{0}', space=sflag, size = 0x4, scoped, tag = 'scoped memory for stnkd_forward.1']
    %18 = vsyncpa [#allocation4], 0
    %19 = vsyncpa [#allocation6], 0
    %20 = vsyncpa [#allocation9], 0
    %21 = vsyncpa [#allocation12], 0
    %22 = vsyncpa [#allocation15], 0
    %23 = vsyncpa [#allocation18], 0
    %24 = vsyncpa [#allocation21], 0
    loop: start=0, step=1, limit=4
    $region2: #{stnkd_forward.1} parent=1 // loop_pre_header
      _
    $region3: #{stnkd_forward.1} parent=1 // loop_header
      %s26 = sphi 0, %s30
      %p27 = scmp.ge.s32.totalorder %s26, 4
      %s33 = sphi 0, %s45
      %s34 = sphi 0, %s41
      %s35 = sphi 0, %s33
      %s36 = sphi 0, %s34
      %s37 = sphi 0, %s35
      %s38 = sphi 0, %s36
      %s50 = sphi 0, %s52
      %s53 = sphi 0, %s50
      %s54 = sphi 0, %s53
      %s70 = sphi 0, %s54
      %s74 = sphi 0, %s74
      %s76 = sphi 0, %s74
      %s77 = sphi 0, %s76
      %s91 = sphi 0, %s77
      %s95 = sphi 0, %s95
      %s97 = sphi 0, %s95
      %s98 = sphi 0, %s97
      %s112 = sphi 0, %s98
      %s116 = sphi 0, %s116
      %s118 = sphi 0, %s116
      %s119 = sphi 0, %s118
      %s133 = sphi 0, %s119
      %s137 = sphi 0, %s137
      %s139 = sphi 0, %s137
      %s140 = sphi 0, %s139
      %s154 = sphi 0, %s140
      %s158 = sphi 0, %s158
      %s160 = sphi 0, %s158
      %s161 = sphi 0, %s160
      %s175 = sphi 0, %s161
      %s179 = sphi 0, %s179
      %s181 = sphi 0, %s179
      %s182 = sphi 0, %s181
      %s196 = sphi 0, %s182
      %s200 = sphi 0, %s200
      %s202 = sphi 0, %s200
      %s203 = sphi 0, %s202
      %s217 = sphi 0, %s203
      %s221 = sphi 0, %s221
      %s223 = sphi 0, %s221
      %s224 = sphi 0, %s223
      %s238 = sphi 0, %s224
      %s242 = sphi 0, %s242
      %s244 = sphi 0, %s242
      %s245 = sphi 0, %s244
      %s259 = sphi 0, %s245
      %s263 = sphi 0, %s263
      %s265 = sphi 0, %s263
      %s266 = sphi 0, %s265
      %s280 = sphi 0, %s266
      %s284 = sphi 0, %s284
      %s286 = sphi 0, %s284
      %s287 = sphi 0, %s286
      %s301 = sphi 0, %s287
      %s305 = sphi 0, %s305
      %s307 = sphi 0, %s305
      %s308 = sphi 0, %s307
      %s322 = sphi 0, %s308
      %s328 = sphi 0, %s330
      %s331 = sphi 0, %s328
      %s332 = sphi 0, %s331
      %s348 = sphi 0, %s332
    $region4: #{stnkd_forward.1} parent=1 // loop_header_branch
      %29 = sbr.rel (%p27) target = $region8
    $region5: #{stnkd_forward.1} parent=1 // loop_body
      %s31 = ssub.s32 %s26, 1
      %s32 = ssub.s32 %s26, 2
      %s39 = sadd.s32 1, %s34
      %p40 = scmp.ge.s32.totalorder %s39, 1
      %s41 = scalar_select %p40, 0, %s39
      %s42 = sadd.s32 1, %s33
      %s43 = scalar_select %p40, %s42, %s33
      %p44 = scmp.ge.s32.totalorder %s43, 2
      %s45 = scalar_select %p44, 0, %s43
      %s46 = ssub.s32 %s33, %s45
      %s47 = ssub.s32 %s34, %s41
      %s48 = sor.u32 %s46, %s47
      %p49 = scmp.eq.s32.totalorder %s48, 0
      %s51 = sadd.s32 %s50, 1
      %s52 = scalar_select %p49, %s50, %s51
      %p55 = pneg %p49
      %p56 = scmp.eq.s32.totalorder %s26, 1
      %p57 = por %p55, %p56
      %p58 = scmp.ne.s32.totalorder %s50, %s53
      %p59 = scmp.eq.s32.totalorder %s26, 0
      %p60 = por %p58, %p59
      %p61 = scmp.ne.s32.totalorder %s50, %s53
      %p62 = scmp.eq.s32.totalorder %s31, 1
      %p63 = por %p61, %p62
      %p64 = scmp.ne.s32.totalorder %s53, %s54
      %p65 = scmp.eq.s32.totalorder %s31, 0
      %p66 = por %p64, %p65
      %p67 = scmp.ne.s32.totalorder %s53, %s54
      %p68 = scmp.eq.s32.totalorder %s32, 1
      %p69 = por %p67, %p68
      %p71 = scmp.ne.s32.totalorder %s54, %s70
      %p72 = scmp.eq.s32.totalorder %s32, 0
      %p73 = por %p71, %p72
      %s75 = sadd.s32 %s74, 1
      %p78 = scmp.eq.s32.totalorder %s26, 1
      %p79 = scmp.ne.s32.totalorder %s74, %s76
      %p80 = scmp.eq.s32.totalorder %s26, 0
      %p81 = por %p79, %p80
      %p82 = scmp.ne.s32.totalorder %s74, %s76
      %p83 = scmp.eq.s32.totalorder %s31, 1
      %p84 = por %p82, %p83
      %p85 = scmp.ne.s32.totalorder %s76, %s77
      %p86 = scmp.eq.s32.totalorder %s31, 0
      %p87 = por %p85, %p86
      %p88 = scmp.ne.s32.totalorder %s76, %s77
      %p89 = scmp.eq.s32.totalorder %s32, 1
      %p90 = por %p88, %p89
      %p92 = scmp.ne.s32.totalorder %s77, %s91
      %p93 = scmp.eq.s32.totalorder %s32, 0
      %p94 = por %p92, %p93
      %s96 = sadd.s32 %s95, 1
      %p99 = scmp.eq.s32.totalorder %s26, 1
      %p100 = scmp.ne.s32.totalorder %s95, %s97
      %p101 = scmp.eq.s32.totalorder %s26, 0
      %p102 = por %p100, %p101
      %p103 = scmp.ne.s32.totalorder %s95, %s97
      %p104 = scmp.eq.s32.totalorder %s31, 1
      %p105 = por %p103, %p104
      %p106 = scmp.ne.s32.totalorder %s97, %s98
      %p107 = scmp.eq.s32.totalorder %s31, 0
      %p108 = por %p106, %p107
      %p109 = scmp.ne.s32.totalorder %s97, %s98
      %p110 = scmp.eq.s32.totalorder %s32, 1
      %p111 = por %p109, %p110
      %p113 = scmp.ne.s32.totalorder %s98, %s112
      %p114 = scmp.eq.s32.totalorder %s32, 0
      %p115 = por %p113, %p114
      %s117 = sadd.s32 %s116, 1
      %p120 = scmp.eq.s32.totalorder %s26, 1
      %p121 = scmp.ne.s32.totalorder %s116, %s118
      %p122 = scmp.eq.s32.totalorder %s26, 0
      %p123 = por %p121, %p122
      %p124 = scmp.ne.s32.totalorder %s116, %s118
      %p125 = scmp.eq.s32.totalorder %s31, 1
      %p126 = por %p124, %p125
      %p127 = scmp.ne.s32.totalorder %s118, %s119
      %p128 = scmp.eq.s32.totalorder %s31, 0
      %p129 = por %p127, %p128
      %p130 = scmp.ne.s32.totalorder %s118, %s119
      %p131 = scmp.eq.s32.totalorder %s32, 1
      %p132 = por %p130, %p131
      %p134 = scmp.ne.s32.totalorder %s119, %s133
      %p135 = scmp.eq.s32.totalorder %s32, 0
      %p136 = por %p134, %p135
      %s138 = sadd.s32 %s137, 1
      %p141 = scmp.eq.s32.totalorder %s26, 1
      %p142 = scmp.ne.s32.totalorder %s137, %s139
      %p143 = scmp.eq.s32.totalorder %s26, 0
      %p144 = por %p142, %p143
      %p145 = scmp.ne.s32.totalorder %s137, %s139
      %p146 = scmp.eq.s32.totalorder %s31, 1
      %p147 = por %p145, %p146
      %p148 = scmp.ne.s32.totalorder %s139, %s140
      %p149 = scmp.eq.s32.totalorder %s31, 0
      %p150 = por %p148, %p149
      %p151 = scmp.ne.s32.totalorder %s139, %s140
      %p152 = scmp.eq.s32.totalorder %s32, 1
      %p153 = por %p151, %p152
      %p155 = scmp.ne.s32.totalorder %s140, %s154
      %p156 = scmp.eq.s32.totalorder %s32, 0
      %p157 = por %p155, %p156
      %s159 = sadd.s32 %s158, 1
      %p162 = scmp.eq.s32.totalorder %s26, 1
      %p163 = scmp.ne.s32.totalorder %s158, %s160
      %p164 = scmp.eq.s32.totalorder %s26, 0
      %p165 = por %p163, %p164
      %p166 = scmp.ne.s32.totalorder %s158, %s160
      %p167 = scmp.eq.s32.totalorder %s31, 1
      %p168 = por %p166, %p167
      %p169 = scmp.ne.s32.totalorder %s160, %s161
      %p170 = scmp.eq.s32.totalorder %s31, 0
      %p171 = por %p169, %p170
      %p172 = scmp.ne.s32.totalorder %s160, %s161
      %p173 = scmp.eq.s32.totalorder %s32, 1
      %p174 = por %p172, %p173
      %p176 = scmp.ne.s32.totalorder %s161, %s175
      %p177 = scmp.eq.s32.totalorder %s32, 0
      %p178 = por %p176, %p177
      %s180 = sadd.s32 %s179, 1
      %p183 = scmp.eq.s32.totalorder %s26, 1
      %p184 = scmp.ne.s32.totalorder %s179, %s181
      %p185 = scmp.eq.s32.totalorder %s26, 0
      %p186 = por %p184, %p185
      %p187 = scmp.ne.s32.totalorder %s179, %s181
      %p188 = scmp.eq.s32.totalorder %s31, 1
      %p189 = por %p187, %p188
      %p190 = scmp.ne.s32.totalorder %s181, %s182
      %p191 = scmp.eq.s32.totalorder %s31, 0
      %p192 = por %p190, %p191
      %p193 = scmp.ne.s32.totalorder %s181, %s182
      %p194 = scmp.eq.s32.totalorder %s32, 1
      %p195 = por %p193, %p194
      %p197 = scmp.ne.s32.totalorder %s182, %s196
      %p198 = scmp.eq.s32.totalorder %s32, 0
      %p199 = por %p197, %p198
      %s201 = sadd.s32 %s200, 1
      %p204 = scmp.eq.s32.totalorder %s26, 1
      %p205 = scmp.ne.s32.totalorder %s200, %s202
      %p206 = scmp.eq.s32.totalorder %s26, 0
      %p207 = por %p205, %p206
      %p208 = scmp.ne.s32.totalorder %s200, %s202
      %p209 = scmp.eq.s32.totalorder %s31, 1
      %p210 = por %p208, %p209
      %p211 = scmp.ne.s32.totalorder %s202, %s203
      %p212 = scmp.eq.s32.totalorder %s31, 0
      %p213 = por %p211, %p212
      %p214 = scmp.ne.s32.totalorder %s202, %s203
      %p215 = scmp.eq.s32.totalorder %s32, 1
      %p216 = por %p214, %p215
      %p218 = scmp.ne.s32.totalorder %s203, %s217
      %p219 = scmp.eq.s32.totalorder %s32, 0
      %p220 = por %p218, %p219
      %s222 = sadd.s32 %s221, 1
      %p225 = scmp.eq.s32.totalorder %s26, 1
      %p226 = scmp.ne.s32.totalorder %s221, %s223
      %p227 = scmp.eq.s32.totalorder %s26, 0
      %p228 = por %p226, %p227
      %p229 = scmp.ne.s32.totalorder %s221, %s223
      %p230 = scmp.eq.s32.totalorder %s31, 1
      %p231 = por %p229, %p230
      %p232 = scmp.ne.s32.totalorder %s223, %s224
      %p233 = scmp.eq.s32.totalorder %s31, 0
      %p234 = por %p232, %p233
      %p235 = scmp.ne.s32.totalorder %s223, %s224
      %p236 = scmp.eq.s32.totalorder %s32, 1
      %p237 = por %p235, %p236
      %p239 = scmp.ne.s32.totalorder %s224, %s238
      %p240 = scmp.eq.s32.totalorder %s32, 0
      %p241 = por %p239, %p240
      %s243 = sadd.s32 %s242, 1
      %p246 = scmp.eq.s32.totalorder %s26, 1
      %p247 = scmp.ne.s32.totalorder %s242, %s244
      %p248 = scmp.eq.s32.totalorder %s26, 0
      %p249 = por %p247, %p248
      %p250 = scmp.ne.s32.totalorder %s242, %s244
      %p251 = scmp.eq.s32.totalorder %s31, 1
      %p252 = por %p250, %p251
      %p253 = scmp.ne.s32.totalorder %s244, %s245
      %p254 = scmp.eq.s32.totalorder %s31, 0
      %p255 = por %p253, %p254
      %p256 = scmp.ne.s32.totalorder %s244, %s245
      %p257 = scmp.eq.s32.totalorder %s32, 1
      %p258 = por %p256, %p257
      %p260 = scmp.ne.s32.totalorder %s245, %s259
      %p261 = scmp.eq.s32.totalorder %s32, 0
      %p262 = por %p260, %p261
      %s264 = sadd.s32 %s263, 1
      %p267 = scmp.eq.s32.totalorder %s26, 1
      %p268 = scmp.ne.s32.totalorder %s263, %s265
      %p269 = scmp.eq.s32.totalorder %s26, 0
      %p270 = por %p268, %p269
      %p271 = scmp.ne.s32.totalorder %s263, %s265
      %p272 = scmp.eq.s32.totalorder %s31, 1
      %p273 = por %p271, %p272
      %p274 = scmp.ne.s32.totalorder %s265, %s266
      %p275 = scmp.eq.s32.totalorder %s31, 0
      %p276 = por %p274, %p275
      %p277 = scmp.ne.s32.totalorder %s265, %s266
      %p278 = scmp.eq.s32.totalorder %s32, 1
      %p279 = por %p277, %p278
      %p281 = scmp.ne.s32.totalorder %s266, %s280
      %p282 = scmp.eq.s32.totalorder %s32, 0
      %p283 = por %p281, %p282
      %s285 = sadd.s32 %s284, 1
      %p288 = scmp.eq.s32.totalorder %s26, 1
      %p289 = scmp.ne.s32.totalorder %s284, %s286
      %p290 = scmp.eq.s32.totalorder %s26, 0
      %p291 = por %p289, %p290
      %p292 = scmp.ne.s32.totalorder %s284, %s286
      %p293 = scmp.eq.s32.totalorder %s31, 1
      %p294 = por %p292, %p293
      %p295 = scmp.ne.s32.totalorder %s286, %s287
      %p296 = scmp.eq.s32.totalorder %s31, 0
      %p297 = por %p295, %p296
      %p298 = scmp.ne.s32.totalorder %s286, %s287
      %p299 = scmp.eq.s32.totalorder %s32, 1
      %p300 = por %p298, %p299
      %p302 = scmp.ne.s32.totalorder %s287, %s301
      %p303 = scmp.eq.s32.totalorder %s32, 0
      %p304 = por %p302, %p303
      %s306 = sadd.s32 %s305, 1
      %p309 = scmp.eq.s32.totalorder %s26, 1
      %p310 = scmp.ne.s32.totalorder %s305, %s307
      %p311 = scmp.eq.s32.totalorder %s26, 0
      %p312 = por %p310, %p311
      %p313 = scmp.ne.s32.totalorder %s305, %s307
      %p314 = scmp.eq.s32.totalorder %s31, 1
      %p315 = por %p313, %p314
      %p316 = scmp.ne.s32.totalorder %s307, %s308
      %p317 = scmp.eq.s32.totalorder %s31, 0
      %p318 = por %p316, %p317
      %p319 = scmp.ne.s32.totalorder %s307, %s308
      %p320 = scmp.eq.s32.totalorder %s32, 1
      %p321 = por %p319, %p320
      %p323 = scmp.ne.s32.totalorder %s308, %s322
      %p324 = scmp.eq.s32.totalorder %s32, 0
      %p325 = por %p323, %p324
      %s326 = ssub.s32 %s33, %s45
      %p327 = scmp.eq.s32.totalorder %s326, 0
      %s329 = sadd.s32 %s328, 1
      %s330 = scalar_select %p327, %s328, %s329
      %p333 = pneg %p327
      %p334 = scmp.eq.s32.totalorder %s26, 1
      %p335 = por %p333, %p334
      %p336 = scmp.ne.s32.totalorder %s328, %s331
      %p337 = scmp.eq.s32.totalorder %s26, 0
      %p338 = por %p336, %p337
      %p339 = scmp.ne.s32.totalorder %s328, %s331
      %p340 = scmp.eq.s32.totalorder %s31, 1
      %p341 = por %p339, %p340
      %p342 = scmp.ne.s32.totalorder %s331, %s332
      %p343 = scmp.eq.s32.totalorder %s31, 0
      %p344 = por %p342, %p343
      %p345 = scmp.ne.s32.totalorder %s331, %s332
      %p346 = scmp.eq.s32.totalorder %s32, 1
      %p347 = por %p345, %p346
      %p349 = scmp.ne.s32.totalorder %s332, %s348
      %p350 = scmp.eq.s32.totalorder %s32, 0
      %p351 = por %p349, %p350
      %p352 = scmp.le.s32.totalorder 1, %s26
      %p353 = scmp.lt.s32.totalorder %s26, 3
      %p354 = pnand %p352, %p353
      %p355 = pneg %p354
      // Predicated region
      $region9: #{stnkd_forward.1} parent=5 // pred_check
        _
      $region10: #{stnkd_forward.1} parent=5 // pred_check_branch
        %357 = sbr.rel (%p354) target = $region12
      $region11: #{stnkd_forward.1} parent=5 // pred_region
        %s358 = ssub.s32 %s26, 1
        // Predicated region
        $region13: #{stnkd_forward.1} parent=11 // pred_check
          %p359 = pneg %p87
        $region14: #{stnkd_forward.1} parent=11 // pred_check_branch
          %361 = sbr.rel (%p359) target = $region16
        $region15: #{stnkd_forward.1} parent=11 // pred_region
          %s363 = ssub.s32 512, 512
          %364 = vsyncadd [#allocation4], %s363
          %s365 = sshll.u32 [#allocation3], 4
          %s366 = int_to_ptr.vmem [resolvable:$true] %s365
          %371 = dma.hbm_to_vmem [thread:$0]  %s1, 512, %s366, [#allocation4], 64, 64, 4
        $region16: #{stnkd_forward.1} parent=11 // pred_fallthru
          _
        // Predicated region
        $region17: #{stnkd_forward.1} parent=11 // pred_check
          %p372 = pneg %p108
        $region18: #{stnkd_forward.1} parent=11 // pred_check_branch
          %374 = sbr.rel (%p372) target = $region20
        $region19: #{stnkd_forward.1} parent=11 // pred_region
          %s376 = ssub.s32 16, 16
          %377 = vsyncadd [#allocation6], %s376
          %s379 = sshll.u32 [#allocation5], 4
          %s380 = int_to_ptr.vmem [resolvable:$true] %s379
          %382 = dma.hbm_to_vmem [thread:$0]  %s2, 16, %s380, [#allocation6]
        $region20: #{stnkd_forward.1} parent=11 // pred_fallthru
          _
        // Predicated region
        $region21: #{stnkd_forward.1} parent=11 // pred_check
          %p383 = pneg %p129
        $region22: #{stnkd_forward.1} parent=11 // pred_check_branch
          %385 = sbr.rel (%p383) target = $region24
        $region23: #{stnkd_forward.1} parent=11 // pred_region
          %s387 = ssub.s32 512, 512
          %388 = vsyncadd [#allocation6], %s387
          %s389 = sshll.u32 [#allocation7], 4
          %s390 = int_to_ptr.vmem [resolvable:$true] %s389
          %395 = dma.hbm_to_vmem [thread:$0]  %s3, 512, %s390, [#allocation6], 64, 64, 4
        $region24: #{stnkd_forward.1} parent=11 // pred_fallthru
          _
        // Predicated region
        $region25: #{stnkd_forward.1} parent=11 // pred_check
          %p396 = pneg %p150
        $region26: #{stnkd_forward.1} parent=11 // pred_check_branch
          %398 = sbr.rel (%p396) target = $region28
        $region27: #{stnkd_forward.1} parent=11 // pred_region
          %s400 = ssub.s32 16, 16
          %401 = vsyncadd [#allocation9], %s400
          %s403 = sshll.u32 [#allocation8], 4
          %s404 = int_to_ptr.vmem [resolvable:$true] %s403
          %406 = dma.hbm_to_vmem [thread:$0]  %s4, 16, %s404, [#allocation9]
        $region28: #{stnkd_forward.1} parent=11 // pred_fallthru
          _
        // Predicated region
        $region29: #{stnkd_forward.1} parent=11 // pred_check
          %p407 = pneg %p171
        $region30: #{stnkd_forward.1} parent=11 // pred_check_branch
          %409 = sbr.rel (%p407) target = $region32
        $region31: #{stnkd_forward.1} parent=11 // pred_region
          %s411 = ssub.s32 8192, 8192
          %412 = vsyncadd [#allocation9], %s411
          %s413 = sshll.u32 [#allocation10], 4
          %s414 = int_to_ptr.vmem [resolvable:$true] %s413
          %419 = dma.hbm_to_vmem [thread:$0]  %s5, 8192, %s414, [#allocation9], 512, 512, 32
        $region32: #{stnkd_forward.1} parent=11 // pred_fallthru
          _
        // Predicated region
        $region33: #{stnkd_forward.1} parent=11 // pred_check
          %p420 = pneg %p192
        $region34: #{stnkd_forward.1} parent=11 // pred_check_branch
          %422 = sbr.rel (%p420) target = $region36
        $region35: #{stnkd_forward.1} parent=11 // pred_region
          %s424 = ssub.s32 128, 128
          %425 = vsyncadd [#allocation12], %s424
          %s427 = sshll.u32 [#allocation11], 4
          %s428 = int_to_ptr.vmem [resolvable:$true] %s427
          %430 = dma.hbm_to_vmem [thread:$0]  %s6, 128, %s428, [#allocation12]
        $region36: #{stnkd_forward.1} parent=11 // pred_fallthru
          _
        // Predicated region
        $region37: #{stnkd_forward.1} parent=11 // pred_check
          %p431 = pneg %p213
        $region38: #{stnkd_forward.1} parent=11 // pred_check_branch
          %433 = sbr.rel (%p431) target = $region40
        $region39: #{stnkd_forward.1} parent=11 // pred_region
          %s435 = ssub.s32 32768, 32768
          %436 = vsyncadd [#allocation12], %s435
          %s437 = sshll.u32 [#allocation13], 4
          %s438 = int_to_ptr.vmem [resolvable:$true] %s437
          %443 = dma.hbm_to_vmem [thread:$0]  %s7, 32768, %s438, [#allocation12], 256, 256, 16
        $region40: #{stnkd_forward.1} parent=11 // pred_fallthru
          _
        // Predicated region
        $region41: #{stnkd_forward.1} parent=11 // pred_check
          %p444 = pneg %p234
        $region42: #{stnkd_forward.1} parent=11 // pred_check_branch
          %446 = sbr.rel (%p444) target = $region44
        $region43: #{stnkd_forward.1} parent=11 // pred_region
          %s448 = ssub.s32 64, 64
          %449 = vsyncadd [#allocation15], %s448
          %s451 = sshll.u32 [#allocation14], 4
          %s452 = int_to_ptr.vmem [resolvable:$true] %s451
          %454 = dma.hbm_to_vmem [thread:$0]  %s8, 64, %s452, [#allocation15]
        $region44: #{stnkd_forward.1} parent=11 // pred_fallthru
          _
        // Predicated region
        $region45: #{stnkd_forward.1} parent=11 // pred_check
          %p455 = pneg %p255
        $region46: #{stnkd_forward.1} parent=11 // pred_check_branch
          %457 = sbr.rel (%p455) target = $region48
        $region47: #{stnkd_forward.1} parent=11 // pred_region
          %s459 = ssub.s32 8192, 8192
          %460 = vsyncadd [#allocation15], %s459
          %s461 = sshll.u32 [#allocation16], 4
          %s462 = int_to_ptr.vmem [resolvable:$true] %s461
          %467 = dma.hbm_to_vmem [thread:$0]  %s9, 8192, %s462, [#allocation15], 128, 128, 8
        $region48: #{stnkd_forward.1} parent=11 // pred_fallthru
          _
        // Predicated region
        $region49: #{stnkd_forward.1} parent=11 // pred_check
          %p468 = pneg %p276
        $region50: #{stnkd_forward.1} parent=11 // pred_check_branch
          %470 = sbr.rel (%p468) target = $region52
        $region51: #{stnkd_forward.1} parent=11 // pred_region
          %s472 = ssub.s32 32, 32
          %473 = vsyncadd [#allocation18], %s472
          %s475 = sshll.u32 [#allocation17], 4
          %s476 = int_to_ptr.vmem [resolvable:$true] %s475
          %478 = dma.hbm_to_vmem [thread:$0]  %s10, 32, %s476, [#allocation18]
        $region52: #{stnkd_forward.1} parent=11 // pred_fallthru
          _
        // Predicated region
        $region53: #{stnkd_forward.1} parent=11 // pred_check
          %p479 = pneg %p297
        $region54: #{stnkd_forward.1} parent=11 // pred_check_branch
          %481 = sbr.rel (%p479) target = $region56
        $region55: #{stnkd_forward.1} parent=11 // pred_region
          %s483 = ssub.s32 65536, 65536
          %484 = vsyncadd [#allocation18], %s483
          %s485 = sshll.u32 [#allocation19], 4
          %s486 = int_to_ptr.vmem [resolvable:$true] %s485
          %491 = dma.hbm_to_vmem [thread:$0]  %s11, 65536, %s486, [#allocation18], 2048, 2048, 128
        $region56: #{stnkd_forward.1} parent=11 // pred_fallthru
          _
        // Predicated region
        $region57: #{stnkd_forward.1} parent=11 // pred_check
          %p492 = pneg %p318
        $region58: #{stnkd_forward.1} parent=11 // pred_check_branch
          %494 = sbr.rel (%p492) target = $region60
        $region59: #{stnkd_forward.1} parent=11 // pred_region
          %s496 = ssub.s32 512, 512
          %497 = vsyncadd [#allocation21], %s496
          %s499 = sshll.u32 [#allocation20], 4
          %s500 = int_to_ptr.vmem [resolvable:$true] %s499
          %502 = dma.hbm_to_vmem [thread:$0]  %s12, 512, %s500, [#allocation21]
        $region60: #{stnkd_forward.1} parent=11 // pred_fallthru
          _
      $region12: #{stnkd_forward.1} parent=5 // pred_fallthru
        _
      %p503 = scmp.lt.s32.totalorder %s26, 2
      // Predicated region
      $region61: #{stnkd_forward.1} parent=5 // pred_check
        %p504 = pneg %p503
      $region62: #{stnkd_forward.1} parent=5 // pred_check_branch
        %506 = sbr.rel (%p504) target = $region64
      $region63: #{stnkd_forward.1} parent=5 // pred_region
        // Predicated region
        $region65: #{stnkd_forward.1} parent=63 // pred_check
          %p507 = pneg %p60
        $region66: #{stnkd_forward.1} parent=63 // pred_check_branch
          %509 = sbr.rel (%p507) target = $region68
        $region67: #{stnkd_forward.1} parent=63 // pred_region
          %s510 = smul.u32 64, %s34
          %p511 = scmp.lt.s32.totalorder %s33, 1
          %s512 = scalar_select %p511, %s33, 1
          %p513 = scmp.lt.s32.totalorder %s510, 63
          %s514 = scalar_select %p513, %s510, 63
          %s515 = smul.addr %s512, 64
          %s516 = sadd.s32 %s514, %s515
          %s517 = smul.addr %s516, 4
          %s518 = scalar_lea.vmem %s0, %s517
          %s519 = smul.u32 64, %s34
        $region68: #{stnkd_forward.1} parent=63 // pred_fallthru
          _
      $region64: #{stnkd_forward.1} parent=5 // pred_fallthru
        _
      %p520 = scmp.le.s32.totalorder 1, %s26
      %p521 = scmp.lt.s32.totalorder %s26, 3
      %p522 = pnand %p520, %p521
      %p523 = pneg %p522
      // Predicated region
      $region69: #{stnkd_forward.1} parent=5 // pred_check
        _
      $region70: #{stnkd_forward.1} parent=5 // pred_check_branch
        %525 = sbr.rel (%p522) target = $region72
      $region71: #{stnkd_forward.1} parent=5 // pred_region
        %s526 = ssub.s32 %s26, 1
        // Predicated region
        $region73: #{stnkd_forward.1} parent=71 // pred_check
          %p527 = pneg %p87
        $region74: #{stnkd_forward.1} parent=71 // pred_check_branch
          %529 = sbr.rel (%p527) target = $region76
        $region75: #{stnkd_forward.1} parent=71 // pred_region
          %530 = dma.done [#allocation4], 512
        $region76: #{stnkd_forward.1} parent=71 // pred_fallthru
          _
        // Predicated region
        $region77: #{stnkd_forward.1} parent=71 // pred_check
          %p531 = pneg %p108
        $region78: #{stnkd_forward.1} parent=71 // pred_check_branch
          %533 = sbr.rel (%p531) target = $region80
        $region79: #{stnkd_forward.1} parent=71 // pred_region
          %534 = dma.done [#allocation6], 16
        $region80: #{stnkd_forward.1} parent=71 // pred_fallthru
          _
        // Predicated region
        $region81: #{stnkd_forward.1} parent=71 // pred_check
          %p535 = pneg %p129
        $region82: #{stnkd_forward.1} parent=71 // pred_check_branch
          %537 = sbr.rel (%p535) target = $region84
        $region83: #{stnkd_forward.1} parent=71 // pred_region
          %538 = dma.done [#allocation6], 512
        $region84: #{stnkd_forward.1} parent=71 // pred_fallthru
          _
        // Predicated region
        $region85: #{stnkd_forward.1} parent=71 // pred_check
          %p539 = pneg %p150
        $region86: #{stnkd_forward.1} parent=71 // pred_check_branch
          %541 = sbr.rel (%p539) target = $region88
        $region87: #{stnkd_forward.1} parent=71 // pred_region
          %542 = dma.done [#allocation9], 16
        $region88: #{stnkd_forward.1} parent=71 // pred_fallthru
          _
        // Predicated region
        $region89: #{stnkd_forward.1} parent=71 // pred_check
          %p543 = pneg %p171
        $region90: #{stnkd_forward.1} parent=71 // pred_check_branch
          %545 = sbr.rel (%p543) target = $region92
        $region91: #{stnkd_forward.1} parent=71 // pred_region
          %546 = dma.done [#allocation9], 8192
        $region92: #{stnkd_forward.1} parent=71 // pred_fallthru
          _
        // Predicated region
        $region93: #{stnkd_forward.1} parent=71 // pred_check
          %p547 = pneg %p192
        $region94: #{stnkd_forward.1} parent=71 // pred_check_branch
          %549 = sbr.rel (%p547) target = $region96
        $region95: #{stnkd_forward.1} parent=71 // pred_region
          %550 = dma.done [#allocation12], 128
        $region96: #{stnkd_forward.1} parent=71 // pred_fallthru
          _
        // Predicated region
        $region97: #{stnkd_forward.1} parent=71 // pred_check
          %p551 = pneg %p213
        $region98: #{stnkd_forward.1} parent=71 // pred_check_branch
          %553 = sbr.rel (%p551) target = $region100
        $region99: #{stnkd_forward.1} parent=71 // pred_region
          %554 = dma.done [#allocation12], 32768
        $region100: #{stnkd_forward.1} parent=71 // pred_fallthru
          _
        // Predicated region
        $region101: #{stnkd_forward.1} parent=71 // pred_check
          %p555 = pneg %p234
        $region102: #{stnkd_forward.1} parent=71 // pred_check_branch
          %557 = sbr.rel (%p555) target = $region104
        $region103: #{stnkd_forward.1} parent=71 // pred_region
          %558 = dma.done [#allocation15], 64
        $region104: #{stnkd_forward.1} parent=71 // pred_fallthru
          _
        // Predicated region
        $region105: #{stnkd_forward.1} parent=71 // pred_check
          %p559 = pneg %p255
        $region106: #{stnkd_forward.1} parent=71 // pred_check_branch
          %561 = sbr.rel (%p559) target = $region108
        $region107: #{stnkd_forward.1} parent=71 // pred_region
          %562 = dma.done [#allocation15], 8192
        $region108: #{stnkd_forward.1} parent=71 // pred_fallthru
          _
        // Predicated region
        $region109: #{stnkd_forward.1} parent=71 // pred_check
          %p563 = pneg %p276
        $region110: #{stnkd_forward.1} parent=71 // pred_check_branch
          %565 = sbr.rel (%p563) target = $region112
        $region111: #{stnkd_forward.1} parent=71 // pred_region
          %566 = dma.done [#allocation18], 32
        $region112: #{stnkd_forward.1} parent=71 // pred_fallthru
          _
        // Predicated region
        $region113: #{stnkd_forward.1} parent=71 // pred_check
          %p567 = pneg %p297
        $region114: #{stnkd_forward.1} parent=71 // pred_check_branch
          %569 = sbr.rel (%p567) target = $region116
        $region115: #{stnkd_forward.1} parent=71 // pred_region
          %570 = dma.done [#allocation18], 65536
        $region116: #{stnkd_forward.1} parent=71 // pred_fallthru
          _
        // Predicated region
        $region117: #{stnkd_forward.1} parent=71 // pred_check
          %p571 = pneg %p318
        $region118: #{stnkd_forward.1} parent=71 // pred_check_branch
          %573 = sbr.rel (%p571) target = $region120
        $region119: #{stnkd_forward.1} parent=71 // pred_region
          %574 = dma.done [#allocation21], 512
        $region120: #{stnkd_forward.1} parent=71 // pred_fallthru
          _
        %s575 = smul.u32 64, %s36
        %p576 = scmp.lt.s32.totalorder %s35, 1
        %s577 = scalar_select %p576, %s35, 1
        %p578 = scmp.lt.s32.totalorder %s575, 63
        %s579 = scalar_select %p578, %s575, 63
        %s580 = smul.addr %s577, 64
        %s581 = sadd.s32 %s579, %s580
        %s582 = smul.addr %s581, 4
        %s583 = scalar_lea.vmem %s0, %s582
        %p584 = pneg %p66
        %p585 = pneg %p63
        %p586 = pneg %p87
        %p587 = pneg %p84
        %p588 = pneg %p108
        %p589 = pneg %p105
        %p590 = pneg %p129
        %p591 = pneg %p126
        %p592 = pneg %p150
        %p593 = pneg %p147
        %p594 = pneg %p171
        %p595 = pneg %p168
        %p596 = pneg %p192
        %p597 = pneg %p189
        %p598 = pneg %p213
        %p599 = pneg %p210
        %p600 = pneg %p234
        %p601 = pneg %p231
        %p602 = pneg %p255
        %p603 = pneg %p252
        %p604 = pneg %p276
        %p605 = pneg %p273
        %p606 = pneg %p297
        %p607 = pneg %p294
        %p608 = pneg %p318
        %p609 = pneg %p315
        %p610 = pneg %p344
        %p611 = pneg %p341
        %p612 = scmp.lt.s32.totalorder %s35, 1
        %s613 = scalar_select %p612, %s35, 1
        %s614 = smul.addr %s613, 32
        %s615 = scalar_lea.vmem %s13, %s614
        %s616 = smul.u32 64, %s36
        %p617 = scmp.lt.s32.totalorder %s35, 1
        %s618 = scalar_select %p617, %s35, 1
        %p619 = scmp.lt.s32.totalorder %s616, 63
        %s620 = scalar_select %p619, %s616, 63
        %s621 = smul.addr %s618, 64
        %s622 = sadd.s32 %s620, %s621
        %s623 = smul.addr %s622, 4
        %s624 = scalar_lea.vmem %s0, %s623
        %s625 = smul.u32 64, %s36
        %p626 = scmp.lt.s32.totalorder %s35, 1
        %s627 = scalar_select %p626, %s35, 1
        %s628 = smul.addr %s627, 32
        %s629 = scalar_lea.vmem %s13, %s628
        %p631 = scmp.eq.s32.totalorder %s36, 0
        // Predicated region
        $region121: #{stnkd_forward.1} parent=71 // pred_check
          %p632 = pneg %p631
        $region122: #{stnkd_forward.1} parent=71 // pred_check_branch
          %634 = sbr.rel (%p632) target = $region124
        $region123: #{stnkd_forward.1} parent=71 // pred_region
          %635 = vst [vmem:[#allocation2] sm:$0xff] 0.0
        $region124: #{stnkd_forward.1} parent=71 // pred_fallthru
          _
        %v636 = vld [vmem:[%s624] sm:$0xf]
        %v637 = vld [vmem:[%s624 + $0x4] sm:$0xf]
        %v638 = vld [vmem:[%s624 + $0x8] sm:$0xf]
        %v639 = vld [vmem:[%s624 + $0xc] sm:$0xf]
        %v640 = vld [vmem:[%s624 + $0x10] sm:$0xf]
        %v641 = vld [vmem:[%s624 + $0x14] sm:$0xf]
        %v642 = vld [vmem:[%s624 + $0x18] sm:$0xf]
        %v643 = vld [vmem:[%s624 + $0x1c] sm:$0xf]
        %v644 = vld [vmem:[%s624 + $0x20] sm:$0xf]
        %v645 = vld [vmem:[%s624 + $0x24] sm:$0xf]
        %v646 = vld [vmem:[%s624 + $0x28] sm:$0xf]
        %v647 = vld [vmem:[%s624 + $0x2c] sm:$0xf]
        %v648 = vld [vmem:[%s624 + $0x30] sm:$0xf]
        %v649 = vld [vmem:[%s624 + $0x34] sm:$0xf]
        %v650 = vld [vmem:[%s624 + $0x38] sm:$0xf]
        %v651 = vld [vmem:[%s624 + $0x3c] sm:$0xf]
        %v652 = vld [vmem:[%s624 + $0x40] sm:$0xf]
        %v653 = vld [vmem:[%s624 + $0x44] sm:$0xf]
        %v654 = vld [vmem:[%s624 + $0x48] sm:$0xf]
        %v655 = vld [vmem:[%s624 + $0x4c] sm:$0xf]
        %v656 = vld [vmem:[%s624 + $0x50] sm:$0xf]
        %v657 = vld [vmem:[%s624 + $0x54] sm:$0xf]
        %v658 = vld [vmem:[%s624 + $0x58] sm:$0xf]
        %v659 = vld [vmem:[%s624 + $0x5c] sm:$0xf]
        %v660 = vld [vmem:[%s624 + $0x60] sm:$0xf]
        %v661 = vld [vmem:[%s624 + $0x64] sm:$0xf]
        %v662 = vld [vmem:[%s624 + $0x68] sm:$0xf]
        %v663 = vld [vmem:[%s624 + $0x6c] sm:$0xf]
        %v664 = vld [vmem:[%s624 + $0x70] sm:$0xf]
        %v665 = vld [vmem:[%s624 + $0x74] sm:$0xf]
        %v666 = vld [vmem:[%s624 + $0x78] sm:$0xf]
        %v667 = vld [vmem:[%s624 + $0x7c] sm:$0xf]
        %v668 = vld [vmem:[%s624 + $0x80] sm:$0xf]
        %v669 = vld [vmem:[%s624 + $0x84] sm:$0xf]
        %v670 = vld [vmem:[%s624 + $0x88] sm:$0xf]
        %v671 = vld [vmem:[%s624 + $0x8c] sm:$0xf]
        %v672 = vld [vmem:[%s624 + $0x90] sm:$0xf]
        %v673 = vld [vmem:[%s624 + $0x94] sm:$0xf]
        %v674 = vld [vmem:[%s624 + $0x98] sm:$0xf]
        %v675 = vld [vmem:[%s624 + $0x9c] sm:$0xf]
        %v676 = vld [vmem:[%s624 + $0xa0] sm:$0xf]
        %v677 = vld [vmem:[%s624 + $0xa4] sm:$0xf]
        %v678 = vld [vmem:[%s624 + $0xa8] sm:$0xf]
        %v679 = vld [vmem:[%s624 + $0xac] sm:$0xf]
        %v680 = vld [vmem:[%s624 + $0xb0] sm:$0xf]
        %v681 = vld [vmem:[%s624 + $0xb4] sm:$0xf]
        %v682 = vld [vmem:[%s624 + $0xb8] sm:$0xf]
        %v683 = vld [vmem:[%s624 + $0xbc] sm:$0xf]
        %v684 = vld [vmem:[%s624 + $0xc0] sm:$0xf]
        %v685 = vld [vmem:[%s624 + $0xc4] sm:$0xf]
        %v686 = vld [vmem:[%s624 + $0xc8] sm:$0xf]
        %v687 = vld [vmem:[%s624 + $0xcc] sm:$0xf]
        %v688 = vld [vmem:[%s624 + $0xd0] sm:$0xf]
        %v689 = vld [vmem:[%s624 + $0xd4] sm:$0xf]
        %v690 = vld [vmem:[%s624 + $0xd8] sm:$0xf]
        %v691 = vld [vmem:[%s624 + $0xdc] sm:$0xf]
        %v692 = vld [vmem:[%s624 + $0xe0] sm:$0xf]
        %v693 = vld [vmem:[%s624 + $0xe4] sm:$0xf]
        %v694 = vld [vmem:[%s624 + $0xe8] sm:$0xf]
        %v695 = vld [vmem:[%s624 + $0xec] sm:$0xf]
        %v696 = vld [vmem:[%s624 + $0xf0] sm:$0xf]
        %v697 = vld [vmem:[%s624 + $0xf4] sm:$0xf]
        %v698 = vld [vmem:[%s624 + $0xf8] sm:$0xf]
        %v699 = vld [vmem:[%s624 + $0xfc] sm:$0xf]
        %v700 = vld [vmem:[#allocation3] sm:$0xf]
        %v701 = vld [vmem:[#allocation3 + $0x4] sm:$0xf]
        %v702 = vld [vmem:[#allocation3 + $0x8] sm:$0xf]
        %v703 = vld [vmem:[#allocation3 + $0xc] sm:$0xf]
        %v704 = vld [vmem:[#allocation3 + $0x10] sm:$0xf]
        %v705 = vld [vmem:[#allocation3 + $0x14] sm:$0xf]
        %v706 = vld [vmem:[#allocation3 + $0x18] sm:$0xf]
        %v707 = vld [vmem:[#allocation3 + $0x1c] sm:$0xf]
        %v708 = vld [vmem:[#allocation5] sm:$0x1]
        %v710 = vlaneseq
        %v711 = vshrl.u32 %v710, 7
        %v712 = vsub.s32 0, %v711
        %v713 = vrot.slane %v708, %v712
        %v779 = vunpack.c.l.b16 %v636
        %v780 = vunpack.c.l.b16 %v637
        %v781 = vunpack.c.l.b16 %v638
        %v782 = vunpack.c.l.b16 %v639
        %v783 = vunpack.c.l.b16 %v640
        %v784 = vunpack.c.l.b16 %v641
        %v785 = vunpack.c.l.b16 %v642
        %v786 = vunpack.c.l.b16 %v643
        %v787 = vunpack.c.l.b16 %v644
        %v788 = vunpack.c.l.b16 %v645
        %v789 = vunpack.c.l.b16 %v646
        %v790 = vunpack.c.l.b16 %v647
        %v791 = vunpack.c.l.b16 %v648
        %v792 = vunpack.c.l.b16 %v649
        %v793 = vunpack.c.l.b16 %v650
        %v794 = vunpack.c.l.b16 %v651
        %v795 = vunpack.c.l.b16 %v652
        %v796 = vunpack.c.l.b16 %v653
        %v797 = vunpack.c.l.b16 %v654
        %v798 = vunpack.c.l.b16 %v655
        %v799 = vunpack.c.l.b16 %v656
        %v800 = vunpack.c.l.b16 %v657
        %v801 = vunpack.c.l.b16 %v658
        %v802 = vunpack.c.l.b16 %v659
        %v803 = vunpack.c.l.b16 %v660
        %v804 = vunpack.c.l.b16 %v661
        %v805 = vunpack.c.l.b16 %v662
        %v806 = vunpack.c.l.b16 %v663
        %v807 = vunpack.c.l.b16 %v664
        %v808 = vunpack.c.l.b16 %v665
        %v809 = vunpack.c.l.b16 %v666
        %v810 = vunpack.c.l.b16 %v667
        %v811 = vunpack.c.l.b16 %v668
        %v812 = vunpack.c.l.b16 %v669
        %v813 = vunpack.c.l.b16 %v670
        %v814 = vunpack.c.l.b16 %v671
        %v815 = vunpack.c.l.b16 %v672
        %v816 = vunpack.c.l.b16 %v673
        %v817 = vunpack.c.l.b16 %v674
        %v818 = vunpack.c.l.b16 %v675
        %v819 = vunpack.c.l.b16 %v676
        %v820 = vunpack.c.l.b16 %v677
        %v821 = vunpack.c.l.b16 %v678
        %v822 = vunpack.c.l.b16 %v679
        %v823 = vunpack.c.l.b16 %v680
        %v824 = vunpack.c.l.b16 %v681
        %v825 = vunpack.c.l.b16 %v682
        %v826 = vunpack.c.l.b16 %v683
        %v827 = vunpack.c.l.b16 %v684
        %v828 = vunpack.c.l.b16 %v685
        %v829 = vunpack.c.l.b16 %v686
        %v830 = vunpack.c.l.b16 %v687
        %v831 = vunpack.c.l.b16 %v688
        %v832 = vunpack.c.l.b16 %v689
        %v833 = vunpack.c.l.b16 %v690
        %v834 = vunpack.c.l.b16 %v691
        %v835 = vunpack.c.l.b16 %v692
        %v836 = vunpack.c.l.b16 %v693
        %v837 = vunpack.c.l.b16 %v694
        %v838 = vunpack.c.l.b16 %v695
        %v839 = vunpack.c.l.b16 %v696
        %v840 = vunpack.c.l.b16 %v697
        %v841 = vunpack.c.l.b16 %v698
        %v842 = vunpack.c.l.b16 %v699
        %v843 = vpack.c.b16 %v780, %v779
        %v844 = vpack.c.b16 %v782, %v781
        %v845 = vpack.c.b16 %v784, %v783
        %v846 = vpack.c.b16 %v786, %v785
        %v847 = vpack.c.b16 %v788, %v787
        %v848 = vpack.c.b16 %v790, %v789
        %v849 = vpack.c.b16 %v792, %v791
        %v850 = vpack.c.b16 %v794, %v793
        %v851 = vpack.c.b16 %v796, %v795
        %v852 = vpack.c.b16 %v798, %v797
        %v853 = vpack.c.b16 %v800, %v799
        %v854 = vpack.c.b16 %v802, %v801
        %v855 = vpack.c.b16 %v804, %v803
        %v856 = vpack.c.b16 %v806, %v805
        %v857 = vpack.c.b16 %v808, %v807
        %v858 = vpack.c.b16 %v810, %v809
        %v859 = vpack.c.b16 %v812, %v811
        %v860 = vpack.c.b16 %v814, %v813
        %v861 = vpack.c.b16 %v816, %v815
        %v862 = vpack.c.b16 %v818, %v817
        %v863 = vpack.c.b16 %v820, %v819
        %v864 = vpack.c.b16 %v822, %v821
        %v865 = vpack.c.b16 %v824, %v823
        %v866 = vpack.c.b16 %v826, %v825
        %v867 = vpack.c.b16 %v828, %v827
        %v868 = vpack.c.b16 %v830, %v829
        %v869 = vpack.c.b16 %v832, %v831
        %v870 = vpack.c.b16 %v834, %v833
        %v871 = vpack.c.b16 %v836, %v835
        %v872 = vpack.c.b16 %v838, %v837
        %v873 = vpack.c.b16 %v840, %v839
        %v874 = vpack.c.b16 %v842, %v841
        %v883 = vunpack.c.l.b16 %v700
        %v884 = vunpack.c.l.b16 %v701
        %v885 = vunpack.c.l.b16 %v702
        %v886 = vunpack.c.l.b16 %v703
        %v887 = vunpack.c.l.b16 %v704
        %v888 = vunpack.c.l.b16 %v705
        %v889 = vunpack.c.l.b16 %v706
        %v890 = vunpack.c.l.b16 %v707
        %v891 = vpack.c.b16 %v884, %v883
        %v892 = vpack.c.b16 %v886, %v885
        %v893 = vpack.c.b16 %v888, %v887
        %v894 = vpack.c.b16 %v890, %v889
        %vm899 = vcmask 523264
        %v901 = vsel %vm899, %v843, 0
        %v904 = vsel %vm899, %v844, 0
        %v907 = vsel %vm899, %v845, 0
        %v910 = vsel %vm899, %v846, 0
        %v913 = vsel %vm899, %v847, 0
        %v916 = vsel %vm899, %v848, 0
        %v919 = vsel %vm899, %v849, 0
        %v922 = vsel %vm899, %v850, 0
        %v925 = vsel %vm899, %v851, 0
        %v928 = vsel %vm899, %v852, 0
        %v931 = vsel %vm899, %v853, 0
        %v934 = vsel %vm899, %v854, 0
        %v937 = vsel %vm899, %v855, 0
        %v940 = vsel %vm899, %v856, 0
        %v943 = vsel %vm899, %v857, 0
        %v946 = vsel %vm899, %v858, 0
        %v949 = vsel %vm899, %v859, 0
        %v952 = vsel %vm899, %v860, 0
        %v955 = vsel %vm899, %v861, 0
        %v958 = vsel %vm899, %v862, 0
        %v961 = vsel %vm899, %v863, 0
        %v964 = vsel %vm899, %v864, 0
        %v967 = vsel %vm899, %v865, 0
        %v970 = vsel %vm899, %v866, 0
        %v973 = vsel %vm899, %v867, 0
        %v976 = vsel %vm899, %v868, 0
        %v979 = vsel %vm899, %v869, 0
        %v982 = vsel %vm899, %v870, 0
        %v985 = vsel %vm899, %v871, 0
        %v988 = vsel %vm899, %v872, 0
        %v991 = vsel %vm899, %v873, 0
        %v994 = vsel %vm899, %v874, 0
        %996 = vmatprep.subr.bf16.mxu0 0
        %997 = vmatpush1.bf16.msra.mxu0 %v891
        %998 = vmatprep.subr.bf16.mxu0 0
        %999 = vmatpush1.bf16.msra.mxu0 %v892
        %1000 = vmatprep.subr.bf16.mxu0 0
        %1001 = vmatpush1.bf16.msra.mxu0 %v893
        %1002 = vmatprep.subr.bf16.mxu0 0
        %1003 = vmatpush1.bf16.msra.mxu0 %v894
        %1004 = vmatprep.subr.bf16.mxu0 0
        %1005 = vmatpush1.bf16.msra.mxu0 0
        %1006 = vmatprep.subr.bf16.mxu0 0
        %1007 = vmatpush1.bf16.msra.mxu0 0
        %1008 = vmatprep.subr.bf16.mxu0 0
        %1009 = vmatpush1.bf16.msra.mxu0 0
        %1010 = vmatprep.subr.bf16.mxu0 0
        %1011 = vmatpush1.bf16.msra.mxu0 0
        %1012 = vmatprep.subr.bf16.mxu0 0
        %1013 = vmatpush1.bf16.msra.mxu0 0
        %1014 = vmatprep.subr.bf16.mxu0 0
        %1015 = vmatpush1.bf16.msra.mxu0 0
        %1016 = vmatprep.subr.bf16.mxu0 0
        %1017 = vmatpush1.bf16.msra.mxu0 0
        %1018 = vmatprep.subr.bf16.mxu0 0
        %1019 = vmatpush1.bf16.msra.mxu0 0
        %1020 = vmatprep.subr.bf16.mxu0 0
        %1021 = vmatpush1.bf16.msra.mxu0 0
        %1022 = vmatprep.subr.bf16.mxu0 0
        %1023 = vmatpush1.bf16.msra.mxu0 0
        %1024 = vmatprep.subr.bf16.mxu0 0
        %1025 = vmatpush1.bf16.msra.mxu0 0
        %1026 = vmatprep.subr.bf16.mxu0 0
        %1027 = vmatpush1.bf16.msra.mxu0 0
        %1028 = vmatprep.mubr.bf16.mxu0 0
        %1029 = vmatmul.mubr.bf16.gmra.mrb[0].mxu0 %v901
        %v1030 = vpop.f32.mrb[0].mxu0
        %v1031 = vadd.f32 %v713, %v1030
        %v1032 = vpop.f32.mrb[0].mxu0
        %v1033 = vpop.f32.mrb[0].mxu0
        %v1034 = vadd.f32 %v713, %v1033
        %v1035 = vpop.f32.mrb[0].mxu0
        %1036 = vmatprep.mubr.bf16.mxu0 0
        %1037 = vmatmul.mubr.bf16.gmra.mrb[0].mxu0 %v904
        %v1038 = vpop.f32.mrb[0].mxu0
        %v1039 = vadd.f32 %v713, %v1038
        %v1040 = vpop.f32.mrb[0].mxu0
        %v1041 = vpop.f32.mrb[0].mxu0
        %v1042 = vadd.f32 %v713, %v1041
        %v1043 = vpop.f32.mrb[0].mxu0
        %1044 = vmatprep.mubr.bf16.mxu0 0
        %1045 = vmatmul.mubr.bf16.gmra.mrb[0].mxu0 %v907
        %v1046 = vpop.f32.mrb[0].mxu0
        %v1047 = vadd.f32 %v713, %v1046
        %v1048 = vpop.f32.mrb[0].mxu0
        %v1049 = vpop.f32.mrb[0].mxu0
        %v1050 = vadd.f32 %v713, %v1049
        %v1051 = vpop.f32.mrb[0].mxu0
        %1052 = vmatprep.mubr.bf16.mxu0 0
        %1053 = vmatmul.mubr.bf16.gmra.mrb[0].mxu0 %v910
        %v1054 = vpop.f32.mrb[0].mxu0
        %v1055 = vadd.f32 %v713, %v1054
        %v1056 = vpop.f32.mrb[0].mxu0
        %v1057 = vpop.f32.mrb[0].mxu0
        %v1058 = vadd.f32 %v713, %v1057
        %v1059 = vpop.f32.mrb[0].mxu0
        %1060 = vmatprep.mubr.bf16.mxu0 0
        %1061 = vmatmul.mubr.bf16.gmra.mrb[0].mxu0 %v913
        %v1062 = vpop.f32.mrb[0].mxu0
        %v1063 = vadd.f32 %v713, %v1062
        %v1064 = vpop.f32.mrb[0].mxu0
        %v1065 = vpop.f32.mrb[0].mxu0
        %v1066 = vadd.f32 %v713, %v1065
        %v1067 = vpop.f32.mrb[0].mxu0
        %1068 = vmatprep.mubr.bf16.mxu0 0
        %1069 = vmatmul.mubr.bf16.gmra.mrb[0].mxu0 %v916
        %v1070 = vpop.f32.mrb[0].mxu0
        %v1071 = vadd.f32 %v713, %v1070
        %v1072 = vpop.f32.mrb[0].mxu0
        %v1073 = vpop.f32.mrb[0].mxu0
        %v1074 = vadd.f32 %v713, %v1073
        %v1075 = vpop.f32.mrb[0].mxu0
        %1076 = vmatprep.mubr.bf16.mxu0 0
        %1077 = vmatmul.mubr.bf16.gmra.mrb[0].mxu0 %v919
        %v1078 = vpop.f32.mrb[0].mxu0
        %v1079 = vadd.f32 %v713, %v1078
        %v1080 = vpop.f32.mrb[0].mxu0
        %v1081 = vpop.f32.mrb[0].mxu0
        %v1082 = vadd.f32 %v713, %v1081
        %v1083 = vpop.f32.mrb[0].mxu0
        %1084 = vmatprep.mubr.bf16.mxu0 0
        %1085 = vmatmul.mubr.bf16.gmra.mrb[0].mxu0 %v922
        %v1086 = vpop.f32.mrb[0].mxu0
        %v1087 = vadd.f32 %v713, %v1086
        %v1088 = vpop.f32.mrb[0].mxu0
        %v1089 = vpop.f32.mrb[0].mxu0
        %v1090 = vadd.f32 %v713, %v1089
        %v1091 = vpop.f32.mrb[0].mxu0
        %1092 = vmatprep.mubr.bf16.mxu0 0
        %1093 = vmatmul.mubr.bf16.gmra.mrb[0].mxu0 %v925
        %v1094 = vpop.f32.mrb[0].mxu0
        %v1095 = vadd.f32 %v713, %v1094
        %v1096 = vpop.f32.mrb[0].mxu0
        %v1097 = vpop.f32.mrb[0].mxu0
        %v1098 = vadd.f32 %v713, %v1097
        %v1099 = vpop.f32.mrb[0].mxu0
        %1100 = vmatprep.mubr.bf16.mxu0 0
        %1101 = vmatmul.mubr.bf16.gmra.mrb[0].mxu0 %v928
        %v1102 = vpop.f32.mrb[0].mxu0
        %v1103 = vadd.f32 %v713, %v1102
        %v1104 = vpop.f32.mrb[0].mxu0
        %v1105 = vpop.f32.mrb[0].mxu0
        %v1106 = vadd.f32 %v713, %v1105
        %v1107 = vpop.f32.mrb[0].mxu0
        %1108 = vmatprep.mubr.bf16.mxu0 0
        %1109 = vmatmul.mubr.bf16.gmra.mrb[0].mxu0 %v931
        %v1110 = vpop.f32.mrb[0].mxu0
        %v1111 = vadd.f32 %v713, %v1110
        %v1112 = vpop.f32.mrb[0].mxu0
        %v1113 = vpop.f32.mrb[0].mxu0
        %v1114 = vadd.f32 %v713, %v1113
        %v1115 = vpop.f32.mrb[0].mxu0
        %1116 = vmatprep.mubr.bf16.mxu0 0
        %1117 = vmatmul.mubr.bf16.gmra.mrb[0].mxu0 %v934
        %v1118 = vpop.f32.mrb[0].mxu0
        %v1119 = vadd.f32 %v713, %v1118
        %v1120 = vpop.f32.mrb[0].mxu0
        %v1121 = vpop.f32.mrb[0].mxu0
        %v1122 = vadd.f32 %v713, %v1121
        %v1123 = vpop.f32.mrb[0].mxu0
        %1124 = vmatprep.mubr.bf16.mxu0 0
        %1125 = vmatmul.mubr.bf16.gmra.mrb[0].mxu0 %v937
        %v1126 = vpop.f32.mrb[0].mxu0
        %v1127 = vadd.f32 %v713, %v1126
        %v1128 = vpop.f32.mrb[0].mxu0
        %v1129 = vpop.f32.mrb[0].mxu0
        %v1130 = vadd.f32 %v713, %v1129
        %v1131 = vpop.f32.mrb[0].mxu0
        %1132 = vmatprep.mubr.bf16.mxu0 0
        %1133 = vmatmul.mubr.bf16.gmra.mrb[0].mxu0 %v940
        %v1134 = vpop.f32.mrb[0].mxu0
        %v1135 = vadd.f32 %v713, %v1134
        %v1136 = vpop.f32.mrb[0].mxu0
        %v1137 = vpop.f32.mrb[0].mxu0
        %v1138 = vadd.f32 %v713, %v1137
        %v1139 = vpop.f32.mrb[0].mxu0
        %1140 = vmatprep.mubr.bf16.mxu0 0
        %1141 = vmatmul.mubr.bf16.gmra.mrb[0].mxu0 %v943
        %v1142 = vpop.f32.mrb[0].mxu0
        %v1143 = vadd.f32 %v713, %v1142
        %v1144 = vpop.f32.mrb[0].mxu0
        %v1145 = vpop.f32.mrb[0].mxu0
        %v1146 = vadd.f32 %v713, %v1145
        %v1147 = vpop.f32.mrb[0].mxu0
        %1148 = vmatprep.mubr.bf16.mxu0 0
        %1149 = vmatmul.mubr.bf16.gmra.mrb[0].mxu0 %v946
        %v1150 = vpop.f32.mrb[0].mxu0
        %v1151 = vadd.f32 %v713, %v1150
        %v1152 = vpop.f32.mrb[0].mxu0
        %v1153 = vpop.f32.mrb[0].mxu0
        %v1154 = vadd.f32 %v713, %v1153
        %v1155 = vpop.f32.mrb[0].mxu0
        %1156 = vmatprep.mubr.bf16.mxu0 0
        %1157 = vmatmul.mubr.bf16.gmra.mrb[0].mxu0 %v949
        %v1158 = vpop.f32.mrb[0].mxu0
        %v1159 = vadd.f32 %v713, %v1158
        %v1160 = vpop.f32.mrb[0].mxu0
        %v1161 = vpop.f32.mrb[0].mxu0
        %v1162 = vadd.f32 %v713, %v1161
        %v1163 = vpop.f32.mrb[0].mxu0
        %1164 = vmatprep.mubr.bf16.mxu0 0
        %1165 = vmatmul.mubr.bf16.gmra.mrb[0].mxu0 %v952
        %v1166 = vpop.f32.mrb[0].mxu0
        %v1167 = vadd.f32 %v713, %v1166
        %v1168 = vpop.f32.mrb[0].mxu0
        %v1169 = vpop.f32.mrb[0].mxu0
        %v1170 = vadd.f32 %v713, %v1169
        %v1171 = vpop.f32.mrb[0].mxu0
        %1172 = vmatprep.mubr.bf16.mxu0 0
        %1173 = vmatmul.mubr.bf16.gmra.mrb[0].mxu0 %v955
        %v1174 = vpop.f32.mrb[0].mxu0
        %v1175 = vadd.f32 %v713, %v1174
        %v1176 = vpop.f32.mrb[0].mxu0
        %v1177 = vpop.f32.mrb[0].mxu0
        %v1178 = vadd.f32 %v713, %v1177
        %v1179 = vpop.f32.mrb[0].mxu0
        %1180 = vmatprep.mubr.bf16.mxu0 0
        %1181 = vmatmul.mubr.bf16.gmra.mrb[0].mxu0 %v958
        %v1182 = vpop.f32.mrb[0].mxu0
        %v1183 = vadd.f32 %v713, %v1182
        %v1184 = vpop.f32.mrb[0].mxu0
        %v1185 = vpop.f32.mrb[0].mxu0
        %v1186 = vadd.f32 %v713, %v1185
        %v1187 = vpop.f32.mrb[0].mxu0
        %1188 = vmatprep.mubr.bf16.mxu0 0
        %1189 = vmatmul.mubr.bf16.gmra.mrb[0].mxu0 %v961
        %v1190 = vpop.f32.mrb[0].mxu0
        %v1191 = vadd.f32 %v713, %v1190
        %v1192 = vpop.f32.mrb[0].mxu0
        %v1193 = vpop.f32.mrb[0].mxu0
        %v1194 = vadd.f32 %v713, %v1193
        %v1195 = vpop.f32.mrb[0].mxu0
        %1196 = vmatprep.mubr.bf16.mxu0 0
        %1197 = vmatmul.mubr.bf16.gmra.mrb[0].mxu0 %v964
        %v1198 = vpop.f32.mrb[0].mxu0
        %v1199 = vadd.f32 %v713, %v1198
        %v1200 = vpop.f32.mrb[0].mxu0
        %v1201 = vpop.f32.mrb[0].mxu0
        %v1202 = vadd.f32 %v713, %v1201
        %v1203 = vpop.f32.mrb[0].mxu0
        %1204 = vmatprep.mubr.bf16.mxu0 0
        %1205 = vmatmul.mubr.bf16.gmra.mrb[0].mxu0 %v967
        %v1206 = vpop.f32.mrb[0].mxu0
        %v1207 = vadd.f32 %v713, %v1206
        %v1208 = vpop.f32.mrb[0].mxu0
        %v1209 = vpop.f32.mrb[0].mxu0
        %v1210 = vadd.f32 %v713, %v1209
        %v1211 = vpop.f32.mrb[0].mxu0
        %1212 = vmatprep.mubr.bf16.mxu0 0
        %1213 = vmatmul.mubr.bf16.gmra.mrb[0].mxu0 %v970
        %v1214 = vpop.f32.mrb[0].mxu0
        %v1215 = vadd.f32 %v713, %v1214
        %v1216 = vpop.f32.mrb[0].mxu0
        %v1217 = vpop.f32.mrb[0].mxu0
        %v1218 = vadd.f32 %v713, %v1217
        %v1219 = vpop.f32.mrb[0].mxu0
        %1220 = vmatprep.mubr.bf16.mxu0 0
        %1221 = vmatmul.mubr.bf16.gmra.mrb[0].mxu0 %v973
        %v1222 = vpop.f32.mrb[0].mxu0
        %v1223 = vadd.f32 %v713, %v1222
        %v1224 = vpop.f32.mrb[0].mxu0
        %v1225 = vpop.f32.mrb[0].mxu0
        %v1226 = vadd.f32 %v713, %v1225
        %v1227 = vpop.f32.mrb[0].mxu0
        %1228 = vmatprep.mubr.bf16.mxu0 0
        %1229 = vmatmul.mubr.bf16.gmra.mrb[0].mxu0 %v976
        %v1230 = vpop.f32.mrb[0].mxu0
        %v1231 = vadd.f32 %v713, %v1230
        %v1232 = vpop.f32.mrb[0].mxu0
        %v1233 = vpop.f32.mrb[0].mxu0
        %v1234 = vadd.f32 %v713, %v1233
        %v1235 = vpop.f32.mrb[0].mxu0
        %1236 = vmatprep.mubr.bf16.mxu0 0
        %1237 = vmatmul.mubr.bf16.gmra.mrb[0].mxu0 %v979
        %v1238 = vpop.f32.mrb[0].mxu0
        %v1239 = vadd.f32 %v713, %v1238
        %v1240 = vpop.f32.mrb[0].mxu0
        %v1241 = vpop.f32.mrb[0].mxu0
        %v1242 = vadd.f32 %v713, %v1241
        %v1243 = vpop.f32.mrb[0].mxu0
        %1244 = vmatprep.mubr.bf16.mxu0 0
        %1245 = vmatmul.mubr.bf16.gmra.mrb[0].mxu0 %v982
        %v1246 = vpop.f32.mrb[0].mxu0
        %v1247 = vadd.f32 %v713, %v1246
        %v1248 = vpop.f32.mrb[0].mxu0
        %v1249 = vpop.f32.mrb[0].mxu0
        %v1250 = vadd.f32 %v713, %v1249
        %v1251 = vpop.f32.mrb[0].mxu0
        %1252 = vmatprep.mubr.bf16.mxu0 0
        %1253 = vmatmul.mubr.bf16.gmra.mrb[0].mxu0 %v985
        %v1254 = vpop.f32.mrb[0].mxu0
        %v1255 = vadd.f32 %v713, %v1254
        %v1256 = vpop.f32.mrb[0].mxu0
        %v1257 = vpop.f32.mrb[0].mxu0
        %v1258 = vadd.f32 %v713, %v1257
        %v1259 = vpop.f32.mrb[0].mxu0
        %1260 = vmatprep.mubr.bf16.mxu0 0
        %1261 = vmatmul.mubr.bf16.gmra.mrb[0].mxu0 %v988
        %v1262 = vpop.f32.mrb[0].mxu0
        %v1263 = vadd.f32 %v713, %v1262
        %v1264 = vpop.f32.mrb[0].mxu0
        %v1265 = vpop.f32.mrb[0].mxu0
        %v1266 = vadd.f32 %v713, %v1265
        %v1267 = vpop.f32.mrb[0].mxu0
        %1268 = vmatprep.mubr.bf16.mxu0 0
        %1269 = vmatmul.mubr.bf16.gmra.mrb[0].mxu0 %v991
        %v1270 = vpop.f32.mrb[0].mxu0
        %v1271 = vadd.f32 %v713, %v1270
        %v1272 = vpop.f32.mrb[0].mxu0
        %v1273 = vpop.f32.mrb[0].mxu0
        %v1274 = vadd.f32 %v713, %v1273
        %v1275 = vpop.f32.mrb[0].mxu0
        %1276 = vmatprep.mubr.bf16.mxu0 0
        %1277 = vmatmul.mubr.bf16.gmra.mrb[0].mxu0 %v994
        %v1278 = vpop.f32.mrb[0].mxu0
        %v1279 = vadd.f32 %v713, %v1278
        %v1280 = vpop.f32.mrb[0].mxu0
        %v1281 = vpop.f32.mrb[0].mxu0
        %v1282 = vadd.f32 %v713, %v1281
        %v1283 = vpop.f32.mrb[0].mxu0
        %1284 = vdwg.mxu0
        %v1285 = vmax.f32 %v1031, 0.0
        %v1286 = vmax.f32 %v1034, 0.0
        %v1287 = vmax.f32 %v1039, 0.0
        %v1288 = vmax.f32 %v1042, 0.0
        %v1289 = vmax.f32 %v1047, 0.0
        %v1290 = vmax.f32 %v1050, 0.0
        %v1291 = vmax.f32 %v1055, 0.0
        %v1292 = vmax.f32 %v1058, 0.0
        %v1293 = vmax.f32 %v1063, 0.0
        %v1294 = vmax.f32 %v1066, 0.0
        %v1295 = vmax.f32 %v1071, 0.0
        %v1296 = vmax.f32 %v1074, 0.0
        %v1297 = vmax.f32 %v1079, 0.0
        %v1298 = vmax.f32 %v1082, 0.0
        %v1299 = vmax.f32 %v1087, 0.0
        %v1300 = vmax.f32 %v1090, 0.0
        %v1301 = vmax.f32 %v1095, 0.0
        %v1302 = vmax.f32 %v1098, 0.0
        %v1303 = vmax.f32 %v1103, 0.0
        %v1304 = vmax.f32 %v1106, 0.0
        %v1305 = vmax.f32 %v1111, 0.0
        %v1306 = vmax.f32 %v1114, 0.0
        %v1307 = vmax.f32 %v1119, 0.0
        %v1308 = vmax.f32 %v1122, 0.0
        %v1309 = vmax.f32 %v1127, 0.0
        %v1310 = vmax.f32 %v1130, 0.0
        %v1311 = vmax.f32 %v1135, 0.0
        %v1312 = vmax.f32 %v1138, 0.0
        %v1313 = vmax.f32 %v1143, 0.0
        %v1314 = vmax.f32 %v1146, 0.0
        %v1315 = vmax.f32 %v1151, 0.0
        %v1316 = vmax.f32 %v1154, 0.0
        %v1317 = vmax.f32 %v1159, 0.0
        %v1318 = vmax.f32 %v1162, 0.0
        %v1319 = vmax.f32 %v1167, 0.0
        %v1320 = vmax.f32 %v1170, 0.0
        %v1321 = vmax.f32 %v1175, 0.0
        %v1322 = vmax.f32 %v1178, 0.0
        %v1323 = vmax.f32 %v1183, 0.0
        %v1324 = vmax.f32 %v1186, 0.0
        %v1325 = vmax.f32 %v1191, 0.0
        %v1326 = vmax.f32 %v1194, 0.0
        %v1327 = vmax.f32 %v1199, 0.0
        %v1328 = vmax.f32 %v1202, 0.0
        %v1329 = vmax.f32 %v1207, 0.0
        %v1330 = vmax.f32 %v1210, 0.0
        %v1331 = vmax.f32 %v1215, 0.0
        %v1332 = vmax.f32 %v1218, 0.0
        %v1333 = vmax.f32 %v1223, 0.0
        %v1334 = vmax.f32 %v1226, 0.0
        %v1335 = vmax.f32 %v1231, 0.0
        %v1336 = vmax.f32 %v1234, 0.0
        %v1337 = vmax.f32 %v1239, 0.0
        %v1338 = vmax.f32 %v1242, 0.0
        %v1339 = vmax.f32 %v1247, 0.0
        %v1340 = vmax.f32 %v1250, 0.0
        %v1341 = vmax.f32 %v1255, 0.0
        %v1342 = vmax.f32 %v1258, 0.0
        %v1343 = vmax.f32 %v1263, 0.0
        %v1344 = vmax.f32 %v1266, 0.0
        %v1345 = vmax.f32 %v1271, 0.0
        %v1346 = vmax.f32 %v1274, 0.0
        %v1347 = vmax.f32 %v1279, 0.0
        %v1348 = vmax.f32 %v1282, 0.0
        %v1349 = vpack.c.bf16 %v1286, %v1285
        %v1350 = vpack.c.bf16 %v1288, %v1287
        %v1351 = vpack.c.bf16 %v1290, %v1289
        %v1352 = vpack.c.bf16 %v1292, %v1291
        %v1353 = vpack.c.bf16 %v1294, %v1293
        %v1354 = vpack.c.bf16 %v1296, %v1295
        %v1355 = vpack.c.bf16 %v1298, %v1297
        %v1356 = vpack.c.bf16 %v1300, %v1299
        %v1357 = vpack.c.bf16 %v1302, %v1301
        %v1358 = vpack.c.bf16 %v1304, %v1303
        %v1359 = vpack.c.bf16 %v1306, %v1305
        %v1360 = vpack.c.bf16 %v1308, %v1307
        %v1361 = vpack.c.bf16 %v1310, %v1309
        %v1362 = vpack.c.bf16 %v1312, %v1311
        %v1363 = vpack.c.bf16 %v1314, %v1313
        %v1364 = vpack.c.bf16 %v1316, %v1315
        %v1365 = vpack.c.bf16 %v1318, %v1317
        %v1366 = vpack.c.bf16 %v1320, %v1319
        %v1367 = vpack.c.bf16 %v1322, %v1321
        %v1368 = vpack.c.bf16 %v1324, %v1323
        %v1369 = vpack.c.bf16 %v1326, %v1325
        %v1370 = vpack.c.bf16 %v1328, %v1327
        %v1371 = vpack.c.bf16 %v1330, %v1329
        %v1372 = vpack.c.bf16 %v1332, %v1331
        %v1373 = vpack.c.bf16 %v1334, %v1333
        %v1374 = vpack.c.bf16 %v1336, %v1335
        %v1375 = vpack.c.bf16 %v1338, %v1337
        %v1376 = vpack.c.bf16 %v1340, %v1339
        %v1377 = vpack.c.bf16 %v1342, %v1341
        %v1378 = vpack.c.bf16 %v1344, %v1343
        %v1379 = vpack.c.bf16 %v1346, %v1345
        %v1380 = vpack.c.bf16 %v1348, %v1347
        %v1381 = vld [vmem:[#allocation7] sm:$0xf]
        %v1382 = vld [vmem:[#allocation7 + $0x4] sm:$0xf]
        %v1383 = vld [vmem:[#allocation7 + $0x8] sm:$0xf]
        %v1384 = vld [vmem:[#allocation7 + $0xc] sm:$0xf]
        %v1385 = vld [vmem:[#allocation7 + $0x10] sm:$0xf]
        %v1386 = vld [vmem:[#allocation7 + $0x14] sm:$0xf]
        %v1387 = vld [vmem:[#allocation7 + $0x18] sm:$0xf]
        %v1388 = vld [vmem:[#allocation7 + $0x1c] sm:$0xf]
        %v1389 = vld [vmem:[#allocation8] sm:$0x1]
        %v1391 = vlaneseq
        %v1392 = vshrl.u32 %v1391, 7
        %v1393 = vsub.s32 0, %v1392
        %v1394 = vrot.slane %v1389, %v1393
        %v1404 = vunpack.c.l.b16 %v1381
        %v1405 = vunpack.c.l.b16 %v1382
        %v1406 = vunpack.c.l.b16 %v1383
        %v1407 = vunpack.c.l.b16 %v1384
        %v1408 = vunpack.c.l.b16 %v1385
        %v1409 = vunpack.c.l.b16 %v1386
        %v1410 = vunpack.c.l.b16 %v1387
        %v1411 = vunpack.c.l.b16 %v1388
        %v1412 = vpack.c.b16 %v1405, %v1404
        %v1413 = vpack.c.b16 %v1407, %v1406
        %v1414 = vpack.c.b16 %v1409, %v1408
        %v1415 = vpack.c.b16 %v1411, %v1410
        %v1421 = vsel %vm899, %v1349, 0
        %v1424 = vsel %vm899, %v1350, 0
        %v1427 = vsel %vm899, %v1351, 0
        %v1430 = vsel %vm899, %v1352, 0
        %v1433 = vsel %vm899, %v1353, 0
        %v1436 = vsel %vm899, %v1354, 0
        %v1439 = vsel %vm899, %v1355, 0
        %v1442 = vsel %vm899, %v1356, 0
        %v1445 = vsel %vm899, %v1357, 0
        %v1448 = vsel %vm899, %v1358, 0
        %v1451 = vsel %vm899, %v1359, 0
        %v1454 = vsel %vm899, %v1360, 0
        %v1457 = vsel %vm899, %v1361, 0
        %v1460 = vsel %vm899, %v1362, 0
        %v1463 = vsel %vm899, %v1363, 0
        %v1466 = vsel %vm899, %v1364, 0
        %v1469 = vsel %vm899, %v1365, 0
        %v1472 = vsel %vm899, %v1366, 0
        %v1475 = vsel %vm899, %v1367, 0
        %v1478 = vsel %vm899, %v1368, 0
        %v1481 = vsel %vm899, %v1369, 0
        %v1484 = vsel %vm899, %v1370, 0
        %v1487 = vsel %vm899, %v1371, 0
        %v1490 = vsel %vm899, %v1372, 0
        %v1493 = vsel %vm899, %v1373, 0
        %v1496 = vsel %vm899, %v1374, 0
        %v1499 = vsel %vm899, %v1375, 0
        %v1502 = vsel %vm899, %v1376, 0
        %v1505 = vsel %vm899, %v1377, 0
        %v1508 = vsel %vm899, %v1378, 0
        %v1511 = vsel %vm899, %v1379, 0
        %v1514 = vsel %vm899, %v1380, 0
        %1516 = vmatprep.subr.bf16.mxu0 0
        %1517 = vmatpush1.bf16.msra.mxu0 %v1412
        %1518 = vmatprep.subr.bf16.mxu0 0
        %1519 = vmatpush1.bf16.msra.mxu0 %v1413
        %1520 = vmatprep.subr.bf16.mxu0 0
        %1521 = vmatpush1.bf16.msra.mxu0 %v1414
        %1522 = vmatprep.subr.bf16.mxu0 0
        %1523 = vmatpush1.bf16.msra.mxu0 %v1415
        %1524 = vmatprep.subr.bf16.mxu0 0
        %1525 = vmatpush1.bf16.msra.mxu0 0
        %1526 = vmatprep.subr.bf16.mxu0 0
        %1527 = vmatpush1.bf16.msra.mxu0 0
        %1528 = vmatprep.subr.bf16.mxu0 0
        %1529 = vmatpush1.bf16.msra.mxu0 0
        %1530 = vmatprep.subr.bf16.mxu0 0
        %1531 = vmatpush1.bf16.msra.mxu0 0
        %1532 = vmatprep.subr.bf16.mxu0 0
        %1533 = vmatpush1.bf16.msra.mxu0 0
        %1534 = vmatprep.subr.bf16.mxu0 0
        %1535 = vmatpush1.bf16.msra.mxu0 0
        %1536 = vmatprep.subr.bf16.mxu0 0
        %1537 = vmatpush1.bf16.msra.mxu0 0
        %1538 = vmatprep.subr.bf16.mxu0 0
        %1539 = vmatpush1.bf16.msra.mxu0 0
        %1540 = vmatprep.subr.bf16.mxu0 0
        %1541 = vmatpush1.bf16.msra.mxu0 0
        %1542 = vmatprep.subr.bf16.mxu0 0
        %1543 = vmatpush1.bf16.msra.mxu0 0
        %1544 = vmatprep.subr.bf16.mxu0 0
        %1545 = vmatpush1.bf16.msra.mxu0 0
        %1546 = vmatprep.subr.bf16.mxu0 0
        %1547 = vmatpush1.bf16.msra.mxu0 0
        %1548 = vmatprep.mubr.bf16.mxu0 0
        %1549 = vmatmul.mubr.bf16.gmra.mrb[0].mxu0 %v1421
        %v1550 = vpop.f32.mrb[0].mxu0
        %v1551 = vadd.f32 %v1394, %v1550
        %v1552 = vpop.f32.mrb[0].mxu0
        %v1553 = vpop.f32.mrb[0].mxu0
        %v1554 = vadd.f32 %v1394, %v1553
        %v1555 = vpop.f32.mrb[0].mxu0
        %1556 = vmatprep.mubr.bf16.mxu0 0
        %1557 = vmatmul.mubr.bf16.gmra.mrb[0].mxu0 %v1424
        %v1558 = vpop.f32.mrb[0].mxu0
        %v1559 = vadd.f32 %v1394, %v1558
        %v1560 = vpop.f32.mrb[0].mxu0
        %v1561 = vpop.f32.mrb[0].mxu0
        %v1562 = vadd.f32 %v1394, %v1561
        %v1563 = vpop.f32.mrb[0].mxu0
        %1564 = vmatprep.mubr.bf16.mxu0 0
        %1565 = vmatmul.mubr.bf16.gmra.mrb[0].mxu0 %v1427
        %v1566 = vpop.f32.mrb[0].mxu0
        %v1567 = vadd.f32 %v1394, %v1566
        %v1568 = vpop.f32.mrb[0].mxu0
        %v1569 = vpop.f32.mrb[0].mxu0
        %v1570 = vadd.f32 %v1394, %v1569
        %v1571 = vpop.f32.mrb[0].mxu0
        %1572 = vmatprep.mubr.bf16.mxu0 0
        %1573 = vmatmul.mubr.bf16.gmra.mrb[0].mxu0 %v1430
        %v1574 = vpop.f32.mrb[0].mxu0
        %v1575 = vadd.f32 %v1394, %v1574
        %v1576 = vpop.f32.mrb[0].mxu0
        %v1577 = vpop.f32.mrb[0].mxu0
        %v1578 = vadd.f32 %v1394, %v1577
        %v1579 = vpop.f32.mrb[0].mxu0
        %1580 = vmatprep.mubr.bf16.mxu0 0
        %1581 = vmatmul.mubr.bf16.gmra.mrb[0].mxu0 %v1433
        %v1582 = vpop.f32.mrb[0].mxu0
        %v1583 = vadd.f32 %v1394, %v1582
        %v1584 = vpop.f32.mrb[0].mxu0
        %v1585 = vpop.f32.mrb[0].mxu0
        %v1586 = vadd.f32 %v1394, %v1585
        %v1587 = vpop.f32.mrb[0].mxu0
        %1588 = vmatprep.mubr.bf16.mxu0 0
        %1589 = vmatmul.mubr.bf16.gmra.mrb[0].mxu0 %v1436
        %v1590 = vpop.f32.mrb[0].mxu0
        %v1591 = vadd.f32 %v1394, %v1590
        %v1592 = vpop.f32.mrb[0].mxu0
        %v1593 = vpop.f32.mrb[0].mxu0
        %v1594 = vadd.f32 %v1394, %v1593
        %v1595 = vpop.f32.mrb[0].mxu0
        %1596 = vmatprep.mubr.bf16.mxu0 0
        %1597 = vmatmul.mubr.bf16.gmra.mrb[0].mxu0 %v1439
        %v1598 = vpop.f32.mrb[0].mxu0
        %v1599 = vadd.f32 %v1394, %v1598
        %v1600 = vpop.f32.mrb[0].mxu0
        %v1601 = vpop.f32.mrb[0].mxu0
        %v1602 = vadd.f32 %v1394, %v1601
        %v1603 = vpop.f32.mrb[0].mxu0
        %1604 = vmatprep.mubr.bf16.mxu0 0
        %1605 = vmatmul.mubr.bf16.gmra.mrb[0].mxu0 %v1442
        %v1606 = vpop.f32.mrb[0].mxu0
        %v1607 = vadd.f32 %v1394, %v1606
        %v1608 = vpop.f32.mrb[0].mxu0
        %v1609 = vpop.f32.mrb[0].mxu0
        %v1610 = vadd.f32 %v1394, %v1609
        %v1611 = vpop.f32.mrb[0].mxu0
        %1612 = vmatprep.mubr.bf16.mxu0 0
        %1613 = vmatmul.mubr.bf16.gmra.mrb[0].mxu0 %v1445
        %v1614 = vpop.f32.mrb[0].mxu0
        %v1615 = vadd.f32 %v1394, %v1614
        %v1616 = vpop.f32.mrb[0].mxu0
        %v1617 = vpop.f32.mrb[0].mxu0
        %v1618 = vadd.f32 %v1394, %v1617
        %v1619 = vpop.f32.mrb[0].mxu0
        %1620 = vmatprep.mubr.bf16.mxu0 0
        %1621 = vmatmul.mubr.bf16.gmra.mrb[0].mxu0 %v1448
        %v1622 = vpop.f32.mrb[0].mxu0
        %v1623 = vadd.f32 %v1394, %v1622
        %v1624 = vpop.f32.mrb[0].mxu0
        %v1625 = vpop.f32.mrb[0].mxu0
        %v1626 = vadd.f32 %v1394, %v1625
        %v1627 = vpop.f32.mrb[0].mxu0
        %1628 = vmatprep.mubr.bf16.mxu0 0
        %1629 = vmatmul.mubr.bf16.gmra.mrb[0].mxu0 %v1451
        %v1630 = vpop.f32.mrb[0].mxu0
        %v1631 = vadd.f32 %v1394, %v1630
        %v1632 = vpop.f32.mrb[0].mxu0
        %v1633 = vpop.f32.mrb[0].mxu0
        %v1634 = vadd.f32 %v1394, %v1633
        %v1635 = vpop.f32.mrb[0].mxu0
        %1636 = vmatprep.mubr.bf16.mxu0 0
        %1637 = vmatmul.mubr.bf16.gmra.mrb[0].mxu0 %v1454
        %v1638 = vpop.f32.mrb[0].mxu0
        %v1639 = vadd.f32 %v1394, %v1638
        %v1640 = vpop.f32.mrb[0].mxu0
        %v1641 = vpop.f32.mrb[0].mxu0
        %v1642 = vadd.f32 %v1394, %v1641
        %v1643 = vpop.f32.mrb[0].mxu0
        %1644 = vmatprep.mubr.bf16.mxu0 0
        %1645 = vmatmul.mubr.bf16.gmra.mrb[0].mxu0 %v1457
        %v1646 = vpop.f32.mrb[0].mxu0
        %v1647 = vadd.f32 %v1394, %v1646
        %v1648 = vpop.f32.mrb[0].mxu0
        %v1649 = vpop.f32.mrb[0].mxu0
        %v1650 = vadd.f32 %v1394, %v1649
        %v1651 = vpop.f32.mrb[0].mxu0
        %1652 = vmatprep.mubr.bf16.mxu0 0
        %1653 = vmatmul.mubr.bf16.gmra.mrb[0].mxu0 %v1460
        %v1654 = vpop.f32.mrb[0].mxu0
        %v1655 = vadd.f32 %v1394, %v1654
        %v1656 = vpop.f32.mrb[0].mxu0
        %v1657 = vpop.f32.mrb[0].mxu0
        %v1658 = vadd.f32 %v1394, %v1657
        %v1659 = vpop.f32.mrb[0].mxu0
        %1660 = vmatprep.mubr.bf16.mxu0 0
        %1661 = vmatmul.mubr.bf16.gmra.mrb[0].mxu0 %v1463
        %v1662 = vpop.f32.mrb[0].mxu0
        %v1663 = vadd.f32 %v1394, %v1662
        %v1664 = vpop.f32.mrb[0].mxu0
        %v1665 = vpop.f32.mrb[0].mxu0
        %v1666 = vadd.f32 %v1394, %v1665
        %v1667 = vpop.f32.mrb[0].mxu0
        %1668 = vmatprep.mubr.bf16.mxu0 0
        %1669 = vmatmul.mubr.bf16.gmra.mrb[0].mxu0 %v1466
        %v1670 = vpop.f32.mrb[0].mxu0
        %v1671 = vadd.f32 %v1394, %v1670
        %v1672 = vpop.f32.mrb[0].mxu0
        %v1673 = vpop.f32.mrb[0].mxu0
        %v1674 = vadd.f32 %v1394, %v1673
        %v1675 = vpop.f32.mrb[0].mxu0
        %1676 = vmatprep.mubr.bf16.mxu0 0
        %1677 = vmatmul.mubr.bf16.gmra.mrb[0].mxu0 %v1469
        %v1678 = vpop.f32.mrb[0].mxu0
        %v1679 = vadd.f32 %v1394, %v1678
        %v1680 = vpop.f32.mrb[0].mxu0
        %v1681 = vpop.f32.mrb[0].mxu0
        %v1682 = vadd.f32 %v1394, %v1681
        %v1683 = vpop.f32.mrb[0].mxu0
        %1684 = vmatprep.mubr.bf16.mxu0 0
        %1685 = vmatmul.mubr.bf16.gmra.mrb[0].mxu0 %v1472
        %v1686 = vpop.f32.mrb[0].mxu0
        %v1687 = vadd.f32 %v1394, %v1686
        %v1688 = vpop.f32.mrb[0].mxu0
        %v1689 = vpop.f32.mrb[0].mxu0
        %v1690 = vadd.f32 %v1394, %v1689
        %v1691 = vpop.f32.mrb[0].mxu0
        %1692 = vmatprep.mubr.bf16.mxu0 0
        %1693 = vmatmul.mubr.bf16.gmra.mrb[0].mxu0 %v1475
        %v1694 = vpop.f32.mrb[0].mxu0
        %v1695 = vadd.f32 %v1394, %v1694
        %v1696 = vpop.f32.mrb[0].mxu0
        %v1697 = vpop.f32.mrb[0].mxu0
        %v1698 = vadd.f32 %v1394, %v1697
        %v1699 = vpop.f32.mrb[0].mxu0
        %1700 = vmatprep.mubr.bf16.mxu0 0
        %1701 = vmatmul.mubr.bf16.gmra.mrb[0].mxu0 %v1478
        %v1702 = vpop.f32.mrb[0].mxu0
        %v1703 = vadd.f32 %v1394, %v1702
        %v1704 = vpop.f32.mrb[0].mxu0
        %v1705 = vpop.f32.mrb[0].mxu0
        %v1706 = vadd.f32 %v1394, %v1705
        %v1707 = vpop.f32.mrb[0].mxu0
        %1708 = vmatprep.mubr.bf16.mxu0 0
        %1709 = vmatmul.mubr.bf16.gmra.mrb[0].mxu0 %v1481
        %v1710 = vpop.f32.mrb[0].mxu0
        %v1711 = vadd.f32 %v1394, %v1710
        %v1712 = vpop.f32.mrb[0].mxu0
        %v1713 = vpop.f32.mrb[0].mxu0
        %v1714 = vadd.f32 %v1394, %v1713
        %v1715 = vpop.f32.mrb[0].mxu0
        %1716 = vmatprep.mubr.bf16.mxu0 0
        %1717 = vmatmul.mubr.bf16.gmra.mrb[0].mxu0 %v1484
        %v1718 = vpop.f32.mrb[0].mxu0
        %v1719 = vadd.f32 %v1394, %v1718
        %v1720 = vpop.f32.mrb[0].mxu0
        %v1721 = vpop.f32.mrb[0].mxu0
        %v1722 = vadd.f32 %v1394, %v1721
        %v1723 = vpop.f32.mrb[0].mxu0
        %1724 = vmatprep.mubr.bf16.mxu0 0
        %1725 = vmatmul.mubr.bf16.gmra.mrb[0].mxu0 %v1487
        %v1726 = vpop.f32.mrb[0].mxu0
        %v1727 = vadd.f32 %v1394, %v1726
        %v1728 = vpop.f32.mrb[0].mxu0
        %v1729 = vpop.f32.mrb[0].mxu0
        %v1730 = vadd.f32 %v1394, %v1729
        %v1731 = vpop.f32.mrb[0].mxu0
        %1732 = vmatprep.mubr.bf16.mxu0 0
        %1733 = vmatmul.mubr.bf16.gmra.mrb[0].mxu0 %v1490
        %v1734 = vpop.f32.mrb[0].mxu0
        %v1735 = vadd.f32 %v1394, %v1734
        %v1736 = vpop.f32.mrb[0].mxu0
        %v1737 = vpop.f32.mrb[0].mxu0
        %v1738 = vadd.f32 %v1394, %v1737
        %v1739 = vpop.f32.mrb[0].mxu0
        %1740 = vmatprep.mubr.bf16.mxu0 0
        %1741 = vmatmul.mubr.bf16.gmra.mrb[0].mxu0 %v1493
        %v1742 = vpop.f32.mrb[0].mxu0
        %v1743 = vadd.f32 %v1394, %v1742
        %v1744 = vpop.f32.mrb[0].mxu0
        %v1745 = vpop.f32.mrb[0].mxu0
        %v1746 = vadd.f32 %v1394, %v1745
        %v1747 = vpop.f32.mrb[0].mxu0
        %1748 = vmatprep.mubr.bf16.mxu0 0
        %1749 = vmatmul.mubr.bf16.gmra.mrb[0].mxu0 %v1496
        %v1750 = vpop.f32.mrb[0].mxu0
        %v1751 = vadd.f32 %v1394, %v1750
        %v1752 = vpop.f32.mrb[0].mxu0
        %v1753 = vpop.f32.mrb[0].mxu0
        %v1754 = vadd.f32 %v1394, %v1753
        %v1755 = vpop.f32.mrb[0].mxu0
        %1756 = vmatprep.mubr.bf16.mxu0 0
        %1757 = vmatmul.mubr.bf16.gmra.mrb[0].mxu0 %v1499
        %v1758 = vpop.f32.mrb[0].mxu0
        %v1759 = vadd.f32 %v1394, %v1758
        %v1760 = vpop.f32.mrb[0].mxu0
        %v1761 = vpop.f32.mrb[0].mxu0
        %v1762 = vadd.f32 %v1394, %v1761
        %v1763 = vpop.f32.mrb[0].mxu0
        %1764 = vmatprep.mubr.bf16.mxu0 0
        %1765 = vmatmul.mubr.bf16.gmra.mrb[0].mxu0 %v1502
        %v1766 = vpop.f32.mrb[0].mxu0
        %v1767 = vadd.f32 %v1394, %v1766
        %v1768 = vpop.f32.mrb[0].mxu0
        %v1769 = vpop.f32.mrb[0].mxu0
        %v1770 = vadd.f32 %v1394, %v1769
        %v1771 = vpop.f32.mrb[0].mxu0
        %1772 = vmatprep.mubr.bf16.mxu0 0
        %1773 = vmatmul.mubr.bf16.gmra.mrb[0].mxu0 %v1505
        %v1774 = vpop.f32.mrb[0].mxu0
        %v1775 = vadd.f32 %v1394, %v1774
        %v1776 = vpop.f32.mrb[0].mxu0
        %v1777 = vpop.f32.mrb[0].mxu0
        %v1778 = vadd.f32 %v1394, %v1777
        %v1779 = vpop.f32.mrb[0].mxu0
        %1780 = vmatprep.mubr.bf16.mxu0 0
        %1781 = vmatmul.mubr.bf16.gmra.mrb[0].mxu0 %v1508
        %v1782 = vpop.f32.mrb[0].mxu0
        %v1783 = vadd.f32 %v1394, %v1782
        %v1784 = vpop.f32.mrb[0].mxu0
        %v1785 = vpop.f32.mrb[0].mxu0
        %v1786 = vadd.f32 %v1394, %v1785
        %v1787 = vpop.f32.mrb[0].mxu0
        %1788 = vmatprep.mubr.bf16.mxu0 0
        %1789 = vmatmul.mubr.bf16.gmra.mrb[0].mxu0 %v1511
        %v1790 = vpop.f32.mrb[0].mxu0
        %v1791 = vadd.f32 %v1394, %v1790
        %v1792 = vpop.f32.mrb[0].mxu0
        %v1793 = vpop.f32.mrb[0].mxu0
        %v1794 = vadd.f32 %v1394, %v1793
        %v1795 = vpop.f32.mrb[0].mxu0
        %1796 = vmatprep.mubr.bf16.mxu0 0
        %1797 = vmatmul.mubr.bf16.gmra.mrb[0].mxu0 %v1514
        %v1798 = vpop.f32.mrb[0].mxu0
        %v1799 = vadd.f32 %v1394, %v1798
        %v1800 = vpop.f32.mrb[0].mxu0
        %v1801 = vpop.f32.mrb[0].mxu0
        %v1802 = vadd.f32 %v1394, %v1801
        %v1803 = vpop.f32.mrb[0].mxu0
        %1804 = vdwg.mxu0
        %v1805 = vmax.f32 %v1551, 0.0
        %v1806 = vmax.f32 %v1554, 0.0
        %v1807 = vmax.f32 %v1559, 0.0
        %v1808 = vmax.f32 %v1562, 0.0
        %v1809 = vmax.f32 %v1567, 0.0
        %v1810 = vmax.f32 %v1570, 0.0
        %v1811 = vmax.f32 %v1575, 0.0
        %v1812 = vmax.f32 %v1578, 0.0
        %v1813 = vmax.f32 %v1583, 0.0
        %v1814 = vmax.f32 %v1586, 0.0
        %v1815 = vmax.f32 %v1591, 0.0
        %v1816 = vmax.f32 %v1594, 0.0
        %v1817 = vmax.f32 %v1599, 0.0
        %v1818 = vmax.f32 %v1602, 0.0
        %v1819 = vmax.f32 %v1607, 0.0
        %v1820 = vmax.f32 %v1610, 0.0
        %v1821 = vmax.f32 %v1615, 0.0
        %v1822 = vmax.f32 %v1618, 0.0
        %v1823 = vmax.f32 %v1623, 0.0
        %v1824 = vmax.f32 %v1626, 0.0
        %v1825 = vmax.f32 %v1631, 0.0
        %v1826 = vmax.f32 %v1634, 0.0
        %v1827 = vmax.f32 %v1639, 0.0
        %v1828 = vmax.f32 %v1642, 0.0
        %v1829 = vmax.f32 %v1647, 0.0
        %v1830 = vmax.f32 %v1650, 0.0
        %v1831 = vmax.f32 %v1655, 0.0
        %v1832 = vmax.f32 %v1658, 0.0
        %v1833 = vmax.f32 %v1663, 0.0
        %v1834 = vmax.f32 %v1666, 0.0
        %v1835 = vmax.f32 %v1671, 0.0
        %v1836 = vmax.f32 %v1674, 0.0
        %v1837 = vmax.f32 %v1679, 0.0
        %v1838 = vmax.f32 %v1682, 0.0
        %v1839 = vmax.f32 %v1687, 0.0
        %v1840 = vmax.f32 %v1690, 0.0
        %v1841 = vmax.f32 %v1695, 0.0
        %v1842 = vmax.f32 %v1698, 0.0
        %v1843 = vmax.f32 %v1703, 0.0
        %v1844 = vmax.f32 %v1706, 0.0
        %v1845 = vmax.f32 %v1711, 0.0
        %v1846 = vmax.f32 %v1714, 0.0
        %v1847 = vmax.f32 %v1719, 0.0
        %v1848 = vmax.f32 %v1722, 0.0
        %v1849 = vmax.f32 %v1727, 0.0
        %v1850 = vmax.f32 %v1730, 0.0
        %v1851 = vmax.f32 %v1735, 0.0
        %v1852 = vmax.f32 %v1738, 0.0
        %v1853 = vmax.f32 %v1743, 0.0
        %v1854 = vmax.f32 %v1746, 0.0
        %v1855 = vmax.f32 %v1751, 0.0
        %v1856 = vmax.f32 %v1754, 0.0
        %v1857 = vmax.f32 %v1759, 0.0
        %v1858 = vmax.f32 %v1762, 0.0
        %v1859 = vmax.f32 %v1767, 0.0
        %v1860 = vmax.f32 %v1770, 0.0
        %v1861 = vmax.f32 %v1775, 0.0
        %v1862 = vmax.f32 %v1778, 0.0
        %v1863 = vmax.f32 %v1783, 0.0
        %v1864 = vmax.f32 %v1786, 0.0
        %v1865 = vmax.f32 %v1791, 0.0
        %v1866 = vmax.f32 %v1794, 0.0
        %v1867 = vmax.f32 %v1799, 0.0
        %v1868 = vmax.f32 %v1802, 0.0
        %v1869 = vpack.c.bf16 %v1806, %v1805
        %v1870 = vpack.c.bf16 %v1808, %v1807
        %v1871 = vpack.c.bf16 %v1810, %v1809
        %v1872 = vpack.c.bf16 %v1812, %v1811
        %v1873 = vpack.c.bf16 %v1814, %v1813
        %v1874 = vpack.c.bf16 %v1816, %v1815
        %v1875 = vpack.c.bf16 %v1818, %v1817
        %v1876 = vpack.c.bf16 %v1820, %v1819
        %v1877 = vpack.c.bf16 %v1822, %v1821
        %v1878 = vpack.c.bf16 %v1824, %v1823
        %v1879 = vpack.c.bf16 %v1826, %v1825
        %v1880 = vpack.c.bf16 %v1828, %v1827
        %v1881 = vpack.c.bf16 %v1830, %v1829
        %v1882 = vpack.c.bf16 %v1832, %v1831
        %v1883 = vpack.c.bf16 %v1834, %v1833
        %v1884 = vpack.c.bf16 %v1836, %v1835
        %v1885 = vpack.c.bf16 %v1838, %v1837
        %v1886 = vpack.c.bf16 %v1840, %v1839
        %v1887 = vpack.c.bf16 %v1842, %v1841
        %v1888 = vpack.c.bf16 %v1844, %v1843
        %v1889 = vpack.c.bf16 %v1846, %v1845
        %v1890 = vpack.c.bf16 %v1848, %v1847
        %v1891 = vpack.c.bf16 %v1850, %v1849
        %v1892 = vpack.c.bf16 %v1852, %v1851
        %v1893 = vpack.c.bf16 %v1854, %v1853
        %v1894 = vpack.c.bf16 %v1856, %v1855
        %v1895 = vpack.c.bf16 %v1858, %v1857
        %v1896 = vpack.c.bf16 %v1860, %v1859
        %v1897 = vpack.c.bf16 %v1862, %v1861
        %v1898 = vpack.c.bf16 %v1864, %v1863
        %v1899 = vpack.c.bf16 %v1866, %v1865
        %v1900 = vpack.c.bf16 %v1868, %v1867
        %v1901 = vld [vmem:[#allocation10] sm:$0xff]
        %v1902 = vld [vmem:[#allocation10 + $0x8] sm:$0xff]
        %v1903 = vld [vmem:[#allocation10 + $0x10] sm:$0xff]
        %v1904 = vld [vmem:[#allocation10 + $0x18] sm:$0xff]
        %v1905 = vld [vmem:[#allocation10 + $0x20] sm:$0xff]
        %v1906 = vld [vmem:[#allocation10 + $0x28] sm:$0xff]
        %v1907 = vld [vmem:[#allocation10 + $0x30] sm:$0xff]
        %v1908 = vld [vmem:[#allocation10 + $0x38] sm:$0xff]
        %v1909 = vld [vmem:[#allocation10 + $0x40] sm:$0xff]
        %v1910 = vld [vmem:[#allocation10 + $0x48] sm:$0xff]
        %v1911 = vld [vmem:[#allocation10 + $0x50] sm:$0xff]
        %v1912 = vld [vmem:[#allocation10 + $0x58] sm:$0xff]
        %v1913 = vld [vmem:[#allocation10 + $0x60] sm:$0xff]
        %v1914 = vld [vmem:[#allocation10 + $0x68] sm:$0xff]
        %v1915 = vld [vmem:[#allocation10 + $0x70] sm:$0xff]
        %v1916 = vld [vmem:[#allocation10 + $0x78] sm:$0xff]
        %v1917 = vld [vmem:[#allocation10 + $0x80] sm:$0xff]
        %v1918 = vld [vmem:[#allocation10 + $0x88] sm:$0xff]
        %v1919 = vld [vmem:[#allocation10 + $0x90] sm:$0xff]
        %v1920 = vld [vmem:[#allocation10 + $0x98] sm:$0xff]
        %v1921 = vld [vmem:[#allocation10 + $0xa0] sm:$0xff]
        %v1922 = vld [vmem:[#allocation10 + $0xa8] sm:$0xff]
        %v1923 = vld [vmem:[#allocation10 + $0xb0] sm:$0xff]
        %v1924 = vld [vmem:[#allocation10 + $0xb8] sm:$0xff]
        %v1925 = vld [vmem:[#allocation10 + $0xc0] sm:$0xff]
        %v1926 = vld [vmem:[#allocation10 + $0xc8] sm:$0xff]
        %v1927 = vld [vmem:[#allocation10 + $0xd0] sm:$0xff]
        %v1928 = vld [vmem:[#allocation10 + $0xd8] sm:$0xff]
        %v1929 = vld [vmem:[#allocation10 + $0xe0] sm:$0xff]
        %v1930 = vld [vmem:[#allocation10 + $0xe8] sm:$0xff]
        %v1931 = vld [vmem:[#allocation10 + $0xf0] sm:$0xff]
        %v1932 = vld [vmem:[#allocation10 + $0xf8] sm:$0xff]
        %v1933 = vld [vmem:[#allocation10 + $0x100] sm:$0xff]
        %v1934 = vld [vmem:[#allocation10 + $0x108] sm:$0xff]
        %v1935 = vld [vmem:[#allocation10 + $0x110] sm:$0xff]
        %v1936 = vld [vmem:[#allocation10 + $0x118] sm:$0xff]
        %v1937 = vld [vmem:[#allocation10 + $0x120] sm:$0xff]
        %v1938 = vld [vmem:[#allocation10 + $0x128] sm:$0xff]
        %v1939 = vld [vmem:[#allocation10 + $0x130] sm:$0xff]
        %v1940 = vld [vmem:[#allocation10 + $0x138] sm:$0xff]
        %v1941 = vld [vmem:[#allocation10 + $0x140] sm:$0xff]
        %v1942 = vld [vmem:[#allocation10 + $0x148] sm:$0xff]
        %v1943 = vld [vmem:[#allocation10 + $0x150] sm:$0xff]
        %v1944 = vld [vmem:[#allocation10 + $0x158] sm:$0xff]
        %v1945 = vld [vmem:[#allocation10 + $0x160] sm:$0xff]
        %v1946 = vld [vmem:[#allocation10 + $0x168] sm:$0xff]
        %v1947 = vld [vmem:[#allocation10 + $0x170] sm:$0xff]
        %v1948 = vld [vmem:[#allocation10 + $0x178] sm:$0xff]
        %v1949 = vld [vmem:[#allocation10 + $0x180] sm:$0xff]
        %v1950 = vld [vmem:[#allocation10 + $0x188] sm:$0xff]
        %v1951 = vld [vmem:[#allocation10 + $0x190] sm:$0xff]
        %v1952 = vld [vmem:[#allocation10 + $0x198] sm:$0xff]
        %v1953 = vld [vmem:[#allocation10 + $0x1a0] sm:$0xff]
        %v1954 = vld [vmem:[#allocation10 + $0x1a8] sm:$0xff]
        %v1955 = vld [vmem:[#allocation10 + $0x1b0] sm:$0xff]
        %v1956 = vld [vmem:[#allocation10 + $0x1b8] sm:$0xff]
        %v1957 = vld [vmem:[#allocation10 + $0x1c0] sm:$0xff]
        %v1958 = vld [vmem:[#allocation10 + $0x1c8] sm:$0xff]
        %v1959 = vld [vmem:[#allocation10 + $0x1d0] sm:$0xff]
        %v1960 = vld [vmem:[#allocation10 + $0x1d8] sm:$0xff]
        %v1961 = vld [vmem:[#allocation10 + $0x1e0] sm:$0xff]
        %v1962 = vld [vmem:[#allocation10 + $0x1e8] sm:$0xff]
        %v1963 = vld [vmem:[#allocation10 + $0x1f0] sm:$0xff]
        %v1964 = vld [vmem:[#allocation10 + $0x1f8] sm:$0xff]
        %v1965 = vld [vmem:[#allocation11] sm:$0xff]
        %v1967 = vlaneseq
        %v1968 = vshrl.u32 %v1967, 7
        %v1969 = vsub.s32 0, %v1968
        %v1970 = vrot.slane %v1965, %v1969
        %v1971 = vlaneseq
        %v1972 = vshrl.u32 %v1971, 7
        %v1973 = vsub.s32 1, %v1972
        %v1974 = vrot.slane %v1965, %v1973
        %v1975 = vlaneseq
        %v1976 = vshrl.u32 %v1975, 7
        %v1977 = vsub.s32 2, %v1976
        %v1978 = vrot.slane %v1965, %v1977
        %v1979 = vlaneseq
        %v1980 = vshrl.u32 %v1979, 7
        %v1981 = vsub.s32 3, %v1980
        %v1982 = vrot.slane %v1965, %v1981
        %v1983 = vlaneseq
        %v1984 = vshrl.u32 %v1983, 7
        %v1985 = vsub.s32 4, %v1984
        %v1986 = vrot.slane %v1965, %v1985
        %v1987 = vlaneseq
        %v1988 = vshrl.u32 %v1987, 7
        %v1989 = vsub.s32 5, %v1988
        %v1990 = vrot.slane %v1965, %v1989
        %v1991 = vlaneseq
        %v1992 = vshrl.u32 %v1991, 7
        %v1993 = vsub.s32 6, %v1992
        %v1994 = vrot.slane %v1965, %v1993
        %v1995 = vlaneseq
        %v1996 = vshrl.u32 %v1995, 7
        %v1997 = vsub.s32 7, %v1996
        %v1998 = vrot.slane %v1965, %v1997
        %v2071 = vunpack.c.l.b16 %v1901
        %v2072 = vunpack.c.h.b16 %v1901
        %v2073 = vunpack.c.l.b16 %v1902
        %v2074 = vunpack.c.h.b16 %v1902
        %v2075 = vunpack.c.l.b16 %v1903
        %v2076 = vunpack.c.h.b16 %v1903
        %v2077 = vunpack.c.l.b16 %v1904
        %v2078 = vunpack.c.h.b16 %v1904
        %v2079 = vunpack.c.l.b16 %v1905
        %v2080 = vunpack.c.h.b16 %v1905
        %v2081 = vunpack.c.l.b16 %v1906
        %v2082 = vunpack.c.h.b16 %v1906
        %v2083 = vunpack.c.l.b16 %v1907
        %v2084 = vunpack.c.h.b16 %v1907
        %v2085 = vunpack.c.l.b16 %v1908
        %v2086 = vunpack.c.h.b16 %v1908
        %v2087 = vunpack.c.l.b16 %v1909
        %v2088 = vunpack.c.h.b16 %v1909
        %v2089 = vunpack.c.l.b16 %v1910
        %v2090 = vunpack.c.h.b16 %v1910
        %v2091 = vunpack.c.l.b16 %v1911
        %v2092 = vunpack.c.h.b16 %v1911
        %v2093 = vunpack.c.l.b16 %v1912
        %v2094 = vunpack.c.h.b16 %v1912
        %v2095 = vunpack.c.l.b16 %v1913
        %v2096 = vunpack.c.h.b16 %v1913
        %v2097 = vunpack.c.l.b16 %v1914
        %v2098 = vunpack.c.h.b16 %v1914
        %v2099 = vunpack.c.l.b16 %v1915
        %v2100 = vunpack.c.h.b16 %v1915
        %v2101 = vunpack.c.l.b16 %v1916
        %v2102 = vunpack.c.h.b16 %v1916
        %v2103 = vunpack.c.l.b16 %v1917
        %v2104 = vunpack.c.h.b16 %v1917
        %v2105 = vunpack.c.l.b16 %v1918
        %v2106 = vunpack.c.h.b16 %v1918
        %v2107 = vunpack.c.l.b16 %v1919
        %v2108 = vunpack.c.h.b16 %v1919
        %v2109 = vunpack.c.l.b16 %v1920
        %v2110 = vunpack.c.h.b16 %v1920
        %v2111 = vunpack.c.l.b16 %v1921
        %v2112 = vunpack.c.h.b16 %v1921
        %v2113 = vunpack.c.l.b16 %v1922
        %v2114 = vunpack.c.h.b16 %v1922
        %v2115 = vunpack.c.l.b16 %v1923
        %v2116 = vunpack.c.h.b16 %v1923
        %v2117 = vunpack.c.l.b16 %v1924
        %v2118 = vunpack.c.h.b16 %v1924
        %v2119 = vunpack.c.l.b16 %v1925
        %v2120 = vunpack.c.h.b16 %v1925
        %v2121 = vunpack.c.l.b16 %v1926
        %v2122 = vunpack.c.h.b16 %v1926
        %v2123 = vunpack.c.l.b16 %v1927
        %v2124 = vunpack.c.h.b16 %v1927
        %v2125 = vunpack.c.l.b16 %v1928
        %v2126 = vunpack.c.h.b16 %v1928
        %v2127 = vunpack.c.l.b16 %v1929
        %v2128 = vunpack.c.h.b16 %v1929
        %v2129 = vunpack.c.l.b16 %v1930
        %v2130 = vunpack.c.h.b16 %v1930
        %v2131 = vunpack.c.l.b16 %v1931
        %v2132 = vunpack.c.h.b16 %v1931
        %v2133 = vunpack.c.l.b16 %v1932
        %v2134 = vunpack.c.h.b16 %v1932
        %v2135 = vunpack.c.l.b16 %v1933
        %v2136 = vunpack.c.h.b16 %v1933
        %v2137 = vunpack.c.l.b16 %v1934
        %v2138 = vunpack.c.h.b16 %v1934
        %v2139 = vunpack.c.l.b16 %v1935
        %v2140 = vunpack.c.h.b16 %v1935
        %v2141 = vunpack.c.l.b16 %v1936
        %v2142 = vunpack.c.h.b16 %v1936
        %v2143 = vunpack.c.l.b16 %v1937
        %v2144 = vunpack.c.h.b16 %v1937
        %v2145 = vunpack.c.l.b16 %v1938
        %v2146 = vunpack.c.h.b16 %v1938
        %v2147 = vunpack.c.l.b16 %v1939
        %v2148 = vunpack.c.h.b16 %v1939
        %v2149 = vunpack.c.l.b16 %v1940
        %v2150 = vunpack.c.h.b16 %v1940
        %v2151 = vunpack.c.l.b16 %v1941
        %v2152 = vunpack.c.h.b16 %v1941
        %v2153 = vunpack.c.l.b16 %v1942
        %v2154 = vunpack.c.h.b16 %v1942
        %v2155 = vunpack.c.l.b16 %v1943
        %v2156 = vunpack.c.h.b16 %v1943
        %v2157 = vunpack.c.l.b16 %v1944
        %v2158 = vunpack.c.h.b16 %v1944
        %v2159 = vunpack.c.l.b16 %v1945
        %v2160 = vunpack.c.h.b16 %v1945
        %v2161 = vunpack.c.l.b16 %v1946
        %v2162 = vunpack.c.h.b16 %v1946
        %v2163 = vunpack.c.l.b16 %v1947
        %v2164 = vunpack.c.h.b16 %v1947
        %v2165 = vunpack.c.l.b16 %v1948
        %v2166 = vunpack.c.h.b16 %v1948
        %v2167 = vunpack.c.l.b16 %v1949
        %v2168 = vunpack.c.h.b16 %v1949
        %v2169 = vunpack.c.l.b16 %v1950
        %v2170 = vunpack.c.h.b16 %v1950
        %v2171 = vunpack.c.l.b16 %v1951
        %v2172 = vunpack.c.h.b16 %v1951
        %v2173 = vunpack.c.l.b16 %v1952
        %v2174 = vunpack.c.h.b16 %v1952
        %v2175 = vunpack.c.l.b16 %v1953
        %v2176 = vunpack.c.h.b16 %v1953
        %v2177 = vunpack.c.l.b16 %v1954
        %v2178 = vunpack.c.h.b16 %v1954
        %v2179 = vunpack.c.l.b16 %v1955
        %v2180 = vunpack.c.h.b16 %v1955
        %v2181 = vunpack.c.l.b16 %v1956
        %v2182 = vunpack.c.h.b16 %v1956
        %v2183 = vunpack.c.l.b16 %v1957
        %v2184 = vunpack.c.h.b16 %v1957
        %v2185 = vunpack.c.l.b16 %v1958
        %v2186 = vunpack.c.h.b16 %v1958
        %v2187 = vunpack.c.l.b16 %v1959
        %v2188 = vunpack.c.h.b16 %v1959
        %v2189 = vunpack.c.l.b16 %v1960
        %v2190 = vunpack.c.h.b16 %v1960
        %v2191 = vunpack.c.l.b16 %v1961
        %v2192 = vunpack.c.h.b16 %v1961
        %v2193 = vunpack.c.l.b16 %v1962
        %v2194 = vunpack.c.h.b16 %v1962
        %v2195 = vunpack.c.l.b16 %v1963
        %v2196 = vunpack.c.h.b16 %v1963
        %v2197 = vunpack.c.l.b16 %v1964
        %v2198 = vunpack.c.h.b16 %v1964
        %v2199 = vpack.c.b16 %v2079, %v2071
        %v2200 = vpack.c.b16 %v2080, %v2072
        %v2201 = vpack.c.b16 %v2081, %v2073
        %v2202 = vpack.c.b16 %v2082, %v2074
        %v2203 = vpack.c.b16 %v2083, %v2075
        %v2204 = vpack.c.b16 %v2084, %v2076
        %v2205 = vpack.c.b16 %v2085, %v2077
        %v2206 = vpack.c.b16 %v2086, %v2078
        %v2207 = vpack.c.b16 %v2095, %v2087
        %v2208 = vpack.c.b16 %v2096, %v2088
        %v2209 = vpack.c.b16 %v2097, %v2089
        %v2210 = vpack.c.b16 %v2098, %v2090
        %v2211 = vpack.c.b16 %v2099, %v2091
        %v2212 = vpack.c.b16 %v2100, %v2092
        %v2213 = vpack.c.b16 %v2101, %v2093
        %v2214 = vpack.c.b16 %v2102, %v2094
        %v2215 = vpack.c.b16 %v2111, %v2103
        %v2216 = vpack.c.b16 %v2112, %v2104
        %v2217 = vpack.c.b16 %v2113, %v2105
        %v2218 = vpack.c.b16 %v2114, %v2106
        %v2219 = vpack.c.b16 %v2115, %v2107
        %v2220 = vpack.c.b16 %v2116, %v2108
        %v2221 = vpack.c.b16 %v2117, %v2109
        %v2222 = vpack.c.b16 %v2118, %v2110
        %v2223 = vpack.c.b16 %v2127, %v2119
        %v2224 = vpack.c.b16 %v2128, %v2120
        %v2225 = vpack.c.b16 %v2129, %v2121
        %v2226 = vpack.c.b16 %v2130, %v2122
        %v2227 = vpack.c.b16 %v2131, %v2123
        %v2228 = vpack.c.b16 %v2132, %v2124
        %v2229 = vpack.c.b16 %v2133, %v2125
        %v2230 = vpack.c.b16 %v2134, %v2126
        %v2231 = vpack.c.b16 %v2143, %v2135
        %v2232 = vpack.c.b16 %v2144, %v2136
        %v2233 = vpack.c.b16 %v2145, %v2137
        %v2234 = vpack.c.b16 %v2146, %v2138
        %v2235 = vpack.c.b16 %v2147, %v2139
        %v2236 = vpack.c.b16 %v2148, %v2140
        %v2237 = vpack.c.b16 %v2149, %v2141
        %v2238 = vpack.c.b16 %v2150, %v2142
        %v2239 = vpack.c.b16 %v2159, %v2151
        %v2240 = vpack.c.b16 %v2160, %v2152
        %v2241 = vpack.c.b16 %v2161, %v2153
        %v2242 = vpack.c.b16 %v2162, %v2154
        %v2243 = vpack.c.b16 %v2163, %v2155
        %v2244 = vpack.c.b16 %v2164, %v2156
        %v2245 = vpack.c.b16 %v2165, %v2157
        %v2246 = vpack.c.b16 %v2166, %v2158
        %v2247 = vpack.c.b16 %v2175, %v2167
        %v2248 = vpack.c.b16 %v2176, %v2168
        %v2249 = vpack.c.b16 %v2177, %v2169
        %v2250 = vpack.c.b16 %v2178, %v2170
        %v2251 = vpack.c.b16 %v2179, %v2171
        %v2252 = vpack.c.b16 %v2180, %v2172
        %v2253 = vpack.c.b16 %v2181, %v2173
        %v2254 = vpack.c.b16 %v2182, %v2174
        %v2255 = vpack.c.b16 %v2191, %v2183
        %v2256 = vpack.c.b16 %v2192, %v2184
        %v2257 = vpack.c.b16 %v2193, %v2185
        %v2258 = vpack.c.b16 %v2194, %v2186
        %v2259 = vpack.c.b16 %v2195, %v2187
        %v2260 = vpack.c.b16 %v2196, %v2188
        %v2261 = vpack.c.b16 %v2197, %v2189
        %v2262 = vpack.c.b16 %v2198, %v2190
        %2327 = vmatprep.subr.bf16.mxu0 %v2200
        %2328 = vmatpush1.bf16.msra.mxu0 %v2199
        %2329 = vmatprep.subr.bf16.mxu0 %v2208
        %2330 = vmatpush1.bf16.msra.mxu0 %v2207
        %2331 = vmatprep.subr.bf16.mxu0 %v2216
        %2332 = vmatpush1.bf16.msra.mxu0 %v2215
        %2333 = vmatprep.subr.bf16.mxu0 %v2224
        %2334 = vmatpush1.bf16.msra.mxu0 %v2223
        %2335 = vmatprep.subr.bf16.mxu0 %v2232
        %2336 = vmatpush1.bf16.msra.mxu0 %v2231
        %2337 = vmatprep.subr.bf16.mxu0 %v2240
        %2338 = vmatpush1.bf16.msra.mxu0 %v2239
        %2339 = vmatprep.subr.bf16.mxu0 %v2248
        %2340 = vmatpush1.bf16.msra.mxu0 %v2247
        %2341 = vmatprep.subr.bf16.mxu0 %v2256
        %2342 = vmatpush1.bf16.msra.mxu0 %v2255
        %2343 = vmatprep.subr.bf16.mxu0 0
        %2344 = vmatpush1.bf16.msra.mxu0 0
        %2345 = vmatprep.subr.bf16.mxu0 0
        %2346 = vmatpush1.bf16.msra.mxu0 0
        %2347 = vmatprep.subr.bf16.mxu0 0
        %2348 = vmatpush1.bf16.msra.mxu0 0
        %2349 = vmatprep.subr.bf16.mxu0 0
        %2350 = vmatpush1.bf16.msra.mxu0 0
        %2351 = vmatprep.subr.bf16.mxu0 0
        %2352 = vmatpush1.bf16.msra.mxu0 0
        %2353 = vmatprep.subr.bf16.mxu0 0
        %2354 = vmatpush1.bf16.msra.mxu0 0
        %2355 = vmatprep.subr.bf16.mxu0 0
        %2356 = vmatpush1.bf16.msra.mxu0 0
        %2357 = vmatprep.subr.bf16.mxu0 0
        %2358 = vmatpush1.bf16.msra.mxu0 0
        %2359 = vmatprep.mubr.bf16.mxu0 0
        %2360 = vmatmul.mubr.bf16.gmra.mrb[0].mxu0 %v1869
        %v2361 = vpop.f32.mrb[0].mxu0
        %v2362 = vadd.f32 %v1970, %v2361
        %v2363 = vpop.f32.mrb[0].mxu0
        %v2364 = vadd.f32 %v1974, %v2363
        %v2365 = vpop.f32.mrb[0].mxu0
        %v2366 = vadd.f32 %v1970, %v2365
        %v2367 = vpop.f32.mrb[0].mxu0
        %v2368 = vadd.f32 %v1974, %v2367
        %2369 = vmatprep.mubr.bf16.mxu0 0
        %2370 = vmatmul.mubr.bf16.gmra.mrb[0].mxu0 %v1870
        %v2371 = vpop.f32.mrb[0].mxu0
        %v2372 = vadd.f32 %v1970, %v2371
        %v2373 = vpop.f32.mrb[0].mxu0
        %v2374 = vadd.f32 %v1974, %v2373
        %v2375 = vpop.f32.mrb[0].mxu0
        %v2376 = vadd.f32 %v1970, %v2375
        %v2377 = vpop.f32.mrb[0].mxu0
        %v2378 = vadd.f32 %v1974, %v2377
        %2379 = vmatprep.mubr.bf16.mxu0 0
        %2380 = vmatmul.mubr.bf16.gmra.mrb[0].mxu0 %v1871
        %v2381 = vpop.f32.mrb[0].mxu0
        %v2382 = vadd.f32 %v1970, %v2381
        %v2383 = vpop.f32.mrb[0].mxu0
        %v2384 = vadd.f32 %v1974, %v2383
        %v2385 = vpop.f32.mrb[0].mxu0
        %v2386 = vadd.f32 %v1970, %v2385
        %v2387 = vpop.f32.mrb[0].mxu0
        %v2388 = vadd.f32 %v1974, %v2387
        %2389 = vmatprep.mubr.bf16.mxu0 0
        %2390 = vmatmul.mubr.bf16.gmra.mrb[0].mxu0 %v1872
        %v2391 = vpop.f32.mrb[0].mxu0
        %v2392 = vadd.f32 %v1970, %v2391
        %v2393 = vpop.f32.mrb[0].mxu0
        %v2394 = vadd.f32 %v1974, %v2393
        %v2395 = vpop.f32.mrb[0].mxu0
        %v2396 = vadd.f32 %v1970, %v2395
        %v2397 = vpop.f32.mrb[0].mxu0
        %v2398 = vadd.f32 %v1974, %v2397
        %2399 = vmatprep.mubr.bf16.mxu0 0
        %2400 = vmatmul.mubr.bf16.gmra.mrb[0].mxu0 %v1873
        %v2401 = vpop.f32.mrb[0].mxu0
        %v2402 = vadd.f32 %v1970, %v2401
        %v2403 = vpop.f32.mrb[0].mxu0
        %v2404 = vadd.f32 %v1974, %v2403
        %v2405 = vpop.f32.mrb[0].mxu0
        %v2406 = vadd.f32 %v1970, %v2405
        %v2407 = vpop.f32.mrb[0].mxu0
        %v2408 = vadd.f32 %v1974, %v2407
        %2409 = vmatprep.mubr.bf16.mxu0 0
        %2410 = vmatmul.mubr.bf16.gmra.mrb[0].mxu0 %v1874
        %v2411 = vpop.f32.mrb[0].mxu0
        %v2412 = vadd.f32 %v1970, %v2411
        %v2413 = vpop.f32.mrb[0].mxu0
        %v2414 = vadd.f32 %v1974, %v2413
        %v2415 = vpop.f32.mrb[0].mxu0
        %v2416 = vadd.f32 %v1970, %v2415
        %v2417 = vpop.f32.mrb[0].mxu0
        %v2418 = vadd.f32 %v1974, %v2417
        %2419 = vmatprep.mubr.bf16.mxu0 0
        %2420 = vmatmul.mubr.bf16.gmra.mrb[0].mxu0 %v1875
        %v2421 = vpop.f32.mrb[0].mxu0
        %v2422 = vadd.f32 %v1970, %v2421
        %v2423 = vpop.f32.mrb[0].mxu0
        %v2424 = vadd.f32 %v1974, %v2423
        %v2425 = vpop.f32.mrb[0].mxu0
        %v2426 = vadd.f32 %v1970, %v2425
        %v2427 = vpop.f32.mrb[0].mxu0
        %v2428 = vadd.f32 %v1974, %v2427
        %2429 = vmatprep.mubr.bf16.mxu0 0
        %2430 = vmatmul.mubr.bf16.gmra.mrb[0].mxu0 %v1876
        %v2431 = vpop.f32.mrb[0].mxu0
        %v2432 = vadd.f32 %v1970, %v2431
        %v2433 = vpop.f32.mrb[0].mxu0
        %v2434 = vadd.f32 %v1974, %v2433
        %v2435 = vpop.f32.mrb[0].mxu0
        %v2436 = vadd.f32 %v1970, %v2435
        %v2437 = vpop.f32.mrb[0].mxu0
        %v2438 = vadd.f32 %v1974, %v2437
        %2439 = vmatprep.mubr.bf16.mxu0 0
        %2440 = vmatmul.mubr.bf16.gmra.mrb[0].mxu0 %v1877
        %v2441 = vpop.f32.mrb[0].mxu0
        %v2442 = vadd.f32 %v1970, %v2441
        %v2443 = vpop.f32.mrb[0].mxu0
        %v2444 = vadd.f32 %v1974, %v2443
        %v2445 = vpop.f32.mrb[0].mxu0
        %v2446 = vadd.f32 %v1970, %v2445
        %v2447 = vpop.f32.mrb[0].mxu0
        %v2448 = vadd.f32 %v1974, %v2447
        %2449 = vmatprep.mubr.bf16.mxu0 0
        %2450 = vmatmul.mubr.bf16.gmra.mrb[0].mxu0 %v1878
        %v2451 = vpop.f32.mrb[0].mxu0
        %v2452 = vadd.f32 %v1970, %v2451
        %v2453 = vpop.f32.mrb[0].mxu0
        %v2454 = vadd.f32 %v1974, %v2453
        %v2455 = vpop.f32.mrb[0].mxu0
        %v2456 = vadd.f32 %v1970, %v2455
        %v2457 = vpop.f32.mrb[0].mxu0
        %v2458 = vadd.f32 %v1974, %v2457
        %2459 = vmatprep.mubr.bf16.mxu0 0
        %2460 = vmatmul.mubr.bf16.gmra.mrb[0].mxu0 %v1879
        %v2461 = vpop.f32.mrb[0].mxu0
        %v2462 = vadd.f32 %v1970, %v2461
        %v2463 = vpop.f32.mrb[0].mxu0
        %v2464 = vadd.f32 %v1974, %v2463
        %v2465 = vpop.f32.mrb[0].mxu0
        %v2466 = vadd.f32 %v1970, %v2465
        %v2467 = vpop.f32.mrb[0].mxu0
        %v2468 = vadd.f32 %v1974, %v2467
        %2469 = vmatprep.mubr.bf16.mxu0 0
        %2470 = vmatmul.mubr.bf16.gmra.mrb[0].mxu0 %v1880
        %v2471 = vpop.f32.mrb[0].mxu0
        %v2472 = vadd.f32 %v1970, %v2471
        %v2473 = vpop.f32.mrb[0].mxu0
        %v2474 = vadd.f32 %v1974, %v2473
        %v2475 = vpop.f32.mrb[0].mxu0
        %v2476 = vadd.f32 %v1970, %v2475
        %v2477 = vpop.f32.mrb[0].mxu0
        %v2478 = vadd.f32 %v1974, %v2477
        %2479 = vmatprep.mubr.bf16.mxu0 0
        %2480 = vmatmul.mubr.bf16.gmra.mrb[0].mxu0 %v1881
        %v2481 = vpop.f32.mrb[0].mxu0
        %v2482 = vadd.f32 %v1970, %v2481
        %v2483 = vpop.f32.mrb[0].mxu0
        %v2484 = vadd.f32 %v1974, %v2483
        %v2485 = vpop.f32.mrb[0].mxu0
        %v2486 = vadd.f32 %v1970, %v2485
        %v2487 = vpop.f32.mrb[0].mxu0
        %v2488 = vadd.f32 %v1974, %v2487
        %2489 = vmatprep.mubr.bf16.mxu0 0
        %2490 = vmatmul.mubr.bf16.gmra.mrb[0].mxu0 %v1882
        %v2491 = vpop.f32.mrb[0].mxu0
        %v2492 = vadd.f32 %v1970, %v2491
        %v2493 = vpop.f32.mrb[0].mxu0
        %v2494 = vadd.f32 %v1974, %v2493
        %v2495 = vpop.f32.mrb[0].mxu0
        %v2496 = vadd.f32 %v1970, %v2495
        %v2497 = vpop.f32.mrb[0].mxu0
        %v2498 = vadd.f32 %v1974, %v2497
        %2499 = vmatprep.mubr.bf16.mxu0 0
        %2500 = vmatmul.mubr.bf16.gmra.mrb[0].mxu0 %v1883
        %v2501 = vpop.f32.mrb[0].mxu0
        %v2502 = vadd.f32 %v1970, %v2501
        %v2503 = vpop.f32.mrb[0].mxu0
        %v2504 = vadd.f32 %v1974, %v2503
        %v2505 = vpop.f32.mrb[0].mxu0
        %v2506 = vadd.f32 %v1970, %v2505
        %v2507 = vpop.f32.mrb[0].mxu0
        %v2508 = vadd.f32 %v1974, %v2507
        %2509 = vmatprep.mubr.bf16.mxu0 0
        %2510 = vmatmul.mubr.bf16.gmra.mrb[0].mxu0 %v1884
        %v2511 = vpop.f32.mrb[0].mxu0
        %v2512 = vadd.f32 %v1970, %v2511
        %v2513 = vpop.f32.mrb[0].mxu0
        %v2514 = vadd.f32 %v1974, %v2513
        %v2515 = vpop.f32.mrb[0].mxu0
        %v2516 = vadd.f32 %v1970, %v2515
        %v2517 = vpop.f32.mrb[0].mxu0
        %v2518 = vadd.f32 %v1974, %v2517
        %2519 = vmatprep.mubr.bf16.mxu0 0
        %2520 = vmatmul.mubr.bf16.gmra.mrb[0].mxu0 %v1885
        %v2521 = vpop.f32.mrb[0].mxu0
        %v2522 = vadd.f32 %v1970, %v2521
        %v2523 = vpop.f32.mrb[0].mxu0
        %v2524 = vadd.f32 %v1974, %v2523
        %v2525 = vpop.f32.mrb[0].mxu0
        %v2526 = vadd.f32 %v1970, %v2525
        %v2527 = vpop.f32.mrb[0].mxu0
        %v2528 = vadd.f32 %v1974, %v2527
        %2529 = vmatprep.mubr.bf16.mxu0 0
        %2530 = vmatmul.mubr.bf16.gmra.mrb[0].mxu0 %v1886
        %v2531 = vpop.f32.mrb[0].mxu0
        %v2532 = vadd.f32 %v1970, %v2531
        %v2533 = vpop.f32.mrb[0].mxu0
        %v2534 = vadd.f32 %v1974, %v2533
        %v2535 = vpop.f32.mrb[0].mxu0
        %v2536 = vadd.f32 %v1970, %v2535
        %v2537 = vpop.f32.mrb[0].mxu0
        %v2538 = vadd.f32 %v1974, %v2537
        %2539 = vmatprep.mubr.bf16.mxu0 0
        %2540 = vmatmul.mubr.bf16.gmra.mrb[0].mxu0 %v1887
        %v2541 = vpop.f32.mrb[0].mxu0
        %v2542 = vadd.f32 %v1970, %v2541
        %v2543 = vpop.f32.mrb[0].mxu0
        %v2544 = vadd.f32 %v1974, %v2543
        %v2545 = vpop.f32.mrb[0].mxu0
        %v2546 = vadd.f32 %v1970, %v2545
        %v2547 = vpop.f32.mrb[0].mxu0
        %v2548 = vadd.f32 %v1974, %v2547
        %2549 = vmatprep.mubr.bf16.mxu0 0
        %2550 = vmatmul.mubr.bf16.gmra.mrb[0].mxu0 %v1888
        %v2551 = vpop.f32.mrb[0].mxu0
        %v2552 = vadd.f32 %v1970, %v2551
        %v2553 = vpop.f32.mrb[0].mxu0
        %v2554 = vadd.f32 %v1974, %v2553
        %v2555 = vpop.f32.mrb[0].mxu0
        %v2556 = vadd.f32 %v1970, %v2555
        %v2557 = vpop.f32.mrb[0].mxu0
        %v2558 = vadd.f32 %v1974, %v2557
        %2559 = vmatprep.mubr.bf16.mxu0 0
        %2560 = vmatmul.mubr.bf16.gmra.mrb[0].mxu0 %v1889
        %v2561 = vpop.f32.mrb[0].mxu0
        %v2562 = vadd.f32 %v1970, %v2561
        %v2563 = vpop.f32.mrb[0].mxu0
        %v2564 = vadd.f32 %v1974, %v2563
        %v2565 = vpop.f32.mrb[0].mxu0
        %v2566 = vadd.f32 %v1970, %v2565
        %v2567 = vpop.f32.mrb[0].mxu0
        %v2568 = vadd.f32 %v1974, %v2567
        %2569 = vmatprep.mubr.bf16.mxu0 0
        %2570 = vmatmul.mubr.bf16.gmra.mrb[0].mxu0 %v1890
        %v2571 = vpop.f32.mrb[0].mxu0
        %v2572 = vadd.f32 %v1970, %v2571
        %v2573 = vpop.f32.mrb[0].mxu0
        %v2574 = vadd.f32 %v1974, %v2573
        %v2575 = vpop.f32.mrb[0].mxu0
        %v2576 = vadd.f32 %v1970, %v2575
        %v2577 = vpop.f32.mrb[0].mxu0
        %v2578 = vadd.f32 %v1974, %v2577
        %2579 = vmatprep.mubr.bf16.mxu0 0
        %2580 = vmatmul.mubr.bf16.gmra.mrb[0].mxu0 %v1891
        %v2581 = vpop.f32.mrb[0].mxu0
        %v2582 = vadd.f32 %v1970, %v2581
        %v2583 = vpop.f32.mrb[0].mxu0
        %v2584 = vadd.f32 %v1974, %v2583
        %v2585 = vpop.f32.mrb[0].mxu0
        %v2586 = vadd.f32 %v1970, %v2585
        %v2587 = vpop.f32.mrb[0].mxu0
        %v2588 = vadd.f32 %v1974, %v2587
        %2589 = vmatprep.mubr.bf16.mxu0 0
        %2590 = vmatmul.mubr.bf16.gmra.mrb[0].mxu0 %v1892
        %v2591 = vpop.f32.mrb[0].mxu0
        %v2592 = vadd.f32 %v1970, %v2591
        %v2593 = vpop.f32.mrb[0].mxu0
        %v2594 = vadd.f32 %v1974, %v2593
        %v2595 = vpop.f32.mrb[0].mxu0
        %v2596 = vadd.f32 %v1970, %v2595
        %v2597 = vpop.f32.mrb[0].mxu0
        %v2598 = vadd.f32 %v1974, %v2597
        %2599 = vmatprep.mubr.bf16.mxu0 0
        %2600 = vmatmul.mubr.bf16.gmra.mrb[0].mxu0 %v1893
        %v2601 = vpop.f32.mrb[0].mxu0
        %v2602 = vadd.f32 %v1970, %v2601
        %v2603 = vpop.f32.mrb[0].mxu0
        %v2604 = vadd.f32 %v1974, %v2603
        %v2605 = vpop.f32.mrb[0].mxu0
        %v2606 = vadd.f32 %v1970, %v2605
        %v2607 = vpop.f32.mrb[0].mxu0
        %v2608 = vadd.f32 %v1974, %v2607
        %2609 = vmatprep.mubr.bf16.mxu0 0
        %2610 = vmatmul.mubr.bf16.gmra.mrb[0].mxu0 %v1894
        %v2611 = vpop.f32.mrb[0].mxu0
        %v2612 = vadd.f32 %v1970, %v2611
        %v2613 = vpop.f32.mrb[0].mxu0
        %v2614 = vadd.f32 %v1974, %v2613
        %v2615 = vpop.f32.mrb[0].mxu0
        %v2616 = vadd.f32 %v1970, %v2615
        %v2617 = vpop.f32.mrb[0].mxu0
        %v2618 = vadd.f32 %v1974, %v2617
        %2619 = vmatprep.mubr.bf16.mxu0 0
        %2620 = vmatmul.mubr.bf16.gmra.mrb[0].mxu0 %v1895
        %v2621 = vpop.f32.mrb[0].mxu0
        %v2622 = vadd.f32 %v1970, %v2621
        %v2623 = vpop.f32.mrb[0].mxu0
        %v2624 = vadd.f32 %v1974, %v2623
        %v2625 = vpop.f32.mrb[0].mxu0
        %v2626 = vadd.f32 %v1970, %v2625
        %v2627 = vpop.f32.mrb[0].mxu0
        %v2628 = vadd.f32 %v1974, %v2627
        %2629 = vmatprep.mubr.bf16.mxu0 0
        %2630 = vmatmul.mubr.bf16.gmra.mrb[0].mxu0 %v1896
        %v2631 = vpop.f32.mrb[0].mxu0
        %v2632 = vadd.f32 %v1970, %v2631
        %v2633 = vpop.f32.mrb[0].mxu0
        %v2634 = vadd.f32 %v1974, %v2633
        %v2635 = vpop.f32.mrb[0].mxu0
        %v2636 = vadd.f32 %v1970, %v2635
        %v2637 = vpop.f32.mrb[0].mxu0
        %v2638 = vadd.f32 %v1974, %v2637
        %2639 = vmatprep.mubr.bf16.mxu0 0
        %2640 = vmatmul.mubr.bf16.gmra.mrb[0].mxu0 %v1897
        %v2641 = vpop.f32.mrb[0].mxu0
        %v2642 = vadd.f32 %v1970, %v2641
        %v2643 = vpop.f32.mrb[0].mxu0
        %v2644 = vadd.f32 %v1974, %v2643
        %v2645 = vpop.f32.mrb[0].mxu0
        %v2646 = vadd.f32 %v1970, %v2645
        %v2647 = vpop.f32.mrb[0].mxu0
        %v2648 = vadd.f32 %v1974, %v2647
        %2649 = vmatprep.mubr.bf16.mxu0 0
        %2650 = vmatmul.mubr.bf16.gmra.mrb[0].mxu0 %v1898
        %v2651 = vpop.f32.mrb[0].mxu0
        %v2652 = vadd.f32 %v1970, %v2651
        %v2653 = vpop.f32.mrb[0].mxu0
        %v2654 = vadd.f32 %v1974, %v2653
        %v2655 = vpop.f32.mrb[0].mxu0
        %v2656 = vadd.f32 %v1970, %v2655
        %v2657 = vpop.f32.mrb[0].mxu0
        %v2658 = vadd.f32 %v1974, %v2657
        %2659 = vmatprep.mubr.bf16.mxu0 0
        %2660 = vmatmul.mubr.bf16.gmra.mrb[0].mxu0 %v1899
        %v2661 = vpop.f32.mrb[0].mxu0
        %v2662 = vadd.f32 %v1970, %v2661
        %v2663 = vpop.f32.mrb[0].mxu0
        %v2664 = vadd.f32 %v1974, %v2663
        %v2665 = vpop.f32.mrb[0].mxu0
        %v2666 = vadd.f32 %v1970, %v2665
        %v2667 = vpop.f32.mrb[0].mxu0
        %v2668 = vadd.f32 %v1974, %v2667
        %2669 = vmatprep.mubr.bf16.mxu0 0
        %2670 = vmatmul.mubr.bf16.gmra.mrb[0].mxu0 %v1900
        %v2671 = vpop.f32.mrb[0].mxu0
        %v2672 = vadd.f32 %v1970, %v2671
        %v2673 = vpop.f32.mrb[0].mxu0
        %v2674 = vadd.f32 %v1974, %v2673
        %v2675 = vpop.f32.mrb[0].mxu0
        %v2676 = vadd.f32 %v1970, %v2675
        %v2677 = vpop.f32.mrb[0].mxu0
        %v2678 = vadd.f32 %v1974, %v2677
        %2679 = vdwg.mxu0
        %2680 = vmatprep.subr.bf16.mxu0 %v2202
        %2681 = vmatpush1.bf16.msra.mxu0 %v2201
        %2682 = vmatprep.subr.bf16.mxu0 %v2210
        %2683 = vmatpush1.bf16.msra.mxu0 %v2209
        %2684 = vmatprep.subr.bf16.mxu0 %v2218
        %2685 = vmatpush1.bf16.msra.mxu0 %v2217
        %2686 = vmatprep.subr.bf16.mxu0 %v2226
        %2687 = vmatpush1.bf16.msra.mxu0 %v2225
        %2688 = vmatprep.subr.bf16.mxu0 %v2234
        %2689 = vmatpush1.bf16.msra.mxu0 %v2233
        %2690 = vmatprep.subr.bf16.mxu0 %v2242
        %2691 = vmatpush1.bf16.msra.mxu0 %v2241
        %2692 = vmatprep.subr.bf16.mxu0 %v2250
        %2693 = vmatpush1.bf16.msra.mxu0 %v2249
        %2694 = vmatprep.subr.bf16.mxu0 %v2258
        %2695 = vmatpush1.bf16.msra.mxu0 %v2257
        %2696 = vmatprep.subr.bf16.mxu0 0
        %2697 = vmatpush1.bf16.msra.mxu0 0
        %2698 = vmatprep.subr.bf16.mxu0 0
        %2699 = vmatpush1.bf16.msra.mxu0 0
        %2700 = vmatprep.subr.bf16.mxu0 0
        %2701 = vmatpush1.bf16.msra.mxu0 0
        %2702 = vmatprep.subr.bf16.mxu0 0
        %2703 = vmatpush1.bf16.msra.mxu0 0
        %2704 = vmatprep.subr.bf16.mxu0 0
        %2705 = vmatpush1.bf16.msra.mxu0 0
        %2706 = vmatprep.subr.bf16.mxu0 0
        %2707 = vmatpush1.bf16.msra.mxu0 0
        %2708 = vmatprep.subr.bf16.mxu0 0
        %2709 = vmatpush1.bf16.msra.mxu0 0
        %2710 = vmatprep.subr.bf16.mxu0 0
        %2711 = vmatpush1.bf16.msra.mxu0 0
        %2712 = vmatprep.mubr.bf16.mxu0 0
        %2713 = vmatmul.mubr.bf16.gmra.mrb[0].mxu0 %v1869
        %v2714 = vpop.f32.mrb[0].mxu0
        %v2715 = vadd.f32 %v1978, %v2714
        %v2716 = vpop.f32.mrb[0].mxu0
        %v2717 = vadd.f32 %v1982, %v2716
        %v2718 = vpop.f32.mrb[0].mxu0
        %v2719 = vadd.f32 %v1978, %v2718
        %v2720 = vpop.f32.mrb[0].mxu0
        %v2721 = vadd.f32 %v1982, %v2720
        %2722 = vmatprep.mubr.bf16.mxu0 0
        %2723 = vmatmul.mubr.bf16.gmra.mrb[0].mxu0 %v1870
        %v2724 = vpop.f32.mrb[0].mxu0
        %v2725 = vadd.f32 %v1978, %v2724
        %v2726 = vpop.f32.mrb[0].mxu0
        %v2727 = vadd.f32 %v1982, %v2726
        %v2728 = vpop.f32.mrb[0].mxu0
        %v2729 = vadd.f32 %v1978, %v2728
        %v2730 = vpop.f32.mrb[0].mxu0
        %v2731 = vadd.f32 %v1982, %v2730
        %2732 = vmatprep.mubr.bf16.mxu0 0
        %2733 = vmatmul.mubr.bf16.gmra.mrb[0].mxu0 %v1871
        %v2734 = vpop.f32.mrb[0].mxu0
        %v2735 = vadd.f32 %v1978, %v2734
        %v2736 = vpop.f32.mrb[0].mxu0
        %v2737 = vadd.f32 %v1982, %v2736
        %v2738 = vpop.f32.mrb[0].mxu0
        %v2739 = vadd.f32 %v1978, %v2738
        %v2740 = vpop.f32.mrb[0].mxu0
        %v2741 = vadd.f32 %v1982, %v2740
        %2742 = vmatprep.mubr.bf16.mxu0 0
        %2743 = vmatmul.mubr.bf16.gmra.mrb[0].mxu0 %v1872
        %v2744 = vpop.f32.mrb[0].mxu0
        %v2745 = vadd.f32 %v1978, %v2744
        %v2746 = vpop.f32.mrb[0].mxu0
        %v2747 = vadd.f32 %v1982, %v2746
        %v2748 = vpop.f32.mrb[0].mxu0
        %v2749 = vadd.f32 %v1978, %v2748
        %v2750 = vpop.f32.mrb[0].mxu0
        %v2751 = vadd.f32 %v1982, %v2750
        %2752 = vmatprep.mubr.bf16.mxu0 0
        %2753 = vmatmul.mubr.bf16.gmra.mrb[0].mxu0 %v1873
        %v2754 = vpop.f32.mrb[0].mxu0
        %v2755 = vadd.f32 %v1978, %v2754
        %v2756 = vpop.f32.mrb[0].mxu0
        %v2757 = vadd.f32 %v1982, %v2756
        %v2758 = vpop.f32.mrb[0].mxu0
        %v2759 = vadd.f32 %v1978, %v2758
        %v2760 = vpop.f32.mrb[0].mxu0
        %v2761 = vadd.f32 %v1982, %v2760
        %2762 = vmatprep.mubr.bf16.mxu0 0
        %2763 = vmatmul.mubr.bf16.gmra.mrb[0].mxu0 %v1874
        %v2764 = vpop.f32.mrb[0].mxu0
        %v2765 = vadd.f32 %v1978, %v2764
        %v2766 = vpop.f32.mrb[0].mxu0
        %v2767 = vadd.f32 %v1982, %v2766
        %v2768 = vpop.f32.mrb[0].mxu0
        %v2769 = vadd.f32 %v1978, %v2768
        %v2770 = vpop.f32.mrb[0].mxu0
        %v2771 = vadd.f32 %v1982, %v2770
        %2772 = vmatprep.mubr.bf16.mxu0 0
        %2773 = vmatmul.mubr.bf16.gmra.mrb[0].mxu0 %v1875
        %v2774 = vpop.f32.mrb[0].mxu0
        %v2775 = vadd.f32 %v1978, %v2774
        %v2776 = vpop.f32.mrb[0].mxu0
        %v2777 = vadd.f32 %v1982, %v2776
        %v2778 = vpop.f32.mrb[0].mxu0
        %v2779 = vadd.f32 %v1978, %v2778
        %v2780 = vpop.f32.mrb[0].mxu0
        %v2781 = vadd.f32 %v1982, %v2780
        %2782 = vmatprep.mubr.bf16.mxu0 0
        %2783 = vmatmul.mubr.bf16.gmra.mrb[0].mxu0 %v1876
        %v2784 = vpop.f32.mrb[0].mxu0
        %v2785 = vadd.f32 %v1978, %v2784
        %v2786 = vpop.f32.mrb[0].mxu0
        %v2787 = vadd.f32 %v1982, %v2786
        %v2788 = vpop.f32.mrb[0].mxu0
        %v2789 = vadd.f32 %v1978, %v2788
        %v2790 = vpop.f32.mrb[0].mxu0
        %v2791 = vadd.f32 %v1982, %v2790
        %2792 = vmatprep.mubr.bf16.mxu0 0
        %2793 = vmatmul.mubr.bf16.gmra.mrb[0].mxu0 %v1877
        %v2794 = vpop.f32.mrb[0].mxu0
        %v2795 = vadd.f32 %v1978, %v2794
        %v2796 = vpop.f32.mrb[0].mxu0
        %v2797 = vadd.f32 %v1982, %v2796
        %v2798 = vpop.f32.mrb[0].mxu0
        %v2799 = vadd.f32 %v1978, %v2798
        %v2800 = vpop.f32.mrb[0].mxu0
        %v2801 = vadd.f32 %v1982, %v2800
        %2802 = vmatprep.mubr.bf16.mxu0 0
        %2803 = vmatmul.mubr.bf16.gmra.mrb[0].mxu0 %v1878
        %v2804 = vpop.f32.mrb[0].mxu0
        %v2805 = vadd.f32 %v1978, %v2804
        %v2806 = vpop.f32.mrb[0].mxu0
        %v2807 = vadd.f32 %v1982, %v2806
        %v2808 = vpop.f32.mrb[0].mxu0
        %v2809 = vadd.f32 %v1978, %v2808
        %v2810 = vpop.f32.mrb[0].mxu0
        %v2811 = vadd.f32 %v1982, %v2810
        %2812 = vmatprep.mubr.bf16.mxu0 0
        %2813 = vmatmul.mubr.bf16.gmra.mrb[0].mxu0 %v1879
        %v2814 = vpop.f32.mrb[0].mxu0
        %v2815 = vadd.f32 %v1978, %v2814
        %v2816 = vpop.f32.mrb[0].mxu0
        %v2817 = vadd.f32 %v1982, %v2816
        %v2818 = vpop.f32.mrb[0].mxu0
        %v2819 = vadd.f32 %v1978, %v2818
        %v2820 = vpop.f32.mrb[0].mxu0
        %v2821 = vadd.f32 %v1982, %v2820
        %2822 = vmatprep.mubr.bf16.mxu0 0
        %2823 = vmatmul.mubr.bf16.gmra.mrb[0].mxu0 %v1880
        %v2824 = vpop.f32.mrb[0].mxu0
        %v2825 = vadd.f32 %v1978, %v2824
        %v2826 = vpop.f32.mrb[0].mxu0
        %v2827 = vadd.f32 %v1982, %v2826
        %v2828 = vpop.f32.mrb[0].mxu0
        %v2829 = vadd.f32 %v1978, %v2828
        %v2830 = vpop.f32.mrb[0].mxu0
        %v2831 = vadd.f32 %v1982, %v2830
        %2832 = vmatprep.mubr.bf16.mxu0 0
        %2833 = vmatmul.mubr.bf16.gmra.mrb[0].mxu0 %v1881
        %v2834 = vpop.f32.mrb[0].mxu0
        %v2835 = vadd.f32 %v1978, %v2834
        %v2836 = vpop.f32.mrb[0].mxu0
        %v2837 = vadd.f32 %v1982, %v2836
        %v2838 = vpop.f32.mrb[0].mxu0
        %v2839 = vadd.f32 %v1978, %v2838
        %v2840 = vpop.f32.mrb[0].mxu0
        %v2841 = vadd.f32 %v1982, %v2840
        %2842 = vmatprep.mubr.bf16.mxu0 0
        %2843 = vmatmul.mubr.bf16.gmra.mrb[0].mxu0 %v1882
        %v2844 = vpop.f32.mrb[0].mxu0
        %v2845 = vadd.f32 %v1978, %v2844
        %v2846 = vpop.f32.mrb[0].mxu0
        %v2847 = vadd.f32 %v1982, %v2846
        %v2848 = vpop.f32.mrb[0].mxu0
        %v2849 = vadd.f32 %v1978, %v2848
        %v2850 = vpop.f32.mrb[0].mxu0
        %v2851 = vadd.f32 %v1982, %v2850
        %2852 = vmatprep.mubr.bf16.mxu0 0
        %2853 = vmatmul.mubr.bf16.gmra.mrb[0].mxu0 %v1883
        %v2854 = vpop.f32.mrb[0].mxu0
        %v2855 = vadd.f32 %v1978, %v2854
        %v2856 = vpop.f32.mrb[0].mxu0
        %v2857 = vadd.f32 %v1982, %v2856
        %v2858 = vpop.f32.mrb[0].mxu0
        %v2859 = vadd.f32 %v1978, %v2858
        %v2860 = vpop.f32.mrb[0].mxu0
        %v2861 = vadd.f32 %v1982, %v2860
        %2862 = vmatprep.mubr.bf16.mxu0 0
        %2863 = vmatmul.mubr.bf16.gmra.mrb[0].mxu0 %v1884
        %v2864 = vpop.f32.mrb[0].mxu0
        %v2865 = vadd.f32 %v1978, %v2864
        %v2866 = vpop.f32.mrb[0].mxu0
        %v2867 = vadd.f32 %v1982, %v2866
        %v2868 = vpop.f32.mrb[0].mxu0
        %v2869 = vadd.f32 %v1978, %v2868
        %v2870 = vpop.f32.mrb[0].mxu0
        %v2871 = vadd.f32 %v1982, %v2870
        %2872 = vmatprep.mubr.bf16.mxu0 0
        %2873 = vmatmul.mubr.bf16.gmra.mrb[0].mxu0 %v1885
        %v2874 = vpop.f32.mrb[0].mxu0
        %v2875 = vadd.f32 %v1978, %v2874
        %v2876 = vpop.f32.mrb[0].mxu0
        %v2877 = vadd.f32 %v1982, %v2876
        %v2878 = vpop.f32.mrb[0].mxu0
        %v2879 = vadd.f32 %v1978, %v2878
        %v2880 = vpop.f32.mrb[0].mxu0
        %v2881 = vadd.f32 %v1982, %v2880
        %2882 = vmatprep.mubr.bf16.mxu0 0
        %2883 = vmatmul.mubr.bf16.gmra.mrb[0].mxu0 %v1886
        %v2884 = vpop.f32.mrb[0].mxu0
        %v2885 = vadd.f32 %v1978, %v2884
        %v2886 = vpop.f32.mrb[0].mxu0
        %v2887 = vadd.f32 %v1982, %v2886
        %v2888 = vpop.f32.mrb[0].mxu0
        %v2889 = vadd.f32 %v1978, %v2888
        %v2890 = vpop.f32.mrb[0].mxu0
        %v2891 = vadd.f32 %v1982, %v2890
        %2892 = vmatprep.mubr.bf16.mxu0 0
        %2893 = vmatmul.mubr.bf16.gmra.mrb[0].mxu0 %v1887
        %v2894 = vpop.f32.mrb[0].mxu0
        %v2895 = vadd.f32 %v1978, %v2894
        %v2896 = vpop.f32.mrb[0].mxu0
        %v2897 = vadd.f32 %v1982, %v2896
        %v2898 = vpop.f32.mrb[0].mxu0
        %v2899 = vadd.f32 %v1978, %v2898
        %v2900 = vpop.f32.mrb[0].mxu0
        %v2901 = vadd.f32 %v1982, %v2900
        %2902 = vmatprep.mubr.bf16.mxu0 0
        %2903 = vmatmul.mubr.bf16.gmra.mrb[0].mxu0 %v1888
        %v2904 = vpop.f32.mrb[0].mxu0
        %v2905 = vadd.f32 %v1978, %v2904
        %v2906 = vpop.f32.mrb[0].mxu0
        %v2907 = vadd.f32 %v1982, %v2906
        %v2908 = vpop.f32.mrb[0].mxu0
        %v2909 = vadd.f32 %v1978, %v2908
        %v2910 = vpop.f32.mrb[0].mxu0
        %v2911 = vadd.f32 %v1982, %v2910
        %2912 = vmatprep.mubr.bf16.mxu0 0
        %2913 = vmatmul.mubr.bf16.gmra.mrb[0].mxu0 %v1889
        %v2914 = vpop.f32.mrb[0].mxu0
        %v2915 = vadd.f32 %v1978, %v2914
        %v2916 = vpop.f32.mrb[0].mxu0
        %v2917 = vadd.f32 %v1982, %v2916
        %v2918 = vpop.f32.mrb[0].mxu0
        %v2919 = vadd.f32 %v1978, %v2918
        %v2920 = vpop.f32.mrb[0].mxu0
        %v2921 = vadd.f32 %v1982, %v2920
        %2922 = vmatprep.mubr.bf16.mxu0 0
        %2923 = vmatmul.mubr.bf16.gmra.mrb[0].mxu0 %v1890
        %v2924 = vpop.f32.mrb[0].mxu0
        %v2925 = vadd.f32 %v1978, %v2924
        %v2926 = vpop.f32.mrb[0].mxu0
        %v2927 = vadd.f32 %v1982, %v2926
        %v2928 = vpop.f32.mrb[0].mxu0
        %v2929 = vadd.f32 %v1978, %v2928
        %v2930 = vpop.f32.mrb[0].mxu0
        %v2931 = vadd.f32 %v1982, %v2930
        %2932 = vmatprep.mubr.bf16.mxu0 0
        %2933 = vmatmul.mubr.bf16.gmra.mrb[0].mxu0 %v1891
        %v2934 = vpop.f32.mrb[0].mxu0
        %v2935 = vadd.f32 %v1978, %v2934
        %v2936 = vpop.f32.mrb[0].mxu0
        %v2937 = vadd.f32 %v1982, %v2936
        %v2938 = vpop.f32.mrb[0].mxu0
        %v2939 = vadd.f32 %v1978, %v2938
        %v2940 = vpop.f32.mrb[0].mxu0
        %v2941 = vadd.f32 %v1982, %v2940
        %2942 = vmatprep.mubr.bf16.mxu0 0
        %2943 = vmatmul.mubr.bf16.gmra.mrb[0].mxu0 %v1892
        %v2944 = vpop.f32.mrb[0].mxu0
        %v2945 = vadd.f32 %v1978, %v2944
        %v2946 = vpop.f32.mrb[0].mxu0
        %v2947 = vadd.f32 %v1982, %v2946
        %v2948 = vpop.f32.mrb[0].mxu0
        %v2949 = vadd.f32 %v1978, %v2948
        %v2950 = vpop.f32.mrb[0].mxu0
        %v2951 = vadd.f32 %v1982, %v2950
        %2952 = vmatprep.mubr.bf16.mxu0 0
        %2953 = vmatmul.mubr.bf16.gmra.mrb[0].mxu0 %v1893
        %v2954 = vpop.f32.mrb[0].mxu0
        %v2955 = vadd.f32 %v1978, %v2954
        %v2956 = vpop.f32.mrb[0].mxu0
        %v2957 = vadd.f32 %v1982, %v2956
        %v2958 = vpop.f32.mrb[0].mxu0
        %v2959 = vadd.f32 %v1978, %v2958
        %v2960 = vpop.f32.mrb[0].mxu0
        %v2961 = vadd.f32 %v1982, %v2960
        %2962 = vmatprep.mubr.bf16.mxu0 0
        %2963 = vmatmul.mubr.bf16.gmra.mrb[0].mxu0 %v1894
        %v2964 = vpop.f32.mrb[0].mxu0
        %v2965 = vadd.f32 %v1978, %v2964
        %v2966 = vpop.f32.mrb[0].mxu0
        %v2967 = vadd.f32 %v1982, %v2966
        %v2968 = vpop.f32.mrb[0].mxu0
        %v2969 = vadd.f32 %v1978, %v2968
        %v2970 = vpop.f32.mrb[0].mxu0
        %v2971 = vadd.f32 %v1982, %v2970
        %2972 = vmatprep.mubr.bf16.mxu0 0
        %2973 = vmatmul.mubr.bf16.gmra.mrb[0].mxu0 %v1895
        %v2974 = vpop.f32.mrb[0].mxu0
        %v2975 = vadd.f32 %v1978, %v2974
        %v2976 = vpop.f32.mrb[0].mxu0
        %v2977 = vadd.f32 %v1982, %v2976
        %v2978 = vpop.f32.mrb[0].mxu0
        %v2979 = vadd.f32 %v1978, %v2978
        %v2980 = vpop.f32.mrb[0].mxu0
        %v2981 = vadd.f32 %v1982, %v2980
        %2982 = vmatprep.mubr.bf16.mxu0 0
        %2983 = vmatmul.mubr.bf16.gmra.mrb[0].mxu0 %v1896
        %v2984 = vpop.f32.mrb[0].mxu0
        %v2985 = vadd.f32 %v1978, %v2984
        %v2986 = vpop.f32.mrb[0].mxu0
        %v2987 = vadd.f32 %v1982, %v2986
        %v2988 = vpop.f32.mrb[0].mxu0
        %v2989 = vadd.f32 %v1978, %v2988
        %v2990 = vpop.f32.mrb[0].mxu0
        %v2991 = vadd.f32 %v1982, %v2990
        %2992 = vmatprep.mubr.bf16.mxu0 0
        %2993 = vmatmul.mubr.bf16.gmra.mrb[0].mxu0 %v1897
        %v2994 = vpop.f32.mrb[0].mxu0
        %v2995 = vadd.f32 %v1978, %v2994
        %v2996 = vpop.f32.mrb[0].mxu0
        %v2997 = vadd.f32 %v1982, %v2996
        %v2998 = vpop.f32.mrb[0].mxu0
        %v2999 = vadd.f32 %v1978, %v2998
        %v3000 = vpop.f32.mrb[0].mxu0
        %v3001 = vadd.f32 %v1982, %v3000
        %3002 = vmatprep.mubr.bf16.mxu0 0
        %3003 = vmatmul.mubr.bf16.gmra.mrb[0].mxu0 %v1898
        %v3004 = vpop.f32.mrb[0].mxu0
        %v3005 = vadd.f32 %v1978, %v3004
        %v3006 = vpop.f32.mrb[0].mxu0
        %v3007 = vadd.f32 %v1982, %v3006
        %v3008 = vpop.f32.mrb[0].mxu0
        %v3009 = vadd.f32 %v1978, %v3008
        %v3010 = vpop.f32.mrb[0].mxu0
        %v3011 = vadd.f32 %v1982, %v3010
        %3012 = vmatprep.mubr.bf16.mxu0 0
        %3013 = vmatmul.mubr.bf16.gmra.mrb[0].mxu0 %v1899
        %v3014 = vpop.f32.mrb[0].mxu0
        %v3015 = vadd.f32 %v1978, %v3014
        %v3016 = vpop.f32.mrb[0].mxu0
        %v3017 = vadd.f32 %v1982, %v3016
        %v3018 = vpop.f32.mrb[0].mxu0
        %v3019 = vadd.f32 %v1978, %v3018
        %v3020 = vpop.f32.mrb[0].mxu0
        %v3021 = vadd.f32 %v1982, %v3020
        %3022 = vmatprep.mubr.bf16.mxu0 0
        %3023 = vmatmul.mubr.bf16.gmra.mrb[0].mxu0 %v1900
        %v3024 = vpop.f32.mrb[0].mxu0
        %v3025 = vadd.f32 %v1978, %v3024
        %v3026 = vpop.f32.mrb[0].mxu0
        %v3027 = vadd.f32 %v1982, %v3026
        %v3028 = vpop.f32.mrb[0].mxu0
        %v3029 = vadd.f32 %v1978, %v3028
        %v3030 = vpop.f32.mrb[0].mxu0
        %v3031 = vadd.f32 %v1982, %v3030
        %3032 = vdwg.mxu0
        %3033 = vmatprep.subr.bf16.mxu0 %v2204
        %3034 = vmatpush1.bf16.msra.mxu0 %v2203
        %3035 = vmatprep.subr.bf16.mxu0 %v2212
        %3036 = vmatpush1.bf16.msra.mxu0 %v2211
        %3037 = vmatprep.subr.bf16.mxu0 %v2220
        %3038 = vmatpush1.bf16.msra.mxu0 %v2219
        %3039 = vmatprep.subr.bf16.mxu0 %v2228
        %3040 = vmatpush1.bf16.msra.mxu0 %v2227
        %3041 = vmatprep.subr.bf16.mxu0 %v2236
        %3042 = vmatpush1.bf16.msra.mxu0 %v2235
        %3043 = vmatprep.subr.bf16.mxu0 %v2244
        %3044 = vmatpush1.bf16.msra.mxu0 %v2243
        %3045 = vmatprep.subr.bf16.mxu0 %v2252
        %3046 = vmatpush1.bf16.msra.mxu0 %v2251
        %3047 = vmatprep.subr.bf16.mxu0 %v2260
        %3048 = vmatpush1.bf16.msra.mxu0 %v2259
        %3049 = vmatprep.subr.bf16.mxu0 0
        %3050 = vmatpush1.bf16.msra.mxu0 0
        %3051 = vmatprep.subr.bf16.mxu0 0
        %3052 = vmatpush1.bf16.msra.mxu0 0
        %3053 = vmatprep.subr.bf16.mxu0 0
        %3054 = vmatpush1.bf16.msra.mxu0 0
        %3055 = vmatprep.subr.bf16.mxu0 0
        %3056 = vmatpush1.bf16.msra.mxu0 0
        %3057 = vmatprep.subr.bf16.mxu0 0
        %3058 = vmatpush1.bf16.msra.mxu0 0
        %3059 = vmatprep.subr.bf16.mxu0 0
        %3060 = vmatpush1.bf16.msra.mxu0 0
        %3061 = vmatprep.subr.bf16.mxu0 0
        %3062 = vmatpush1.bf16.msra.mxu0 0
        %3063 = vmatprep.subr.bf16.mxu0 0
        %3064 = vmatpush1.bf16.msra.mxu0 0
        %3065 = vmatprep.mubr.bf16.mxu0 0
        %3066 = vmatmul.mubr.bf16.gmra.mrb[0].mxu0 %v1869
        %v3067 = vpop.f32.mrb[0].mxu0
        %v3068 = vadd.f32 %v1986, %v3067
        %v3069 = vpop.f32.mrb[0].mxu0
        %v3070 = vadd.f32 %v1990, %v3069
        %v3071 = vpop.f32.mrb[0].mxu0
        %v3072 = vadd.f32 %v1986, %v3071
        %v3073 = vpop.f32.mrb[0].mxu0
        %v3074 = vadd.f32 %v1990, %v3073
        %3075 = vmatprep.mubr.bf16.mxu0 0
        %3076 = vmatmul.mubr.bf16.gmra.mrb[0].mxu0 %v1870
        %v3077 = vpop.f32.mrb[0].mxu0
        %v3078 = vadd.f32 %v1986, %v3077
        %v3079 = vpop.f32.mrb[0].mxu0
        %v3080 = vadd.f32 %v1990, %v3079
        %v3081 = vpop.f32.mrb[0].mxu0
        %v3082 = vadd.f32 %v1986, %v3081
        %v3083 = vpop.f32.mrb[0].mxu0
        %v3084 = vadd.f32 %v1990, %v3083
        %3085 = vmatprep.mubr.bf16.mxu0 0
        %3086 = vmatmul.mubr.bf16.gmra.mrb[0].mxu0 %v1871
        %v3087 = vpop.f32.mrb[0].mxu0
        %v3088 = vadd.f32 %v1986, %v3087
        %v3089 = vpop.f32.mrb[0].mxu0
        %v3090 = vadd.f32 %v1990, %v3089
        %v3091 = vpop.f32.mrb[0].mxu0
        %v3092 = vadd.f32 %v1986, %v3091
        %v3093 = vpop.f32.mrb[0].mxu0
        %v3094 = vadd.f32 %v1990, %v3093
        %3095 = vmatprep.mubr.bf16.mxu0 0
        %3096 = vmatmul.mubr.bf16.gmra.mrb[0].mxu0 %v1872
        %v3097 = vpop.f32.mrb[0].mxu0
        %v3098 = vadd.f32 %v1986, %v3097
        %v3099 = vpop.f32.mrb[0].mxu0
        %v3100 = vadd.f32 %v1990, %v3099
        %v3101 = vpop.f32.mrb[0].mxu0
        %v3102 = vadd.f32 %v1986, %v3101
        %v3103 = vpop.f32.mrb[0].mxu0
        %v3104 = vadd.f32 %v1990, %v3103
        %3105 = vmatprep.mubr.bf16.mxu0 0
        %3106 = vmatmul.mubr.bf16.gmra.mrb[0].mxu0 %v1873
        %v3107 = vpop.f32.mrb[0].mxu0
        %v3108 = vadd.f32 %v1986, %v3107
        %v3109 = vpop.f32.mrb[0].mxu0
        %v3110 = vadd.f32 %v1990, %v3109
        %v3111 = vpop.f32.mrb[0].mxu0
        %v3112 = vadd.f32 %v1986, %v3111
        %v3113 = vpop.f32.mrb[0].mxu0
        %v3114 = vadd.f32 %v1990, %v3113
        %3115 = vmatprep.mubr.bf16.mxu0 0
        %3116 = vmatmul.mubr.bf16.gmra.mrb[0].mxu0 %v1874
        %v3117 = vpop.f32.mrb[0].mxu0
        %v3118 = vadd.f32 %v1986, %v3117
        %v3119 = vpop.f32.mrb[0].mxu0
        %v3120 = vadd.f32 %v1990, %v3119
        %v3121 = vpop.f32.mrb[0].mxu0
        %v3122 = vadd.f32 %v1986, %v3121
        %v3123 = vpop.f32.mrb[0].mxu0
        %v3124 = vadd.f32 %v1990, %v3123
        %3125 = vmatprep.mubr.bf16.mxu0 0
        %3126 = vmatmul.mubr.bf16.gmra.mrb[0].mxu0 %v1875
        %v3127 = vpop.f32.mrb[0].mxu0
        %v3128 = vadd.f32 %v1986, %v3127
        %v3129 = vpop.f32.mrb[0].mxu0
        %v3130 = vadd.f32 %v1990, %v3129
        %v3131 = vpop.f32.mrb[0].mxu0
        %v3132 = vadd.f32 %v1986, %v3131
        %v3133 = vpop.f32.mrb[0].mxu0
        %v3134 = vadd.f32 %v1990, %v3133
        %3135 = vmatprep.mubr.bf16.mxu0 0
        %3136 = vmatmul.mubr.bf16.gmra.mrb[0].mxu0 %v1876
        %v3137 = vpop.f32.mrb[0].mxu0
        %v3138 = vadd.f32 %v1986, %v3137
        %v3139 = vpop.f32.mrb[0].mxu0
        %v3140 = vadd.f32 %v1990, %v3139
        %v3141 = vpop.f32.mrb[0].mxu0
        %v3142 = vadd.f32 %v1986, %v3141
        %v3143 = vpop.f32.mrb[0].mxu0
        %v3144 = vadd.f32 %v1990, %v3143
        %3145 = vmatprep.mubr.bf16.mxu0 0
        %3146 = vmatmul.mubr.bf16.gmra.mrb[0].mxu0 %v1877
        %v3147 = vpop.f32.mrb[0].mxu0
        %v3148 = vadd.f32 %v1986, %v3147
        %v3149 = vpop.f32.mrb[0].mxu0
        %v3150 = vadd.f32 %v1990, %v3149
        %v3151 = vpop.f32.mrb[0].mxu0
        %v3152 = vadd.f32 %v1986, %v3151
        %v3153 = vpop.f32.mrb[0].mxu0
        %v3154 = vadd.f32 %v1990, %v3153
        %3155 = vmatprep.mubr.bf16.mxu0 0
        %3156 = vmatmul.mubr.bf16.gmra.mrb[0].mxu0 %v1878
        %v3157 = vpop.f32.mrb[0].mxu0
        %v3158 = vadd.f32 %v1986, %v3157
        %v3159 = vpop.f32.mrb[0].mxu0
        %v3160 = vadd.f32 %v1990, %v3159
        %v3161 = vpop.f32.mrb[0].mxu0
        %v3162 = vadd.f32 %v1986, %v3161
        %v3163 = vpop.f32.mrb[0].mxu0
        %v3164 = vadd.f32 %v1990, %v3163
        %3165 = vmatprep.mubr.bf16.mxu0 0
        %3166 = vmatmul.mubr.bf16.gmra.mrb[0].mxu0 %v1879
        %v3167 = vpop.f32.mrb[0].mxu0
        %v3168 = vadd.f32 %v1986, %v3167
        %v3169 = vpop.f32.mrb[0].mxu0
        %v3170 = vadd.f32 %v1990, %v3169
        %v3171 = vpop.f32.mrb[0].mxu0
        %v3172 = vadd.f32 %v1986, %v3171
        %v3173 = vpop.f32.mrb[0].mxu0
        %v3174 = vadd.f32 %v1990, %v3173
        %3175 = vmatprep.mubr.bf16.mxu0 0
        %3176 = vmatmul.mubr.bf16.gmra.mrb[0].mxu0 %v1880
        %v3177 = vpop.f32.mrb[0].mxu0
        %v3178 = vadd.f32 %v1986, %v3177
        %v3179 = vpop.f32.mrb[0].mxu0
        %v3180 = vadd.f32 %v1990, %v3179
        %v3181 = vpop.f32.mrb[0].mxu0
        %v3182 = vadd.f32 %v1986, %v3181
        %v3183 = vpop.f32.mrb[0].mxu0
        %v3184 = vadd.f32 %v1990, %v3183
        %3185 = vmatprep.mubr.bf16.mxu0 0
        %3186 = vmatmul.mubr.bf16.gmra.mrb[0].mxu0 %v1881
        %v3187 = vpop.f32.mrb[0].mxu0
        %v3188 = vadd.f32 %v1986, %v3187
        %v3189 = vpop.f32.mrb[0].mxu0
        %v3190 = vadd.f32 %v1990, %v3189
        %v3191 = vpop.f32.mrb[0].mxu0
        %v3192 = vadd.f32 %v1986, %v3191
        %v3193 = vpop.f32.mrb[0].mxu0
        %v3194 = vadd.f32 %v1990, %v3193
        %3195 = vmatprep.mubr.bf16.mxu0 0
        %3196 = vmatmul.mubr.bf16.gmra.mrb[0].mxu0 %v1882
        %v3197 = vpop.f32.mrb[0].mxu0
        %v3198 = vadd.f32 %v1986, %v3197
        %v3199 = vpop.f32.mrb[0].mxu0
        %v3200 = vadd.f32 %v1990, %v3199
        %v3201 = vpop.f32.mrb[0].mxu0
        %v3202 = vadd.f32 %v1986, %v3201
        %v3203 = vpop.f32.mrb[0].mxu0
        %v3204 = vadd.f32 %v1990, %v3203
        %3205 = vmatprep.mubr.bf16.mxu0 0
        %3206 = vmatmul.mubr.bf16.gmra.mrb[0].mxu0 %v1883
        %v3207 = vpop.f32.mrb[0].mxu0
        %v3208 = vadd.f32 %v1986, %v3207
        %v3209 = vpop.f32.mrb[0].mxu0
        %v3210 = vadd.f32 %v1990, %v3209
        %v3211 = vpop.f32.mrb[0].mxu0
        %v3212 = vadd.f32 %v1986, %v3211
        %v3213 = vpop.f32.mrb[0].mxu0
        %v3214 = vadd.f32 %v1990, %v3213
        %3215 = vmatprep.mubr.bf16.mxu0 0
        %3216 = vmatmul.mubr.bf16.gmra.mrb[0].mxu0 %v1884
        %v3217 = vpop.f32.mrb[0].mxu0
        %v3218 = vadd.f32 %v1986, %v3217
        %v3219 = vpop.f32.mrb[0].mxu0
        %v3220 = vadd.f32 %v1990, %v3219
        %v3221 = vpop.f32.mrb[0].mxu0
        %v3222 = vadd.f32 %v1986, %v3221
        %v3223 = vpop.f32.mrb[0].mxu0
        %v3224 = vadd.f32 %v1990, %v3223
        %3225 = vmatprep.mubr.bf16.mxu0 0
        %3226 = vmatmul.mubr.bf16.gmra.mrb[0].mxu0 %v1885
        %v3227 = vpop.f32.mrb[0].mxu0
        %v3228 = vadd.f32 %v1986, %v3227
        %v3229 = vpop.f32.mrb[0].mxu0
        %v3230 = vadd.f32 %v1990, %v3229
        %v3231 = vpop.f32.mrb[0].mxu0
        %v3232 = vadd.f32 %v1986, %v3231
        %v3233 = vpop.f32.mrb[0].mxu0
        %v3234 = vadd.f32 %v1990, %v3233
        %3235 = vmatprep.mubr.bf16.mxu0 0
        %3236 = vmatmul.mubr.bf16.gmra.mrb[0].mxu0 %v1886
        %v3237 = vpop.f32.mrb[0].mxu0
        %v3238 = vadd.f32 %v1986, %v3237
        %v3239 = vpop.f32.mrb[0].mxu0
        %v3240 = vadd.f32 %v1990, %v3239
        %v3241 = vpop.f32.mrb[0].mxu0
        %v3242 = vadd.f32 %v1986, %v3241
        %v3243 = vpop.f32.mrb[0].mxu0
        %v3244 = vadd.f32 %v1990, %v3243
        %3245 = vmatprep.mubr.bf16.mxu0 0
        %3246 = vmatmul.mubr.bf16.gmra.mrb[0].mxu0 %v1887
        %v3247 = vpop.f32.mrb[0].mxu0
        %v3248 = vadd.f32 %v1986, %v3247
        %v3249 = vpop.f32.mrb[0].mxu0
        %v3250 = vadd.f32 %v1990, %v3249
        %v3251 = vpop.f32.mrb[0].mxu0
        %v3252 = vadd.f32 %v1986, %v3251
        %v3253 = vpop.f32.mrb[0].mxu0
        %v3254 = vadd.f32 %v1990, %v3253
        %3255 = vmatprep.mubr.bf16.mxu0 0
        %3256 = vmatmul.mubr.bf16.gmra.mrb[0].mxu0 %v1888
        %v3257 = vpop.f32.mrb[0].mxu0
        %v3258 = vadd.f32 %v1986, %v3257
        %v3259 = vpop.f32.mrb[0].mxu0
        %v3260 = vadd.f32 %v1990, %v3259
        %v3261 = vpop.f32.mrb[0].mxu0
        %v3262 = vadd.f32 %v1986, %v3261
        %v3263 = vpop.f32.mrb[0].mxu0
        %v3264 = vadd.f32 %v1990, %v3263
        %3265 = vmatprep.mubr.bf16.mxu0 0
        %3266 = vmatmul.mubr.bf16.gmra.mrb[0].mxu0 %v1889
        %v3267 = vpop.f32.mrb[0].mxu0
        %v3268 = vadd.f32 %v1986, %v3267
        %v3269 = vpop.f32.mrb[0].mxu0
        %v3270 = vadd.f32 %v1990, %v3269
        %v3271 = vpop.f32.mrb[0].mxu0
        %v3272 = vadd.f32 %v1986, %v3271
        %v3273 = vpop.f32.mrb[0].mxu0
        %v3274 = vadd.f32 %v1990, %v3273
        %3275 = vmatprep.mubr.bf16.mxu0 0
        %3276 = vmatmul.mubr.bf16.gmra.mrb[0].mxu0 %v1890
        %v3277 = vpop.f32.mrb[0].mxu0
        %v3278 = vadd.f32 %v1986, %v3277
        %v3279 = vpop.f32.mrb[0].mxu0
        %v3280 = vadd.f32 %v1990, %v3279
        %v3281 = vpop.f32.mrb[0].mxu0
        %v3282 = vadd.f32 %v1986, %v3281
        %v3283 = vpop.f32.mrb[0].mxu0
        %v3284 = vadd.f32 %v1990, %v3283
        %3285 = vmatprep.mubr.bf16.mxu0 0
        %3286 = vmatmul.mubr.bf16.gmra.mrb[0].mxu0 %v1891
        %v3287 = vpop.f32.mrb[0].mxu0
        %v3288 = vadd.f32 %v1986, %v3287
        %v3289 = vpop.f32.mrb[0].mxu0
        %v3290 = vadd.f32 %v1990, %v3289
        %v3291 = vpop.f32.mrb[0].mxu0
        %v3292 = vadd.f32 %v1986, %v3291
        %v3293 = vpop.f32.mrb[0].mxu0
        %v3294 = vadd.f32 %v1990, %v3293
        %3295 = vmatprep.mubr.bf16.mxu0 0
        %3296 = vmatmul.mubr.bf16.gmra.mrb[0].mxu0 %v1892
        %v3297 = vpop.f32.mrb[0].mxu0
        %v3298 = vadd.f32 %v1986, %v3297
        %v3299 = vpop.f32.mrb[0].mxu0
        %v3300 = vadd.f32 %v1990, %v3299
        %v3301 = vpop.f32.mrb[0].mxu0
        %v3302 = vadd.f32 %v1986, %v3301
        %v3303 = vpop.f32.mrb[0].mxu0
        %v3304 = vadd.f32 %v1990, %v3303
        %3305 = vmatprep.mubr.bf16.mxu0 0
        %3306 = vmatmul.mubr.bf16.gmra.mrb[0].mxu0 %v1893
        %v3307 = vpop.f32.mrb[0].mxu0
        %v3308 = vadd.f32 %v1986, %v3307
        %v3309 = vpop.f32.mrb[0].mxu0
        %v3310 = vadd.f32 %v1990, %v3309
        %v3311 = vpop.f32.mrb[0].mxu0
        %v3312 = vadd.f32 %v1986, %v3311
        %v3313 = vpop.f32.mrb[0].mxu0
        %v3314 = vadd.f32 %v1990, %v3313
        %3315 = vmatprep.mubr.bf16.mxu0 0
        %3316 = vmatmul.mubr.bf16.gmra.mrb[0].mxu0 %v1894
        %v3317 = vpop.f32.mrb[0].mxu0
        %v3318 = vadd.f32 %v1986, %v3317
        %v3319 = vpop.f32.mrb[0].mxu0
        %v3320 = vadd.f32 %v1990, %v3319
        %v3321 = vpop.f32.mrb[0].mxu0
        %v3322 = vadd.f32 %v1986, %v3321
        %v3323 = vpop.f32.mrb[0].mxu0
        %v3324 = vadd.f32 %v1990, %v3323
        %3325 = vmatprep.mubr.bf16.mxu0 0
        %3326 = vmatmul.mubr.bf16.gmra.mrb[0].mxu0 %v1895
        %v3327 = vpop.f32.mrb[0].mxu0
        %v3328 = vadd.f32 %v1986, %v3327
        %v3329 = vpop.f32.mrb[0].mxu0
        %v3330 = vadd.f32 %v1990, %v3329
        %v3331 = vpop.f32.mrb[0].mxu0
        %v3332 = vadd.f32 %v1986, %v3331
        %v3333 = vpop.f32.mrb[0].mxu0
        %v3334 = vadd.f32 %v1990, %v3333
        %3335 = vmatprep.mubr.bf16.mxu0 0
        %3336 = vmatmul.mubr.bf16.gmra.mrb[0].mxu0 %v1896
        %v3337 = vpop.f32.mrb[0].mxu0
        %v3338 = vadd.f32 %v1986, %v3337
        %v3339 = vpop.f32.mrb[0].mxu0
        %v3340 = vadd.f32 %v1990, %v3339
        %v3341 = vpop.f32.mrb[0].mxu0
        %v3342 = vadd.f32 %v1986, %v3341
        %v3343 = vpop.f32.mrb[0].mxu0
        %v3344 = vadd.f32 %v1990, %v3343
        %3345 = vmatprep.mubr.bf16.mxu0 0
        %3346 = vmatmul.mubr.bf16.gmra.mrb[0].mxu0 %v1897
        %v3347 = vpop.f32.mrb[0].mxu0
        %v3348 = vadd.f32 %v1986, %v3347
        %v3349 = vpop.f32.mrb[0].mxu0
        %v3350 = vadd.f32 %v1990, %v3349
        %v3351 = vpop.f32.mrb[0].mxu0
        %v3352 = vadd.f32 %v1986, %v3351
        %v3353 = vpop.f32.mrb[0].mxu0
        %v3354 = vadd.f32 %v1990, %v3353
        %3355 = vmatprep.mubr.bf16.mxu0 0
        %3356 = vmatmul.mubr.bf16.gmra.mrb[0].mxu0 %v1898
        %v3357 = vpop.f32.mrb[0].mxu0
        %v3358 = vadd.f32 %v1986, %v3357
        %v3359 = vpop.f32.mrb[0].mxu0
        %v3360 = vadd.f32 %v1990, %v3359
        %v3361 = vpop.f32.mrb[0].mxu0
        %v3362 = vadd.f32 %v1986, %v3361
        %v3363 = vpop.f32.mrb[0].mxu0
        %v3364 = vadd.f32 %v1990, %v3363
        %3365 = vmatprep.mubr.bf16.mxu0 0
        %3366 = vmatmul.mubr.bf16.gmra.mrb[0].mxu0 %v1899
        %v3367 = vpop.f32.mrb[0].mxu0
        %v3368 = vadd.f32 %v1986, %v3367
        %v3369 = vpop.f32.mrb[0].mxu0
        %v3370 = vadd.f32 %v1990, %v3369
        %v3371 = vpop.f32.mrb[0].mxu0
        %v3372 = vadd.f32 %v1986, %v3371
        %v3373 = vpop.f32.mrb[0].mxu0
        %v3374 = vadd.f32 %v1990, %v3373
        %3375 = vmatprep.mubr.bf16.mxu0 0
        %3376 = vmatmul.mubr.bf16.gmra.mrb[0].mxu0 %v1900
        %v3377 = vpop.f32.mrb[0].mxu0
        %v3378 = vadd.f32 %v1986, %v3377
        %v3379 = vpop.f32.mrb[0].mxu0
        %v3380 = vadd.f32 %v1990, %v3379
        %v3381 = vpop.f32.mrb[0].mxu0
        %v3382 = vadd.f32 %v1986, %v3381
        %v3383 = vpop.f32.mrb[0].mxu0
        %v3384 = vadd.f32 %v1990, %v3383
        %3385 = vdwg.mxu0
        %3386 = vmatprep.subr.bf16.mxu0 %v2206
        %3387 = vmatpush1.bf16.msra.mxu0 %v2205
        %3388 = vmatprep.subr.bf16.mxu0 %v2214
        %3389 = vmatpush1.bf16.msra.mxu0 %v2213
        %3390 = vmatprep.subr.bf16.mxu0 %v2222
        %3391 = vmatpush1.bf16.msra.mxu0 %v2221
        %3392 = vmatprep.subr.bf16.mxu0 %v2230
        %3393 = vmatpush1.bf16.msra.mxu0 %v2229
        %3394 = vmatprep.subr.bf16.mxu0 %v2238
        %3395 = vmatpush1.bf16.msra.mxu0 %v2237
        %3396 = vmatprep.subr.bf16.mxu0 %v2246
        %3397 = vmatpush1.bf16.msra.mxu0 %v2245
        %3398 = vmatprep.subr.bf16.mxu0 %v2254
        %3399 = vmatpush1.bf16.msra.mxu0 %v2253
        %3400 = vmatprep.subr.bf16.mxu0 %v2262
        %3401 = vmatpush1.bf16.msra.mxu0 %v2261
        %3402 = vmatprep.subr.bf16.mxu0 0
        %3403 = vmatpush1.bf16.msra.mxu0 0
        %3404 = vmatprep.subr.bf16.mxu0 0
        %3405 = vmatpush1.bf16.msra.mxu0 0
        %3406 = vmatprep.subr.bf16.mxu0 0
        %3407 = vmatpush1.bf16.msra.mxu0 0
        %3408 = vmatprep.subr.bf16.mxu0 0
        %3409 = vmatpush1.bf16.msra.mxu0 0
        %3410 = vmatprep.subr.bf16.mxu0 0
        %3411 = vmatpush1.bf16.msra.mxu0 0
        %3412 = vmatprep.subr.bf16.mxu0 0
        %3413 = vmatpush1.bf16.msra.mxu0 0
        %3414 = vmatprep.subr.bf16.mxu0 0
        %3415 = vmatpush1.bf16.msra.mxu0 0
        %3416 = vmatprep.subr.bf16.mxu0 0
        %3417 = vmatpush1.bf16.msra.mxu0 0
        %3418 = vmatprep.mubr.bf16.mxu0 0
        %3419 = vmatmul.mubr.bf16.gmra.mrb[0].mxu0 %v1869
        %v3420 = vpop.f32.mrb[0].mxu0
        %v3421 = vadd.f32 %v1994, %v3420
        %v3422 = vpop.f32.mrb[0].mxu0
        %v3423 = vadd.f32 %v1998, %v3422
        %v3424 = vpop.f32.mrb[0].mxu0
        %v3425 = vadd.f32 %v1994, %v3424
        %v3426 = vpop.f32.mrb[0].mxu0
        %v3427 = vadd.f32 %v1998, %v3426
        %3428 = vmatprep.mubr.bf16.mxu0 0
        %3429 = vmatmul.mubr.bf16.gmra.mrb[0].mxu0 %v1870
        %v3430 = vpop.f32.mrb[0].mxu0
        %v3431 = vadd.f32 %v1994, %v3430
        %v3432 = vpop.f32.mrb[0].mxu0
        %v3433 = vadd.f32 %v1998, %v3432
        %v3434 = vpop.f32.mrb[0].mxu0
        %v3435 = vadd.f32 %v1994, %v3434
        %v3436 = vpop.f32.mrb[0].mxu0
        %v3437 = vadd.f32 %v1998, %v3436
        %3438 = vmatprep.mubr.bf16.mxu0 0
        %3439 = vmatmul.mubr.bf16.gmra.mrb[0].mxu0 %v1871
        %v3440 = vpop.f32.mrb[0].mxu0
        %v3441 = vadd.f32 %v1994, %v3440
        %v3442 = vpop.f32.mrb[0].mxu0
        %v3443 = vadd.f32 %v1998, %v3442
        %v3444 = vpop.f32.mrb[0].mxu0
        %v3445 = vadd.f32 %v1994, %v3444
        %v3446 = vpop.f32.mrb[0].mxu0
        %v3447 = vadd.f32 %v1998, %v3446
        %3448 = vmatprep.mubr.bf16.mxu0 0
        %3449 = vmatmul.mubr.bf16.gmra.mrb[0].mxu0 %v1872
        %v3450 = vpop.f32.mrb[0].mxu0
        %v3451 = vadd.f32 %v1994, %v3450
        %v3452 = vpop.f32.mrb[0].mxu0
        %v3453 = vadd.f32 %v1998, %v3452
        %v3454 = vpop.f32.mrb[0].mxu0
        %v3455 = vadd.f32 %v1994, %v3454
        %v3456 = vpop.f32.mrb[0].mxu0
        %v3457 = vadd.f32 %v1998, %v3456
        %3458 = vmatprep.mubr.bf16.mxu0 0
        %3459 = vmatmul.mubr.bf16.gmra.mrb[0].mxu0 %v1873
        %v3460 = vpop.f32.mrb[0].mxu0
        %v3461 = vadd.f32 %v1994, %v3460
        %v3462 = vpop.f32.mrb[0].mxu0
        %v3463 = vadd.f32 %v1998, %v3462
        %v3464 = vpop.f32.mrb[0].mxu0
        %v3465 = vadd.f32 %v1994, %v3464
        %v3466 = vpop.f32.mrb[0].mxu0
        %v3467 = vadd.f32 %v1998, %v3466
        %3468 = vmatprep.mubr.bf16.mxu0 0
        %3469 = vmatmul.mubr.bf16.gmra.mrb[0].mxu0 %v1874
        %v3470 = vpop.f32.mrb[0].mxu0
        %v3471 = vadd.f32 %v1994, %v3470
        %v3472 = vpop.f32.mrb[0].mxu0
        %v3473 = vadd.f32 %v1998, %v3472
        %v3474 = vpop.f32.mrb[0].mxu0
        %v3475 = vadd.f32 %v1994, %v3474
        %v3476 = vpop.f32.mrb[0].mxu0
        %v3477 = vadd.f32 %v1998, %v3476
        %3478 = vmatprep.mubr.bf16.mxu0 0
        %3479 = vmatmul.mubr.bf16.gmra.mrb[0].mxu0 %v1875
        %v3480 = vpop.f32.mrb[0].mxu0
        %v3481 = vadd.f32 %v1994, %v3480
        %v3482 = vpop.f32.mrb[0].mxu0
        %v3483 = vadd.f32 %v1998, %v3482
        %v3484 = vpop.f32.mrb[0].mxu0
        %v3485 = vadd.f32 %v1994, %v3484
        %v3486 = vpop.f32.mrb[0].mxu0
        %v3487 = vadd.f32 %v1998, %v3486
        %3488 = vmatprep.mubr.bf16.mxu0 0
        %3489 = vmatmul.mubr.bf16.gmra.mrb[0].mxu0 %v1876
        %v3490 = vpop.f32.mrb[0].mxu0
        %v3491 = vadd.f32 %v1994, %v3490
        %v3492 = vpop.f32.mrb[0].mxu0
        %v3493 = vadd.f32 %v1998, %v3492
        %v3494 = vpop.f32.mrb[0].mxu0
        %v3495 = vadd.f32 %v1994, %v3494
        %v3496 = vpop.f32.mrb[0].mxu0
        %v3497 = vadd.f32 %v1998, %v3496
        %3498 = vmatprep.mubr.bf16.mxu0 0
        %3499 = vmatmul.mubr.bf16.gmra.mrb[0].mxu0 %v1877
        %v3500 = vpop.f32.mrb[0].mxu0
        %v3501 = vadd.f32 %v1994, %v3500
        %v3502 = vpop.f32.mrb[0].mxu0
        %v3503 = vadd.f32 %v1998, %v3502
        %v3504 = vpop.f32.mrb[0].mxu0
        %v3505 = vadd.f32 %v1994, %v3504
        %v3506 = vpop.f32.mrb[0].mxu0
        %v3507 = vadd.f32 %v1998, %v3506
        %3508 = vmatprep.mubr.bf16.mxu0 0
        %3509 = vmatmul.mubr.bf16.gmra.mrb[0].mxu0 %v1878
        %v3510 = vpop.f32.mrb[0].mxu0
        %v3511 = vadd.f32 %v1994, %v3510
        %v3512 = vpop.f32.mrb[0].mxu0
        %v3513 = vadd.f32 %v1998, %v3512
        %v3514 = vpop.f32.mrb[0].mxu0
        %v3515 = vadd.f32 %v1994, %v3514
        %v3516 = vpop.f32.mrb[0].mxu0
        %v3517 = vadd.f32 %v1998, %v3516
        %3518 = vmatprep.mubr.bf16.mxu0 0
        %3519 = vmatmul.mubr.bf16.gmra.mrb[0].mxu0 %v1879
        %v3520 = vpop.f32.mrb[0].mxu0
        %v3521 = vadd.f32 %v1994, %v3520
        %v3522 = vpop.f32.mrb[0].mxu0
        %v3523 = vadd.f32 %v1998, %v3522
        %v3524 = vpop.f32.mrb[0].mxu0
        %v3525 = vadd.f32 %v1994, %v3524
        %v3526 = vpop.f32.mrb[0].mxu0
        %v3527 = vadd.f32 %v1998, %v3526
        %3528 = vmatprep.mubr.bf16.mxu0 0
        %3529 = vmatmul.mubr.bf16.gmra.mrb[0].mxu0 %v1880
        %v3530 = vpop.f32.mrb[0].mxu0
        %v3531 = vadd.f32 %v1994, %v3530
        %v3532 = vpop.f32.mrb[0].mxu0
        %v3533 = vadd.f32 %v1998, %v3532
        %v3534 = vpop.f32.mrb[0].mxu0
        %v3535 = vadd.f32 %v1994, %v3534
        %v3536 = vpop.f32.mrb[0].mxu0
        %v3537 = vadd.f32 %v1998, %v3536
        %3538 = vmatprep.mubr.bf16.mxu0 0
        %3539 = vmatmul.mubr.bf16.gmra.mrb[0].mxu0 %v1881
        %v3540 = vpop.f32.mrb[0].mxu0
        %v3541 = vadd.f32 %v1994, %v3540
        %v3542 = vpop.f32.mrb[0].mxu0
        %v3543 = vadd.f32 %v1998, %v3542
        %v3544 = vpop.f32.mrb[0].mxu0
        %v3545 = vadd.f32 %v1994, %v3544
        %v3546 = vpop.f32.mrb[0].mxu0
        %v3547 = vadd.f32 %v1998, %v3546
        %3548 = vmatprep.mubr.bf16.mxu0 0
        %3549 = vmatmul.mubr.bf16.gmra.mrb[0].mxu0 %v1882
        %v3550 = vpop.f32.mrb[0].mxu0
        %v3551 = vadd.f32 %v1994, %v3550
        %v3552 = vpop.f32.mrb[0].mxu0
        %v3553 = vadd.f32 %v1998, %v3552
        %v3554 = vpop.f32.mrb[0].mxu0
        %v3555 = vadd.f32 %v1994, %v3554
        %v3556 = vpop.f32.mrb[0].mxu0
        %v3557 = vadd.f32 %v1998, %v3556
        %3558 = vmatprep.mubr.bf16.mxu0 0
        %3559 = vmatmul.mubr.bf16.gmra.mrb[0].mxu0 %v1883
        %v3560 = vpop.f32.mrb[0].mxu0
        %v3561 = vadd.f32 %v1994, %v3560
        %v3562 = vpop.f32.mrb[0].mxu0
        %v3563 = vadd.f32 %v1998, %v3562
        %v3564 = vpop.f32.mrb[0].mxu0
        %v3565 = vadd.f32 %v1994, %v3564
        %v3566 = vpop.f32.mrb[0].mxu0
        %v3567 = vadd.f32 %v1998, %v3566
        %3568 = vmatprep.mubr.bf16.mxu0 0
        %3569 = vmatmul.mubr.bf16.gmra.mrb[0].mxu0 %v1884
        %v3570 = vpop.f32.mrb[0].mxu0
        %v3571 = vadd.f32 %v1994, %v3570
        %v3572 = vpop.f32.mrb[0].mxu0
        %v3573 = vadd.f32 %v1998, %v3572
        %v3574 = vpop.f32.mrb[0].mxu0
        %v3575 = vadd.f32 %v1994, %v3574
        %v3576 = vpop.f32.mrb[0].mxu0
        %v3577 = vadd.f32 %v1998, %v3576
        %3578 = vmatprep.mubr.bf16.mxu0 0
        %3579 = vmatmul.mubr.bf16.gmra.mrb[0].mxu0 %v1885
        %v3580 = vpop.f32.mrb[0].mxu0
        %v3581 = vadd.f32 %v1994, %v3580
        %v3582 = vpop.f32.mrb[0].mxu0
        %v3583 = vadd.f32 %v1998, %v3582
        %v3584 = vpop.f32.mrb[0].mxu0
        %v3585 = vadd.f32 %v1994, %v3584
        %v3586 = vpop.f32.mrb[0].mxu0
        %v3587 = vadd.f32 %v1998, %v3586
        %3588 = vmatprep.mubr.bf16.mxu0 0
        %3589 = vmatmul.mubr.bf16.gmra.mrb[0].mxu0 %v1886
        %v3590 = vpop.f32.mrb[0].mxu0
        %v3591 = vadd.f32 %v1994, %v3590
        %v3592 = vpop.f32.mrb[0].mxu0
        %v3593 = vadd.f32 %v1998, %v3592
        %v3594 = vpop.f32.mrb[0].mxu0
        %v3595 = vadd.f32 %v1994, %v3594
        %v3596 = vpop.f32.mrb[0].mxu0
        %v3597 = vadd.f32 %v1998, %v3596
        %3598 = vmatprep.mubr.bf16.mxu0 0
        %3599 = vmatmul.mubr.bf16.gmra.mrb[0].mxu0 %v1887
        %v3600 = vpop.f32.mrb[0].mxu0
        %v3601 = vadd.f32 %v1994, %v3600
        %v3602 = vpop.f32.mrb[0].mxu0
        %v3603 = vadd.f32 %v1998, %v3602
        %v3604 = vpop.f32.mrb[0].mxu0
        %v3605 = vadd.f32 %v1994, %v3604
        %v3606 = vpop.f32.mrb[0].mxu0
        %v3607 = vadd.f32 %v1998, %v3606
        %3608 = vmatprep.mubr.bf16.mxu0 0
        %3609 = vmatmul.mubr.bf16.gmra.mrb[0].mxu0 %v1888
        %v3610 = vpop.f32.mrb[0].mxu0
        %v3611 = vadd.f32 %v1994, %v3610
        %v3612 = vpop.f32.mrb[0].mxu0
        %v3613 = vadd.f32 %v1998, %v3612
        %v3614 = vpop.f32.mrb[0].mxu0
        %v3615 = vadd.f32 %v1994, %v3614
        %v3616 = vpop.f32.mrb[0].mxu0
        %v3617 = vadd.f32 %v1998, %v3616
        %3618 = vmatprep.mubr.bf16.mxu0 0
        %3619 = vmatmul.mubr.bf16.gmra.mrb[0].mxu0 %v1889
        %v3620 = vpop.f32.mrb[0].mxu0
        %v3621 = vadd.f32 %v1994, %v3620
        %v3622 = vpop.f32.mrb[0].mxu0
        %v3623 = vadd.f32 %v1998, %v3622
        %v3624 = vpop.f32.mrb[0].mxu0
        %v3625 = vadd.f32 %v1994, %v3624
        %v3626 = vpop.f32.mrb[0].mxu0
        %v3627 = vadd.f32 %v1998, %v3626
        %3628 = vmatprep.mubr.bf16.mxu0 0
        %3629 = vmatmul.mubr.bf16.gmra.mrb[0].mxu0 %v1890
        %v3630 = vpop.f32.mrb[0].mxu0
        %v3631 = vadd.f32 %v1994, %v3630
        %v3632 = vpop.f32.mrb[0].mxu0
        %v3633 = vadd.f32 %v1998, %v3632
        %v3634 = vpop.f32.mrb[0].mxu0
        %v3635 = vadd.f32 %v1994, %v3634
        %v3636 = vpop.f32.mrb[0].mxu0
        %v3637 = vadd.f32 %v1998, %v3636
        %3638 = vmatprep.mubr.bf16.mxu0 0
        %3639 = vmatmul.mubr.bf16.gmra.mrb[0].mxu0 %v1891
        %v3640 = vpop.f32.mrb[0].mxu0
        %v3641 = vadd.f32 %v1994, %v3640
        %v3642 = vpop.f32.mrb[0].mxu0
        %v3643 = vadd.f32 %v1998, %v3642
        %v3644 = vpop.f32.mrb[0].mxu0
        %v3645 = vadd.f32 %v1994, %v3644
        %v3646 = vpop.f32.mrb[0].mxu0
        %v3647 = vadd.f32 %v1998, %v3646
        %3648 = vmatprep.mubr.bf16.mxu0 0
        %3649 = vmatmul.mubr.bf16.gmra.mrb[0].mxu0 %v1892
        %v3650 = vpop.f32.mrb[0].mxu0
        %v3651 = vadd.f32 %v1994, %v3650
        %v3652 = vpop.f32.mrb[0].mxu0
        %v3653 = vadd.f32 %v1998, %v3652
        %v3654 = vpop.f32.mrb[0].mxu0
        %v3655 = vadd.f32 %v1994, %v3654
        %v3656 = vpop.f32.mrb[0].mxu0
        %v3657 = vadd.f32 %v1998, %v3656
        %3658 = vmatprep.mubr.bf16.mxu0 0
        %3659 = vmatmul.mubr.bf16.gmra.mrb[0].mxu0 %v1893
        %v3660 = vpop.f32.mrb[0].mxu0
        %v3661 = vadd.f32 %v1994, %v3660
        %v3662 = vpop.f32.mrb[0].mxu0
        %v3663 = vadd.f32 %v1998, %v3662
        %v3664 = vpop.f32.mrb[0].mxu0
        %v3665 = vadd.f32 %v1994, %v3664
        %v3666 = vpop.f32.mrb[0].mxu0
        %v3667 = vadd.f32 %v1998, %v3666
        %3668 = vmatprep.mubr.bf16.mxu0 0
        %3669 = vmatmul.mubr.bf16.gmra.mrb[0].mxu0 %v1894
        %v3670 = vpop.f32.mrb[0].mxu0
        %v3671 = vadd.f32 %v1994, %v3670
        %v3672 = vpop.f32.mrb[0].mxu0
        %v3673 = vadd.f32 %v1998, %v3672
        %v3674 = vpop.f32.mrb[0].mxu0
        %v3675 = vadd.f32 %v1994, %v3674
        %v3676 = vpop.f32.mrb[0].mxu0
        %v3677 = vadd.f32 %v1998, %v3676
        %3678 = vmatprep.mubr.bf16.mxu0 0
        %3679 = vmatmul.mubr.bf16.gmra.mrb[0].mxu0 %v1895
        %v3680 = vpop.f32.mrb[0].mxu0
        %v3681 = vadd.f32 %v1994, %v3680
        %v3682 = vpop.f32.mrb[0].mxu0
        %v3683 = vadd.f32 %v1998, %v3682
        %v3684 = vpop.f32.mrb[0].mxu0
        %v3685 = vadd.f32 %v1994, %v3684
        %v3686 = vpop.f32.mrb[0].mxu0
        %v3687 = vadd.f32 %v1998, %v3686
        %3688 = vmatprep.mubr.bf16.mxu0 0
        %3689 = vmatmul.mubr.bf16.gmra.mrb[0].mxu0 %v1896
        %v3690 = vpop.f32.mrb[0].mxu0
        %v3691 = vadd.f32 %v1994, %v3690
        %v3692 = vpop.f32.mrb[0].mxu0
        %v3693 = vadd.f32 %v1998, %v3692
        %v3694 = vpop.f32.mrb[0].mxu0
        %v3695 = vadd.f32 %v1994, %v3694
        %v3696 = vpop.f32.mrb[0].mxu0
        %v3697 = vadd.f32 %v1998, %v3696
        %3698 = vmatprep.mubr.bf16.mxu0 0
        %3699 = vmatmul.mubr.bf16.gmra.mrb[0].mxu0 %v1897
        %v3700 = vpop.f32.mrb[0].mxu0
        %v3701 = vadd.f32 %v1994, %v3700
        %v3702 = vpop.f32.mrb[0].mxu0
        %v3703 = vadd.f32 %v1998, %v3702
        %v3704 = vpop.f32.mrb[0].mxu0
        %v3705 = vadd.f32 %v1994, %v3704
        %v3706 = vpop.f32.mrb[0].mxu0
        %v3707 = vadd.f32 %v1998, %v3706
        %3708 = vmatprep.mubr.bf16.mxu0 0
        %3709 = vmatmul.mubr.bf16.gmra.mrb[0].mxu0 %v1898
        %v3710 = vpop.f32.mrb[0].mxu0
        %v3711 = vadd.f32 %v1994, %v3710
        %v3712 = vpop.f32.mrb[0].mxu0
        %v3713 = vadd.f32 %v1998, %v3712
        %v3714 = vpop.f32.mrb[0].mxu0
        %v3715 = vadd.f32 %v1994, %v3714
        %v3716 = vpop.f32.mrb[0].mxu0
        %v3717 = vadd.f32 %v1998, %v3716
        %3718 = vmatprep.mubr.bf16.mxu0 0
        %3719 = vmatmul.mubr.bf16.gmra.mrb[0].mxu0 %v1899
        %v3720 = vpop.f32.mrb[0].mxu0
        %v3721 = vadd.f32 %v1994, %v3720
        %v3722 = vpop.f32.mrb[0].mxu0
        %v3723 = vadd.f32 %v1998, %v3722
        %v3724 = vpop.f32.mrb[0].mxu0
        %v3725 = vadd.f32 %v1994, %v3724
        %v3726 = vpop.f32.mrb[0].mxu0
        %v3727 = vadd.f32 %v1998, %v3726
        %3728 = vmatprep.mubr.bf16.mxu0 0
        %3729 = vmatmul.mubr.bf16.gmra.mrb[0].mxu0 %v1900
        %v3730 = vpop.f32.mrb[0].mxu0
        %v3731 = vadd.f32 %v1994, %v3730
        %v3732 = vpop.f32.mrb[0].mxu0
        %v3733 = vadd.f32 %v1998, %v3732
        %v3734 = vpop.f32.mrb[0].mxu0
        %v3735 = vadd.f32 %v1994, %v3734
        %v3736 = vpop.f32.mrb[0].mxu0
        %v3737 = vadd.f32 %v1998, %v3736
        %3738 = vdwg.mxu0
        %v3739 = vmax.f32 %v2362, 0.0
        %v3740 = vmax.f32 %v2364, 0.0
        %v3741 = vmax.f32 %v2715, 0.0
        %v3742 = vmax.f32 %v2717, 0.0
        %v3743 = vmax.f32 %v3068, 0.0
        %v3744 = vmax.f32 %v3070, 0.0
        %v3745 = vmax.f32 %v3421, 0.0
        %v3746 = vmax.f32 %v3423, 0.0
        %v3747 = vmax.f32 %v2366, 0.0
        %v3748 = vmax.f32 %v2368, 0.0
        %v3749 = vmax.f32 %v2719, 0.0
        %v3750 = vmax.f32 %v2721, 0.0
        %v3751 = vmax.f32 %v3072, 0.0
        %v3752 = vmax.f32 %v3074, 0.0
        %v3753 = vmax.f32 %v3425, 0.0
        %v3754 = vmax.f32 %v3427, 0.0
        %v3755 = vmax.f32 %v2372, 0.0
        %v3756 = vmax.f32 %v2374, 0.0
        %v3757 = vmax.f32 %v2725, 0.0
        %v3758 = vmax.f32 %v2727, 0.0
        %v3759 = vmax.f32 %v3078, 0.0
        %v3760 = vmax.f32 %v3080, 0.0
        %v3761 = vmax.f32 %v3431, 0.0
        %v3762 = vmax.f32 %v3433, 0.0
        %v3763 = vmax.f32 %v2376, 0.0
        %v3764 = vmax.f32 %v2378, 0.0
        %v3765 = vmax.f32 %v2729, 0.0
        %v3766 = vmax.f32 %v2731, 0.0
        %v3767 = vmax.f32 %v3082, 0.0
        %v3768 = vmax.f32 %v3084, 0.0
        %v3769 = vmax.f32 %v3435, 0.0
        %v3770 = vmax.f32 %v3437, 0.0
        %v3771 = vmax.f32 %v2382, 0.0
        %v3772 = vmax.f32 %v2384, 0.0
        %v3773 = vmax.f32 %v2735, 0.0
        %v3774 = vmax.f32 %v2737, 0.0
        %v3775 = vmax.f32 %v3088, 0.0
        %v3776 = vmax.f32 %v3090, 0.0
        %v3777 = vmax.f32 %v3441, 0.0
        %v3778 = vmax.f32 %v3443, 0.0
        %v3779 = vmax.f32 %v2386, 0.0
        %v3780 = vmax.f32 %v2388, 0.0
        %v3781 = vmax.f32 %v2739, 0.0
        %v3782 = vmax.f32 %v2741, 0.0
        %v3783 = vmax.f32 %v3092, 0.0
        %v3784 = vmax.f32 %v3094, 0.0
        %v3785 = vmax.f32 %v3445, 0.0
        %v3786 = vmax.f32 %v3447, 0.0
        %v3787 = vmax.f32 %v2392, 0.0
        %v3788 = vmax.f32 %v2394, 0.0
        %v3789 = vmax.f32 %v2745, 0.0
        %v3790 = vmax.f32 %v2747, 0.0
        %v3791 = vmax.f32 %v3098, 0.0
        %v3792 = vmax.f32 %v3100, 0.0
        %v3793 = vmax.f32 %v3451, 0.0
        %v3794 = vmax.f32 %v3453, 0.0
        %v3795 = vmax.f32 %v2396, 0.0
        %v3796 = vmax.f32 %v2398, 0.0
        %v3797 = vmax.f32 %v2749, 0.0
        %v3798 = vmax.f32 %v2751, 0.0
        %v3799 = vmax.f32 %v3102, 0.0
        %v3800 = vmax.f32 %v3104, 0.0
        %v3801 = vmax.f32 %v3455, 0.0
        %v3802 = vmax.f32 %v3457, 0.0
        %v3803 = vmax.f32 %v2402, 0.0
        %v3804 = vmax.f32 %v2404, 0.0
        %v3805 = vmax.f32 %v2755, 0.0
        %v3806 = vmax.f32 %v2757, 0.0
        %v3807 = vmax.f32 %v3108, 0.0
        %v3808 = vmax.f32 %v3110, 0.0
        %v3809 = vmax.f32 %v3461, 0.0
        %v3810 = vmax.f32 %v3463, 0.0
        %v3811 = vmax.f32 %v2406, 0.0
        %v3812 = vmax.f32 %v2408, 0.0
        %v3813 = vmax.f32 %v2759, 0.0
        %v3814 = vmax.f32 %v2761, 0.0
        %v3815 = vmax.f32 %v3112, 0.0
        %v3816 = vmax.f32 %v3114, 0.0
        %v3817 = vmax.f32 %v3465, 0.0
        %v3818 = vmax.f32 %v3467, 0.0
        %v3819 = vmax.f32 %v2412, 0.0
        %v3820 = vmax.f32 %v2414, 0.0
        %v3821 = vmax.f32 %v2765, 0.0
        %v3822 = vmax.f32 %v2767, 0.0
        %v3823 = vmax.f32 %v3118, 0.0
        %v3824 = vmax.f32 %v3120, 0.0
        %v3825 = vmax.f32 %v3471, 0.0
        %v3826 = vmax.f32 %v3473, 0.0
        %v3827 = vmax.f32 %v2416, 0.0
        %v3828 = vmax.f32 %v2418, 0.0
        %v3829 = vmax.f32 %v2769, 0.0
        %v3830 = vmax.f32 %v2771, 0.0
        %v3831 = vmax.f32 %v3122, 0.0
        %v3832 = vmax.f32 %v3124, 0.0
        %v3833 = vmax.f32 %v3475, 0.0
        %v3834 = vmax.f32 %v3477, 0.0
        %v3835 = vmax.f32 %v2422, 0.0
        %v3836 = vmax.f32 %v2424, 0.0
        %v3837 = vmax.f32 %v2775, 0.0
        %v3838 = vmax.f32 %v2777, 0.0
        %v3839 = vmax.f32 %v3128, 0.0
        %v3840 = vmax.f32 %v3130, 0.0
        %v3841 = vmax.f32 %v3481, 0.0
        %v3842 = vmax.f32 %v3483, 0.0
        %v3843 = vmax.f32 %v2426, 0.0
        %v3844 = vmax.f32 %v2428, 0.0
        %v3845 = vmax.f32 %v2779, 0.0
        %v3846 = vmax.f32 %v2781, 0.0
        %v3847 = vmax.f32 %v3132, 0.0
        %v3848 = vmax.f32 %v3134, 0.0
        %v3849 = vmax.f32 %v3485, 0.0
        %v3850 = vmax.f32 %v3487, 0.0
        %v3851 = vmax.f32 %v2432, 0.0
        %v3852 = vmax.f32 %v2434, 0.0
        %v3853 = vmax.f32 %v2785, 0.0
        %v3854 = vmax.f32 %v2787, 0.0
        %v3855 = vmax.f32 %v3138, 0.0
        %v3856 = vmax.f32 %v3140, 0.0
        %v3857 = vmax.f32 %v3491, 0.0
        %v3858 = vmax.f32 %v3493, 0.0
        %v3859 = vmax.f32 %v2436, 0.0
        %v3860 = vmax.f32 %v2438, 0.0
        %v3861 = vmax.f32 %v2789, 0.0
        %v3862 = vmax.f32 %v2791, 0.0
        %v3863 = vmax.f32 %v3142, 0.0
        %v3864 = vmax.f32 %v3144, 0.0
        %v3865 = vmax.f32 %v3495, 0.0
        %v3866 = vmax.f32 %v3497, 0.0
        %v3867 = vmax.f32 %v2442, 0.0
        %v3868 = vmax.f32 %v2444, 0.0
        %v3869 = vmax.f32 %v2795, 0.0
        %v3870 = vmax.f32 %v2797, 0.0
        %v3871 = vmax.f32 %v3148, 0.0
        %v3872 = vmax.f32 %v3150, 0.0
        %v3873 = vmax.f32 %v3501, 0.0
        %v3874 = vmax.f32 %v3503, 0.0
        %v3875 = vmax.f32 %v2446, 0.0
        %v3876 = vmax.f32 %v2448, 0.0
        %v3877 = vmax.f32 %v2799, 0.0
        %v3878 = vmax.f32 %v2801, 0.0
        %v3879 = vmax.f32 %v3152, 0.0
        %v3880 = vmax.f32 %v3154, 0.0
        %v3881 = vmax.f32 %v3505, 0.0
        %v3882 = vmax.f32 %v3507, 0.0
        %v3883 = vmax.f32 %v2452, 0.0
        %v3884 = vmax.f32 %v2454, 0.0
        %v3885 = vmax.f32 %v2805, 0.0
        %v3886 = vmax.f32 %v2807, 0.0
        %v3887 = vmax.f32 %v3158, 0.0
        %v3888 = vmax.f32 %v3160, 0.0
        %v3889 = vmax.f32 %v3511, 0.0
        %v3890 = vmax.f32 %v3513, 0.0
        %v3891 = vmax.f32 %v2456, 0.0
        %v3892 = vmax.f32 %v2458, 0.0
        %v3893 = vmax.f32 %v2809, 0.0
        %v3894 = vmax.f32 %v2811, 0.0
        %v3895 = vmax.f32 %v3162, 0.0
        %v3896 = vmax.f32 %v3164, 0.0
        %v3897 = vmax.f32 %v3515, 0.0
        %v3898 = vmax.f32 %v3517, 0.0
        %v3899 = vmax.f32 %v2462, 0.0
        %v3900 = vmax.f32 %v2464, 0.0
        %v3901 = vmax.f32 %v2815, 0.0
        %v3902 = vmax.f32 %v2817, 0.0
        %v3903 = vmax.f32 %v3168, 0.0
        %v3904 = vmax.f32 %v3170, 0.0
        %v3905 = vmax.f32 %v3521, 0.0
        %v3906 = vmax.f32 %v3523, 0.0
        %v3907 = vmax.f32 %v2466, 0.0
        %v3908 = vmax.f32 %v2468, 0.0
        %v3909 = vmax.f32 %v2819, 0.0
        %v3910 = vmax.f32 %v2821, 0.0
        %v3911 = vmax.f32 %v3172, 0.0
        %v3912 = vmax.f32 %v3174, 0.0
        %v3913 = vmax.f32 %v3525, 0.0
        %v3914 = vmax.f32 %v3527, 0.0
        %v3915 = vmax.f32 %v2472, 0.0
        %v3916 = vmax.f32 %v2474, 0.0
        %v3917 = vmax.f32 %v2825, 0.0
        %v3918 = vmax.f32 %v2827, 0.0
        %v3919 = vmax.f32 %v3178, 0.0
        %v3920 = vmax.f32 %v3180, 0.0
        %v3921 = vmax.f32 %v3531, 0.0
        %v3922 = vmax.f32 %v3533, 0.0
        %v3923 = vmax.f32 %v2476, 0.0
        %v3924 = vmax.f32 %v2478, 0.0
        %v3925 = vmax.f32 %v2829, 0.0
        %v3926 = vmax.f32 %v2831, 0.0
        %v3927 = vmax.f32 %v3182, 0.0
        %v3928 = vmax.f32 %v3184, 0.0
        %v3929 = vmax.f32 %v3535, 0.0
        %v3930 = vmax.f32 %v3537, 0.0
        %v3931 = vmax.f32 %v2482, 0.0
        %v3932 = vmax.f32 %v2484, 0.0
        %v3933 = vmax.f32 %v2835, 0.0
        %v3934 = vmax.f32 %v2837, 0.0
        %v3935 = vmax.f32 %v3188, 0.0
        %v3936 = vmax.f32 %v3190, 0.0
        %v3937 = vmax.f32 %v3541, 0.0
        %v3938 = vmax.f32 %v3543, 0.0
        %v3939 = vmax.f32 %v2486, 0.0
        %v3940 = vmax.f32 %v2488, 0.0
        %v3941 = vmax.f32 %v2839, 0.0
        %v3942 = vmax.f32 %v2841, 0.0
        %v3943 = vmax.f32 %v3192, 0.0
        %v3944 = vmax.f32 %v3194, 0.0
        %v3945 = vmax.f32 %v3545, 0.0
        %v3946 = vmax.f32 %v3547, 0.0
        %v3947 = vmax.f32 %v2492, 0.0
        %v3948 = vmax.f32 %v2494, 0.0
        %v3949 = vmax.f32 %v2845, 0.0
        %v3950 = vmax.f32 %v2847, 0.0
        %v3951 = vmax.f32 %v3198, 0.0
        %v3952 = vmax.f32 %v3200, 0.0
        %v3953 = vmax.f32 %v3551, 0.0
        %v3954 = vmax.f32 %v3553, 0.0
        %v3955 = vmax.f32 %v2496, 0.0
        %v3956 = vmax.f32 %v2498, 0.0
        %v3957 = vmax.f32 %v2849, 0.0
        %v3958 = vmax.f32 %v2851, 0.0
        %v3959 = vmax.f32 %v3202, 0.0
        %v3960 = vmax.f32 %v3204, 0.0
        %v3961 = vmax.f32 %v3555, 0.0
        %v3962 = vmax.f32 %v3557, 0.0
        %v3963 = vmax.f32 %v2502, 0.0
        %v3964 = vmax.f32 %v2504, 0.0
        %v3965 = vmax.f32 %v2855, 0.0
        %v3966 = vmax.f32 %v2857, 0.0
        %v3967 = vmax.f32 %v3208, 0.0
        %v3968 = vmax.f32 %v3210, 0.0
        %v3969 = vmax.f32 %v3561, 0.0
        %v3970 = vmax.f32 %v3563, 0.0
        %v3971 = vmax.f32 %v2506, 0.0
        %v3972 = vmax.f32 %v2508, 0.0
        %v3973 = vmax.f32 %v2859, 0.0
        %v3974 = vmax.f32 %v2861, 0.0
        %v3975 = vmax.f32 %v3212, 0.0
        %v3976 = vmax.f32 %v3214, 0.0
        %v3977 = vmax.f32 %v3565, 0.0
        %v3978 = vmax.f32 %v3567, 0.0
        %v3979 = vmax.f32 %v2512, 0.0
        %v3980 = vmax.f32 %v2514, 0.0
        %v3981 = vmax.f32 %v2865, 0.0
        %v3982 = vmax.f32 %v2867, 0.0
        %v3983 = vmax.f32 %v3218, 0.0
        %v3984 = vmax.f32 %v3220, 0.0
        %v3985 = vmax.f32 %v3571, 0.0
        %v3986 = vmax.f32 %v3573, 0.0
        %v3987 = vmax.f32 %v2516, 0.0
        %v3988 = vmax.f32 %v2518, 0.0
        %v3989 = vmax.f32 %v2869, 0.0
        %v3990 = vmax.f32 %v2871, 0.0
        %v3991 = vmax.f32 %v3222, 0.0
        %v3992 = vmax.f32 %v3224, 0.0
        %v3993 = vmax.f32 %v3575, 0.0
        %v3994 = vmax.f32 %v3577, 0.0
        %v3995 = vmax.f32 %v2522, 0.0
        %v3996 = vmax.f32 %v2524, 0.0
        %v3997 = vmax.f32 %v2875, 0.0
        %v3998 = vmax.f32 %v2877, 0.0
        %v3999 = vmax.f32 %v3228, 0.0
        %v4000 = vmax.f32 %v3230, 0.0
        %v4001 = vmax.f32 %v3581, 0.0
        %v4002 = vmax.f32 %v3583, 0.0
        %v4003 = vmax.f32 %v2526, 0.0
        %v4004 = vmax.f32 %v2528, 0.0
        %v4005 = vmax.f32 %v2879, 0.0
        %v4006 = vmax.f32 %v2881, 0.0
        %v4007 = vmax.f32 %v3232, 0.0
        %v4008 = vmax.f32 %v3234, 0.0
        %v4009 = vmax.f32 %v3585, 0.0
        %v4010 = vmax.f32 %v3587, 0.0
        %v4011 = vmax.f32 %v2532, 0.0
        %v4012 = vmax.f32 %v2534, 0.0
        %v4013 = vmax.f32 %v2885, 0.0
        %v4014 = vmax.f32 %v2887, 0.0
        %v4015 = vmax.f32 %v3238, 0.0
        %v4016 = vmax.f32 %v3240, 0.0
        %v4017 = vmax.f32 %v3591, 0.0
        %v4018 = vmax.f32 %v3593, 0.0
        %v4019 = vmax.f32 %v2536, 0.0
        %v4020 = vmax.f32 %v2538, 0.0
        %v4021 = vmax.f32 %v2889, 0.0
        %v4022 = vmax.f32 %v2891, 0.0
        %v4023 = vmax.f32 %v3242, 0.0
        %v4024 = vmax.f32 %v3244, 0.0
        %v4025 = vmax.f32 %v3595, 0.0
        %v4026 = vmax.f32 %v3597, 0.0
        %v4027 = vmax.f32 %v2542, 0.0
        %v4028 = vmax.f32 %v2544, 0.0
        %v4029 = vmax.f32 %v2895, 0.0
        %v4030 = vmax.f32 %v2897, 0.0
        %v4031 = vmax.f32 %v3248, 0.0
        %v4032 = vmax.f32 %v3250, 0.0
        %v4033 = vmax.f32 %v3601, 0.0
        %v4034 = vmax.f32 %v3603, 0.0
        %v4035 = vmax.f32 %v2546, 0.0
        %v4036 = vmax.f32 %v2548, 0.0
        %v4037 = vmax.f32 %v2899, 0.0
        %v4038 = vmax.f32 %v2901, 0.0
        %v4039 = vmax.f32 %v3252, 0.0
        %v4040 = vmax.f32 %v3254, 0.0
        %v4041 = vmax.f32 %v3605, 0.0
        %v4042 = vmax.f32 %v3607, 0.0
        %v4043 = vmax.f32 %v2552, 0.0
        %v4044 = vmax.f32 %v2554, 0.0
        %v4045 = vmax.f32 %v2905, 0.0
        %v4046 = vmax.f32 %v2907, 0.0
        %v4047 = vmax.f32 %v3258, 0.0
        %v4048 = vmax.f32 %v3260, 0.0
        %v4049 = vmax.f32 %v3611, 0.0
        %v4050 = vmax.f32 %v3613, 0.0
        %v4051 = vmax.f32 %v2556, 0.0
        %v4052 = vmax.f32 %v2558, 0.0
        %v4053 = vmax.f32 %v2909, 0.0
        %v4054 = vmax.f32 %v2911, 0.0
        %v4055 = vmax.f32 %v3262, 0.0
        %v4056 = vmax.f32 %v3264, 0.0
        %v4057 = vmax.f32 %v3615, 0.0
        %v4058 = vmax.f32 %v3617, 0.0
        %v4059 = vmax.f32 %v2562, 0.0
        %v4060 = vmax.f32 %v2564, 0.0
        %v4061 = vmax.f32 %v2915, 0.0
        %v4062 = vmax.f32 %v2917, 0.0
        %v4063 = vmax.f32 %v3268, 0.0
        %v4064 = vmax.f32 %v3270, 0.0
        %v4065 = vmax.f32 %v3621, 0.0
        %v4066 = vmax.f32 %v3623, 0.0
        %v4067 = vmax.f32 %v2566, 0.0
        %v4068 = vmax.f32 %v2568, 0.0
        %v4069 = vmax.f32 %v2919, 0.0
        %v4070 = vmax.f32 %v2921, 0.0
        %v4071 = vmax.f32 %v3272, 0.0
        %v4072 = vmax.f32 %v3274, 0.0
        %v4073 = vmax.f32 %v3625, 0.0
        %v4074 = vmax.f32 %v3627, 0.0
        %v4075 = vmax.f32 %v2572, 0.0
        %v4076 = vmax.f32 %v2574, 0.0
        %v4077 = vmax.f32 %v2925, 0.0
        %v4078 = vmax.f32 %v2927, 0.0
        %v4079 = vmax.f32 %v3278, 0.0
        %v4080 = vmax.f32 %v3280, 0.0
        %v4081 = vmax.f32 %v3631, 0.0
        %v4082 = vmax.f32 %v3633, 0.0
        %v4083 = vmax.f32 %v2576, 0.0
        %v4084 = vmax.f32 %v2578, 0.0
        %v4085 = vmax.f32 %v2929, 0.0
        %v4086 = vmax.f32 %v2931, 0.0
        %v4087 = vmax.f32 %v3282, 0.0
        %v4088 = vmax.f32 %v3284, 0.0
        %v4089 = vmax.f32 %v3635, 0.0
        %v4090 = vmax.f32 %v3637, 0.0
        %v4091 = vmax.f32 %v2582, 0.0
        %v4092 = vmax.f32 %v2584, 0.0
        %v4093 = vmax.f32 %v2935, 0.0
        %v4094 = vmax.f32 %v2937, 0.0
        %v4095 = vmax.f32 %v3288, 0.0
        %v4096 = vmax.f32 %v3290, 0.0
        %v4097 = vmax.f32 %v3641, 0.0
        %v4098 = vmax.f32 %v3643, 0.0
        %v4099 = vmax.f32 %v2586, 0.0
        %v4100 = vmax.f32 %v2588, 0.0
        %v4101 = vmax.f32 %v2939, 0.0
        %v4102 = vmax.f32 %v2941, 0.0
        %v4103 = vmax.f32 %v3292, 0.0
        %v4104 = vmax.f32 %v3294, 0.0
        %v4105 = vmax.f32 %v3645, 0.0
        %v4106 = vmax.f32 %v3647, 0.0
        %v4107 = vmax.f32 %v2592, 0.0
        %v4108 = vmax.f32 %v2594, 0.0
        %v4109 = vmax.f32 %v2945, 0.0
        %v4110 = vmax.f32 %v2947, 0.0
        %v4111 = vmax.f32 %v3298, 0.0
        %v4112 = vmax.f32 %v3300, 0.0
        %v4113 = vmax.f32 %v3651, 0.0
        %v4114 = vmax.f32 %v3653, 0.0
        %v4115 = vmax.f32 %v2596, 0.0
        %v4116 = vmax.f32 %v2598, 0.0
        %v4117 = vmax.f32 %v2949, 0.0
        %v4118 = vmax.f32 %v2951, 0.0
        %v4119 = vmax.f32 %v3302, 0.0
        %v4120 = vmax.f32 %v3304, 0.0
        %v4121 = vmax.f32 %v3655, 0.0
        %v4122 = vmax.f32 %v3657, 0.0
        %v4123 = vmax.f32 %v2602, 0.0
        %v4124 = vmax.f32 %v2604, 0.0
        %v4125 = vmax.f32 %v2955, 0.0
        %v4126 = vmax.f32 %v2957, 0.0
        %v4127 = vmax.f32 %v3308, 0.0
        %v4128 = vmax.f32 %v3310, 0.0
        %v4129 = vmax.f32 %v3661, 0.0
        %v4130 = vmax.f32 %v3663, 0.0
        %v4131 = vmax.f32 %v2606, 0.0
        %v4132 = vmax.f32 %v2608, 0.0
        %v4133 = vmax.f32 %v2959, 0.0
        %v4134 = vmax.f32 %v2961, 0.0
        %v4135 = vmax.f32 %v3312, 0.0
        %v4136 = vmax.f32 %v3314, 0.0
        %v4137 = vmax.f32 %v3665, 0.0
        %v4138 = vmax.f32 %v3667, 0.0
        %v4139 = vmax.f32 %v2612, 0.0
        %v4140 = vmax.f32 %v2614, 0.0
        %v4141 = vmax.f32 %v2965, 0.0
        %v4142 = vmax.f32 %v2967, 0.0
        %v4143 = vmax.f32 %v3318, 0.0
        %v4144 = vmax.f32 %v3320, 0.0
        %v4145 = vmax.f32 %v3671, 0.0
        %v4146 = vmax.f32 %v3673, 0.0
        %v4147 = vmax.f32 %v2616, 0.0
        %v4148 = vmax.f32 %v2618, 0.0
        %v4149 = vmax.f32 %v2969, 0.0
        %v4150 = vmax.f32 %v2971, 0.0
        %v4151 = vmax.f32 %v3322, 0.0
        %v4152 = vmax.f32 %v3324, 0.0
        %v4153 = vmax.f32 %v3675, 0.0
        %v4154 = vmax.f32 %v3677, 0.0
        %v4155 = vmax.f32 %v2622, 0.0
        %v4156 = vmax.f32 %v2624, 0.0
        %v4157 = vmax.f32 %v2975, 0.0
        %v4158 = vmax.f32 %v2977, 0.0
        %v4159 = vmax.f32 %v3328, 0.0
        %v4160 = vmax.f32 %v3330, 0.0
        %v4161 = vmax.f32 %v3681, 0.0
        %v4162 = vmax.f32 %v3683, 0.0
        %v4163 = vmax.f32 %v2626, 0.0
        %v4164 = vmax.f32 %v2628, 0.0
        %v4165 = vmax.f32 %v2979, 0.0
        %v4166 = vmax.f32 %v2981, 0.0
        %v4167 = vmax.f32 %v3332, 0.0
        %v4168 = vmax.f32 %v3334, 0.0
        %v4169 = vmax.f32 %v3685, 0.0
        %v4170 = vmax.f32 %v3687, 0.0
        %v4171 = vmax.f32 %v2632, 0.0
        %v4172 = vmax.f32 %v2634, 0.0
        %v4173 = vmax.f32 %v2985, 0.0
        %v4174 = vmax.f32 %v2987, 0.0
        %v4175 = vmax.f32 %v3338, 0.0
        %v4176 = vmax.f32 %v3340, 0.0
        %v4177 = vmax.f32 %v3691, 0.0
        %v4178 = vmax.f32 %v3693, 0.0
        %v4179 = vmax.f32 %v2636, 0.0
        %v4180 = vmax.f32 %v2638, 0.0
        %v4181 = vmax.f32 %v2989, 0.0
        %v4182 = vmax.f32 %v2991, 0.0
        %v4183 = vmax.f32 %v3342, 0.0
        %v4184 = vmax.f32 %v3344, 0.0
        %v4185 = vmax.f32 %v3695, 0.0
        %v4186 = vmax.f32 %v3697, 0.0
        %v4187 = vmax.f32 %v2642, 0.0
        %v4188 = vmax.f32 %v2644, 0.0
        %v4189 = vmax.f32 %v2995, 0.0
        %v4190 = vmax.f32 %v2997, 0.0
        %v4191 = vmax.f32 %v3348, 0.0
        %v4192 = vmax.f32 %v3350, 0.0
        %v4193 = vmax.f32 %v3701, 0.0
        %v4194 = vmax.f32 %v3703, 0.0
        %v4195 = vmax.f32 %v2646, 0.0
        %v4196 = vmax.f32 %v2648, 0.0
        %v4197 = vmax.f32 %v2999, 0.0
        %v4198 = vmax.f32 %v3001, 0.0
        %v4199 = vmax.f32 %v3352, 0.0
        %v4200 = vmax.f32 %v3354, 0.0
        %v4201 = vmax.f32 %v3705, 0.0
        %v4202 = vmax.f32 %v3707, 0.0
        %v4203 = vmax.f32 %v2652, 0.0
        %v4204 = vmax.f32 %v2654, 0.0
        %v4205 = vmax.f32 %v3005, 0.0
        %v4206 = vmax.f32 %v3007, 0.0
        %v4207 = vmax.f32 %v3358, 0.0
        %v4208 = vmax.f32 %v3360, 0.0
        %v4209 = vmax.f32 %v3711, 0.0
        %v4210 = vmax.f32 %v3713, 0.0
        %v4211 = vmax.f32 %v2656, 0.0
        %v4212 = vmax.f32 %v2658, 0.0
        %v4213 = vmax.f32 %v3009, 0.0
        %v4214 = vmax.f32 %v3011, 0.0
        %v4215 = vmax.f32 %v3362, 0.0
        %v4216 = vmax.f32 %v3364, 0.0
        %v4217 = vmax.f32 %v3715, 0.0
        %v4218 = vmax.f32 %v3717, 0.0
        %v4219 = vmax.f32 %v2662, 0.0
        %v4220 = vmax.f32 %v2664, 0.0
        %v4221 = vmax.f32 %v3015, 0.0
        %v4222 = vmax.f32 %v3017, 0.0
        %v4223 = vmax.f32 %v3368, 0.0
        %v4224 = vmax.f32 %v3370, 0.0
        %v4225 = vmax.f32 %v3721, 0.0
        %v4226 = vmax.f32 %v3723, 0.0
        %v4227 = vmax.f32 %v2666, 0.0
        %v4228 = vmax.f32 %v2668, 0.0
        %v4229 = vmax.f32 %v3019, 0.0
        %v4230 = vmax.f32 %v3021, 0.0
        %v4231 = vmax.f32 %v3372, 0.0
        %v4232 = vmax.f32 %v3374, 0.0
        %v4233 = vmax.f32 %v3725, 0.0
        %v4234 = vmax.f32 %v3727, 0.0
        %v4235 = vmax.f32 %v2672, 0.0
        %v4236 = vmax.f32 %v2674, 0.0
        %v4237 = vmax.f32 %v3025, 0.0
        %v4238 = vmax.f32 %v3027, 0.0
        %v4239 = vmax.f32 %v3378, 0.0
        %v4240 = vmax.f32 %v3380, 0.0
        %v4241 = vmax.f32 %v3731, 0.0
        %v4242 = vmax.f32 %v3733, 0.0
        %v4243 = vmax.f32 %v2676, 0.0
        %v4244 = vmax.f32 %v2678, 0.0
        %v4245 = vmax.f32 %v3029, 0.0
        %v4246 = vmax.f32 %v3031, 0.0
        %v4247 = vmax.f32 %v3382, 0.0
        %v4248 = vmax.f32 %v3384, 0.0
        %v4249 = vmax.f32 %v3735, 0.0
        %v4250 = vmax.f32 %v3737, 0.0
        %v4251 = vld [vmem:[#allocation2] sm:$0xff]
        %v4252 = vmax.f32 %v3739, %v3747
        %v4253 = vmax.f32 %v4252, %v3755
        %v4254 = vmax.f32 %v4253, %v3763
        %v4255 = vmax.f32 %v4254, %v3771
        %v4256 = vmax.f32 %v4255, %v3779
        %v4257 = vmax.f32 %v4256, %v3787
        %v4258 = vmax.f32 %v4257, %v3795
        %v4259 = vmax.f32 %v4258, %v3803
        %v4260 = vmax.f32 %v4259, %v3811
        %v4261 = vmax.f32 %v4260, %v3819
        %v4262 = vmax.f32 %v4261, %v3827
        %v4263 = vmax.f32 %v4262, %v3835
        %v4264 = vmax.f32 %v4263, %v3843
        %v4265 = vmax.f32 %v4264, %v3851
        %v4266 = vmax.f32 %v4265, %v3859
        %v4267 = vmax.f32 %v4266, %v3867
        %v4268 = vmax.f32 %v4267, %v3875
        %v4269 = vmax.f32 %v4268, %v3883
        %v4270 = vmax.f32 %v4269, %v3891
        %v4271 = vmax.f32 %v4270, %v3899
        %v4272 = vmax.f32 %v4271, %v3907
        %v4273 = vmax.f32 %v4272, %v3915
        %v4274 = vmax.f32 %v4273, %v3923
        %v4275 = vmax.f32 %v4274, %v3931
        %v4276 = vmax.f32 %v4275, %v3939
        %v4277 = vmax.f32 %v4276, %v3947
        %v4278 = vmax.f32 %v4277, %v3955
        %v4279 = vmax.f32 %v4278, %v3963
        %v4280 = vmax.f32 %v4279, %v3971
        %v4281 = vmax.f32 %v4280, %v3979
        %v4282 = vmax.f32 %v4281, %v3987
        %v4283 = vmax.f32 %v4282, %v3995
        %v4284 = vmax.f32 %v4283, %v4003
        %v4285 = vmax.f32 %v4284, %v4011
        %v4286 = vmax.f32 %v4285, %v4019
        %v4287 = vmax.f32 %v4286, %v4027
        %v4288 = vmax.f32 %v4287, %v4035
        %v4289 = vmax.f32 %v4288, %v4043
        %v4290 = vmax.f32 %v4289, %v4051
        %v4291 = vmax.f32 %v4290, %v4059
        %v4292 = vmax.f32 %v4291, %v4067
        %v4293 = vmax.f32 %v4292, %v4075
        %v4294 = vmax.f32 %v4293, %v4083
        %v4295 = vmax.f32 %v4294, %v4091
        %v4296 = vmax.f32 %v4295, %v4099
        %v4297 = vmax.f32 %v4296, %v4107
        %v4298 = vmax.f32 %v4297, %v4115
        %v4299 = vmax.f32 %v4298, %v4123
        %v4300 = vmax.f32 %v4299, %v4131
        %v4301 = vmax.f32 %v4300, %v4139
        %v4302 = vmax.f32 %v4301, %v4147
        %v4303 = vmax.f32 %v4302, %v4155
        %v4304 = vmax.f32 %v4303, %v4163
        %v4305 = vmax.f32 %v4304, %v4171
        %v4306 = vmax.f32 %v4305, %v4179
        %v4307 = vmax.f32 %v4306, %v4187
        %v4308 = vmax.f32 %v4307, %v4195
        %v4309 = vmax.f32 %v4308, %v4203
        %v4310 = vmax.f32 %v4309, %v4211
        %v4311 = vmax.f32 %v4310, %v4219
        %v4312 = vmax.f32 %v4311, %v4227
        %v4313 = vmax.f32 %v4312, %v4235
        %v4314 = vmax.f32 %v4313, %v4243
        %v4315 = vrot.slane %v4314, 4
        %v4316 = vmax.f32 %v4314, %v4315
        %v4317 = vrot.slane %v4316, 2
        %v4318 = vmax.f32 %v4316, %v4317
        %v4319 = vrot.slane %v4318, 1
        %v4320 = vmax.f32 %v4318, %v4319
        %v4321 = vmax.f32 %v3740, %v3748
        %v4322 = vmax.f32 %v4321, %v3756
        %v4323 = vmax.f32 %v4322, %v3764
        %v4324 = vmax.f32 %v4323, %v3772
        %v4325 = vmax.f32 %v4324, %v3780
        %v4326 = vmax.f32 %v4325, %v3788
        %v4327 = vmax.f32 %v4326, %v3796
        %v4328 = vmax.f32 %v4327, %v3804
        %v4329 = vmax.f32 %v4328, %v3812
        %v4330 = vmax.f32 %v4329, %v3820
        %v4331 = vmax.f32 %v4330, %v3828
        %v4332 = vmax.f32 %v4331, %v3836
        %v4333 = vmax.f32 %v4332, %v3844
        %v4334 = vmax.f32 %v4333, %v3852
        %v4335 = vmax.f32 %v4334, %v3860
        %v4336 = vmax.f32 %v4335, %v3868
        %v4337 = vmax.f32 %v4336, %v3876
        %v4338 = vmax.f32 %v4337, %v3884
        %v4339 = vmax.f32 %v4338, %v3892
        %v4340 = vmax.f32 %v4339, %v3900
        %v4341 = vmax.f32 %v4340, %v3908
        %v4342 = vmax.f32 %v4341, %v3916
        %v4343 = vmax.f32 %v4342, %v3924
        %v4344 = vmax.f32 %v4343, %v3932
        %v4345 = vmax.f32 %v4344, %v3940
        %v4346 = vmax.f32 %v4345, %v3948
        %v4347 = vmax.f32 %v4346, %v3956
        %v4348 = vmax.f32 %v4347, %v3964
        %v4349 = vmax.f32 %v4348, %v3972
        %v4350 = vmax.f32 %v4349, %v3980
        %v4351 = vmax.f32 %v4350, %v3988
        %v4352 = vmax.f32 %v4351, %v3996
        %v4353 = vmax.f32 %v4352, %v4004
        %v4354 = vmax.f32 %v4353, %v4012
        %v4355 = vmax.f32 %v4354, %v4020
        %v4356 = vmax.f32 %v4355, %v4028
        %v4357 = vmax.f32 %v4356, %v4036
        %v4358 = vmax.f32 %v4357, %v4044
        %v4359 = vmax.f32 %v4358, %v4052
        %v4360 = vmax.f32 %v4359, %v4060
        %v4361 = vmax.f32 %v4360, %v4068
        %v4362 = vmax.f32 %v4361, %v4076
        %v4363 = vmax.f32 %v4362, %v4084
        %v4364 = vmax.f32 %v4363, %v4092
        %v4365 = vmax.f32 %v4364, %v4100
        %v4366 = vmax.f32 %v4365, %v4108
        %v4367 = vmax.f32 %v4366, %v4116
        %v4368 = vmax.f32 %v4367, %v4124
        %v4369 = vmax.f32 %v4368, %v4132
        %v4370 = vmax.f32 %v4369, %v4140
        %v4371 = vmax.f32 %v4370, %v4148
        %v4372 = vmax.f32 %v4371, %v4156
        %v4373 = vmax.f32 %v4372, %v4164
        %v4374 = vmax.f32 %v4373, %v4172
        %v4375 = vmax.f32 %v4374, %v4180
        %v4376 = vmax.f32 %v4375, %v4188
        %v4377 = vmax.f32 %v4376, %v4196
        %v4378 = vmax.f32 %v4377, %v4204
        %v4379 = vmax.f32 %v4378, %v4212
        %v4380 = vmax.f32 %v4379, %v4220
        %v4381 = vmax.f32 %v4380, %v4228
        %v4382 = vmax.f32 %v4381, %v4236
        %v4383 = vmax.f32 %v4382, %v4244
        %v4384 = vrot.slane %v4383, 4
        %v4385 = vmax.f32 %v4383, %v4384
        %v4386 = vrot.slane %v4385, 2
        %v4387 = vmax.f32 %v4385, %v4386
        %v4388 = vrot.slane %v4387, 1
        %v4389 = vmax.f32 %v4387, %v4388
        %v4390 = vmax.f32 %v3741, %v3749
        %v4391 = vmax.f32 %v4390, %v3757
        %v4392 = vmax.f32 %v4391, %v3765
        %v4393 = vmax.f32 %v4392, %v3773
        %v4394 = vmax.f32 %v4393, %v3781
        %v4395 = vmax.f32 %v4394, %v3789
        %v4396 = vmax.f32 %v4395, %v3797
        %v4397 = vmax.f32 %v4396, %v3805
        %v4398 = vmax.f32 %v4397, %v3813
        %v4399 = vmax.f32 %v4398, %v3821
        %v4400 = vmax.f32 %v4399, %v3829
        %v4401 = vmax.f32 %v4400, %v3837
        %v4402 = vmax.f32 %v4401, %v3845
        %v4403 = vmax.f32 %v4402, %v3853
        %v4404 = vmax.f32 %v4403, %v3861
        %v4405 = vmax.f32 %v4404, %v3869
        %v4406 = vmax.f32 %v4405, %v3877
        %v4407 = vmax.f32 %v4406, %v3885
        %v4408 = vmax.f32 %v4407, %v3893
        %v4409 = vmax.f32 %v4408, %v3901
        %v4410 = vmax.f32 %v4409, %v3909
        %v4411 = vmax.f32 %v4410, %v3917
        %v4412 = vmax.f32 %v4411, %v3925
        %v4413 = vmax.f32 %v4412, %v3933
        %v4414 = vmax.f32 %v4413, %v3941
        %v4415 = vmax.f32 %v4414, %v3949
        %v4416 = vmax.f32 %v4415, %v3957
        %v4417 = vmax.f32 %v4416, %v3965
        %v4418 = vmax.f32 %v4417, %v3973
        %v4419 = vmax.f32 %v4418, %v3981
        %v4420 = vmax.f32 %v4419, %v3989
        %v4421 = vmax.f32 %v4420, %v3997
        %v4422 = vmax.f32 %v4421, %v4005
        %v4423 = vmax.f32 %v4422, %v4013
        %v4424 = vmax.f32 %v4423, %v4021
        %v4425 = vmax.f32 %v4424, %v4029
        %v4426 = vmax.f32 %v4425, %v4037
        %v4427 = vmax.f32 %v4426, %v4045
        %v4428 = vmax.f32 %v4427, %v4053
        %v4429 = vmax.f32 %v4428, %v4061
        %v4430 = vmax.f32 %v4429, %v4069
        %v4431 = vmax.f32 %v4430, %v4077
        %v4432 = vmax.f32 %v4431, %v4085
        %v4433 = vmax.f32 %v4432, %v4093
        %v4434 = vmax.f32 %v4433, %v4101
        %v4435 = vmax.f32 %v4434, %v4109
        %v4436 = vmax.f32 %v4435, %v4117
        %v4437 = vmax.f32 %v4436, %v4125
        %v4438 = vmax.f32 %v4437, %v4133
        %v4439 = vmax.f32 %v4438, %v4141
        %v4440 = vmax.f32 %v4439, %v4149
        %v4441 = vmax.f32 %v4440, %v4157
        %v4442 = vmax.f32 %v4441, %v4165
        %v4443 = vmax.f32 %v4442, %v4173
        %v4444 = vmax.f32 %v4443, %v4181
        %v4445 = vmax.f32 %v4444, %v4189
        %v4446 = vmax.f32 %v4445, %v4197
        %v4447 = vmax.f32 %v4446, %v4205
        %v4448 = vmax.f32 %v4447, %v4213
        %v4449 = vmax.f32 %v4448, %v4221
        %v4450 = vmax.f32 %v4449, %v4229
        %v4451 = vmax.f32 %v4450, %v4237
        %v4452 = vmax.f32 %v4451, %v4245
        %v4453 = vrot.slane %v4452, 4
        %v4454 = vmax.f32 %v4452, %v4453
        %v4455 = vrot.slane %v4454, 2
        %v4456 = vmax.f32 %v4454, %v4455
        %v4457 = vrot.slane %v4456, 1
        %v4458 = vmax.f32 %v4456, %v4457
        %v4459 = vmax.f32 %v3742, %v3750
        %v4460 = vmax.f32 %v4459, %v3758
        %v4461 = vmax.f32 %v4460, %v3766
        %v4462 = vmax.f32 %v4461, %v3774
        %v4463 = vmax.f32 %v4462, %v3782
        %v4464 = vmax.f32 %v4463, %v3790
        %v4465 = vmax.f32 %v4464, %v3798
        %v4466 = vmax.f32 %v4465, %v3806
        %v4467 = vmax.f32 %v4466, %v3814
        %v4468 = vmax.f32 %v4467, %v3822
        %v4469 = vmax.f32 %v4468, %v3830
        %v4470 = vmax.f32 %v4469, %v3838
        %v4471 = vmax.f32 %v4470, %v3846
        %v4472 = vmax.f32 %v4471, %v3854
        %v4473 = vmax.f32 %v4472, %v3862
        %v4474 = vmax.f32 %v4473, %v3870
        %v4475 = vmax.f32 %v4474, %v3878
        %v4476 = vmax.f32 %v4475, %v3886
        %v4477 = vmax.f32 %v4476, %v3894
        %v4478 = vmax.f32 %v4477, %v3902
        %v4479 = vmax.f32 %v4478, %v3910
        %v4480 = vmax.f32 %v4479, %v3918
        %v4481 = vmax.f32 %v4480, %v3926
        %v4482 = vmax.f32 %v4481, %v3934
        %v4483 = vmax.f32 %v4482, %v3942
        %v4484 = vmax.f32 %v4483, %v3950
        %v4485 = vmax.f32 %v4484, %v3958
        %v4486 = vmax.f32 %v4485, %v3966
        %v4487 = vmax.f32 %v4486, %v3974
        %v4488 = vmax.f32 %v4487, %v3982
        %v4489 = vmax.f32 %v4488, %v3990
        %v4490 = vmax.f32 %v4489, %v3998
        %v4491 = vmax.f32 %v4490, %v4006
        %v4492 = vmax.f32 %v4491, %v4014
        %v4493 = vmax.f32 %v4492, %v4022
        %v4494 = vmax.f32 %v4493, %v4030
        %v4495 = vmax.f32 %v4494, %v4038
        %v4496 = vmax.f32 %v4495, %v4046
        %v4497 = vmax.f32 %v4496, %v4054
        %v4498 = vmax.f32 %v4497, %v4062
        %v4499 = vmax.f32 %v4498, %v4070
        %v4500 = vmax.f32 %v4499, %v4078
        %v4501 = vmax.f32 %v4500, %v4086
        %v4502 = vmax.f32 %v4501, %v4094
        %v4503 = vmax.f32 %v4502, %v4102
        %v4504 = vmax.f32 %v4503, %v4110
        %v4505 = vmax.f32 %v4504, %v4118
        %v4506 = vmax.f32 %v4505, %v4126
        %v4507 = vmax.f32 %v4506, %v4134
        %v4508 = vmax.f32 %v4507, %v4142
        %v4509 = vmax.f32 %v4508, %v4150
        %v4510 = vmax.f32 %v4509, %v4158
        %v4511 = vmax.f32 %v4510, %v4166
        %v4512 = vmax.f32 %v4511, %v4174
        %v4513 = vmax.f32 %v4512, %v4182
        %v4514 = vmax.f32 %v4513, %v4190
        %v4515 = vmax.f32 %v4514, %v4198
        %v4516 = vmax.f32 %v4515, %v4206
        %v4517 = vmax.f32 %v4516, %v4214
        %v4518 = vmax.f32 %v4517, %v4222
        %v4519 = vmax.f32 %v4518, %v4230
        %v4520 = vmax.f32 %v4519, %v4238
        %v4521 = vmax.f32 %v4520, %v4246
        %v4522 = vrot.slane %v4521, 4
        %v4523 = vmax.f32 %v4521, %v4522
        %v4524 = vrot.slane %v4523, 2
        %v4525 = vmax.f32 %v4523, %v4524
        %v4526 = vrot.slane %v4525, 1
        %v4527 = vmax.f32 %v4525, %v4526
        %v4528 = vmax.f32 %v3743, %v3751
        %v4529 = vmax.f32 %v4528, %v3759
        %v4530 = vmax.f32 %v4529, %v3767
        %v4531 = vmax.f32 %v4530, %v3775
        %v4532 = vmax.f32 %v4531, %v3783
        %v4533 = vmax.f32 %v4532, %v3791
        %v4534 = vmax.f32 %v4533, %v3799
        %v4535 = vmax.f32 %v4534, %v3807
        %v4536 = vmax.f32 %v4535, %v3815
        %v4537 = vmax.f32 %v4536, %v3823
        %v4538 = vmax.f32 %v4537, %v3831
        %v4539 = vmax.f32 %v4538, %v3839
        %v4540 = vmax.f32 %v4539, %v3847
        %v4541 = vmax.f32 %v4540, %v3855
        %v4542 = vmax.f32 %v4541, %v3863
        %v4543 = vmax.f32 %v4542, %v3871
        %v4544 = vmax.f32 %v4543, %v3879
        %v4545 = vmax.f32 %v4544, %v3887
        %v4546 = vmax.f32 %v4545, %v3895
        %v4547 = vmax.f32 %v4546, %v3903
        %v4548 = vmax.f32 %v4547, %v3911
        %v4549 = vmax.f32 %v4548, %v3919
        %v4550 = vmax.f32 %v4549, %v3927
        %v4551 = vmax.f32 %v4550, %v3935
        %v4552 = vmax.f32 %v4551, %v3943
        %v4553 = vmax.f32 %v4552, %v3951
        %v4554 = vmax.f32 %v4553, %v3959
        %v4555 = vmax.f32 %v4554, %v3967
        %v4556 = vmax.f32 %v4555, %v3975
        %v4557 = vmax.f32 %v4556, %v3983
        %v4558 = vmax.f32 %v4557, %v3991
        %v4559 = vmax.f32 %v4558, %v3999
        %v4560 = vmax.f32 %v4559, %v4007
        %v4561 = vmax.f32 %v4560, %v4015
        %v4562 = vmax.f32 %v4561, %v4023
        %v4563 = vmax.f32 %v4562, %v4031
        %v4564 = vmax.f32 %v4563, %v4039
        %v4565 = vmax.f32 %v4564, %v4047
        %v4566 = vmax.f32 %v4565, %v4055
        %v4567 = vmax.f32 %v4566, %v4063
        %v4568 = vmax.f32 %v4567, %v4071
        %v4569 = vmax.f32 %v4568, %v4079
        %v4570 = vmax.f32 %v4569, %v4087
        %v4571 = vmax.f32 %v4570, %v4095
        %v4572 = vmax.f32 %v4571, %v4103
        %v4573 = vmax.f32 %v4572, %v4111
        %v4574 = vmax.f32 %v4573, %v4119
        %v4575 = vmax.f32 %v4574, %v4127
        %v4576 = vmax.f32 %v4575, %v4135
        %v4577 = vmax.f32 %v4576, %v4143
        %v4578 = vmax.f32 %v4577, %v4151
        %v4579 = vmax.f32 %v4578, %v4159
        %v4580 = vmax.f32 %v4579, %v4167
        %v4581 = vmax.f32 %v4580, %v4175
        %v4582 = vmax.f32 %v4581, %v4183
        %v4583 = vmax.f32 %v4582, %v4191
        %v4584 = vmax.f32 %v4583, %v4199
        %v4585 = vmax.f32 %v4584, %v4207
        %v4586 = vmax.f32 %v4585, %v4215
        %v4587 = vmax.f32 %v4586, %v4223
        %v4588 = vmax.f32 %v4587, %v4231
        %v4589 = vmax.f32 %v4588, %v4239
        %v4590 = vmax.f32 %v4589, %v4247
        %v4591 = vrot.slane %v4590, 4
        %v4592 = vmax.f32 %v4590, %v4591
        %v4593 = vrot.slane %v4592, 2
        %v4594 = vmax.f32 %v4592, %v4593
        %v4595 = vrot.slane %v4594, 1
        %v4596 = vmax.f32 %v4594, %v4595
        %v4597 = vmax.f32 %v3744, %v3752
        %v4598 = vmax.f32 %v4597, %v3760
        %v4599 = vmax.f32 %v4598, %v3768
        %v4600 = vmax.f32 %v4599, %v3776
        %v4601 = vmax.f32 %v4600, %v3784
        %v4602 = vmax.f32 %v4601, %v3792
        %v4603 = vmax.f32 %v4602, %v3800
        %v4604 = vmax.f32 %v4603, %v3808
        %v4605 = vmax.f32 %v4604, %v3816
        %v4606 = vmax.f32 %v4605, %v3824
        %v4607 = vmax.f32 %v4606, %v3832
        %v4608 = vmax.f32 %v4607, %v3840
        %v4609 = vmax.f32 %v4608, %v3848
        %v4610 = vmax.f32 %v4609, %v3856
        %v4611 = vmax.f32 %v4610, %v3864
        %v4612 = vmax.f32 %v4611, %v3872
        %v4613 = vmax.f32 %v4612, %v3880
        %v4614 = vmax.f32 %v4613, %v3888
        %v4615 = vmax.f32 %v4614, %v3896
        %v4616 = vmax.f32 %v4615, %v3904
        %v4617 = vmax.f32 %v4616, %v3912
        %v4618 = vmax.f32 %v4617, %v3920
        %v4619 = vmax.f32 %v4618, %v3928
        %v4620 = vmax.f32 %v4619, %v3936
        %v4621 = vmax.f32 %v4620, %v3944
        %v4622 = vmax.f32 %v4621, %v3952
        %v4623 = vmax.f32 %v4622, %v3960
        %v4624 = vmax.f32 %v4623, %v3968
        %v4625 = vmax.f32 %v4624, %v3976
        %v4626 = vmax.f32 %v4625, %v3984
        %v4627 = vmax.f32 %v4626, %v3992
        %v4628 = vmax.f32 %v4627, %v4000
        %v4629 = vmax.f32 %v4628, %v4008
        %v4630 = vmax.f32 %v4629, %v4016
        %v4631 = vmax.f32 %v4630, %v4024
        %v4632 = vmax.f32 %v4631, %v4032
        %v4633 = vmax.f32 %v4632, %v4040
        %v4634 = vmax.f32 %v4633, %v4048
        %v4635 = vmax.f32 %v4634, %v4056
        %v4636 = vmax.f32 %v4635, %v4064
        %v4637 = vmax.f32 %v4636, %v4072
        %v4638 = vmax.f32 %v4637, %v4080
        %v4639 = vmax.f32 %v4638, %v4088
        %v4640 = vmax.f32 %v4639, %v4096
        %v4641 = vmax.f32 %v4640, %v4104
        %v4642 = vmax.f32 %v4641, %v4112
        %v4643 = vmax.f32 %v4642, %v4120
        %v4644 = vmax.f32 %v4643, %v4128
        %v4645 = vmax.f32 %v4644, %v4136
        %v4646 = vmax.f32 %v4645, %v4144
        %v4647 = vmax.f32 %v4646, %v4152
        %v4648 = vmax.f32 %v4647, %v4160
        %v4649 = vmax.f32 %v4648, %v4168
        %v4650 = vmax.f32 %v4649, %v4176
        %v4651 = vmax.f32 %v4650, %v4184
        %v4652 = vmax.f32 %v4651, %v4192
        %v4653 = vmax.f32 %v4652, %v4200
        %v4654 = vmax.f32 %v4653, %v4208
        %v4655 = vmax.f32 %v4654, %v4216
        %v4656 = vmax.f32 %v4655, %v4224
        %v4657 = vmax.f32 %v4656, %v4232
        %v4658 = vmax.f32 %v4657, %v4240
        %v4659 = vmax.f32 %v4658, %v4248
        %v4660 = vrot.slane %v4659, 4
        %v4661 = vmax.f32 %v4659, %v4660
        %v4662 = vrot.slane %v4661, 2
        %v4663 = vmax.f32 %v4661, %v4662
        %v4664 = vrot.slane %v4663, 1
        %v4665 = vmax.f32 %v4663, %v4664
        %v4666 = vmax.f32 %v3745, %v3753
        %v4667 = vmax.f32 %v4666, %v3761
        %v4668 = vmax.f32 %v4667, %v3769
        %v4669 = vmax.f32 %v4668, %v3777
        %v4670 = vmax.f32 %v4669, %v3785
        %v4671 = vmax.f32 %v4670, %v3793
        %v4672 = vmax.f32 %v4671, %v3801
        %v4673 = vmax.f32 %v4672, %v3809
        %v4674 = vmax.f32 %v4673, %v3817
        %v4675 = vmax.f32 %v4674, %v3825
        %v4676 = vmax.f32 %v4675, %v3833
        %v4677 = vmax.f32 %v4676, %v3841
        %v4678 = vmax.f32 %v4677, %v3849
        %v4679 = vmax.f32 %v4678, %v3857
        %v4680 = vmax.f32 %v4679, %v3865
        %v4681 = vmax.f32 %v4680, %v3873
        %v4682 = vmax.f32 %v4681, %v3881
        %v4683 = vmax.f32 %v4682, %v3889
        %v4684 = vmax.f32 %v4683, %v3897
        %v4685 = vmax.f32 %v4684, %v3905
        %v4686 = vmax.f32 %v4685, %v3913
        %v4687 = vmax.f32 %v4686, %v3921
        %v4688 = vmax.f32 %v4687, %v3929
        %v4689 = vmax.f32 %v4688, %v3937
        %v4690 = vmax.f32 %v4689, %v3945
        %v4691 = vmax.f32 %v4690, %v3953
        %v4692 = vmax.f32 %v4691, %v3961
        %v4693 = vmax.f32 %v4692, %v3969
        %v4694 = vmax.f32 %v4693, %v3977
        %v4695 = vmax.f32 %v4694, %v3985
        %v4696 = vmax.f32 %v4695, %v3993
        %v4697 = vmax.f32 %v4696, %v4001
        %v4698 = vmax.f32 %v4697, %v4009
        %v4699 = vmax.f32 %v4698, %v4017
        %v4700 = vmax.f32 %v4699, %v4025
        %v4701 = vmax.f32 %v4700, %v4033
        %v4702 = vmax.f32 %v4701, %v4041
        %v4703 = vmax.f32 %v4702, %v4049
        %v4704 = vmax.f32 %v4703, %v4057
        %v4705 = vmax.f32 %v4704, %v4065
        %v4706 = vmax.f32 %v4705, %v4073
        %v4707 = vmax.f32 %v4706, %v4081
        %v4708 = vmax.f32 %v4707, %v4089
        %v4709 = vmax.f32 %v4708, %v4097
        %v4710 = vmax.f32 %v4709, %v4105
        %v4711 = vmax.f32 %v4710, %v4113
        %v4712 = vmax.f32 %v4711, %v4121
        %v4713 = vmax.f32 %v4712, %v4129
        %v4714 = vmax.f32 %v4713, %v4137
        %v4715 = vmax.f32 %v4714, %v4145
        %v4716 = vmax.f32 %v4715, %v4153
        %v4717 = vmax.f32 %v4716, %v4161
        %v4718 = vmax.f32 %v4717, %v4169
        %v4719 = vmax.f32 %v4718, %v4177
        %v4720 = vmax.f32 %v4719, %v4185
        %v4721 = vmax.f32 %v4720, %v4193
        %v4722 = vmax.f32 %v4721, %v4201
        %v4723 = vmax.f32 %v4722, %v4209
        %v4724 = vmax.f32 %v4723, %v4217
        %v4725 = vmax.f32 %v4724, %v4225
        %v4726 = vmax.f32 %v4725, %v4233
        %v4727 = vmax.f32 %v4726, %v4241
        %v4728 = vmax.f32 %v4727, %v4249
        %v4729 = vrot.slane %v4728, 4
        %v4730 = vmax.f32 %v4728, %v4729
        %v4731 = vrot.slane %v4730, 2
        %v4732 = vmax.f32 %v4730, %v4731
        %v4733 = vrot.slane %v4732, 1
        %v4734 = vmax.f32 %v4732, %v4733
        %v4735 = vmax.f32 %v3746, %v3754
        %v4736 = vmax.f32 %v4735, %v3762
        %v4737 = vmax.f32 %v4736, %v3770
        %v4738 = vmax.f32 %v4737, %v3778
        %v4739 = vmax.f32 %v4738, %v3786
        %v4740 = vmax.f32 %v4739, %v3794
        %v4741 = vmax.f32 %v4740, %v3802
        %v4742 = vmax.f32 %v4741, %v3810
        %v4743 = vmax.f32 %v4742, %v3818
        %v4744 = vmax.f32 %v4743, %v3826
        %v4745 = vmax.f32 %v4744, %v3834
        %v4746 = vmax.f32 %v4745, %v3842
        %v4747 = vmax.f32 %v4746, %v3850
        %v4748 = vmax.f32 %v4747, %v3858
        %v4749 = vmax.f32 %v4748, %v3866
        %v4750 = vmax.f32 %v4749, %v3874
        %v4751 = vmax.f32 %v4750, %v3882
        %v4752 = vmax.f32 %v4751, %v3890
        %v4753 = vmax.f32 %v4752, %v3898
        %v4754 = vmax.f32 %v4753, %v3906
        %v4755 = vmax.f32 %v4754, %v3914
        %v4756 = vmax.f32 %v4755, %v3922
        %v4757 = vmax.f32 %v4756, %v3930
        %v4758 = vmax.f32 %v4757, %v3938
        %v4759 = vmax.f32 %v4758, %v3946
        %v4760 = vmax.f32 %v4759, %v3954
        %v4761 = vmax.f32 %v4760, %v3962
        %v4762 = vmax.f32 %v4761, %v3970
        %v4763 = vmax.f32 %v4762, %v3978
        %v4764 = vmax.f32 %v4763, %v3986
        %v4765 = vmax.f32 %v4764, %v3994
        %v4766 = vmax.f32 %v4765, %v4002
        %v4767 = vmax.f32 %v4766, %v4010
        %v4768 = vmax.f32 %v4767, %v4018
        %v4769 = vmax.f32 %v4768, %v4026
        %v4770 = vmax.f32 %v4769, %v4034
        %v4771 = vmax.f32 %v4770, %v4042
        %v4772 = vmax.f32 %v4771, %v4050
        %v4773 = vmax.f32 %v4772, %v4058
        %v4774 = vmax.f32 %v4773, %v4066
        %v4775 = vmax.f32 %v4774, %v4074
        %v4776 = vmax.f32 %v4775, %v4082
        %v4777 = vmax.f32 %v4776, %v4090
        %v4778 = vmax.f32 %v4777, %v4098
        %v4779 = vmax.f32 %v4778, %v4106
        %v4780 = vmax.f32 %v4779, %v4114
        %v4781 = vmax.f32 %v4780, %v4122
        %v4782 = vmax.f32 %v4781, %v4130
        %v4783 = vmax.f32 %v4782, %v4138
        %v4784 = vmax.f32 %v4783, %v4146
        %v4785 = vmax.f32 %v4784, %v4154
        %v4786 = vmax.f32 %v4785, %v4162
        %v4787 = vmax.f32 %v4786, %v4170
        %v4788 = vmax.f32 %v4787, %v4178
        %v4789 = vmax.f32 %v4788, %v4186
        %v4790 = vmax.f32 %v4789, %v4194
        %v4791 = vmax.f32 %v4790, %v4202
        %v4792 = vmax.f32 %v4791, %v4210
        %v4793 = vmax.f32 %v4792, %v4218
        %v4794 = vmax.f32 %v4793, %v4226
        %v4795 = vmax.f32 %v4794, %v4234
        %v4796 = vmax.f32 %v4795, %v4242
        %v4797 = vmax.f32 %v4796, %v4250
        %v4798 = vrot.slane %v4797, 4
        %v4799 = vmax.f32 %v4797, %v4798
        %v4800 = vrot.slane %v4799, 2
        %v4801 = vmax.f32 %v4799, %v4800
        %v4802 = vrot.slane %v4801, 1
        %v4803 = vmax.f32 %v4801, %v4802
        %v4812 = vcombine.low %v4320, %v4389
        %v4813 = vcombine.low %v4458, %v4527
        %v4814 = vcombine.low %v4596, %v4665
        %v4815 = vcombine.low %v4734, %v4803
        %v4817 = vunpack.c.l.s4 1966171168
        %v4818 = vunpack.c.0.s8 %v4817
        %v4819 = vlaneseq
        %v4820 = vshrl.u32 %v4819, 7
        %v4821 = vsub.s32 %v4818, %v4820
        %v4822 = vrot.slane %v4812, %v4821
        %v4824 = vunpack.c.l.s4 1966171168
        %v4825 = vunpack.c.0.s8 %v4824
        %v4826 = vlaneseq
        %v4827 = vshrl.u32 %v4826, 7
        %v4828 = vsub.s32 %v4825, %v4827
        %v4829 = vrot.slane %v4813, %v4828
        %v4831 = vunpack.c.l.s4 1966171168
        %v4832 = vunpack.c.0.s8 %v4831
        %v4833 = vlaneseq
        %v4834 = vshrl.u32 %v4833, 7
        %v4835 = vsub.s32 %v4832, %v4834
        %v4836 = vrot.slane %v4814, %v4835
        %v4838 = vunpack.c.l.s4 1966171168
        %v4839 = vunpack.c.0.s8 %v4838
        %v4840 = vlaneseq
        %v4841 = vshrl.u32 %v4840, 7
        %v4842 = vsub.s32 %v4839, %v4841
        %v4843 = vrot.slane %v4815, %v4842
        %v4844 = vcombine.low %v4822, %v4829
        %v4845 = vcombine.low %v4836, %v4843
        %v4847 = vunpack.c.l.s4 1966171168
        %v4848 = vunpack.c.0.s8 %v4847
        %v4849 = vlaneseq
        %v4850 = vshrl.u32 %v4849, 7
        %v4851 = vsub.s32 %v4848, %v4850
        %v4852 = vrot.slane %v4844, %v4851
        %v4854 = vunpack.c.l.s4 1966171168
        %v4855 = vunpack.c.0.s8 %v4854
        %v4856 = vlaneseq
        %v4857 = vshrl.u32 %v4856, 7
        %v4858 = vsub.s32 %v4855, %v4857
        %v4859 = vrot.slane %v4845, %v4858
        %v4860 = vcombine.low %v4852, %v4859
        %v4862 = vmax.f32 %v4251, %v4860
        %4863 = vst [vmem:[#allocation2] sm:$0xff] %v4862
        // Predicated region
        $region125: #{stnkd_forward.1} parent=71 // pred_check
          %p4864 = pneg %p631
        $region126: #{stnkd_forward.1} parent=71 // pred_check_branch
          %4866 = sbr.rel (%p4864) target = $region128
        $region127: #{stnkd_forward.1} parent=71 // pred_region
          %v4867 = vld [vmem:[#allocation2] sm:$0xff]
          %v4869 = vlaneseq
          %v4870 = vshrl.u32 %v4869, 7
          %v4871 = vsub.s32 0, %v4870
          %v4872 = vrot.slane %v4867, %v4871
          %v4873 = vlaneseq
          %v4874 = vshrl.u32 %v4873, 7
          %v4875 = vsub.s32 1, %v4874
          %v4876 = vrot.slane %v4867, %v4875
          %v4877 = vlaneseq
          %v4878 = vshrl.u32 %v4877, 7
          %v4879 = vsub.s32 2, %v4878
          %v4880 = vrot.slane %v4867, %v4879
          %v4881 = vlaneseq
          %v4882 = vshrl.u32 %v4881, 7
          %v4883 = vsub.s32 3, %v4882
          %v4884 = vrot.slane %v4867, %v4883
          %v4885 = vlaneseq
          %v4886 = vshrl.u32 %v4885, 7
          %v4887 = vsub.s32 4, %v4886
          %v4888 = vrot.slane %v4867, %v4887
          %v4889 = vlaneseq
          %v4890 = vshrl.u32 %v4889, 7
          %v4891 = vsub.s32 5, %v4890
          %v4892 = vrot.slane %v4867, %v4891
          %v4893 = vlaneseq
          %v4894 = vshrl.u32 %v4893, 7
          %v4895 = vsub.s32 6, %v4894
          %v4896 = vrot.slane %v4867, %v4895
          %v4897 = vlaneseq
          %v4898 = vshrl.u32 %v4897, 7
          %v4899 = vsub.s32 7, %v4898
          %v4900 = vrot.slane %v4867, %v4899
          %v4909 = vpack.c.bf16 %v4872, %v4872
          %v4910 = vpack.c.bf16 %v4876, %v4876
          %v4911 = vpack.c.bf16 %v4880, %v4880
          %v4912 = vpack.c.bf16 %v4884, %v4884
          %v4913 = vpack.c.bf16 %v4888, %v4888
          %v4914 = vpack.c.bf16 %v4892, %v4892
          %v4915 = vpack.c.bf16 %v4896, %v4896
          %v4916 = vpack.c.bf16 %v4900, %v4900
          %v4917 = vld [vmem:[#allocation13] sm:$0xff]
          %v4918 = vld [vmem:[#allocation13 + $0x8] sm:$0xff]
          %v4919 = vld [vmem:[#allocation13 + $0x10] sm:$0xff]
          %v4920 = vld [vmem:[#allocation13 + $0x18] sm:$0xff]
          %v4921 = vld [vmem:[#allocation13 + $0x20] sm:$0xff]
          %v4922 = vld [vmem:[#allocation13 + $0x28] sm:$0xff]
          %v4923 = vld [vmem:[#allocation13 + $0x30] sm:$0xff]
          %v4924 = vld [vmem:[#allocation13 + $0x38] sm:$0xff]
          %v4925 = vld [vmem:[#allocation13 + $0x40] sm:$0xff]
          %v4926 = vld [vmem:[#allocation13 + $0x48] sm:$0xff]
          %v4927 = vld [vmem:[#allocation13 + $0x50] sm:$0xff]
          %v4928 = vld [vmem:[#allocation13 + $0x58] sm:$0xff]
          %v4929 = vld [vmem:[#allocation13 + $0x60] sm:$0xff]
          %v4930 = vld [vmem:[#allocation13 + $0x68] sm:$0xff]
          %v4931 = vld [vmem:[#allocation13 + $0x70] sm:$0xff]
          %v4932 = vld [vmem:[#allocation13 + $0x78] sm:$0xff]
          %v4933 = vld [vmem:[#allocation13 + $0x80] sm:$0xff]
          %v4934 = vld [vmem:[#allocation13 + $0x88] sm:$0xff]
          %v4935 = vld [vmem:[#allocation13 + $0x90] sm:$0xff]
          %v4936 = vld [vmem:[#allocation13 + $0x98] sm:$0xff]
          %v4937 = vld [vmem:[#allocation13 + $0xa0] sm:$0xff]
          %v4938 = vld [vmem:[#allocation13 + $0xa8] sm:$0xff]
          %v4939 = vld [vmem:[#allocation13 + $0xb0] sm:$0xff]
          %v4940 = vld [vmem:[#allocation13 + $0xb8] sm:$0xff]
          %v4941 = vld [vmem:[#allocation13 + $0xc0] sm:$0xff]
          %v4942 = vld [vmem:[#allocation13 + $0xc8] sm:$0xff]
          %v4943 = vld [vmem:[#allocation13 + $0xd0] sm:$0xff]
          %v4944 = vld [vmem:[#allocation13 + $0xd8] sm:$0xff]
          %v4945 = vld [vmem:[#allocation13 + $0xe0] sm:$0xff]
          %v4946 = vld [vmem:[#allocation13 + $0xe8] sm:$0xff]
          %v4947 = vld [vmem:[#allocation13 + $0xf0] sm:$0xff]
          %v4948 = vld [vmem:[#allocation13 + $0xf8] sm:$0xff]
          %v4949 = vld [vmem:[#allocation13 + $0x100] sm:$0xff]
          %v4950 = vld [vmem:[#allocation13 + $0x108] sm:$0xff]
          %v4951 = vld [vmem:[#allocation13 + $0x110] sm:$0xff]
          %v4952 = vld [vmem:[#allocation13 + $0x118] sm:$0xff]
          %v4953 = vld [vmem:[#allocation13 + $0x120] sm:$0xff]
          %v4954 = vld [vmem:[#allocation13 + $0x128] sm:$0xff]
          %v4955 = vld [vmem:[#allocation13 + $0x130] sm:$0xff]
          %v4956 = vld [vmem:[#allocation13 + $0x138] sm:$0xff]
          %v4957 = vld [vmem:[#allocation13 + $0x140] sm:$0xff]
          %v4958 = vld [vmem:[#allocation13 + $0x148] sm:$0xff]
          %v4959 = vld [vmem:[#allocation13 + $0x150] sm:$0xff]
          %v4960 = vld [vmem:[#allocation13 + $0x158] sm:$0xff]
          %v4961 = vld [vmem:[#allocation13 + $0x160] sm:$0xff]
          %v4962 = vld [vmem:[#allocation13 + $0x168] sm:$0xff]
          %v4963 = vld [vmem:[#allocation13 + $0x170] sm:$0xff]
          %v4964 = vld [vmem:[#allocation13 + $0x178] sm:$0xff]
          %v4965 = vld [vmem:[#allocation13 + $0x180] sm:$0xff]
          %v4966 = vld [vmem:[#allocation13 + $0x188] sm:$0xff]
          %v4967 = vld [vmem:[#allocation13 + $0x190] sm:$0xff]
          %v4968 = vld [vmem:[#allocation13 + $0x198] sm:$0xff]
          %v4969 = vld [vmem:[#allocation13 + $0x1a0] sm:$0xff]
          %v4970 = vld [vmem:[#allocation13 + $0x1a8] sm:$0xff]
          %v4971 = vld [vmem:[#allocation13 + $0x1b0] sm:$0xff]
          %v4972 = vld [vmem:[#allocation13 + $0x1b8] sm:$0xff]
          %v4973 = vld [vmem:[#allocation13 + $0x1c0] sm:$0xff]
          %v4974 = vld [vmem:[#allocation13 + $0x1c8] sm:$0xff]
          %v4975 = vld [vmem:[#allocation13 + $0x1d0] sm:$0xff]
          %v4976 = vld [vmem:[#allocation13 + $0x1d8] sm:$0xff]
          %v4977 = vld [vmem:[#allocation13 + $0x1e0] sm:$0xff]
          %v4978 = vld [vmem:[#allocation13 + $0x1e8] sm:$0xff]
          %v4979 = vld [vmem:[#allocation13 + $0x1f0] sm:$0xff]
          %v4980 = vld [vmem:[#allocation13 + $0x1f8] sm:$0xff]
          %v4981 = vld [vmem:[#allocation13 + $0x200] sm:$0xff]
          %v4982 = vld [vmem:[#allocation13 + $0x208] sm:$0xff]
          %v4983 = vld [vmem:[#allocation13 + $0x210] sm:$0xff]
          %v4984 = vld [vmem:[#allocation13 + $0x218] sm:$0xff]
          %v4985 = vld [vmem:[#allocation13 + $0x220] sm:$0xff]
          %v4986 = vld [vmem:[#allocation13 + $0x228] sm:$0xff]
          %v4987 = vld [vmem:[#allocation13 + $0x230] sm:$0xff]
          %v4988 = vld [vmem:[#allocation13 + $0x238] sm:$0xff]
          %v4989 = vld [vmem:[#allocation13 + $0x240] sm:$0xff]
          %v4990 = vld [vmem:[#allocation13 + $0x248] sm:$0xff]
          %v4991 = vld [vmem:[#allocation13 + $0x250] sm:$0xff]
          %v4992 = vld [vmem:[#allocation13 + $0x258] sm:$0xff]
          %v4993 = vld [vmem:[#allocation13 + $0x260] sm:$0xff]
          %v4994 = vld [vmem:[#allocation13 + $0x268] sm:$0xff]
          %v4995 = vld [vmem:[#allocation13 + $0x270] sm:$0xff]
          %v4996 = vld [vmem:[#allocation13 + $0x278] sm:$0xff]
          %v4997 = vld [vmem:[#allocation13 + $0x280] sm:$0xff]
          %v4998 = vld [vmem:[#allocation13 + $0x288] sm:$0xff]
          %v4999 = vld [vmem:[#allocation13 + $0x290] sm:$0xff]
          %v5000 = vld [vmem:[#allocation13 + $0x298] sm:$0xff]
          %v5001 = vld [vmem:[#allocation13 + $0x2a0] sm:$0xff]
          %v5002 = vld [vmem:[#allocation13 + $0x2a8] sm:$0xff]
          %v5003 = vld [vmem:[#allocation13 + $0x2b0] sm:$0xff]
          %v5004 = vld [vmem:[#allocation13 + $0x2b8] sm:$0xff]
          %v5005 = vld [vmem:[#allocation13 + $0x2c0] sm:$0xff]
          %v5006 = vld [vmem:[#allocation13 + $0x2c8] sm:$0xff]
          %v5007 = vld [vmem:[#allocation13 + $0x2d0] sm:$0xff]
          %v5008 = vld [vmem:[#allocation13 + $0x2d8] sm:$0xff]
          %v5009 = vld [vmem:[#allocation13 + $0x2e0] sm:$0xff]
          %v5010 = vld [vmem:[#allocation13 + $0x2e8] sm:$0xff]
          %v5011 = vld [vmem:[#allocation13 + $0x2f0] sm:$0xff]
          %v5012 = vld [vmem:[#allocation13 + $0x2f8] sm:$0xff]
          %v5013 = vld [vmem:[#allocation13 + $0x300] sm:$0xff]
          %v5014 = vld [vmem:[#allocation13 + $0x308] sm:$0xff]
          %v5015 = vld [vmem:[#allocation13 + $0x310] sm:$0xff]
          %v5016 = vld [vmem:[#allocation13 + $0x318] sm:$0xff]
          %v5017 = vld [vmem:[#allocation13 + $0x320] sm:$0xff]
          %v5018 = vld [vmem:[#allocation13 + $0x328] sm:$0xff]
          %v5019 = vld [vmem:[#allocation13 + $0x330] sm:$0xff]
          %v5020 = vld [vmem:[#allocation13 + $0x338] sm:$0xff]
          %v5021 = vld [vmem:[#allocation13 + $0x340] sm:$0xff]
          %v5022 = vld [vmem:[#allocation13 + $0x348] sm:$0xff]
          %v5023 = vld [vmem:[#allocation13 + $0x350] sm:$0xff]
          %v5024 = vld [vmem:[#allocation13 + $0x358] sm:$0xff]
          %v5025 = vld [vmem:[#allocation13 + $0x360] sm:$0xff]
          %v5026 = vld [vmem:[#allocation13 + $0x368] sm:$0xff]
          %v5027 = vld [vmem:[#allocation13 + $0x370] sm:$0xff]
          %v5028 = vld [vmem:[#allocation13 + $0x378] sm:$0xff]
          %v5029 = vld [vmem:[#allocation13 + $0x380] sm:$0xff]
          %v5030 = vld [vmem:[#allocation13 + $0x388] sm:$0xff]
          %v5031 = vld [vmem:[#allocation13 + $0x390] sm:$0xff]
          %v5032 = vld [vmem:[#allocation13 + $0x398] sm:$0xff]
          %v5033 = vld [vmem:[#allocation13 + $0x3a0] sm:$0xff]
          %v5034 = vld [vmem:[#allocation13 + $0x3a8] sm:$0xff]
          %v5035 = vld [vmem:[#allocation13 + $0x3b0] sm:$0xff]
          %v5036 = vld [vmem:[#allocation13 + $0x3b8] sm:$0xff]
          %v5037 = vld [vmem:[#allocation13 + $0x3c0] sm:$0xff]
          %v5038 = vld [vmem:[#allocation13 + $0x3c8] sm:$0xff]
          %v5039 = vld [vmem:[#allocation13 + $0x3d0] sm:$0xff]
          %v5040 = vld [vmem:[#allocation13 + $0x3d8] sm:$0xff]
          %v5041 = vld [vmem:[#allocation13 + $0x3e0] sm:$0xff]
          %v5042 = vld [vmem:[#allocation13 + $0x3e8] sm:$0xff]
          %v5043 = vld [vmem:[#allocation13 + $0x3f0] sm:$0xff]
          %v5044 = vld [vmem:[#allocation13 + $0x3f8] sm:$0xff]
          %v5045 = vld [vmem:[#allocation13 + $0x400] sm:$0xff]
          %v5046 = vld [vmem:[#allocation13 + $0x408] sm:$0xff]
          %v5047 = vld [vmem:[#allocation13 + $0x410] sm:$0xff]
          %v5048 = vld [vmem:[#allocation13 + $0x418] sm:$0xff]
          %v5049 = vld [vmem:[#allocation13 + $0x420] sm:$0xff]
          %v5050 = vld [vmem:[#allocation13 + $0x428] sm:$0xff]
          %v5051 = vld [vmem:[#allocation13 + $0x430] sm:$0xff]
          %v5052 = vld [vmem:[#allocation13 + $0x438] sm:$0xff]
          %v5053 = vld [vmem:[#allocation13 + $0x440] sm:$0xff]
          %v5054 = vld [vmem:[#allocation13 + $0x448] sm:$0xff]
          %v5055 = vld [vmem:[#allocation13 + $0x450] sm:$0xff]
          %v5056 = vld [vmem:[#allocation13 + $0x458] sm:$0xff]
          %v5057 = vld [vmem:[#allocation13 + $0x460] sm:$0xff]
          %v5058 = vld [vmem:[#allocation13 + $0x468] sm:$0xff]
          %v5059 = vld [vmem:[#allocation13 + $0x470] sm:$0xff]
          %v5060 = vld [vmem:[#allocation13 + $0x478] sm:$0xff]
          %v5061 = vld [vmem:[#allocation13 + $0x480] sm:$0xff]
          %v5062 = vld [vmem:[#allocation13 + $0x488] sm:$0xff]
          %v5063 = vld [vmem:[#allocation13 + $0x490] sm:$0xff]
          %v5064 = vld [vmem:[#allocation13 + $0x498] sm:$0xff]
          %v5065 = vld [vmem:[#allocation13 + $0x4a0] sm:$0xff]
          %v5066 = vld [vmem:[#allocation13 + $0x4a8] sm:$0xff]
          %v5067 = vld [vmem:[#allocation13 + $0x4b0] sm:$0xff]
          %v5068 = vld [vmem:[#allocation13 + $0x4b8] sm:$0xff]
          %v5069 = vld [vmem:[#allocation13 + $0x4c0] sm:$0xff]
          %v5070 = vld [vmem:[#allocation13 + $0x4c8] sm:$0xff]
          %v5071 = vld [vmem:[#allocation13 + $0x4d0] sm:$0xff]
          %v5072 = vld [vmem:[#allocation13 + $0x4d8] sm:$0xff]
          %v5073 = vld [vmem:[#allocation13 + $0x4e0] sm:$0xff]
          %v5074 = vld [vmem:[#allocation13 + $0x4e8] sm:$0xff]
          %v5075 = vld [vmem:[#allocation13 + $0x4f0] sm:$0xff]
          %v5076 = vld [vmem:[#allocation13 + $0x4f8] sm:$0xff]
          %v5077 = vld [vmem:[#allocation13 + $0x500] sm:$0xff]
          %v5078 = vld [vmem:[#allocation13 + $0x508] sm:$0xff]
          %v5079 = vld [vmem:[#allocation13 + $0x510] sm:$0xff]
          %v5080 = vld [vmem:[#allocation13 + $0x518] sm:$0xff]
          %v5081 = vld [vmem:[#allocation13 + $0x520] sm:$0xff]
          %v5082 = vld [vmem:[#allocation13 + $0x528] sm:$0xff]
          %v5083 = vld [vmem:[#allocation13 + $0x530] sm:$0xff]
          %v5084 = vld [vmem:[#allocation13 + $0x538] sm:$0xff]
          %v5085 = vld [vmem:[#allocation13 + $0x540] sm:$0xff]
          %v5086 = vld [vmem:[#allocation13 + $0x548] sm:$0xff]
          %v5087 = vld [vmem:[#allocation13 + $0x550] sm:$0xff]
          %v5088 = vld [vmem:[#allocation13 + $0x558] sm:$0xff]
          %v5089 = vld [vmem:[#allocation13 + $0x560] sm:$0xff]
          %v5090 = vld [vmem:[#allocation13 + $0x568] sm:$0xff]
          %v5091 = vld [vmem:[#allocation13 + $0x570] sm:$0xff]
          %v5092 = vld [vmem:[#allocation13 + $0x578] sm:$0xff]
          %v5093 = vld [vmem:[#allocation13 + $0x580] sm:$0xff]
          %v5094 = vld [vmem:[#allocation13 + $0x588] sm:$0xff]
          %v5095 = vld [vmem:[#allocation13 + $0x590] sm:$0xff]
          %v5096 = vld [vmem:[#allocation13 + $0x598] sm:$0xff]
          %v5097 = vld [vmem:[#allocation13 + $0x5a0] sm:$0xff]
          %v5098 = vld [vmem:[#allocation13 + $0x5a8] sm:$0xff]
          %v5099 = vld [vmem:[#allocation13 + $0x5b0] sm:$0xff]
          %v5100 = vld [vmem:[#allocation13 + $0x5b8] sm:$0xff]
          %v5101 = vld [vmem:[#allocation13 + $0x5c0] sm:$0xff]
          %v5102 = vld [vmem:[#allocation13 + $0x5c8] sm:$0xff]
          %v5103 = vld [vmem:[#allocation13 + $0x5d0] sm:$0xff]
          %v5104 = vld [vmem:[#allocation13 + $0x5d8] sm:$0xff]
          %v5105 = vld [vmem:[#allocation13 + $0x5e0] sm:$0xff]
          %v5106 = vld [vmem:[#allocation13 + $0x5e8] sm:$0xff]
          %v5107 = vld [vmem:[#allocation13 + $0x5f0] sm:$0xff]
          %v5108 = vld [vmem:[#allocation13 + $0x5f8] sm:$0xff]
          %v5109 = vld [vmem:[#allocation13 + $0x600] sm:$0xff]
          %v5110 = vld [vmem:[#allocation13 + $0x608] sm:$0xff]
          %v5111 = vld [vmem:[#allocation13 + $0x610] sm:$0xff]
          %v5112 = vld [vmem:[#allocation13 + $0x618] sm:$0xff]
          %v5113 = vld [vmem:[#allocation13 + $0x620] sm:$0xff]
          %v5114 = vld [vmem:[#allocation13 + $0x628] sm:$0xff]
          %v5115 = vld [vmem:[#allocation13 + $0x630] sm:$0xff]
          %v5116 = vld [vmem:[#allocation13 + $0x638] sm:$0xff]
          %v5117 = vld [vmem:[#allocation13 + $0x640] sm:$0xff]
          %v5118 = vld [vmem:[#allocation13 + $0x648] sm:$0xff]
          %v5119 = vld [vmem:[#allocation13 + $0x650] sm:$0xff]
          %v5120 = vld [vmem:[#allocation13 + $0x658] sm:$0xff]
          %v5121 = vld [vmem:[#allocation13 + $0x660] sm:$0xff]
          %v5122 = vld [vmem:[#allocation13 + $0x668] sm:$0xff]
          %v5123 = vld [vmem:[#allocation13 + $0x670] sm:$0xff]
          %v5124 = vld [vmem:[#allocation13 + $0x678] sm:$0xff]
          %v5125 = vld [vmem:[#allocation13 + $0x680] sm:$0xff]
          %v5126 = vld [vmem:[#allocation13 + $0x688] sm:$0xff]
          %v5127 = vld [vmem:[#allocation13 + $0x690] sm:$0xff]
          %v5128 = vld [vmem:[#allocation13 + $0x698] sm:$0xff]
          %v5129 = vld [vmem:[#allocation13 + $0x6a0] sm:$0xff]
          %v5130 = vld [vmem:[#allocation13 + $0x6a8] sm:$0xff]
          %v5131 = vld [vmem:[#allocation13 + $0x6b0] sm:$0xff]
          %v5132 = vld [vmem:[#allocation13 + $0x6b8] sm:$0xff]
          %v5133 = vld [vmem:[#allocation13 + $0x6c0] sm:$0xff]
          %v5134 = vld [vmem:[#allocation13 + $0x6c8] sm:$0xff]
          %v5135 = vld [vmem:[#allocation13 + $0x6d0] sm:$0xff]
          %v5136 = vld [vmem:[#allocation13 + $0x6d8] sm:$0xff]
          %v5137 = vld [vmem:[#allocation13 + $0x6e0] sm:$0xff]
          %v5138 = vld [vmem:[#allocation13 + $0x6e8] sm:$0xff]
          %v5139 = vld [vmem:[#allocation13 + $0x6f0] sm:$0xff]
          %v5140 = vld [vmem:[#allocation13 + $0x6f8] sm:$0xff]
          %v5141 = vld [vmem:[#allocation13 + $0x700] sm:$0xff]
          %v5142 = vld [vmem:[#allocation13 + $0x708] sm:$0xff]
          %v5143 = vld [vmem:[#allocation13 + $0x710] sm:$0xff]
          %v5144 = vld [vmem:[#allocation13 + $0x718] sm:$0xff]
          %v5145 = vld [vmem:[#allocation13 + $0x720] sm:$0xff]
          %v5146 = vld [vmem:[#allocation13 + $0x728] sm:$0xff]
          %v5147 = vld [vmem:[#allocation13 + $0x730] sm:$0xff]
          %v5148 = vld [vmem:[#allocation13 + $0x738] sm:$0xff]
          %v5149 = vld [vmem:[#allocation13 + $0x740] sm:$0xff]
          %v5150 = vld [vmem:[#allocation13 + $0x748] sm:$0xff]
          %v5151 = vld [vmem:[#allocation13 + $0x750] sm:$0xff]
          %v5152 = vld [vmem:[#allocation13 + $0x758] sm:$0xff]
          %v5153 = vld [vmem:[#allocation13 + $0x760] sm:$0xff]
          %v5154 = vld [vmem:[#allocation13 + $0x768] sm:$0xff]
          %v5155 = vld [vmem:[#allocation13 + $0x770] sm:$0xff]
          %v5156 = vld [vmem:[#allocation13 + $0x778] sm:$0xff]
          %v5157 = vld [vmem:[#allocation13 + $0x780] sm:$0xff]
          %v5158 = vld [vmem:[#allocation13 + $0x788] sm:$0xff]
          %v5159 = vld [vmem:[#allocation13 + $0x790] sm:$0xff]
          %v5160 = vld [vmem:[#allocation13 + $0x798] sm:$0xff]
          %v5161 = vld [vmem:[#allocation13 + $0x7a0] sm:$0xff]
          %v5162 = vld [vmem:[#allocation13 + $0x7a8] sm:$0xff]
          %v5163 = vld [vmem:[#allocation13 + $0x7b0] sm:$0xff]
          %v5164 = vld [vmem:[#allocation13 + $0x7b8] sm:$0xff]
          %v5165 = vld [vmem:[#allocation13 + $0x7c0] sm:$0xff]
          %v5166 = vld [vmem:[#allocation13 + $0x7c8] sm:$0xff]
          %v5167 = vld [vmem:[#allocation13 + $0x7d0] sm:$0xff]
          %v5168 = vld [vmem:[#allocation13 + $0x7d8] sm:$0xff]
          %v5169 = vld [vmem:[#allocation13 + $0x7e0] sm:$0xff]
          %v5170 = vld [vmem:[#allocation13 + $0x7e8] sm:$0xff]
          %v5171 = vld [vmem:[#allocation13 + $0x7f0] sm:$0xff]
          %v5172 = vld [vmem:[#allocation13 + $0x7f8] sm:$0xff]
          %v5173 = vld [vmem:[#allocation14] sm:$0xf]
          %v5430 = vunpack.c.l.b16 %v4917
          %v5431 = vunpack.c.h.b16 %v4917
          %v5432 = vunpack.c.l.b16 %v4918
          %v5433 = vunpack.c.h.b16 %v4918
          %v5434 = vunpack.c.l.b16 %v4919
          %v5435 = vunpack.c.h.b16 %v4919
          %v5436 = vunpack.c.l.b16 %v4920
          %v5437 = vunpack.c.h.b16 %v4920
          %v5438 = vunpack.c.l.b16 %v4921
          %v5439 = vunpack.c.h.b16 %v4921
          %v5440 = vunpack.c.l.b16 %v4922
          %v5441 = vunpack.c.h.b16 %v4922
          %v5442 = vunpack.c.l.b16 %v4923
          %v5443 = vunpack.c.h.b16 %v4923
          %v5444 = vunpack.c.l.b16 %v4924
          %v5445 = vunpack.c.h.b16 %v4924
          %v5446 = vunpack.c.l.b16 %v4925
          %v5447 = vunpack.c.h.b16 %v4925
          %v5448 = vunpack.c.l.b16 %v4926
          %v5449 = vunpack.c.h.b16 %v4926
          %v5450 = vunpack.c.l.b16 %v4927
          %v5451 = vunpack.c.h.b16 %v4927
          %v5452 = vunpack.c.l.b16 %v4928
          %v5453 = vunpack.c.h.b16 %v4928
          %v5454 = vunpack.c.l.b16 %v4929
          %v5455 = vunpack.c.h.b16 %v4929
          %v5456 = vunpack.c.l.b16 %v4930
          %v5457 = vunpack.c.h.b16 %v4930
          %v5458 = vunpack.c.l.b16 %v4931
          %v5459 = vunpack.c.h.b16 %v4931
          %v5460 = vunpack.c.l.b16 %v4932
          %v5461 = vunpack.c.h.b16 %v4932
          %v5462 = vunpack.c.l.b16 %v4933
          %v5463 = vunpack.c.h.b16 %v4933
          %v5464 = vunpack.c.l.b16 %v4934
          %v5465 = vunpack.c.h.b16 %v4934
          %v5466 = vunpack.c.l.b16 %v4935
          %v5467 = vunpack.c.h.b16 %v4935
          %v5468 = vunpack.c.l.b16 %v4936
          %v5469 = vunpack.c.h.b16 %v4936
          %v5470 = vunpack.c.l.b16 %v4937
          %v5471 = vunpack.c.h.b16 %v4937
          %v5472 = vunpack.c.l.b16 %v4938
          %v5473 = vunpack.c.h.b16 %v4938
          %v5474 = vunpack.c.l.b16 %v4939
          %v5475 = vunpack.c.h.b16 %v4939
          %v5476 = vunpack.c.l.b16 %v4940
          %v5477 = vunpack.c.h.b16 %v4940
          %v5478 = vunpack.c.l.b16 %v4941
          %v5479 = vunpack.c.h.b16 %v4941
          %v5480 = vunpack.c.l.b16 %v4942
          %v5481 = vunpack.c.h.b16 %v4942
          %v5482 = vunpack.c.l.b16 %v4943
          %v5483 = vunpack.c.h.b16 %v4943
          %v5484 = vunpack.c.l.b16 %v4944
          %v5485 = vunpack.c.h.b16 %v4944
          %v5486 = vunpack.c.l.b16 %v4945
          %v5487 = vunpack.c.h.b16 %v4945
          %v5488 = vunpack.c.l.b16 %v4946
          %v5489 = vunpack.c.h.b16 %v4946
          %v5490 = vunpack.c.l.b16 %v4947
          %v5491 = vunpack.c.h.b16 %v4947
          %v5492 = vunpack.c.l.b16 %v4948
          %v5493 = vunpack.c.h.b16 %v4948
          %v5494 = vunpack.c.l.b16 %v4949
          %v5495 = vunpack.c.h.b16 %v4949
          %v5496 = vunpack.c.l.b16 %v4950
          %v5497 = vunpack.c.h.b16 %v4950
          %v5498 = vunpack.c.l.b16 %v4951
          %v5499 = vunpack.c.h.b16 %v4951
          %v5500 = vunpack.c.l.b16 %v4952
          %v5501 = vunpack.c.h.b16 %v4952
          %v5502 = vunpack.c.l.b16 %v4953
          %v5503 = vunpack.c.h.b16 %v4953
          %v5504 = vunpack.c.l.b16 %v4954
          %v5505 = vunpack.c.h.b16 %v4954
          %v5506 = vunpack.c.l.b16 %v4955
          %v5507 = vunpack.c.h.b16 %v4955
          %v5508 = vunpack.c.l.b16 %v4956
          %v5509 = vunpack.c.h.b16 %v4956
          %v5510 = vunpack.c.l.b16 %v4957
          %v5511 = vunpack.c.h.b16 %v4957
          %v5512 = vunpack.c.l.b16 %v4958
          %v5513 = vunpack.c.h.b16 %v4958
          %v5514 = vunpack.c.l.b16 %v4959
          %v5515 = vunpack.c.h.b16 %v4959
          %v5516 = vunpack.c.l.b16 %v4960
          %v5517 = vunpack.c.h.b16 %v4960
          %v5518 = vunpack.c.l.b16 %v4961
          %v5519 = vunpack.c.h.b16 %v4961
          %v5520 = vunpack.c.l.b16 %v4962
          %v5521 = vunpack.c.h.b16 %v4962
          %v5522 = vunpack.c.l.b16 %v4963
          %v5523 = vunpack.c.h.b16 %v4963
          %v5524 = vunpack.c.l.b16 %v4964
          %v5525 = vunpack.c.h.b16 %v4964
          %v5526 = vunpack.c.l.b16 %v4965
          %v5527 = vunpack.c.h.b16 %v4965
          %v5528 = vunpack.c.l.b16 %v4966
          %v5529 = vunpack.c.h.b16 %v4966
          %v5530 = vunpack.c.l.b16 %v4967
          %v5531 = vunpack.c.h.b16 %v4967
          %v5532 = vunpack.c.l.b16 %v4968
          %v5533 = vunpack.c.h.b16 %v4968
          %v5534 = vunpack.c.l.b16 %v4969
          %v5535 = vunpack.c.h.b16 %v4969
          %v5536 = vunpack.c.l.b16 %v4970
          %v5537 = vunpack.c.h.b16 %v4970
          %v5538 = vunpack.c.l.b16 %v4971
          %v5539 = vunpack.c.h.b16 %v4971
          %v5540 = vunpack.c.l.b16 %v4972
          %v5541 = vunpack.c.h.b16 %v4972
          %v5542 = vunpack.c.l.b16 %v4973
          %v5543 = vunpack.c.h.b16 %v4973
          %v5544 = vunpack.c.l.b16 %v4974
          %v5545 = vunpack.c.h.b16 %v4974
          %v5546 = vunpack.c.l.b16 %v4975
          %v5547 = vunpack.c.h.b16 %v4975
          %v5548 = vunpack.c.l.b16 %v4976
          %v5549 = vunpack.c.h.b16 %v4976
          %v5550 = vunpack.c.l.b16 %v4977
          %v5551 = vunpack.c.h.b16 %v4977
          %v5552 = vunpack.c.l.b16 %v4978
          %v5553 = vunpack.c.h.b16 %v4978
          %v5554 = vunpack.c.l.b16 %v4979
          %v5555 = vunpack.c.h.b16 %v4979
          %v5556 = vunpack.c.l.b16 %v4980
          %v5557 = vunpack.c.h.b16 %v4980
          %v5558 = vunpack.c.l.b16 %v4981
          %v5559 = vunpack.c.h.b16 %v4981
          %v5560 = vunpack.c.l.b16 %v4982
          %v5561 = vunpack.c.h.b16 %v4982
          %v5562 = vunpack.c.l.b16 %v4983
          %v5563 = vunpack.c.h.b16 %v4983
          %v5564 = vunpack.c.l.b16 %v4984
          %v5565 = vunpack.c.h.b16 %v4984
          %v5566 = vunpack.c.l.b16 %v4985
          %v5567 = vunpack.c.h.b16 %v4985
          %v5568 = vunpack.c.l.b16 %v4986
          %v5569 = vunpack.c.h.b16 %v4986
          %v5570 = vunpack.c.l.b16 %v4987
          %v5571 = vunpack.c.h.b16 %v4987
          %v5572 = vunpack.c.l.b16 %v4988
          %v5573 = vunpack.c.h.b16 %v4988
          %v5574 = vunpack.c.l.b16 %v4989
          %v5575 = vunpack.c.h.b16 %v4989
          %v5576 = vunpack.c.l.b16 %v4990
          %v5577 = vunpack.c.h.b16 %v4990
          %v5578 = vunpack.c.l.b16 %v4991
          %v5579 = vunpack.c.h.b16 %v4991
          %v5580 = vunpack.c.l.b16 %v4992
          %v5581 = vunpack.c.h.b16 %v4992
          %v5582 = vunpack.c.l.b16 %v4993
          %v5583 = vunpack.c.h.b16 %v4993
          %v5584 = vunpack.c.l.b16 %v4994
          %v5585 = vunpack.c.h.b16 %v4994
          %v5586 = vunpack.c.l.b16 %v4995
          %v5587 = vunpack.c.h.b16 %v4995
          %v5588 = vunpack.c.l.b16 %v4996
          %v5589 = vunpack.c.h.b16 %v4996
          %v5590 = vunpack.c.l.b16 %v4997
          %v5591 = vunpack.c.h.b16 %v4997
          %v5592 = vunpack.c.l.b16 %v4998
          %v5593 = vunpack.c.h.b16 %v4998
          %v5594 = vunpack.c.l.b16 %v4999
          %v5595 = vunpack.c.h.b16 %v4999
          %v5596 = vunpack.c.l.b16 %v5000
          %v5597 = vunpack.c.h.b16 %v5000
          %v5598 = vunpack.c.l.b16 %v5001
          %v5599 = vunpack.c.h.b16 %v5001
          %v5600 = vunpack.c.l.b16 %v5002
          %v5601 = vunpack.c.h.b16 %v5002
          %v5602 = vunpack.c.l.b16 %v5003
          %v5603 = vunpack.c.h.b16 %v5003
          %v5604 = vunpack.c.l.b16 %v5004
          %v5605 = vunpack.c.h.b16 %v5004
          %v5606 = vunpack.c.l.b16 %v5005
          %v5607 = vunpack.c.h.b16 %v5005
          %v5608 = vunpack.c.l.b16 %v5006
          %v5609 = vunpack.c.h.b16 %v5006
          %v5610 = vunpack.c.l.b16 %v5007
          %v5611 = vunpack.c.h.b16 %v5007
          %v5612 = vunpack.c.l.b16 %v5008
          %v5613 = vunpack.c.h.b16 %v5008
          %v5614 = vunpack.c.l.b16 %v5009
          %v5615 = vunpack.c.h.b16 %v5009
          %v5616 = vunpack.c.l.b16 %v5010
          %v5617 = vunpack.c.h.b16 %v5010
          %v5618 = vunpack.c.l.b16 %v5011
          %v5619 = vunpack.c.h.b16 %v5011
          %v5620 = vunpack.c.l.b16 %v5012
          %v5621 = vunpack.c.h.b16 %v5012
          %v5622 = vunpack.c.l.b16 %v5013
          %v5623 = vunpack.c.h.b16 %v5013
          %v5624 = vunpack.c.l.b16 %v5014
          %v5625 = vunpack.c.h.b16 %v5014
          %v5626 = vunpack.c.l.b16 %v5015
          %v5627 = vunpack.c.h.b16 %v5015
          %v5628 = vunpack.c.l.b16 %v5016
          %v5629 = vunpack.c.h.b16 %v5016
          %v5630 = vunpack.c.l.b16 %v5017
          %v5631 = vunpack.c.h.b16 %v5017
          %v5632 = vunpack.c.l.b16 %v5018
          %v5633 = vunpack.c.h.b16 %v5018
          %v5634 = vunpack.c.l.b16 %v5019
          %v5635 = vunpack.c.h.b16 %v5019
          %v5636 = vunpack.c.l.b16 %v5020
          %v5637 = vunpack.c.h.b16 %v5020
          %v5638 = vunpack.c.l.b16 %v5021
          %v5639 = vunpack.c.h.b16 %v5021
          %v5640 = vunpack.c.l.b16 %v5022
          %v5641 = vunpack.c.h.b16 %v5022
          %v5642 = vunpack.c.l.b16 %v5023
          %v5643 = vunpack.c.h.b16 %v5023
          %v5644 = vunpack.c.l.b16 %v5024
          %v5645 = vunpack.c.h.b16 %v5024
          %v5646 = vunpack.c.l.b16 %v5025
          %v5647 = vunpack.c.h.b16 %v5025
          %v5648 = vunpack.c.l.b16 %v5026
          %v5649 = vunpack.c.h.b16 %v5026
          %v5650 = vunpack.c.l.b16 %v5027
          %v5651 = vunpack.c.h.b16 %v5027
          %v5652 = vunpack.c.l.b16 %v5028
          %v5653 = vunpack.c.h.b16 %v5028
          %v5654 = vunpack.c.l.b16 %v5029
          %v5655 = vunpack.c.h.b16 %v5029
          %v5656 = vunpack.c.l.b16 %v5030
          %v5657 = vunpack.c.h.b16 %v5030
          %v5658 = vunpack.c.l.b16 %v5031
          %v5659 = vunpack.c.h.b16 %v5031
          %v5660 = vunpack.c.l.b16 %v5032
          %v5661 = vunpack.c.h.b16 %v5032
          %v5662 = vunpack.c.l.b16 %v5033
          %v5663 = vunpack.c.h.b16 %v5033
          %v5664 = vunpack.c.l.b16 %v5034
          %v5665 = vunpack.c.h.b16 %v5034
          %v5666 = vunpack.c.l.b16 %v5035
          %v5667 = vunpack.c.h.b16 %v5035
          %v5668 = vunpack.c.l.b16 %v5036
          %v5669 = vunpack.c.h.b16 %v5036
          %v5670 = vunpack.c.l.b16 %v5037
          %v5671 = vunpack.c.h.b16 %v5037
          %v5672 = vunpack.c.l.b16 %v5038
          %v5673 = vunpack.c.h.b16 %v5038
          %v5674 = vunpack.c.l.b16 %v5039
          %v5675 = vunpack.c.h.b16 %v5039
          %v5676 = vunpack.c.l.b16 %v5040
          %v5677 = vunpack.c.h.b16 %v5040
          %v5678 = vunpack.c.l.b16 %v5041
          %v5679 = vunpack.c.h.b16 %v5041
          %v5680 = vunpack.c.l.b16 %v5042
          %v5681 = vunpack.c.h.b16 %v5042
          %v5682 = vunpack.c.l.b16 %v5043
          %v5683 = vunpack.c.h.b16 %v5043
          %v5684 = vunpack.c.l.b16 %v5044
          %v5685 = vunpack.c.h.b16 %v5044
          %v5686 = vunpack.c.l.b16 %v5045
          %v5687 = vunpack.c.h.b16 %v5045
          %v5688 = vunpack.c.l.b16 %v5046
          %v5689 = vunpack.c.h.b16 %v5046
          %v5690 = vunpack.c.l.b16 %v5047
          %v5691 = vunpack.c.h.b16 %v5047
          %v5692 = vunpack.c.l.b16 %v5048
          %v5693 = vunpack.c.h.b16 %v5048
          %v5694 = vunpack.c.l.b16 %v5049
          %v5695 = vunpack.c.h.b16 %v5049
          %v5696 = vunpack.c.l.b16 %v5050
          %v5697 = vunpack.c.h.b16 %v5050
          %v5698 = vunpack.c.l.b16 %v5051
          %v5699 = vunpack.c.h.b16 %v5051
          %v5700 = vunpack.c.l.b16 %v5052
          %v5701 = vunpack.c.h.b16 %v5052
          %v5702 = vunpack.c.l.b16 %v5053
          %v5703 = vunpack.c.h.b16 %v5053
          %v5704 = vunpack.c.l.b16 %v5054
          %v5705 = vunpack.c.h.b16 %v5054
          %v5706 = vunpack.c.l.b16 %v5055
          %v5707 = vunpack.c.h.b16 %v5055
          %v5708 = vunpack.c.l.b16 %v5056
          %v5709 = vunpack.c.h.b16 %v5056
          %v5710 = vunpack.c.l.b16 %v5057
          %v5711 = vunpack.c.h.b16 %v5057
          %v5712 = vunpack.c.l.b16 %v5058
          %v5713 = vunpack.c.h.b16 %v5058
          %v5714 = vunpack.c.l.b16 %v5059
          %v5715 = vunpack.c.h.b16 %v5059
          %v5716 = vunpack.c.l.b16 %v5060
          %v5717 = vunpack.c.h.b16 %v5060
          %v5718 = vunpack.c.l.b16 %v5061
          %v5719 = vunpack.c.h.b16 %v5061
          %v5720 = vunpack.c.l.b16 %v5062
          %v5721 = vunpack.c.h.b16 %v5062
          %v5722 = vunpack.c.l.b16 %v5063
          %v5723 = vunpack.c.h.b16 %v5063
          %v5724 = vunpack.c.l.b16 %v5064
          %v5725 = vunpack.c.h.b16 %v5064
          %v5726 = vunpack.c.l.b16 %v5065
          %v5727 = vunpack.c.h.b16 %v5065
          %v5728 = vunpack.c.l.b16 %v5066
          %v5729 = vunpack.c.h.b16 %v5066
          %v5730 = vunpack.c.l.b16 %v5067
          %v5731 = vunpack.c.h.b16 %v5067
          %v5732 = vunpack.c.l.b16 %v5068
          %v5733 = vunpack.c.h.b16 %v5068
          %v5734 = vunpack.c.l.b16 %v5069
          %v5735 = vunpack.c.h.b16 %v5069
          %v5736 = vunpack.c.l.b16 %v5070
          %v5737 = vunpack.c.h.b16 %v5070
          %v5738 = vunpack.c.l.b16 %v5071
          %v5739 = vunpack.c.h.b16 %v5071
          %v5740 = vunpack.c.l.b16 %v5072
          %v5741 = vunpack.c.h.b16 %v5072
          %v5742 = vunpack.c.l.b16 %v5073
          %v5743 = vunpack.c.h.b16 %v5073
          %v5744 = vunpack.c.l.b16 %v5074
          %v5745 = vunpack.c.h.b16 %v5074
          %v5746 = vunpack.c.l.b16 %v5075
          %v5747 = vunpack.c.h.b16 %v5075
          %v5748 = vunpack.c.l.b16 %v5076
          %v5749 = vunpack.c.h.b16 %v5076
          %v5750 = vunpack.c.l.b16 %v5077
          %v5751 = vunpack.c.h.b16 %v5077
          %v5752 = vunpack.c.l.b16 %v5078
          %v5753 = vunpack.c.h.b16 %v5078
          %v5754 = vunpack.c.l.b16 %v5079
          %v5755 = vunpack.c.h.b16 %v5079
          %v5756 = vunpack.c.l.b16 %v5080
          %v5757 = vunpack.c.h.b16 %v5080
          %v5758 = vunpack.c.l.b16 %v5081
          %v5759 = vunpack.c.h.b16 %v5081
          %v5760 = vunpack.c.l.b16 %v5082
          %v5761 = vunpack.c.h.b16 %v5082
          %v5762 = vunpack.c.l.b16 %v5083
          %v5763 = vunpack.c.h.b16 %v5083
          %v5764 = vunpack.c.l.b16 %v5084
          %v5765 = vunpack.c.h.b16 %v5084
          %v5766 = vunpack.c.l.b16 %v5085
          %v5767 = vunpack.c.h.b16 %v5085
          %v5768 = vunpack.c.l.b16 %v5086
          %v5769 = vunpack.c.h.b16 %v5086
          %v5770 = vunpack.c.l.b16 %v5087
          %v5771 = vunpack.c.h.b16 %v5087
          %v5772 = vunpack.c.l.b16 %v5088
          %v5773 = vunpack.c.h.b16 %v5088
          %v5774 = vunpack.c.l.b16 %v5089
          %v5775 = vunpack.c.h.b16 %v5089
          %v5776 = vunpack.c.l.b16 %v5090
          %v5777 = vunpack.c.h.b16 %v5090
          %v5778 = vunpack.c.l.b16 %v5091
          %v5779 = vunpack.c.h.b16 %v5091
          %v5780 = vunpack.c.l.b16 %v5092
          %v5781 = vunpack.c.h.b16 %v5092
          %v5782 = vunpack.c.l.b16 %v5093
          %v5783 = vunpack.c.h.b16 %v5093
          %v5784 = vunpack.c.l.b16 %v5094
          %v5785 = vunpack.c.h.b16 %v5094
          %v5786 = vunpack.c.l.b16 %v5095
          %v5787 = vunpack.c.h.b16 %v5095
          %v5788 = vunpack.c.l.b16 %v5096
          %v5789 = vunpack.c.h.b16 %v5096
          %v5790 = vunpack.c.l.b16 %v5097
          %v5791 = vunpack.c.h.b16 %v5097
          %v5792 = vunpack.c.l.b16 %v5098
          %v5793 = vunpack.c.h.b16 %v5098
          %v5794 = vunpack.c.l.b16 %v5099
          %v5795 = vunpack.c.h.b16 %v5099
          %v5796 = vunpack.c.l.b16 %v5100
          %v5797 = vunpack.c.h.b16 %v5100
          %v5798 = vunpack.c.l.b16 %v5101
          %v5799 = vunpack.c.h.b16 %v5101
          %v5800 = vunpack.c.l.b16 %v5102
          %v5801 = vunpack.c.h.b16 %v5102
          %v5802 = vunpack.c.l.b16 %v5103
          %v5803 = vunpack.c.h.b16 %v5103
          %v5804 = vunpack.c.l.b16 %v5104
          %v5805 = vunpack.c.h.b16 %v5104
          %v5806 = vunpack.c.l.b16 %v5105
          %v5807 = vunpack.c.h.b16 %v5105
          %v5808 = vunpack.c.l.b16 %v5106
          %v5809 = vunpack.c.h.b16 %v5106
          %v5810 = vunpack.c.l.b16 %v5107
          %v5811 = vunpack.c.h.b16 %v5107
          %v5812 = vunpack.c.l.b16 %v5108
          %v5813 = vunpack.c.h.b16 %v5108
          %v5814 = vunpack.c.l.b16 %v5109
          %v5815 = vunpack.c.h.b16 %v5109
          %v5816 = vunpack.c.l.b16 %v5110
          %v5817 = vunpack.c.h.b16 %v5110
          %v5818 = vunpack.c.l.b16 %v5111
          %v5819 = vunpack.c.h.b16 %v5111
          %v5820 = vunpack.c.l.b16 %v5112
          %v5821 = vunpack.c.h.b16 %v5112
          %v5822 = vunpack.c.l.b16 %v5113
          %v5823 = vunpack.c.h.b16 %v5113
          %v5824 = vunpack.c.l.b16 %v5114
          %v5825 = vunpack.c.h.b16 %v5114
          %v5826 = vunpack.c.l.b16 %v5115
          %v5827 = vunpack.c.h.b16 %v5115
          %v5828 = vunpack.c.l.b16 %v5116
          %v5829 = vunpack.c.h.b16 %v5116
          %v5830 = vunpack.c.l.b16 %v5117
          %v5831 = vunpack.c.h.b16 %v5117
          %v5832 = vunpack.c.l.b16 %v5118
          %v5833 = vunpack.c.h.b16 %v5118
          %v5834 = vunpack.c.l.b16 %v5119
          %v5835 = vunpack.c.h.b16 %v5119
          %v5836 = vunpack.c.l.b16 %v5120
          %v5837 = vunpack.c.h.b16 %v5120
          %v5838 = vunpack.c.l.b16 %v5121
          %v5839 = vunpack.c.h.b16 %v5121
          %v5840 = vunpack.c.l.b16 %v5122
          %v5841 = vunpack.c.h.b16 %v5122
          %v5842 = vunpack.c.l.b16 %v5123
          %v5843 = vunpack.c.h.b16 %v5123
          %v5844 = vunpack.c.l.b16 %v5124
          %v5845 = vunpack.c.h.b16 %v5124
          %v5846 = vunpack.c.l.b16 %v5125
          %v5847 = vunpack.c.h.b16 %v5125
          %v5848 = vunpack.c.l.b16 %v5126
          %v5849 = vunpack.c.h.b16 %v5126
          %v5850 = vunpack.c.l.b16 %v5127
          %v5851 = vunpack.c.h.b16 %v5127
          %v5852 = vunpack.c.l.b16 %v5128
          %v5853 = vunpack.c.h.b16 %v5128
          %v5854 = vunpack.c.l.b16 %v5129
          %v5855 = vunpack.c.h.b16 %v5129
          %v5856 = vunpack.c.l.b16 %v5130
          %v5857 = vunpack.c.h.b16 %v5130
          %v5858 = vunpack.c.l.b16 %v5131
          %v5859 = vunpack.c.h.b16 %v5131
          %v5860 = vunpack.c.l.b16 %v5132
          %v5861 = vunpack.c.h.b16 %v5132
          %v5862 = vunpack.c.l.b16 %v5133
          %v5863 = vunpack.c.h.b16 %v5133
          %v5864 = vunpack.c.l.b16 %v5134
          %v5865 = vunpack.c.h.b16 %v5134
          %v5866 = vunpack.c.l.b16 %v5135
          %v5867 = vunpack.c.h.b16 %v5135
          %v5868 = vunpack.c.l.b16 %v5136
          %v5869 = vunpack.c.h.b16 %v5136
          %v5870 = vunpack.c.l.b16 %v5137
          %v5871 = vunpack.c.h.b16 %v5137
          %v5872 = vunpack.c.l.b16 %v5138
          %v5873 = vunpack.c.h.b16 %v5138
          %v5874 = vunpack.c.l.b16 %v5139
          %v5875 = vunpack.c.h.b16 %v5139
          %v5876 = vunpack.c.l.b16 %v5140
          %v5877 = vunpack.c.h.b16 %v5140
          %v5878 = vunpack.c.l.b16 %v5141
          %v5879 = vunpack.c.h.b16 %v5141
          %v5880 = vunpack.c.l.b16 %v5142
          %v5881 = vunpack.c.h.b16 %v5142
          %v5882 = vunpack.c.l.b16 %v5143
          %v5883 = vunpack.c.h.b16 %v5143
          %v5884 = vunpack.c.l.b16 %v5144
          %v5885 = vunpack.c.h.b16 %v5144
          %v5886 = vunpack.c.l.b16 %v5145
          %v5887 = vunpack.c.h.b16 %v5145
          %v5888 = vunpack.c.l.b16 %v5146
          %v5889 = vunpack.c.h.b16 %v5146
          %v5890 = vunpack.c.l.b16 %v5147
          %v5891 = vunpack.c.h.b16 %v5147
          %v5892 = vunpack.c.l.b16 %v5148
          %v5893 = vunpack.c.h.b16 %v5148
          %v5894 = vunpack.c.l.b16 %v5149
          %v5895 = vunpack.c.h.b16 %v5149
          %v5896 = vunpack.c.l.b16 %v5150
          %v5897 = vunpack.c.h.b16 %v5150
          %v5898 = vunpack.c.l.b16 %v5151
          %v5899 = vunpack.c.h.b16 %v5151
          %v5900 = vunpack.c.l.b16 %v5152
          %v5901 = vunpack.c.h.b16 %v5152
          %v5902 = vunpack.c.l.b16 %v5153
          %v5903 = vunpack.c.h.b16 %v5153
          %v5904 = vunpack.c.l.b16 %v5154
          %v5905 = vunpack.c.h.b16 %v5154
          %v5906 = vunpack.c.l.b16 %v5155
          %v5907 = vunpack.c.h.b16 %v5155
          %v5908 = vunpack.c.l.b16 %v5156
          %v5909 = vunpack.c.h.b16 %v5156
          %v5910 = vunpack.c.l.b16 %v5157
          %v5911 = vunpack.c.h.b16 %v5157
          %v5912 = vunpack.c.l.b16 %v5158
          %v5913 = vunpack.c.h.b16 %v5158
          %v5914 = vunpack.c.l.b16 %v5159
          %v5915 = vunpack.c.h.b16 %v5159
          %v5916 = vunpack.c.l.b16 %v5160
          %v5917 = vunpack.c.h.b16 %v5160
          %v5918 = vunpack.c.l.b16 %v5161
          %v5919 = vunpack.c.h.b16 %v5161
          %v5920 = vunpack.c.l.b16 %v5162
          %v5921 = vunpack.c.h.b16 %v5162
          %v5922 = vunpack.c.l.b16 %v5163
          %v5923 = vunpack.c.h.b16 %v5163
          %v5924 = vunpack.c.l.b16 %v5164
          %v5925 = vunpack.c.h.b16 %v5164
          %v5926 = vunpack.c.l.b16 %v5165
          %v5927 = vunpack.c.h.b16 %v5165
          %v5928 = vunpack.c.l.b16 %v5166
          %v5929 = vunpack.c.h.b16 %v5166
          %v5930 = vunpack.c.l.b16 %v5167
          %v5931 = vunpack.c.h.b16 %v5167
          %v5932 = vunpack.c.l.b16 %v5168
          %v5933 = vunpack.c.h.b16 %v5168
          %v5934 = vunpack.c.l.b16 %v5169
          %v5935 = vunpack.c.h.b16 %v5169
          %v5936 = vunpack.c.l.b16 %v5170
          %v5937 = vunpack.c.h.b16 %v5170
          %v5938 = vunpack.c.l.b16 %v5171
          %v5939 = vunpack.c.h.b16 %v5171
          %v5940 = vunpack.c.l.b16 %v5172
          %v5941 = vunpack.c.h.b16 %v5172
          %v5942 = vpack.c.b16 %v5434, %v5430
          %v5943 = vpack.c.b16 %v5435, %v5431
          %v5944 = vpack.c.b16 %v5436, %v5432
          %v5945 = vpack.c.b16 %v5437, %v5433
          %v5946 = vpack.c.b16 %v5442, %v5438
          %v5947 = vpack.c.b16 %v5443, %v5439
          %v5948 = vpack.c.b16 %v5444, %v5440
          %v5949 = vpack.c.b16 %v5445, %v5441
          %v5950 = vpack.c.b16 %v5450, %v5446
          %v5951 = vpack.c.b16 %v5451, %v5447
          %v5952 = vpack.c.b16 %v5452, %v5448
          %v5953 = vpack.c.b16 %v5453, %v5449
          %v5954 = vpack.c.b16 %v5458, %v5454
          %v5955 = vpack.c.b16 %v5459, %v5455
          %v5956 = vpack.c.b16 %v5460, %v5456
          %v5957 = vpack.c.b16 %v5461, %v5457
          %v5958 = vpack.c.b16 %v5466, %v5462
          %v5959 = vpack.c.b16 %v5467, %v5463
          %v5960 = vpack.c.b16 %v5468, %v5464
          %v5961 = vpack.c.b16 %v5469, %v5465
          %v5962 = vpack.c.b16 %v5474, %v5470
          %v5963 = vpack.c.b16 %v5475, %v5471
          %v5964 = vpack.c.b16 %v5476, %v5472
          %v5965 = vpack.c.b16 %v5477, %v5473
          %v5966 = vpack.c.b16 %v5482, %v5478
          %v5967 = vpack.c.b16 %v5483, %v5479
          %v5968 = vpack.c.b16 %v5484, %v5480
          %v5969 = vpack.c.b16 %v5485, %v5481
          %v5970 = vpack.c.b16 %v5490, %v5486
          %v5971 = vpack.c.b16 %v5491, %v5487
          %v5972 = vpack.c.b16 %v5492, %v5488
          %v5973 = vpack.c.b16 %v5493, %v5489
          %v5974 = vpack.c.b16 %v5498, %v5494
          %v5975 = vpack.c.b16 %v5499, %v5495
          %v5976 = vpack.c.b16 %v5500, %v5496
          %v5977 = vpack.c.b16 %v5501, %v5497
          %v5978 = vpack.c.b16 %v5506, %v5502
          %v5979 = vpack.c.b16 %v5507, %v5503
          %v5980 = vpack.c.b16 %v5508, %v5504
          %v5981 = vpack.c.b16 %v5509, %v5505
          %v5982 = vpack.c.b16 %v5514, %v5510
          %v5983 = vpack.c.b16 %v5515, %v5511
          %v5984 = vpack.c.b16 %v5516, %v5512
          %v5985 = vpack.c.b16 %v5517, %v5513
          %v5986 = vpack.c.b16 %v5522, %v5518
          %v5987 = vpack.c.b16 %v5523, %v5519
          %v5988 = vpack.c.b16 %v5524, %v5520
          %v5989 = vpack.c.b16 %v5525, %v5521
          %v5990 = vpack.c.b16 %v5530, %v5526
          %v5991 = vpack.c.b16 %v5531, %v5527
          %v5992 = vpack.c.b16 %v5532, %v5528
          %v5993 = vpack.c.b16 %v5533, %v5529
          %v5994 = vpack.c.b16 %v5538, %v5534
          %v5995 = vpack.c.b16 %v5539, %v5535
          %v5996 = vpack.c.b16 %v5540, %v5536
          %v5997 = vpack.c.b16 %v5541, %v5537
          %v5998 = vpack.c.b16 %v5546, %v5542
          %v5999 = vpack.c.b16 %v5547, %v5543
          %v6000 = vpack.c.b16 %v5548, %v5544
          %v6001 = vpack.c.b16 %v5549, %v5545
          %v6002 = vpack.c.b16 %v5554, %v5550
          %v6003 = vpack.c.b16 %v5555, %v5551
          %v6004 = vpack.c.b16 %v5556, %v5552
          %v6005 = vpack.c.b16 %v5557, %v5553
          %v6006 = vpack.c.b16 %v5562, %v5558
          %v6007 = vpack.c.b16 %v5563, %v5559
          %v6008 = vpack.c.b16 %v5564, %v5560
          %v6009 = vpack.c.b16 %v5565, %v5561
          %v6010 = vpack.c.b16 %v5570, %v5566
          %v6011 = vpack.c.b16 %v5571, %v5567
          %v6012 = vpack.c.b16 %v5572, %v5568
          %v6013 = vpack.c.b16 %v5573, %v5569
          %v6014 = vpack.c.b16 %v5578, %v5574
          %v6015 = vpack.c.b16 %v5579, %v5575
          %v6016 = vpack.c.b16 %v5580, %v5576
          %v6017 = vpack.c.b16 %v5581, %v5577
          %v6018 = vpack.c.b16 %v5586, %v5582
          %v6019 = vpack.c.b16 %v5587, %v5583
          %v6020 = vpack.c.b16 %v5588, %v5584
          %v6021 = vpack.c.b16 %v5589, %v5585
          %v6022 = vpack.c.b16 %v5594, %v5590
          %v6023 = vpack.c.b16 %v5595, %v5591
          %v6024 = vpack.c.b16 %v5596, %v5592
          %v6025 = vpack.c.b16 %v5597, %v5593
          %v6026 = vpack.c.b16 %v5602, %v5598
          %v6027 = vpack.c.b16 %v5603, %v5599
          %v6028 = vpack.c.b16 %v5604, %v5600
          %v6029 = vpack.c.b16 %v5605, %v5601
          %v6030 = vpack.c.b16 %v5610, %v5606
          %v6031 = vpack.c.b16 %v5611, %v5607
          %v6032 = vpack.c.b16 %v5612, %v5608
          %v6033 = vpack.c.b16 %v5613, %v5609
          %v6034 = vpack.c.b16 %v5618, %v5614
          %v6035 = vpack.c.b16 %v5619, %v5615
          %v6036 = vpack.c.b16 %v5620, %v5616
          %v6037 = vpack.c.b16 %v5621, %v5617
          %v6038 = vpack.c.b16 %v5626, %v5622
          %v6039 = vpack.c.b16 %v5627, %v5623
          %v6040 = vpack.c.b16 %v5628, %v5624
          %v6041 = vpack.c.b16 %v5629, %v5625
          %v6042 = vpack.c.b16 %v5634, %v5630
          %v6043 = vpack.c.b16 %v5635, %v5631
          %v6044 = vpack.c.b16 %v5636, %v5632
          %v6045 = vpack.c.b16 %v5637, %v5633
          %v6046 = vpack.c.b16 %v5642, %v5638
          %v6047 = vpack.c.b16 %v5643, %v5639
          %v6048 = vpack.c.b16 %v5644, %v5640
          %v6049 = vpack.c.b16 %v5645, %v5641
          %v6050 = vpack.c.b16 %v5650, %v5646
          %v6051 = vpack.c.b16 %v5651, %v5647
          %v6052 = vpack.c.b16 %v5652, %v5648
          %v6053 = vpack.c.b16 %v5653, %v5649
          %v6054 = vpack.c.b16 %v5658, %v5654
          %v6055 = vpack.c.b16 %v5659, %v5655
          %v6056 = vpack.c.b16 %v5660, %v5656
          %v6057 = vpack.c.b16 %v5661, %v5657
          %v6058 = vpack.c.b16 %v5666, %v5662
          %v6059 = vpack.c.b16 %v5667, %v5663
          %v6060 = vpack.c.b16 %v5668, %v5664
          %v6061 = vpack.c.b16 %v5669, %v5665
          %v6062 = vpack.c.b16 %v5674, %v5670
          %v6063 = vpack.c.b16 %v5675, %v5671
          %v6064 = vpack.c.b16 %v5676, %v5672
          %v6065 = vpack.c.b16 %v5677, %v5673
          %v6066 = vpack.c.b16 %v5682, %v5678
          %v6067 = vpack.c.b16 %v5683, %v5679
          %v6068 = vpack.c.b16 %v5684, %v5680
          %v6069 = vpack.c.b16 %v5685, %v5681
          %v6070 = vpack.c.b16 %v5690, %v5686
          %v6071 = vpack.c.b16 %v5691, %v5687
          %v6072 = vpack.c.b16 %v5692, %v5688
          %v6073 = vpack.c.b16 %v5693, %v5689
          %v6074 = vpack.c.b16 %v5698, %v5694
          %v6075 = vpack.c.b16 %v5699, %v5695
          %v6076 = vpack.c.b16 %v5700, %v5696
          %v6077 = vpack.c.b16 %v5701, %v5697
          %v6078 = vpack.c.b16 %v5706, %v5702
          %v6079 = vpack.c.b16 %v5707, %v5703
          %v6080 = vpack.c.b16 %v5708, %v5704
          %v6081 = vpack.c.b16 %v5709, %v5705
          %v6082 = vpack.c.b16 %v5714, %v5710
          %v6083 = vpack.c.b16 %v5715, %v5711
          %v6084 = vpack.c.b16 %v5716, %v5712
          %v6085 = vpack.c.b16 %v5717, %v5713
          %v6086 = vpack.c.b16 %v5722, %v5718
          %v6087 = vpack.c.b16 %v5723, %v5719
          %v6088 = vpack.c.b16 %v5724, %v5720
          %v6089 = vpack.c.b16 %v5725, %v5721
          %v6090 = vpack.c.b16 %v5730, %v5726
          %v6091 = vpack.c.b16 %v5731, %v5727
          %v6092 = vpack.c.b16 %v5732, %v5728
          %v6093 = vpack.c.b16 %v5733, %v5729
          %v6094 = vpack.c.b16 %v5738, %v5734
          %v6095 = vpack.c.b16 %v5739, %v5735
          %v6096 = vpack.c.b16 %v5740, %v5736
          %v6097 = vpack.c.b16 %v5741, %v5737
          %v6098 = vpack.c.b16 %v5746, %v5742
          %v6099 = vpack.c.b16 %v5747, %v5743
          %v6100 = vpack.c.b16 %v5748, %v5744
          %v6101 = vpack.c.b16 %v5749, %v5745
          %v6102 = vpack.c.b16 %v5754, %v5750
          %v6103 = vpack.c.b16 %v5755, %v5751
          %v6104 = vpack.c.b16 %v5756, %v5752
          %v6105 = vpack.c.b16 %v5757, %v5753
          %v6106 = vpack.c.b16 %v5762, %v5758
          %v6107 = vpack.c.b16 %v5763, %v5759
          %v6108 = vpack.c.b16 %v5764, %v5760
          %v6109 = vpack.c.b16 %v5765, %v5761
          %v6110 = vpack.c.b16 %v5770, %v5766
          %v6111 = vpack.c.b16 %v5771, %v5767
          %v6112 = vpack.c.b16 %v5772, %v5768
          %v6113 = vpack.c.b16 %v5773, %v5769
          %v6114 = vpack.c.b16 %v5778, %v5774
          %v6115 = vpack.c.b16 %v5779, %v5775
          %v6116 = vpack.c.b16 %v5780, %v5776
          %v6117 = vpack.c.b16 %v5781, %v5777
          %v6118 = vpack.c.b16 %v5786, %v5782
          %v6119 = vpack.c.b16 %v5787, %v5783
          %v6120 = vpack.c.b16 %v5788, %v5784
          %v6121 = vpack.c.b16 %v5789, %v5785
          %v6122 = vpack.c.b16 %v5794, %v5790
          %v6123 = vpack.c.b16 %v5795, %v5791
          %v6124 = vpack.c.b16 %v5796, %v5792
          %v6125 = vpack.c.b16 %v5797, %v5793
          %v6126 = vpack.c.b16 %v5802, %v5798
          %v6127 = vpack.c.b16 %v5803, %v5799
          %v6128 = vpack.c.b16 %v5804, %v5800
          %v6129 = vpack.c.b16 %v5805, %v5801
          %v6130 = vpack.c.b16 %v5810, %v5806
          %v6131 = vpack.c.b16 %v5811, %v5807
          %v6132 = vpack.c.b16 %v5812, %v5808
          %v6133 = vpack.c.b16 %v5813, %v5809
          %v6134 = vpack.c.b16 %v5818, %v5814
          %v6135 = vpack.c.b16 %v5819, %v5815
          %v6136 = vpack.c.b16 %v5820, %v5816
          %v6137 = vpack.c.b16 %v5821, %v5817
          %v6138 = vpack.c.b16 %v5826, %v5822
          %v6139 = vpack.c.b16 %v5827, %v5823
          %v6140 = vpack.c.b16 %v5828, %v5824
          %v6141 = vpack.c.b16 %v5829, %v5825
          %v6142 = vpack.c.b16 %v5834, %v5830
          %v6143 = vpack.c.b16 %v5835, %v5831
          %v6144 = vpack.c.b16 %v5836, %v5832
          %v6145 = vpack.c.b16 %v5837, %v5833
          %v6146 = vpack.c.b16 %v5842, %v5838
          %v6147 = vpack.c.b16 %v5843, %v5839
          %v6148 = vpack.c.b16 %v5844, %v5840
          %v6149 = vpack.c.b16 %v5845, %v5841
          %v6150 = vpack.c.b16 %v5850, %v5846
          %v6151 = vpack.c.b16 %v5851, %v5847
          %v6152 = vpack.c.b16 %v5852, %v5848
          %v6153 = vpack.c.b16 %v5853, %v5849
          %v6154 = vpack.c.b16 %v5858, %v5854
          %v6155 = vpack.c.b16 %v5859, %v5855
          %v6156 = vpack.c.b16 %v5860, %v5856
          %v6157 = vpack.c.b16 %v5861, %v5857
          %v6158 = vpack.c.b16 %v5866, %v5862
          %v6159 = vpack.c.b16 %v5867, %v5863
          %v6160 = vpack.c.b16 %v5868, %v5864
          %v6161 = vpack.c.b16 %v5869, %v5865
          %v6162 = vpack.c.b16 %v5874, %v5870
          %v6163 = vpack.c.b16 %v5875, %v5871
          %v6164 = vpack.c.b16 %v5876, %v5872
          %v6165 = vpack.c.b16 %v5877, %v5873
          %v6166 = vpack.c.b16 %v5882, %v5878
          %v6167 = vpack.c.b16 %v5883, %v5879
          %v6168 = vpack.c.b16 %v5884, %v5880
          %v6169 = vpack.c.b16 %v5885, %v5881
          %v6170 = vpack.c.b16 %v5890, %v5886
          %v6171 = vpack.c.b16 %v5891, %v5887
          %v6172 = vpack.c.b16 %v5892, %v5888
          %v6173 = vpack.c.b16 %v5893, %v5889
          %v6174 = vpack.c.b16 %v5898, %v5894
          %v6175 = vpack.c.b16 %v5899, %v5895
          %v6176 = vpack.c.b16 %v5900, %v5896
          %v6177 = vpack.c.b16 %v5901, %v5897
          %v6178 = vpack.c.b16 %v5906, %v5902
          %v6179 = vpack.c.b16 %v5907, %v5903
          %v6180 = vpack.c.b16 %v5908, %v5904
          %v6181 = vpack.c.b16 %v5909, %v5905
          %v6182 = vpack.c.b16 %v5914, %v5910
          %v6183 = vpack.c.b16 %v5915, %v5911
          %v6184 = vpack.c.b16 %v5916, %v5912
          %v6185 = vpack.c.b16 %v5917, %v5913
          %v6186 = vpack.c.b16 %v5922, %v5918
          %v6187 = vpack.c.b16 %v5923, %v5919
          %v6188 = vpack.c.b16 %v5924, %v5920
          %v6189 = vpack.c.b16 %v5925, %v5921
          %v6190 = vpack.c.b16 %v5930, %v5926
          %v6191 = vpack.c.b16 %v5931, %v5927
          %v6192 = vpack.c.b16 %v5932, %v5928
          %v6193 = vpack.c.b16 %v5933, %v5929
          %v6194 = vpack.c.b16 %v5938, %v5934
          %v6195 = vpack.c.b16 %v5939, %v5935
          %v6196 = vpack.c.b16 %v5940, %v5936
          %v6197 = vpack.c.b16 %v5941, %v5937
          %v6455 = vlaneseq
          %v6456 = vshrl.u32 %v6455, 7
          %v6457 = vsub.s32 0, %v6456
          %v6458 = vrot.slane %v5173, %v6457
          %v6459 = vlaneseq
          %v6460 = vshrl.u32 %v6459, 7
          %v6461 = vsub.s32 1, %v6460
          %v6462 = vrot.slane %v5173, %v6461
          %v6463 = vlaneseq
          %v6464 = vshrl.u32 %v6463, 7
          %v6465 = vsub.s32 2, %v6464
          %v6466 = vrot.slane %v5173, %v6465
          %v6467 = vlaneseq
          %v6468 = vshrl.u32 %v6467, 7
          %v6469 = vsub.s32 3, %v6468
          %v6470 = vrot.slane %v5173, %v6469
          %6475 = vmatprep.subr.bf16.mxu0 %v5943
          %6476 = vmatpush1.bf16.msra.mxu0 %v5942
          %6477 = vmatprep.subr.bf16.mxu0 %v5947
          %6478 = vmatpush1.bf16.msra.mxu0 %v5946
          %6479 = vmatprep.subr.bf16.mxu0 %v5951
          %6480 = vmatpush1.bf16.msra.mxu0 %v5950
          %6481 = vmatprep.subr.bf16.mxu0 %v5955
          %6482 = vmatpush1.bf16.msra.mxu0 %v5954
          %6483 = vmatprep.subr.bf16.mxu0 %v5959
          %6484 = vmatpush1.bf16.msra.mxu0 %v5958
          %6485 = vmatprep.subr.bf16.mxu0 %v5963
          %6486 = vmatpush1.bf16.msra.mxu0 %v5962
          %6487 = vmatprep.subr.bf16.mxu0 %v5967
          %6488 = vmatpush1.bf16.msra.mxu0 %v5966
          %6489 = vmatprep.subr.bf16.mxu0 %v5971
          %6490 = vmatpush1.bf16.msra.mxu0 %v5970
          %6491 = vmatprep.subr.bf16.mxu0 %v5975
          %6492 = vmatpush1.bf16.msra.mxu0 %v5974
          %6493 = vmatprep.subr.bf16.mxu0 %v5979
          %6494 = vmatpush1.bf16.msra.mxu0 %v5978
          %6495 = vmatprep.subr.bf16.mxu0 %v5983
          %6496 = vmatpush1.bf16.msra.mxu0 %v5982
          %6497 = vmatprep.subr.bf16.mxu0 %v5987
          %6498 = vmatpush1.bf16.msra.mxu0 %v5986
          %6499 = vmatprep.subr.bf16.mxu0 %v5991
          %6500 = vmatpush1.bf16.msra.mxu0 %v5990
          %6501 = vmatprep.subr.bf16.mxu0 %v5995
          %6502 = vmatpush1.bf16.msra.mxu0 %v5994
          %6503 = vmatprep.subr.bf16.mxu0 %v5999
          %6504 = vmatpush1.bf16.msra.mxu0 %v5998
          %6505 = vmatprep.subr.bf16.mxu0 %v6003
          %6506 = vmatpush1.bf16.msra.mxu0 %v6002
          %6507 = vmatprep.mubr.bf16.mxu0 %v4910
          %6508 = vmatmul.mubr.bf16.gmra.mrb[0].mxu0 %v4909
          %v6509 = vpop.f32.mrb[0].mxu0
          %v6510 = vadd.f32 %v6458, %v6509
          %v6511 = vpop.f32.mrb[0].mxu0
          %v6512 = vadd.f32 %v6462, %v6511
          %v6513 = vpop.f32.mrb[0].mxu0
          %v6514 = vpop.f32.mrb[0].mxu0
          %6515 = vdwg.mxu0
          %6516 = vmatprep.subr.bf16.mxu0 %v6007
          %6517 = vmatpush1.bf16.msra.mxu0 %v6006
          %6518 = vmatprep.subr.bf16.mxu0 %v6011
          %6519 = vmatpush1.bf16.msra.mxu0 %v6010
          %6520 = vmatprep.subr.bf16.mxu0 %v6015
          %6521 = vmatpush1.bf16.msra.mxu0 %v6014
          %6522 = vmatprep.subr.bf16.mxu0 %v6019
          %6523 = vmatpush1.bf16.msra.mxu0 %v6018
          %6524 = vmatprep.subr.bf16.mxu0 %v6023
          %6525 = vmatpush1.bf16.msra.mxu0 %v6022
          %6526 = vmatprep.subr.bf16.mxu0 %v6027
          %6527 = vmatpush1.bf16.msra.mxu0 %v6026
          %6528 = vmatprep.subr.bf16.mxu0 %v6031
          %6529 = vmatpush1.bf16.msra.mxu0 %v6030
          %6530 = vmatprep.subr.bf16.mxu0 %v6035
          %6531 = vmatpush1.bf16.msra.mxu0 %v6034
          %6532 = vmatprep.subr.bf16.mxu0 %v6039
          %6533 = vmatpush1.bf16.msra.mxu0 %v6038
          %6534 = vmatprep.subr.bf16.mxu0 %v6043
          %6535 = vmatpush1.bf16.msra.mxu0 %v6042
          %6536 = vmatprep.subr.bf16.mxu0 %v6047
          %6537 = vmatpush1.bf16.msra.mxu0 %v6046
          %6538 = vmatprep.subr.bf16.mxu0 %v6051
          %6539 = vmatpush1.bf16.msra.mxu0 %v6050
          %6540 = vmatprep.subr.bf16.mxu0 %v6055
          %6541 = vmatpush1.bf16.msra.mxu0 %v6054
          %6542 = vmatprep.subr.bf16.mxu0 %v6059
          %6543 = vmatpush1.bf16.msra.mxu0 %v6058
          %6544 = vmatprep.subr.bf16.mxu0 %v6063
          %6545 = vmatpush1.bf16.msra.mxu0 %v6062
          %6546 = vmatprep.subr.bf16.mxu0 %v6067
          %6547 = vmatpush1.bf16.msra.mxu0 %v6066
          %6548 = vmatprep.mubr.bf16.mxu0 %v4912
          %6549 = vmatmul.mubr.bf16.gmra.mrb[0].mxu0 %v4911
          %v6550 = vpop.f32.mrb[0].mxu0
          %v6551 = vadd.f32 %v6510, %v6550
          %v6552 = vpop.f32.mrb[0].mxu0
          %v6553 = vadd.f32 %v6512, %v6552
          %v6554 = vpop.f32.mrb[0].mxu0
          %v6555 = vpop.f32.mrb[0].mxu0
          %6556 = vdwg.mxu0
          %6557 = vmatprep.subr.bf16.mxu0 %v6071
          %6558 = vmatpush1.bf16.msra.mxu0 %v6070
          %6559 = vmatprep.subr.bf16.mxu0 %v6075
          %6560 = vmatpush1.bf16.msra.mxu0 %v6074
          %6561 = vmatprep.subr.bf16.mxu0 %v6079
          %6562 = vmatpush1.bf16.msra.mxu0 %v6078
          %6563 = vmatprep.subr.bf16.mxu0 %v6083
          %6564 = vmatpush1.bf16.msra.mxu0 %v6082
          %6565 = vmatprep.subr.bf16.mxu0 %v6087
          %6566 = vmatpush1.bf16.msra.mxu0 %v6086
          %6567 = vmatprep.subr.bf16.mxu0 %v6091
          %6568 = vmatpush1.bf16.msra.mxu0 %v6090
          %6569 = vmatprep.subr.bf16.mxu0 %v6095
          %6570 = vmatpush1.bf16.msra.mxu0 %v6094
          %6571 = vmatprep.subr.bf16.mxu0 %v6099
          %6572 = vmatpush1.bf16.msra.mxu0 %v6098
          %6573 = vmatprep.subr.bf16.mxu0 %v6103
          %6574 = vmatpush1.bf16.msra.mxu0 %v6102
          %6575 = vmatprep.subr.bf16.mxu0 %v6107
          %6576 = vmatpush1.bf16.msra.mxu0 %v6106
          %6577 = vmatprep.subr.bf16.mxu0 %v6111
          %6578 = vmatpush1.bf16.msra.mxu0 %v6110
          %6579 = vmatprep.subr.bf16.mxu0 %v6115
          %6580 = vmatpush1.bf16.msra.mxu0 %v6114
          %6581 = vmatprep.subr.bf16.mxu0 %v6119
          %6582 = vmatpush1.bf16.msra.mxu0 %v6118
          %6583 = vmatprep.subr.bf16.mxu0 %v6123
          %6584 = vmatpush1.bf16.msra.mxu0 %v6122
          %6585 = vmatprep.subr.bf16.mxu0 %v6127
          %6586 = vmatpush1.bf16.msra.mxu0 %v6126
          %6587 = vmatprep.subr.bf16.mxu0 %v6131
          %6588 = vmatpush1.bf16.msra.mxu0 %v6130
          %6589 = vmatprep.mubr.bf16.mxu0 %v4914
          %6590 = vmatmul.mubr.bf16.gmra.mrb[0].mxu0 %v4913
          %v6591 = vpop.f32.mrb[0].mxu0
          %v6592 = vadd.f32 %v6551, %v6591
          %v6593 = vpop.f32.mrb[0].mxu0
          %v6594 = vadd.f32 %v6553, %v6593
          %v6595 = vpop.f32.mrb[0].mxu0
          %v6596 = vpop.f32.mrb[0].mxu0
          %6597 = vdwg.mxu0
          %6598 = vmatprep.subr.bf16.mxu0 %v6135
          %6599 = vmatpush1.bf16.msra.mxu0 %v6134
          %6600 = vmatprep.subr.bf16.mxu0 %v6139
          %6601 = vmatpush1.bf16.msra.mxu0 %v6138
          %6602 = vmatprep.subr.bf16.mxu0 %v6143
          %6603 = vmatpush1.bf16.msra.mxu0 %v6142
          %6604 = vmatprep.subr.bf16.mxu0 %v6147
          %6605 = vmatpush1.bf16.msra.mxu0 %v6146
          %6606 = vmatprep.subr.bf16.mxu0 %v6151
          %6607 = vmatpush1.bf16.msra.mxu0 %v6150
          %6608 = vmatprep.subr.bf16.mxu0 %v6155
          %6609 = vmatpush1.bf16.msra.mxu0 %v6154
          %6610 = vmatprep.subr.bf16.mxu0 %v6159
          %6611 = vmatpush1.bf16.msra.mxu0 %v6158
          %6612 = vmatprep.subr.bf16.mxu0 %v6163
          %6613 = vmatpush1.bf16.msra.mxu0 %v6162
          %6614 = vmatprep.subr.bf16.mxu0 %v6167
          %6615 = vmatpush1.bf16.msra.mxu0 %v6166
          %6616 = vmatprep.subr.bf16.mxu0 %v6171
          %6617 = vmatpush1.bf16.msra.mxu0 %v6170
          %6618 = vmatprep.subr.bf16.mxu0 %v6175
          %6619 = vmatpush1.bf16.msra.mxu0 %v6174
          %6620 = vmatprep.subr.bf16.mxu0 %v6179
          %6621 = vmatpush1.bf16.msra.mxu0 %v6178
          %6622 = vmatprep.subr.bf16.mxu0 %v6183
          %6623 = vmatpush1.bf16.msra.mxu0 %v6182
          %6624 = vmatprep.subr.bf16.mxu0 %v6187
          %6625 = vmatpush1.bf16.msra.mxu0 %v6186
          %6626 = vmatprep.subr.bf16.mxu0 %v6191
          %6627 = vmatpush1.bf16.msra.mxu0 %v6190
          %6628 = vmatprep.subr.bf16.mxu0 %v6195
          %6629 = vmatpush1.bf16.msra.mxu0 %v6194
          %6630 = vmatprep.mubr.bf16.mxu0 %v4916
          %6631 = vmatmul.mubr.bf16.gmra.mrb[0].mxu0 %v4915
          %v6632 = vpop.f32.mrb[0].mxu0
          %v6633 = vadd.f32 %v6592, %v6632
          %v6634 = vpop.f32.mrb[0].mxu0
          %v6635 = vadd.f32 %v6594, %v6634
          %v6636 = vpop.f32.mrb[0].mxu0
          %v6637 = vpop.f32.mrb[0].mxu0
          %6638 = vdwg.mxu0
          %6639 = vmatprep.subr.bf16.mxu0 %v5945
          %6640 = vmatpush1.bf16.msra.mxu0 %v5944
          %6641 = vmatprep.subr.bf16.mxu0 %v5949
          %6642 = vmatpush1.bf16.msra.mxu0 %v5948
          %6643 = vmatprep.subr.bf16.mxu0 %v5953
          %6644 = vmatpush1.bf16.msra.mxu0 %v5952
          %6645 = vmatprep.subr.bf16.mxu0 %v5957
          %6646 = vmatpush1.bf16.msra.mxu0 %v5956
          %6647 = vmatprep.subr.bf16.mxu0 %v5961
          %6648 = vmatpush1.bf16.msra.mxu0 %v5960
          %6649 = vmatprep.subr.bf16.mxu0 %v5965
          %6650 = vmatpush1.bf16.msra.mxu0 %v5964
          %6651 = vmatprep.subr.bf16.mxu0 %v5969
          %6652 = vmatpush1.bf16.msra.mxu0 %v5968
          %6653 = vmatprep.subr.bf16.mxu0 %v5973
          %6654 = vmatpush1.bf16.msra.mxu0 %v5972
          %6655 = vmatprep.subr.bf16.mxu0 %v5977
          %6656 = vmatpush1.bf16.msra.mxu0 %v5976
          %6657 = vmatprep.subr.bf16.mxu0 %v5981
          %6658 = vmatpush1.bf16.msra.mxu0 %v5980
          %6659 = vmatprep.subr.bf16.mxu0 %v5985
          %6660 = vmatpush1.bf16.msra.mxu0 %v5984
          %6661 = vmatprep.subr.bf16.mxu0 %v5989
          %6662 = vmatpush1.bf16.msra.mxu0 %v5988
          %6663 = vmatprep.subr.bf16.mxu0 %v5993
          %6664 = vmatpush1.bf16.msra.mxu0 %v5992
          %6665 = vmatprep.subr.bf16.mxu0 %v5997
          %6666 = vmatpush1.bf16.msra.mxu0 %v5996
          %6667 = vmatprep.subr.bf16.mxu0 %v6001
          %6668 = vmatpush1.bf16.msra.mxu0 %v6000
          %6669 = vmatprep.subr.bf16.mxu0 %v6005
          %6670 = vmatpush1.bf16.msra.mxu0 %v6004
          %6671 = vmatprep.mubr.bf16.mxu0 %v4910
          %6672 = vmatmul.mubr.bf16.gmra.mrb[0].mxu0 %v4909
          %v6673 = vpop.f32.mrb[0].mxu0
          %v6674 = vadd.f32 %v6466, %v6673
          %v6675 = vpop.f32.mrb[0].mxu0
          %v6676 = vadd.f32 %v6470, %v6675
          %v6677 = vpop.f32.mrb[0].mxu0
          %v6678 = vpop.f32.mrb[0].mxu0
          %6679 = vdwg.mxu0
          %6680 = vmatprep.subr.bf16.mxu0 %v6009
          %6681 = vmatpush1.bf16.msra.mxu0 %v6008
          %6682 = vmatprep.subr.bf16.mxu0 %v6013
          %6683 = vmatpush1.bf16.msra.mxu0 %v6012
          %6684 = vmatprep.subr.bf16.mxu0 %v6017
          %6685 = vmatpush1.bf16.msra.mxu0 %v6016
          %6686 = vmatprep.subr.bf16.mxu0 %v6021
          %6687 = vmatpush1.bf16.msra.mxu0 %v6020
          %6688 = vmatprep.subr.bf16.mxu0 %v6025
          %6689 = vmatpush1.bf16.msra.mxu0 %v6024
          %6690 = vmatprep.subr.bf16.mxu0 %v6029
          %6691 = vmatpush1.bf16.msra.mxu0 %v6028
          %6692 = vmatprep.subr.bf16.mxu0 %v6033
          %6693 = vmatpush1.bf16.msra.mxu0 %v6032
          %6694 = vmatprep.subr.bf16.mxu0 %v6037
          %6695 = vmatpush1.bf16.msra.mxu0 %v6036
          %6696 = vmatprep.subr.bf16.mxu0 %v6041
          %6697 = vmatpush1.bf16.msra.mxu0 %v6040
          %6698 = vmatprep.subr.bf16.mxu0 %v6045
          %6699 = vmatpush1.bf16.msra.mxu0 %v6044
          %6700 = vmatprep.subr.bf16.mxu0 %v6049
          %6701 = vmatpush1.bf16.msra.mxu0 %v6048
          %6702 = vmatprep.subr.bf16.mxu0 %v6053
          %6703 = vmatpush1.bf16.msra.mxu0 %v6052
          %6704 = vmatprep.subr.bf16.mxu0 %v6057
          %6705 = vmatpush1.bf16.msra.mxu0 %v6056
          %6706 = vmatprep.subr.bf16.mxu0 %v6061
          %6707 = vmatpush1.bf16.msra.mxu0 %v6060
          %6708 = vmatprep.subr.bf16.mxu0 %v6065
          %6709 = vmatpush1.bf16.msra.mxu0 %v6064
          %6710 = vmatprep.subr.bf16.mxu0 %v6069
          %6711 = vmatpush1.bf16.msra.mxu0 %v6068
          %6712 = vmatprep.mubr.bf16.mxu0 %v4912
          %6713 = vmatmul.mubr.bf16.gmra.mrb[0].mxu0 %v4911
          %v6714 = vpop.f32.mrb[0].mxu0
          %v6715 = vadd.f32 %v6674, %v6714
          %v6716 = vpop.f32.mrb[0].mxu0
          %v6717 = vadd.f32 %v6676, %v6716
          %v6718 = vpop.f32.mrb[0].mxu0
          %v6719 = vpop.f32.mrb[0].mxu0
          %6720 = vdwg.mxu0
          %6721 = vmatprep.subr.bf16.mxu0 %v6073
          %6722 = vmatpush1.bf16.msra.mxu0 %v6072
          %6723 = vmatprep.subr.bf16.mxu0 %v6077
          %6724 = vmatpush1.bf16.msra.mxu0 %v6076
          %6725 = vmatprep.subr.bf16.mxu0 %v6081
          %6726 = vmatpush1.bf16.msra.mxu0 %v6080
          %6727 = vmatprep.subr.bf16.mxu0 %v6085
          %6728 = vmatpush1.bf16.msra.mxu0 %v6084
          %6729 = vmatprep.subr.bf16.mxu0 %v6089
          %6730 = vmatpush1.bf16.msra.mxu0 %v6088
          %6731 = vmatprep.subr.bf16.mxu0 %v6093
          %6732 = vmatpush1.bf16.msra.mxu0 %v6092
          %6733 = vmatprep.subr.bf16.mxu0 %v6097
          %6734 = vmatpush1.bf16.msra.mxu0 %v6096
          %6735 = vmatprep.subr.bf16.mxu0 %v6101
          %6736 = vmatpush1.bf16.msra.mxu0 %v6100
          %6737 = vmatprep.subr.bf16.mxu0 %v6105
          %6738 = vmatpush1.bf16.msra.mxu0 %v6104
          %6739 = vmatprep.subr.bf16.mxu0 %v6109
          %6740 = vmatpush1.bf16.msra.mxu0 %v6108
          %6741 = vmatprep.subr.bf16.mxu0 %v6113
          %6742 = vmatpush1.bf16.msra.mxu0 %v6112
          %6743 = vmatprep.subr.bf16.mxu0 %v6117
          %6744 = vmatpush1.bf16.msra.mxu0 %v6116
          %6745 = vmatprep.subr.bf16.mxu0 %v6121
          %6746 = vmatpush1.bf16.msra.mxu0 %v6120
          %6747 = vmatprep.subr.bf16.mxu0 %v6125
          %6748 = vmatpush1.bf16.msra.mxu0 %v6124
          %6749 = vmatprep.subr.bf16.mxu0 %v6129
          %6750 = vmatpush1.bf16.msra.mxu0 %v6128
          %6751 = vmatprep.subr.bf16.mxu0 %v6133
          %6752 = vmatpush1.bf16.msra.mxu0 %v6132
          %6753 = vmatprep.mubr.bf16.mxu0 %v4914
          %6754 = vmatmul.mubr.bf16.gmra.mrb[0].mxu0 %v4913
          %v6755 = vpop.f32.mrb[0].mxu0
          %v6756 = vadd.f32 %v6715, %v6755
          %v6757 = vpop.f32.mrb[0].mxu0
          %v6758 = vadd.f32 %v6717, %v6757
          %v6759 = vpop.f32.mrb[0].mxu0
          %v6760 = vpop.f32.mrb[0].mxu0
          %6761 = vdwg.mxu0
          %6762 = vmatprep.subr.bf16.mxu0 %v6137
          %6763 = vmatpush1.bf16.msra.mxu0 %v6136
          %6764 = vmatprep.subr.bf16.mxu0 %v6141
          %6765 = vmatpush1.bf16.msra.mxu0 %v6140
          %6766 = vmatprep.subr.bf16.mxu0 %v6145
          %6767 = vmatpush1.bf16.msra.mxu0 %v6144
          %6768 = vmatprep.subr.bf16.mxu0 %v6149
          %6769 = vmatpush1.bf16.msra.mxu0 %v6148
          %6770 = vmatprep.subr.bf16.mxu0 %v6153
          %6771 = vmatpush1.bf16.msra.mxu0 %v6152
          %6772 = vmatprep.subr.bf16.mxu0 %v6157
          %6773 = vmatpush1.bf16.msra.mxu0 %v6156
          %6774 = vmatprep.subr.bf16.mxu0 %v6161
          %6775 = vmatpush1.bf16.msra.mxu0 %v6160
          %6776 = vmatprep.subr.bf16.mxu0 %v6165
          %6777 = vmatpush1.bf16.msra.mxu0 %v6164
          %6778 = vmatprep.subr.bf16.mxu0 %v6169
          %6779 = vmatpush1.bf16.msra.mxu0 %v6168
          %6780 = vmatprep.subr.bf16.mxu0 %v6173
          %6781 = vmatpush1.bf16.msra.mxu0 %v6172
          %6782 = vmatprep.subr.bf16.mxu0 %v6177
          %6783 = vmatpush1.bf16.msra.mxu0 %v6176
          %6784 = vmatprep.subr.bf16.mxu0 %v6181
          %6785 = vmatpush1.bf16.msra.mxu0 %v6180
          %6786 = vmatprep.subr.bf16.mxu0 %v6185
          %6787 = vmatpush1.bf16.msra.mxu0 %v6184
          %6788 = vmatprep.subr.bf16.mxu0 %v6189
          %6789 = vmatpush1.bf16.msra.mxu0 %v6188
          %6790 = vmatprep.subr.bf16.mxu0 %v6193
          %6791 = vmatpush1.bf16.msra.mxu0 %v6192
          %6792 = vmatprep.subr.bf16.mxu0 %v6197
          %6793 = vmatpush1.bf16.msra.mxu0 %v6196
          %6794 = vmatprep.mubr.bf16.mxu0 %v4916
          %6795 = vmatmul.mubr.bf16.gmra.mrb[0].mxu0 %v4915
          %v6796 = vpop.f32.mrb[0].mxu0
          %v6797 = vadd.f32 %v6756, %v6796
          %v6798 = vpop.f32.mrb[0].mxu0
          %v6799 = vadd.f32 %v6758, %v6798
          %v6800 = vpop.f32.mrb[0].mxu0
          %v6801 = vpop.f32.mrb[0].mxu0
          %6802 = vdwg.mxu0
          %v6803 = vmax.f32 %v6633, 0.0
          %v6804 = vmax.f32 %v6635, 0.0
          %v6805 = vmax.f32 %v6797, 0.0
          %v6806 = vmax.f32 %v6799, 0.0
          %v6807 = vpack.c.bf16 %v6803, %v6803
          %v6808 = vpack.c.bf16 %v6804, %v6804
          %v6809 = vpack.c.bf16 %v6805, %v6805
          %v6810 = vpack.c.bf16 %v6806, %v6806
          %v6811 = vld [vmem:[#allocation16] sm:$0xff]
          %v6812 = vld [vmem:[#allocation16 + $0x8] sm:$0xff]
          %v6813 = vld [vmem:[#allocation16 + $0x10] sm:$0xff]
          %v6814 = vld [vmem:[#allocation16 + $0x18] sm:$0xff]
          %v6815 = vld [vmem:[#allocation16 + $0x20] sm:$0xff]
          %v6816 = vld [vmem:[#allocation16 + $0x28] sm:$0xff]
          %v6817 = vld [vmem:[#allocation16 + $0x30] sm:$0xff]
          %v6818 = vld [vmem:[#allocation16 + $0x38] sm:$0xff]
          %v6819 = vld [vmem:[#allocation16 + $0x40] sm:$0xff]
          %v6820 = vld [vmem:[#allocation16 + $0x48] sm:$0xff]
          %v6821 = vld [vmem:[#allocation16 + $0x50] sm:$0xff]
          %v6822 = vld [vmem:[#allocation16 + $0x58] sm:$0xff]
          %v6823 = vld [vmem:[#allocation16 + $0x60] sm:$0xff]
          %v6824 = vld [vmem:[#allocation16 + $0x68] sm:$0xff]
          %v6825 = vld [vmem:[#allocation16 + $0x70] sm:$0xff]
          %v6826 = vld [vmem:[#allocation16 + $0x78] sm:$0xff]
          %v6827 = vld [vmem:[#allocation16 + $0x80] sm:$0xff]
          %v6828 = vld [vmem:[#allocation16 + $0x88] sm:$0xff]
          %v6829 = vld [vmem:[#allocation16 + $0x90] sm:$0xff]
          %v6830 = vld [vmem:[#allocation16 + $0x98] sm:$0xff]
          %v6831 = vld [vmem:[#allocation16 + $0xa0] sm:$0xff]
          %v6832 = vld [vmem:[#allocation16 + $0xa8] sm:$0xff]
          %v6833 = vld [vmem:[#allocation16 + $0xb0] sm:$0xff]
          %v6834 = vld [vmem:[#allocation16 + $0xb8] sm:$0xff]
          %v6835 = vld [vmem:[#allocation16 + $0xc0] sm:$0xff]
          %v6836 = vld [vmem:[#allocation16 + $0xc8] sm:$0xff]
          %v6837 = vld [vmem:[#allocation16 + $0xd0] sm:$0xff]
          %v6838 = vld [vmem:[#allocation16 + $0xd8] sm:$0xff]
          %v6839 = vld [vmem:[#allocation16 + $0xe0] sm:$0xff]
          %v6840 = vld [vmem:[#allocation16 + $0xe8] sm:$0xff]
          %v6841 = vld [vmem:[#allocation16 + $0xf0] sm:$0xff]
          %v6842 = vld [vmem:[#allocation16 + $0xf8] sm:$0xff]
          %v6843 = vld [vmem:[#allocation16 + $0x100] sm:$0xff]
          %v6844 = vld [vmem:[#allocation16 + $0x108] sm:$0xff]
          %v6845 = vld [vmem:[#allocation16 + $0x110] sm:$0xff]
          %v6846 = vld [vmem:[#allocation16 + $0x118] sm:$0xff]
          %v6847 = vld [vmem:[#allocation16 + $0x120] sm:$0xff]
          %v6848 = vld [vmem:[#allocation16 + $0x128] sm:$0xff]
          %v6849 = vld [vmem:[#allocation16 + $0x130] sm:$0xff]
          %v6850 = vld [vmem:[#allocation16 + $0x138] sm:$0xff]
          %v6851 = vld [vmem:[#allocation16 + $0x140] sm:$0xff]
          %v6852 = vld [vmem:[#allocation16 + $0x148] sm:$0xff]
          %v6853 = vld [vmem:[#allocation16 + $0x150] sm:$0xff]
          %v6854 = vld [vmem:[#allocation16 + $0x158] sm:$0xff]
          %v6855 = vld [vmem:[#allocation16 + $0x160] sm:$0xff]
          %v6856 = vld [vmem:[#allocation16 + $0x168] sm:$0xff]
          %v6857 = vld [vmem:[#allocation16 + $0x170] sm:$0xff]
          %v6858 = vld [vmem:[#allocation16 + $0x178] sm:$0xff]
          %v6859 = vld [vmem:[#allocation16 + $0x180] sm:$0xff]
          %v6860 = vld [vmem:[#allocation16 + $0x188] sm:$0xff]
          %v6861 = vld [vmem:[#allocation16 + $0x190] sm:$0xff]
          %v6862 = vld [vmem:[#allocation16 + $0x198] sm:$0xff]
          %v6863 = vld [vmem:[#allocation16 + $0x1a0] sm:$0xff]
          %v6864 = vld [vmem:[#allocation16 + $0x1a8] sm:$0xff]
          %v6865 = vld [vmem:[#allocation16 + $0x1b0] sm:$0xff]
          %v6866 = vld [vmem:[#allocation16 + $0x1b8] sm:$0xff]
          %v6867 = vld [vmem:[#allocation16 + $0x1c0] sm:$0xff]
          %v6868 = vld [vmem:[#allocation16 + $0x1c8] sm:$0xff]
          %v6869 = vld [vmem:[#allocation16 + $0x1d0] sm:$0xff]
          %v6870 = vld [vmem:[#allocation16 + $0x1d8] sm:$0xff]
          %v6871 = vld [vmem:[#allocation16 + $0x1e0] sm:$0xff]
          %v6872 = vld [vmem:[#allocation16 + $0x1e8] sm:$0xff]
          %v6873 = vld [vmem:[#allocation16 + $0x1f0] sm:$0xff]
          %v6874 = vld [vmem:[#allocation16 + $0x1f8] sm:$0xff]
          %v6875 = vld [vmem:[#allocation17] sm:$0x3]
          %v6940 = vunpack.c.l.b16 %v6811
          %v6941 = vunpack.c.h.b16 %v6811
          %v6942 = vunpack.c.l.b16 %v6812
          %v6943 = vunpack.c.h.b16 %v6812
          %v6944 = vunpack.c.l.b16 %v6813
          %v6945 = vunpack.c.h.b16 %v6813
          %v6946 = vunpack.c.l.b16 %v6814
          %v6947 = vunpack.c.h.b16 %v6814
          %v6948 = vunpack.c.l.b16 %v6815
          %v6949 = vunpack.c.h.b16 %v6815
          %v6950 = vunpack.c.l.b16 %v6816
          %v6951 = vunpack.c.h.b16 %v6816
          %v6952 = vunpack.c.l.b16 %v6817
          %v6953 = vunpack.c.h.b16 %v6817
          %v6954 = vunpack.c.l.b16 %v6818
          %v6955 = vunpack.c.h.b16 %v6818
          %v6956 = vunpack.c.l.b16 %v6819
          %v6957 = vunpack.c.h.b16 %v6819
          %v6958 = vunpack.c.l.b16 %v6820
          %v6959 = vunpack.c.h.b16 %v6820
          %v6960 = vunpack.c.l.b16 %v6821
          %v6961 = vunpack.c.h.b16 %v6821
          %v6962 = vunpack.c.l.b16 %v6822
          %v6963 = vunpack.c.h.b16 %v6822
          %v6964 = vunpack.c.l.b16 %v6823
          %v6965 = vunpack.c.h.b16 %v6823
          %v6966 = vunpack.c.l.b16 %v6824
          %v6967 = vunpack.c.h.b16 %v6824
          %v6968 = vunpack.c.l.b16 %v6825
          %v6969 = vunpack.c.h.b16 %v6825
          %v6970 = vunpack.c.l.b16 %v6826
          %v6971 = vunpack.c.h.b16 %v6826
          %v6972 = vunpack.c.l.b16 %v6827
          %v6973 = vunpack.c.h.b16 %v6827
          %v6974 = vunpack.c.l.b16 %v6828
          %v6975 = vunpack.c.h.b16 %v6828
          %v6976 = vunpack.c.l.b16 %v6829
          %v6977 = vunpack.c.h.b16 %v6829
          %v6978 = vunpack.c.l.b16 %v6830
          %v6979 = vunpack.c.h.b16 %v6830
          %v6980 = vunpack.c.l.b16 %v6831
          %v6981 = vunpack.c.h.b16 %v6831
          %v6982 = vunpack.c.l.b16 %v6832
          %v6983 = vunpack.c.h.b16 %v6832
          %v6984 = vunpack.c.l.b16 %v6833
          %v6985 = vunpack.c.h.b16 %v6833
          %v6986 = vunpack.c.l.b16 %v6834
          %v6987 = vunpack.c.h.b16 %v6834
          %v6988 = vunpack.c.l.b16 %v6835
          %v6989 = vunpack.c.h.b16 %v6835
          %v6990 = vunpack.c.l.b16 %v6836
          %v6991 = vunpack.c.h.b16 %v6836
          %v6992 = vunpack.c.l.b16 %v6837
          %v6993 = vunpack.c.h.b16 %v6837
          %v6994 = vunpack.c.l.b16 %v6838
          %v6995 = vunpack.c.h.b16 %v6838
          %v6996 = vunpack.c.l.b16 %v6839
          %v6997 = vunpack.c.h.b16 %v6839
          %v6998 = vunpack.c.l.b16 %v6840
          %v6999 = vunpack.c.h.b16 %v6840
          %v7000 = vunpack.c.l.b16 %v6841
          %v7001 = vunpack.c.h.b16 %v6841
          %v7002 = vunpack.c.l.b16 %v6842
          %v7003 = vunpack.c.h.b16 %v6842
          %v7004 = vunpack.c.l.b16 %v6843
          %v7005 = vunpack.c.h.b16 %v6843
          %v7006 = vunpack.c.l.b16 %v6844
          %v7007 = vunpack.c.h.b16 %v6844
          %v7008 = vunpack.c.l.b16 %v6845
          %v7009 = vunpack.c.h.b16 %v6845
          %v7010 = vunpack.c.l.b16 %v6846
          %v7011 = vunpack.c.h.b16 %v6846
          %v7012 = vunpack.c.l.b16 %v6847
          %v7013 = vunpack.c.h.b16 %v6847
          %v7014 = vunpack.c.l.b16 %v6848
          %v7015 = vunpack.c.h.b16 %v6848
          %v7016 = vunpack.c.l.b16 %v6849
          %v7017 = vunpack.c.h.b16 %v6849
          %v7018 = vunpack.c.l.b16 %v6850
          %v7019 = vunpack.c.h.b16 %v6850
          %v7020 = vunpack.c.l.b16 %v6851
          %v7021 = vunpack.c.h.b16 %v6851
          %v7022 = vunpack.c.l.b16 %v6852
          %v7023 = vunpack.c.h.b16 %v6852
          %v7024 = vunpack.c.l.b16 %v6853
          %v7025 = vunpack.c.h.b16 %v6853
          %v7026 = vunpack.c.l.b16 %v6854
          %v7027 = vunpack.c.h.b16 %v6854
          %v7028 = vunpack.c.l.b16 %v6855
          %v7029 = vunpack.c.h.b16 %v6855
          %v7030 = vunpack.c.l.b16 %v6856
          %v7031 = vunpack.c.h.b16 %v6856
          %v7032 = vunpack.c.l.b16 %v6857
          %v7033 = vunpack.c.h.b16 %v6857
          %v7034 = vunpack.c.l.b16 %v6858
          %v7035 = vunpack.c.h.b16 %v6858
          %v7036 = vunpack.c.l.b16 %v6859
          %v7037 = vunpack.c.h.b16 %v6859
          %v7038 = vunpack.c.l.b16 %v6860
          %v7039 = vunpack.c.h.b16 %v6860
          %v7040 = vunpack.c.l.b16 %v6861
          %v7041 = vunpack.c.h.b16 %v6861
          %v7042 = vunpack.c.l.b16 %v6862
          %v7043 = vunpack.c.h.b16 %v6862
          %v7044 = vunpack.c.l.b16 %v6863
          %v7045 = vunpack.c.h.b16 %v6863
          %v7046 = vunpack.c.l.b16 %v6864
          %v7047 = vunpack.c.h.b16 %v6864
          %v7048 = vunpack.c.l.b16 %v6865
          %v7049 = vunpack.c.h.b16 %v6865
          %v7050 = vunpack.c.l.b16 %v6866
          %v7051 = vunpack.c.h.b16 %v6866
          %v7052 = vunpack.c.l.b16 %v6867
          %v7053 = vunpack.c.h.b16 %v6867
          %v7054 = vunpack.c.l.b16 %v6868
          %v7055 = vunpack.c.h.b16 %v6868
          %v7056 = vunpack.c.l.b16 %v6869
          %v7057 = vunpack.c.h.b16 %v6869
          %v7058 = vunpack.c.l.b16 %v6870
          %v7059 = vunpack.c.h.b16 %v6870
          %v7060 = vunpack.c.l.b16 %v6871
          %v7061 = vunpack.c.h.b16 %v6871
          %v7062 = vunpack.c.l.b16 %v6872
          %v7063 = vunpack.c.h.b16 %v6872
          %v7064 = vunpack.c.l.b16 %v6873
          %v7065 = vunpack.c.h.b16 %v6873
          %v7066 = vunpack.c.l.b16 %v6874
          %v7067 = vunpack.c.h.b16 %v6874
          %v7068 = vpack.c.b16 %v6942, %v6940
          %v7069 = vpack.c.b16 %v6943, %v6941
          %v7070 = vpack.c.b16 %v6946, %v6944
          %v7071 = vpack.c.b16 %v6947, %v6945
          %v7072 = vpack.c.b16 %v6950, %v6948
          %v7073 = vpack.c.b16 %v6951, %v6949
          %v7074 = vpack.c.b16 %v6954, %v6952
          %v7075 = vpack.c.b16 %v6955, %v6953
          %v7076 = vpack.c.b16 %v6958, %v6956
          %v7077 = vpack.c.b16 %v6959, %v6957
          %v7078 = vpack.c.b16 %v6962, %v6960
          %v7079 = vpack.c.b16 %v6963, %v6961
          %v7080 = vpack.c.b16 %v6966, %v6964
          %v7081 = vpack.c.b16 %v6967, %v6965
          %v7082 = vpack.c.b16 %v6970, %v6968
          %v7083 = vpack.c.b16 %v6971, %v6969
          %v7084 = vpack.c.b16 %v6974, %v6972
          %v7085 = vpack.c.b16 %v6975, %v6973
          %v7086 = vpack.c.b16 %v6978, %v6976
          %v7087 = vpack.c.b16 %v6979, %v6977
          %v7088 = vpack.c.b16 %v6982, %v6980
          %v7089 = vpack.c.b16 %v6983, %v6981
          %v7090 = vpack.c.b16 %v6986, %v6984
          %v7091 = vpack.c.b16 %v6987, %v6985
          %v7092 = vpack.c.b16 %v6990, %v6988
          %v7093 = vpack.c.b16 %v6991, %v6989
          %v7094 = vpack.c.b16 %v6994, %v6992
          %v7095 = vpack.c.b16 %v6995, %v6993
          %v7096 = vpack.c.b16 %v6998, %v6996
          %v7097 = vpack.c.b16 %v6999, %v6997
          %v7098 = vpack.c.b16 %v7002, %v7000
          %v7099 = vpack.c.b16 %v7003, %v7001
          %v7100 = vpack.c.b16 %v7006, %v7004
          %v7101 = vpack.c.b16 %v7007, %v7005
          %v7102 = vpack.c.b16 %v7010, %v7008
          %v7103 = vpack.c.b16 %v7011, %v7009
          %v7104 = vpack.c.b16 %v7014, %v7012
          %v7105 = vpack.c.b16 %v7015, %v7013
          %v7106 = vpack.c.b16 %v7018, %v7016
          %v7107 = vpack.c.b16 %v7019, %v7017
          %v7108 = vpack.c.b16 %v7022, %v7020
          %v7109 = vpack.c.b16 %v7023, %v7021
          %v7110 = vpack.c.b16 %v7026, %v7024
          %v7111 = vpack.c.b16 %v7027, %v7025
          %v7112 = vpack.c.b16 %v7030, %v7028
          %v7113 = vpack.c.b16 %v7031, %v7029
          %v7114 = vpack.c.b16 %v7034, %v7032
          %v7115 = vpack.c.b16 %v7035, %v7033
          %v7116 = vpack.c.b16 %v7038, %v7036
          %v7117 = vpack.c.b16 %v7039, %v7037
          %v7118 = vpack.c.b16 %v7042, %v7040
          %v7119 = vpack.c.b16 %v7043, %v7041
          %v7120 = vpack.c.b16 %v7046, %v7044
          %v7121 = vpack.c.b16 %v7047, %v7045
          %v7122 = vpack.c.b16 %v7050, %v7048
          %v7123 = vpack.c.b16 %v7051, %v7049
          %v7124 = vpack.c.b16 %v7054, %v7052
          %v7125 = vpack.c.b16 %v7055, %v7053
          %v7126 = vpack.c.b16 %v7058, %v7056
          %v7127 = vpack.c.b16 %v7059, %v7057
          %v7128 = vpack.c.b16 %v7062, %v7060
          %v7129 = vpack.c.b16 %v7063, %v7061
          %v7130 = vpack.c.b16 %v7066, %v7064
          %v7131 = vpack.c.b16 %v7067, %v7065
          %v7197 = vlaneseq
          %v7198 = vshrl.u32 %v7197, 7
          %v7199 = vsub.s32 0, %v7198
          %v7200 = vrot.slane %v6875, %v7199
          %v7201 = vlaneseq
          %v7202 = vshrl.u32 %v7201, 7
          %v7203 = vsub.s32 1, %v7202
          %v7204 = vrot.slane %v6875, %v7203
          %7207 = vmatprep.subr.bf16.mxu0 %v7069
          %7208 = vmatpush1.bf16.msra.mxu0 %v7068
          %7209 = vmatprep.subr.bf16.mxu0 %v7071
          %7210 = vmatpush1.bf16.msra.mxu0 %v7070
          %7211 = vmatprep.subr.bf16.mxu0 %v7073
          %7212 = vmatpush1.bf16.msra.mxu0 %v7072
          %7213 = vmatprep.subr.bf16.mxu0 %v7075
          %7214 = vmatpush1.bf16.msra.mxu0 %v7074
          %7215 = vmatprep.subr.bf16.mxu0 %v7077
          %7216 = vmatpush1.bf16.msra.mxu0 %v7076
          %7217 = vmatprep.subr.bf16.mxu0 %v7079
          %7218 = vmatpush1.bf16.msra.mxu0 %v7078
          %7219 = vmatprep.subr.bf16.mxu0 %v7081
          %7220 = vmatpush1.bf16.msra.mxu0 %v7080
          %7221 = vmatprep.subr.bf16.mxu0 %v7083
          %7222 = vmatpush1.bf16.msra.mxu0 %v7082
          %7223 = vmatprep.subr.bf16.mxu0 %v7085
          %7224 = vmatpush1.bf16.msra.mxu0 %v7084
          %7225 = vmatprep.subr.bf16.mxu0 %v7087
          %7226 = vmatpush1.bf16.msra.mxu0 %v7086
          %7227 = vmatprep.subr.bf16.mxu0 %v7089
          %7228 = vmatpush1.bf16.msra.mxu0 %v7088
          %7229 = vmatprep.subr.bf16.mxu0 %v7091
          %7230 = vmatpush1.bf16.msra.mxu0 %v7090
          %7231 = vmatprep.subr.bf16.mxu0 %v7093
          %7232 = vmatpush1.bf16.msra.mxu0 %v7092
          %7233 = vmatprep.subr.bf16.mxu0 %v7095
          %7234 = vmatpush1.bf16.msra.mxu0 %v7094
          %7235 = vmatprep.subr.bf16.mxu0 %v7097
          %7236 = vmatpush1.bf16.msra.mxu0 %v7096
          %7237 = vmatprep.subr.bf16.mxu0 %v7099
          %7238 = vmatpush1.bf16.msra.mxu0 %v7098
          %7239 = vmatprep.mubr.bf16.mxu0 %v6808
          %7240 = vmatmul.mubr.bf16.gmra.mrb[0].mxu0 %v6807
          %v7241 = vpop.f32.mrb[0].mxu0
          %v7242 = vadd.f32 %v7200, %v7241
          %v7243 = vpop.f32.mrb[0].mxu0
          %v7244 = vadd.f32 %v7204, %v7243
          %v7245 = vpop.f32.mrb[0].mxu0
          %v7246 = vpop.f32.mrb[0].mxu0
          %7247 = vdwg.mxu0
          %7248 = vmatprep.subr.bf16.mxu0 %v7101
          %7249 = vmatpush1.bf16.msra.mxu0 %v7100
          %7250 = vmatprep.subr.bf16.mxu0 %v7103
          %7251 = vmatpush1.bf16.msra.mxu0 %v7102
          %7252 = vmatprep.subr.bf16.mxu0 %v7105
          %7253 = vmatpush1.bf16.msra.mxu0 %v7104
          %7254 = vmatprep.subr.bf16.mxu0 %v7107
          %7255 = vmatpush1.bf16.msra.mxu0 %v7106
          %7256 = vmatprep.subr.bf16.mxu0 %v7109
          %7257 = vmatpush1.bf16.msra.mxu0 %v7108
          %7258 = vmatprep.subr.bf16.mxu0 %v7111
          %7259 = vmatpush1.bf16.msra.mxu0 %v7110
          %7260 = vmatprep.subr.bf16.mxu0 %v7113
          %7261 = vmatpush1.bf16.msra.mxu0 %v7112
          %7262 = vmatprep.subr.bf16.mxu0 %v7115
          %7263 = vmatpush1.bf16.msra.mxu0 %v7114
          %7264 = vmatprep.subr.bf16.mxu0 %v7117
          %7265 = vmatpush1.bf16.msra.mxu0 %v7116
          %7266 = vmatprep.subr.bf16.mxu0 %v7119
          %7267 = vmatpush1.bf16.msra.mxu0 %v7118
          %7268 = vmatprep.subr.bf16.mxu0 %v7121
          %7269 = vmatpush1.bf16.msra.mxu0 %v7120
          %7270 = vmatprep.subr.bf16.mxu0 %v7123
          %7271 = vmatpush1.bf16.msra.mxu0 %v7122
          %7272 = vmatprep.subr.bf16.mxu0 %v7125
          %7273 = vmatpush1.bf16.msra.mxu0 %v7124
          %7274 = vmatprep.subr.bf16.mxu0 %v7127
          %7275 = vmatpush1.bf16.msra.mxu0 %v7126
          %7276 = vmatprep.subr.bf16.mxu0 %v7129
          %7277 = vmatpush1.bf16.msra.mxu0 %v7128
          %7278 = vmatprep.subr.bf16.mxu0 %v7131
          %7279 = vmatpush1.bf16.msra.mxu0 %v7130
          %7280 = vmatprep.mubr.bf16.mxu0 %v6810
          %7281 = vmatmul.mubr.bf16.gmra.mrb[0].mxu0 %v6809
          %v7282 = vpop.f32.mrb[0].mxu0
          %v7283 = vadd.f32 %v7242, %v7282
          %v7284 = vpop.f32.mrb[0].mxu0
          %v7285 = vadd.f32 %v7244, %v7284
          %v7286 = vpop.f32.mrb[0].mxu0
          %v7287 = vpop.f32.mrb[0].mxu0
          %7288 = vdwg.mxu0
          %v7289 = vmax.f32 %v7283, 0.0
          %v7290 = vmax.f32 %v7285, 0.0
          %v7291 = vpack.c.bf16 %v7289, %v7289
          %v7292 = vpack.c.bf16 %v7290, %v7290
          %v7293 = vld [vmem:[#allocation19] sm:$0xff]
          %v7294 = vld [vmem:[#allocation19 + $0x8] sm:$0xff]
          %v7295 = vld [vmem:[#allocation19 + $0x10] sm:$0xff]
          %v7296 = vld [vmem:[#allocation19 + $0x18] sm:$0xff]
          %v7297 = vld [vmem:[#allocation19 + $0x20] sm:$0xff]
          %v7298 = vld [vmem:[#allocation19 + $0x28] sm:$0xff]
          %v7299 = vld [vmem:[#allocation19 + $0x30] sm:$0xff]
          %v7300 = vld [vmem:[#allocation19 + $0x38] sm:$0xff]
          %v7301 = vld [vmem:[#allocation19 + $0x40] sm:$0xff]
          %v7302 = vld [vmem:[#allocation19 + $0x48] sm:$0xff]
          %v7303 = vld [vmem:[#allocation19 + $0x50] sm:$0xff]
          %v7304 = vld [vmem:[#allocation19 + $0x58] sm:$0xff]
          %v7305 = vld [vmem:[#allocation19 + $0x60] sm:$0xff]
          %v7306 = vld [vmem:[#allocation19 + $0x68] sm:$0xff]
          %v7307 = vld [vmem:[#allocation19 + $0x70] sm:$0xff]
          %v7308 = vld [vmem:[#allocation19 + $0x78] sm:$0xff]
          %v7309 = vld [vmem:[#allocation19 + $0x80] sm:$0xff]
          %v7310 = vld [vmem:[#allocation19 + $0x88] sm:$0xff]
          %v7311 = vld [vmem:[#allocation19 + $0x90] sm:$0xff]
          %v7312 = vld [vmem:[#allocation19 + $0x98] sm:$0xff]
          %v7313 = vld [vmem:[#allocation19 + $0xa0] sm:$0xff]
          %v7314 = vld [vmem:[#allocation19 + $0xa8] sm:$0xff]
          %v7315 = vld [vmem:[#allocation19 + $0xb0] sm:$0xff]
          %v7316 = vld [vmem:[#allocation19 + $0xb8] sm:$0xff]
          %v7317 = vld [vmem:[#allocation19 + $0xc0] sm:$0xff]
          %v7318 = vld [vmem:[#allocation19 + $0xc8] sm:$0xff]
          %v7319 = vld [vmem:[#allocation19 + $0xd0] sm:$0xff]
          %v7320 = vld [vmem:[#allocation19 + $0xd8] sm:$0xff]
          %v7321 = vld [vmem:[#allocation19 + $0xe0] sm:$0xff]
          %v7322 = vld [vmem:[#allocation19 + $0xe8] sm:$0xff]
          %v7323 = vld [vmem:[#allocation19 + $0xf0] sm:$0xff]
          %v7324 = vld [vmem:[#allocation19 + $0xf8] sm:$0xff]
          %v7325 = vld [vmem:[#allocation19 + $0x100] sm:$0xff]
          %v7326 = vld [vmem:[#allocation19 + $0x108] sm:$0xff]
          %v7327 = vld [vmem:[#allocation19 + $0x110] sm:$0xff]
          %v7328 = vld [vmem:[#allocation19 + $0x118] sm:$0xff]
          %v7329 = vld [vmem:[#allocation19 + $0x120] sm:$0xff]
          %v7330 = vld [vmem:[#allocation19 + $0x128] sm:$0xff]
          %v7331 = vld [vmem:[#allocation19 + $0x130] sm:$0xff]
          %v7332 = vld [vmem:[#allocation19 + $0x138] sm:$0xff]
          %v7333 = vld [vmem:[#allocation19 + $0x140] sm:$0xff]
          %v7334 = vld [vmem:[#allocation19 + $0x148] sm:$0xff]
          %v7335 = vld [vmem:[#allocation19 + $0x150] sm:$0xff]
          %v7336 = vld [vmem:[#allocation19 + $0x158] sm:$0xff]
          %v7337 = vld [vmem:[#allocation19 + $0x160] sm:$0xff]
          %v7338 = vld [vmem:[#allocation19 + $0x168] sm:$0xff]
          %v7339 = vld [vmem:[#allocation19 + $0x170] sm:$0xff]
          %v7340 = vld [vmem:[#allocation19 + $0x178] sm:$0xff]
          %v7341 = vld [vmem:[#allocation19 + $0x180] sm:$0xff]
          %v7342 = vld [vmem:[#allocation19 + $0x188] sm:$0xff]
          %v7343 = vld [vmem:[#allocation19 + $0x190] sm:$0xff]
          %v7344 = vld [vmem:[#allocation19 + $0x198] sm:$0xff]
          %v7345 = vld [vmem:[#allocation19 + $0x1a0] sm:$0xff]
          %v7346 = vld [vmem:[#allocation19 + $0x1a8] sm:$0xff]
          %v7347 = vld [vmem:[#allocation19 + $0x1b0] sm:$0xff]
          %v7348 = vld [vmem:[#allocation19 + $0x1b8] sm:$0xff]
          %v7349 = vld [vmem:[#allocation19 + $0x1c0] sm:$0xff]
          %v7350 = vld [vmem:[#allocation19 + $0x1c8] sm:$0xff]
          %v7351 = vld [vmem:[#allocation19 + $0x1d0] sm:$0xff]
          %v7352 = vld [vmem:[#allocation19 + $0x1d8] sm:$0xff]
          %v7353 = vld [vmem:[#allocation19 + $0x1e0] sm:$0xff]
          %v7354 = vld [vmem:[#allocation19 + $0x1e8] sm:$0xff]
          %v7355 = vld [vmem:[#allocation19 + $0x1f0] sm:$0xff]
          %v7356 = vld [vmem:[#allocation19 + $0x1f8] sm:$0xff]
          %v7357 = vld [vmem:[#allocation19 + $0x200] sm:$0xff]
          %v7358 = vld [vmem:[#allocation19 + $0x208] sm:$0xff]
          %v7359 = vld [vmem:[#allocation19 + $0x210] sm:$0xff]
          %v7360 = vld [vmem:[#allocation19 + $0x218] sm:$0xff]
          %v7361 = vld [vmem:[#allocation19 + $0x220] sm:$0xff]
          %v7362 = vld [vmem:[#allocation19 + $0x228] sm:$0xff]
          %v7363 = vld [vmem:[#allocation19 + $0x230] sm:$0xff]
          %v7364 = vld [vmem:[#allocation19 + $0x238] sm:$0xff]
          %v7365 = vld [vmem:[#allocation19 + $0x240] sm:$0xff]
          %v7366 = vld [vmem:[#allocation19 + $0x248] sm:$0xff]
          %v7367 = vld [vmem:[#allocation19 + $0x250] sm:$0xff]
          %v7368 = vld [vmem:[#allocation19 + $0x258] sm:$0xff]
          %v7369 = vld [vmem:[#allocation19 + $0x260] sm:$0xff]
          %v7370 = vld [vmem:[#allocation19 + $0x268] sm:$0xff]
          %v7371 = vld [vmem:[#allocation19 + $0x270] sm:$0xff]
          %v7372 = vld [vmem:[#allocation19 + $0x278] sm:$0xff]
          %v7373 = vld [vmem:[#allocation19 + $0x280] sm:$0xff]
          %v7374 = vld [vmem:[#allocation19 + $0x288] sm:$0xff]
          %v7375 = vld [vmem:[#allocation19 + $0x290] sm:$0xff]
          %v7376 = vld [vmem:[#allocation19 + $0x298] sm:$0xff]
          %v7377 = vld [vmem:[#allocation19 + $0x2a0] sm:$0xff]
          %v7378 = vld [vmem:[#allocation19 + $0x2a8] sm:$0xff]
          %v7379 = vld [vmem:[#allocation19 + $0x2b0] sm:$0xff]
          %v7380 = vld [vmem:[#allocation19 + $0x2b8] sm:$0xff]
          %v7381 = vld [vmem:[#allocation19 + $0x2c0] sm:$0xff]
          %v7382 = vld [vmem:[#allocation19 + $0x2c8] sm:$0xff]
          %v7383 = vld [vmem:[#allocation19 + $0x2d0] sm:$0xff]
          %v7384 = vld [vmem:[#allocation19 + $0x2d8] sm:$0xff]
          %v7385 = vld [vmem:[#allocation19 + $0x2e0] sm:$0xff]
          %v7386 = vld [vmem:[#allocation19 + $0x2e8] sm:$0xff]
          %v7387 = vld [vmem:[#allocation19 + $0x2f0] sm:$0xff]
          %v7388 = vld [vmem:[#allocation19 + $0x2f8] sm:$0xff]
          %v7389 = vld [vmem:[#allocation19 + $0x300] sm:$0xff]
          %v7390 = vld [vmem:[#allocation19 + $0x308] sm:$0xff]
          %v7391 = vld [vmem:[#allocation19 + $0x310] sm:$0xff]
          %v7392 = vld [vmem:[#allocation19 + $0x318] sm:$0xff]
          %v7393 = vld [vmem:[#allocation19 + $0x320] sm:$0xff]
          %v7394 = vld [vmem:[#allocation19 + $0x328] sm:$0xff]
          %v7395 = vld [vmem:[#allocation19 + $0x330] sm:$0xff]
          %v7396 = vld [vmem:[#allocation19 + $0x338] sm:$0xff]
          %v7397 = vld [vmem:[#allocation19 + $0x340] sm:$0xff]
          %v7398 = vld [vmem:[#allocation19 + $0x348] sm:$0xff]
          %v7399 = vld [vmem:[#allocation19 + $0x350] sm:$0xff]
          %v7400 = vld [vmem:[#allocation19 + $0x358] sm:$0xff]
          %v7401 = vld [vmem:[#allocation19 + $0x360] sm:$0xff]
          %v7402 = vld [vmem:[#allocation19 + $0x368] sm:$0xff]
          %v7403 = vld [vmem:[#allocation19 + $0x370] sm:$0xff]
          %v7404 = vld [vmem:[#allocation19 + $0x378] sm:$0xff]
          %v7405 = vld [vmem:[#allocation19 + $0x380] sm:$0xff]
          %v7406 = vld [vmem:[#allocation19 + $0x388] sm:$0xff]
          %v7407 = vld [vmem:[#allocation19 + $0x390] sm:$0xff]
          %v7408 = vld [vmem:[#allocation19 + $0x398] sm:$0xff]
          %v7409 = vld [vmem:[#allocation19 + $0x3a0] sm:$0xff]
          %v7410 = vld [vmem:[#allocation19 + $0x3a8] sm:$0xff]
          %v7411 = vld [vmem:[#allocation19 + $0x3b0] sm:$0xff]
          %v7412 = vld [vmem:[#allocation19 + $0x3b8] sm:$0xff]
          %v7413 = vld [vmem:[#allocation19 + $0x3c0] sm:$0xff]
          %v7414 = vld [vmem:[#allocation19 + $0x3c8] sm:$0xff]
          %v7415 = vld [vmem:[#allocation19 + $0x3d0] sm:$0xff]
          %v7416 = vld [vmem:[#allocation19 + $0x3d8] sm:$0xff]
          %v7417 = vld [vmem:[#allocation19 + $0x3e0] sm:$0xff]
          %v7418 = vld [vmem:[#allocation19 + $0x3e8] sm:$0xff]
          %v7419 = vld [vmem:[#allocation19 + $0x3f0] sm:$0xff]
          %v7420 = vld [vmem:[#allocation19 + $0x3f8] sm:$0xff]
          %v7421 = vld [vmem:[#allocation19 + $0x400] sm:$0xff]
          %v7422 = vld [vmem:[#allocation19 + $0x408] sm:$0xff]
          %v7423 = vld [vmem:[#allocation19 + $0x410] sm:$0xff]
          %v7424 = vld [vmem:[#allocation19 + $0x418] sm:$0xff]
          %v7425 = vld [vmem:[#allocation19 + $0x420] sm:$0xff]
          %v7426 = vld [vmem:[#allocation19 + $0x428] sm:$0xff]
          %v7427 = vld [vmem:[#allocation19 + $0x430] sm:$0xff]
          %v7428 = vld [vmem:[#allocation19 + $0x438] sm:$0xff]
          %v7429 = vld [vmem:[#allocation19 + $0x440] sm:$0xff]
          %v7430 = vld [vmem:[#allocation19 + $0x448] sm:$0xff]
          %v7431 = vld [vmem:[#allocation19 + $0x450] sm:$0xff]
          %v7432 = vld [vmem:[#allocation19 + $0x458] sm:$0xff]
          %v7433 = vld [vmem:[#allocation19 + $0x460] sm:$0xff]
          %v7434 = vld [vmem:[#allocation19 + $0x468] sm:$0xff]
          %v7435 = vld [vmem:[#allocation19 + $0x470] sm:$0xff]
          %v7436 = vld [vmem:[#allocation19 + $0x478] sm:$0xff]
          %v7437 = vld [vmem:[#allocation19 + $0x480] sm:$0xff]
          %v7438 = vld [vmem:[#allocation19 + $0x488] sm:$0xff]
          %v7439 = vld [vmem:[#allocation19 + $0x490] sm:$0xff]
          %v7440 = vld [vmem:[#allocation19 + $0x498] sm:$0xff]
          %v7441 = vld [vmem:[#allocation19 + $0x4a0] sm:$0xff]
          %v7442 = vld [vmem:[#allocation19 + $0x4a8] sm:$0xff]
          %v7443 = vld [vmem:[#allocation19 + $0x4b0] sm:$0xff]
          %v7444 = vld [vmem:[#allocation19 + $0x4b8] sm:$0xff]
          %v7445 = vld [vmem:[#allocation19 + $0x4c0] sm:$0xff]
          %v7446 = vld [vmem:[#allocation19 + $0x4c8] sm:$0xff]
          %v7447 = vld [vmem:[#allocation19 + $0x4d0] sm:$0xff]
          %v7448 = vld [vmem:[#allocation19 + $0x4d8] sm:$0xff]
          %v7449 = vld [vmem:[#allocation19 + $0x4e0] sm:$0xff]
          %v7450 = vld [vmem:[#allocation19 + $0x4e8] sm:$0xff]
          %v7451 = vld [vmem:[#allocation19 + $0x4f0] sm:$0xff]
          %v7452 = vld [vmem:[#allocation19 + $0x4f8] sm:$0xff]
          %v7453 = vld [vmem:[#allocation19 + $0x500] sm:$0xff]
          %v7454 = vld [vmem:[#allocation19 + $0x508] sm:$0xff]
          %v7455 = vld [vmem:[#allocation19 + $0x510] sm:$0xff]
          %v7456 = vld [vmem:[#allocation19 + $0x518] sm:$0xff]
          %v7457 = vld [vmem:[#allocation19 + $0x520] sm:$0xff]
          %v7458 = vld [vmem:[#allocation19 + $0x528] sm:$0xff]
          %v7459 = vld [vmem:[#allocation19 + $0x530] sm:$0xff]
          %v7460 = vld [vmem:[#allocation19 + $0x538] sm:$0xff]
          %v7461 = vld [vmem:[#allocation19 + $0x540] sm:$0xff]
          %v7462 = vld [vmem:[#allocation19 + $0x548] sm:$0xff]
          %v7463 = vld [vmem:[#allocation19 + $0x550] sm:$0xff]
          %v7464 = vld [vmem:[#allocation19 + $0x558] sm:$0xff]
          %v7465 = vld [vmem:[#allocation19 + $0x560] sm:$0xff]
          %v7466 = vld [vmem:[#allocation19 + $0x568] sm:$0xff]
          %v7467 = vld [vmem:[#allocation19 + $0x570] sm:$0xff]
          %v7468 = vld [vmem:[#allocation19 + $0x578] sm:$0xff]
          %v7469 = vld [vmem:[#allocation19 + $0x580] sm:$0xff]
          %v7470 = vld [vmem:[#allocation19 + $0x588] sm:$0xff]
          %v7471 = vld [vmem:[#allocation19 + $0x590] sm:$0xff]
          %v7472 = vld [vmem:[#allocation19 + $0x598] sm:$0xff]
          %v7473 = vld [vmem:[#allocation19 + $0x5a0] sm:$0xff]
          %v7474 = vld [vmem:[#allocation19 + $0x5a8] sm:$0xff]
          %v7475 = vld [vmem:[#allocation19 + $0x5b0] sm:$0xff]
          %v7476 = vld [vmem:[#allocation19 + $0x5b8] sm:$0xff]
          %v7477 = vld [vmem:[#allocation19 + $0x5c0] sm:$0xff]
          %v7478 = vld [vmem:[#allocation19 + $0x5c8] sm:$0xff]
          %v7479 = vld [vmem:[#allocation19 + $0x5d0] sm:$0xff]
          %v7480 = vld [vmem:[#allocation19 + $0x5d8] sm:$0xff]
          %v7481 = vld [vmem:[#allocation19 + $0x5e0] sm:$0xff]
          %v7482 = vld [vmem:[#allocation19 + $0x5e8] sm:$0xff]
          %v7483 = vld [vmem:[#allocation19 + $0x5f0] sm:$0xff]
          %v7484 = vld [vmem:[#allocation19 + $0x5f8] sm:$0xff]
          %v7485 = vld [vmem:[#allocation19 + $0x600] sm:$0xff]
          %v7486 = vld [vmem:[#allocation19 + $0x608] sm:$0xff]
          %v7487 = vld [vmem:[#allocation19 + $0x610] sm:$0xff]
          %v7488 = vld [vmem:[#allocation19 + $0x618] sm:$0xff]
          %v7489 = vld [vmem:[#allocation19 + $0x620] sm:$0xff]
          %v7490 = vld [vmem:[#allocation19 + $0x628] sm:$0xff]
          %v7491 = vld [vmem:[#allocation19 + $0x630] sm:$0xff]
          %v7492 = vld [vmem:[#allocation19 + $0x638] sm:$0xff]
          %v7493 = vld [vmem:[#allocation19 + $0x640] sm:$0xff]
          %v7494 = vld [vmem:[#allocation19 + $0x648] sm:$0xff]
          %v7495 = vld [vmem:[#allocation19 + $0x650] sm:$0xff]
          %v7496 = vld [vmem:[#allocation19 + $0x658] sm:$0xff]
          %v7497 = vld [vmem:[#allocation19 + $0x660] sm:$0xff]
          %v7498 = vld [vmem:[#allocation19 + $0x668] sm:$0xff]
          %v7499 = vld [vmem:[#allocation19 + $0x670] sm:$0xff]
          %v7500 = vld [vmem:[#allocation19 + $0x678] sm:$0xff]
          %v7501 = vld [vmem:[#allocation19 + $0x680] sm:$0xff]
          %v7502 = vld [vmem:[#allocation19 + $0x688] sm:$0xff]
          %v7503 = vld [vmem:[#allocation19 + $0x690] sm:$0xff]
          %v7504 = vld [vmem:[#allocation19 + $0x698] sm:$0xff]
          %v7505 = vld [vmem:[#allocation19 + $0x6a0] sm:$0xff]
          %v7506 = vld [vmem:[#allocation19 + $0x6a8] sm:$0xff]
          %v7507 = vld [vmem:[#allocation19 + $0x6b0] sm:$0xff]
          %v7508 = vld [vmem:[#allocation19 + $0x6b8] sm:$0xff]
          %v7509 = vld [vmem:[#allocation19 + $0x6c0] sm:$0xff]
          %v7510 = vld [vmem:[#allocation19 + $0x6c8] sm:$0xff]
          %v7511 = vld [vmem:[#allocation19 + $0x6d0] sm:$0xff]
          %v7512 = vld [vmem:[#allocation19 + $0x6d8] sm:$0xff]
          %v7513 = vld [vmem:[#allocation19 + $0x6e0] sm:$0xff]
          %v7514 = vld [vmem:[#allocation19 + $0x6e8] sm:$0xff]
          %v7515 = vld [vmem:[#allocation19 + $0x6f0] sm:$0xff]
          %v7516 = vld [vmem:[#allocation19 + $0x6f8] sm:$0xff]
          %v7517 = vld [vmem:[#allocation19 + $0x700] sm:$0xff]
          %v7518 = vld [vmem:[#allocation19 + $0x708] sm:$0xff]
          %v7519 = vld [vmem:[#allocation19 + $0x710] sm:$0xff]
          %v7520 = vld [vmem:[#allocation19 + $0x718] sm:$0xff]
          %v7521 = vld [vmem:[#allocation19 + $0x720] sm:$0xff]
          %v7522 = vld [vmem:[#allocation19 + $0x728] sm:$0xff]
          %v7523 = vld [vmem:[#allocation19 + $0x730] sm:$0xff]
          %v7524 = vld [vmem:[#allocation19 + $0x738] sm:$0xff]
          %v7525 = vld [vmem:[#allocation19 + $0x740] sm:$0xff]
          %v7526 = vld [vmem:[#allocation19 + $0x748] sm:$0xff]
          %v7527 = vld [vmem:[#allocation19 + $0x750] sm:$0xff]
          %v7528 = vld [vmem:[#allocation19 + $0x758] sm:$0xff]
          %v7529 = vld [vmem:[#allocation19 + $0x760] sm:$0xff]
          %v7530 = vld [vmem:[#allocation19 + $0x768] sm:$0xff]
          %v7531 = vld [vmem:[#allocation19 + $0x770] sm:$0xff]
          %v7532 = vld [vmem:[#allocation19 + $0x778] sm:$0xff]
          %v7533 = vld [vmem:[#allocation19 + $0x780] sm:$0xff]
          %v7534 = vld [vmem:[#allocation19 + $0x788] sm:$0xff]
          %v7535 = vld [vmem:[#allocation19 + $0x790] sm:$0xff]
          %v7536 = vld [vmem:[#allocation19 + $0x798] sm:$0xff]
          %v7537 = vld [vmem:[#allocation19 + $0x7a0] sm:$0xff]
          %v7538 = vld [vmem:[#allocation19 + $0x7a8] sm:$0xff]
          %v7539 = vld [vmem:[#allocation19 + $0x7b0] sm:$0xff]
          %v7540 = vld [vmem:[#allocation19 + $0x7b8] sm:$0xff]
          %v7541 = vld [vmem:[#allocation19 + $0x7c0] sm:$0xff]
          %v7542 = vld [vmem:[#allocation19 + $0x7c8] sm:$0xff]
          %v7543 = vld [vmem:[#allocation19 + $0x7d0] sm:$0xff]
          %v7544 = vld [vmem:[#allocation19 + $0x7d8] sm:$0xff]
          %v7545 = vld [vmem:[#allocation19 + $0x7e0] sm:$0xff]
          %v7546 = vld [vmem:[#allocation19 + $0x7e8] sm:$0xff]
          %v7547 = vld [vmem:[#allocation19 + $0x7f0] sm:$0xff]
          %v7548 = vld [vmem:[#allocation19 + $0x7f8] sm:$0xff]
          %v7549 = vld [vmem:[#allocation19 + $0x800] sm:$0xff]
          %v7550 = vld [vmem:[#allocation19 + $0x808] sm:$0xff]
          %v7551 = vld [vmem:[#allocation19 + $0x810] sm:$0xff]
          %v7552 = vld [vmem:[#allocation19 + $0x818] sm:$0xff]
          %v7553 = vld [vmem:[#allocation19 + $0x820] sm:$0xff]
          %v7554 = vld [vmem:[#allocation19 + $0x828] sm:$0xff]
          %v7555 = vld [vmem:[#allocation19 + $0x830] sm:$0xff]
          %v7556 = vld [vmem:[#allocation19 + $0x838] sm:$0xff]
          %v7557 = vld [vmem:[#allocation19 + $0x840] sm:$0xff]
          %v7558 = vld [vmem:[#allocation19 + $0x848] sm:$0xff]
          %v7559 = vld [vmem:[#allocation19 + $0x850] sm:$0xff]
          %v7560 = vld [vmem:[#allocation19 + $0x858] sm:$0xff]
          %v7561 = vld [vmem:[#allocation19 + $0x860] sm:$0xff]
          %v7562 = vld [vmem:[#allocation19 + $0x868] sm:$0xff]
          %v7563 = vld [vmem:[#allocation19 + $0x870] sm:$0xff]
          %v7564 = vld [vmem:[#allocation19 + $0x878] sm:$0xff]
          %v7565 = vld [vmem:[#allocation19 + $0x880] sm:$0xff]
          %v7566 = vld [vmem:[#allocation19 + $0x888] sm:$0xff]
          %v7567 = vld [vmem:[#allocation19 + $0x890] sm:$0xff]
          %v7568 = vld [vmem:[#allocation19 + $0x898] sm:$0xff]
          %v7569 = vld [vmem:[#allocation19 + $0x8a0] sm:$0xff]
          %v7570 = vld [vmem:[#allocation19 + $0x8a8] sm:$0xff]
          %v7571 = vld [vmem:[#allocation19 + $0x8b0] sm:$0xff]
          %v7572 = vld [vmem:[#allocation19 + $0x8b8] sm:$0xff]
          %v7573 = vld [vmem:[#allocation19 + $0x8c0] sm:$0xff]
          %v7574 = vld [vmem:[#allocation19 + $0x8c8] sm:$0xff]
          %v7575 = vld [vmem:[#allocation19 + $0x8d0] sm:$0xff]
          %v7576 = vld [vmem:[#allocation19 + $0x8d8] sm:$0xff]
          %v7577 = vld [vmem:[#allocation19 + $0x8e0] sm:$0xff]
          %v7578 = vld [vmem:[#allocation19 + $0x8e8] sm:$0xff]
          %v7579 = vld [vmem:[#allocation19 + $0x8f0] sm:$0xff]
          %v7580 = vld [vmem:[#allocation19 + $0x8f8] sm:$0xff]
          %v7581 = vld [vmem:[#allocation19 + $0x900] sm:$0xff]
          %v7582 = vld [vmem:[#allocation19 + $0x908] sm:$0xff]
          %v7583 = vld [vmem:[#allocation19 + $0x910] sm:$0xff]
          %v7584 = vld [vmem:[#allocation19 + $0x918] sm:$0xff]
          %v7585 = vld [vmem:[#allocation19 + $0x920] sm:$0xff]
          %v7586 = vld [vmem:[#allocation19 + $0x928] sm:$0xff]
          %v7587 = vld [vmem:[#allocation19 + $0x930] sm:$0xff]
          %v7588 = vld [vmem:[#allocation19 + $0x938] sm:$0xff]
          %v7589 = vld [vmem:[#allocation19 + $0x940] sm:$0xff]
          %v7590 = vld [vmem:[#allocation19 + $0x948] sm:$0xff]
          %v7591 = vld [vmem:[#allocation19 + $0x950] sm:$0xff]
          %v7592 = vld [vmem:[#allocation19 + $0x958] sm:$0xff]
          %v7593 = vld [vmem:[#allocation19 + $0x960] sm:$0xff]
          %v7594 = vld [vmem:[#allocation19 + $0x968] sm:$0xff]
          %v7595 = vld [vmem:[#allocation19 + $0x970] sm:$0xff]
          %v7596 = vld [vmem:[#allocation19 + $0x978] sm:$0xff]
          %v7597 = vld [vmem:[#allocation19 + $0x980] sm:$0xff]
          %v7598 = vld [vmem:[#allocation19 + $0x988] sm:$0xff]
          %v7599 = vld [vmem:[#allocation19 + $0x990] sm:$0xff]
          %v7600 = vld [vmem:[#allocation19 + $0x998] sm:$0xff]
          %v7601 = vld [vmem:[#allocation19 + $0x9a0] sm:$0xff]
          %v7602 = vld [vmem:[#allocation19 + $0x9a8] sm:$0xff]
          %v7603 = vld [vmem:[#allocation19 + $0x9b0] sm:$0xff]
          %v7604 = vld [vmem:[#allocation19 + $0x9b8] sm:$0xff]
          %v7605 = vld [vmem:[#allocation19 + $0x9c0] sm:$0xff]
          %v7606 = vld [vmem:[#allocation19 + $0x9c8] sm:$0xff]
          %v7607 = vld [vmem:[#allocation19 + $0x9d0] sm:$0xff]
          %v7608 = vld [vmem:[#allocation19 + $0x9d8] sm:$0xff]
          %v7609 = vld [vmem:[#allocation19 + $0x9e0] sm:$0xff]
          %v7610 = vld [vmem:[#allocation19 + $0x9e8] sm:$0xff]
          %v7611 = vld [vmem:[#allocation19 + $0x9f0] sm:$0xff]
          %v7612 = vld [vmem:[#allocation19 + $0x9f8] sm:$0xff]
          %v7613 = vld [vmem:[#allocation19 + $0xa00] sm:$0xff]
          %v7614 = vld [vmem:[#allocation19 + $0xa08] sm:$0xff]
          %v7615 = vld [vmem:[#allocation19 + $0xa10] sm:$0xff]
          %v7616 = vld [vmem:[#allocation19 + $0xa18] sm:$0xff]
          %v7617 = vld [vmem:[#allocation19 + $0xa20] sm:$0xff]
          %v7618 = vld [vmem:[#allocation19 + $0xa28] sm:$0xff]
          %v7619 = vld [vmem:[#allocation19 + $0xa30] sm:$0xff]
          %v7620 = vld [vmem:[#allocation19 + $0xa38] sm:$0xff]
          %v7621 = vld [vmem:[#allocation19 + $0xa40] sm:$0xff]
          %v7622 = vld [vmem:[#allocation19 + $0xa48] sm:$0xff]
          %v7623 = vld [vmem:[#allocation19 + $0xa50] sm:$0xff]
          %v7624 = vld [vmem:[#allocation19 + $0xa58] sm:$0xff]
          %v7625 = vld [vmem:[#allocation19 + $0xa60] sm:$0xff]
          %v7626 = vld [vmem:[#allocation19 + $0xa68] sm:$0xff]
          %v7627 = vld [vmem:[#allocation19 + $0xa70] sm:$0xff]
          %v7628 = vld [vmem:[#allocation19 + $0xa78] sm:$0xff]
          %v7629 = vld [vmem:[#allocation19 + $0xa80] sm:$0xff]
          %v7630 = vld [vmem:[#allocation19 + $0xa88] sm:$0xff]
          %v7631 = vld [vmem:[#allocation19 + $0xa90] sm:$0xff]
          %v7632 = vld [vmem:[#allocation19 + $0xa98] sm:$0xff]
          %v7633 = vld [vmem:[#allocation19 + $0xaa0] sm:$0xff]
          %v7634 = vld [vmem:[#allocation19 + $0xaa8] sm:$0xff]
          %v7635 = vld [vmem:[#allocation19 + $0xab0] sm:$0xff]
          %v7636 = vld [vmem:[#allocation19 + $0xab8] sm:$0xff]
          %v7637 = vld [vmem:[#allocation19 + $0xac0] sm:$0xff]
          %v7638 = vld [vmem:[#allocation19 + $0xac8] sm:$0xff]
          %v7639 = vld [vmem:[#allocation19 + $0xad0] sm:$0xff]
          %v7640 = vld [vmem:[#allocation19 + $0xad8] sm:$0xff]
          %v7641 = vld [vmem:[#allocation19 + $0xae0] sm:$0xff]
          %v7642 = vld [vmem:[#allocation19 + $0xae8] sm:$0xff]
          %v7643 = vld [vmem:[#allocation19 + $0xaf0] sm:$0xff]
          %v7644 = vld [vmem:[#allocation19 + $0xaf8] sm:$0xff]
          %v7645 = vld [vmem:[#allocation19 + $0xb00] sm:$0xff]
          %v7646 = vld [vmem:[#allocation19 + $0xb08] sm:$0xff]
          %v7647 = vld [vmem:[#allocation19 + $0xb10] sm:$0xff]
          %v7648 = vld [vmem:[#allocation19 + $0xb18] sm:$0xff]
          %v7649 = vld [vmem:[#allocation19 + $0xb20] sm:$0xff]
          %v7650 = vld [vmem:[#allocation19 + $0xb28] sm:$0xff]
          %v7651 = vld [vmem:[#allocation19 + $0xb30] sm:$0xff]
          %v7652 = vld [vmem:[#allocation19 + $0xb38] sm:$0xff]
          %v7653 = vld [vmem:[#allocation19 + $0xb40] sm:$0xff]
          %v7654 = vld [vmem:[#allocation19 + $0xb48] sm:$0xff]
          %v7655 = vld [vmem:[#allocation19 + $0xb50] sm:$0xff]
          %v7656 = vld [vmem:[#allocation19 + $0xb58] sm:$0xff]
          %v7657 = vld [vmem:[#allocation19 + $0xb60] sm:$0xff]
          %v7658 = vld [vmem:[#allocation19 + $0xb68] sm:$0xff]
          %v7659 = vld [vmem:[#allocation19 + $0xb70] sm:$0xff]
          %v7660 = vld [vmem:[#allocation19 + $0xb78] sm:$0xff]
          %v7661 = vld [vmem:[#allocation19 + $0xb80] sm:$0xff]
          %v7662 = vld [vmem:[#allocation19 + $0xb88] sm:$0xff]
          %v7663 = vld [vmem:[#allocation19 + $0xb90] sm:$0xff]
          %v7664 = vld [vmem:[#allocation19 + $0xb98] sm:$0xff]
          %v7665 = vld [vmem:[#allocation19 + $0xba0] sm:$0xff]
          %v7666 = vld [vmem:[#allocation19 + $0xba8] sm:$0xff]
          %v7667 = vld [vmem:[#allocation19 + $0xbb0] sm:$0xff]
          %v7668 = vld [vmem:[#allocation19 + $0xbb8] sm:$0xff]
          %v7669 = vld [vmem:[#allocation19 + $0xbc0] sm:$0xff]
          %v7670 = vld [vmem:[#allocation19 + $0xbc8] sm:$0xff]
          %v7671 = vld [vmem:[#allocation19 + $0xbd0] sm:$0xff]
          %v7672 = vld [vmem:[#allocation19 + $0xbd8] sm:$0xff]
          %v7673 = vld [vmem:[#allocation19 + $0xbe0] sm:$0xff]
          %v7674 = vld [vmem:[#allocation19 + $0xbe8] sm:$0xff]
          %v7675 = vld [vmem:[#allocation19 + $0xbf0] sm:$0xff]
          %v7676 = vld [vmem:[#allocation19 + $0xbf8] sm:$0xff]
          %v7677 = vld [vmem:[#allocation19 + $0xc00] sm:$0xff]
          %v7678 = vld [vmem:[#allocation19 + $0xc08] sm:$0xff]
          %v7679 = vld [vmem:[#allocation19 + $0xc10] sm:$0xff]
          %v7680 = vld [vmem:[#allocation19 + $0xc18] sm:$0xff]
          %v7681 = vld [vmem:[#allocation19 + $0xc20] sm:$0xff]
          %v7682 = vld [vmem:[#allocation19 + $0xc28] sm:$0xff]
          %v7683 = vld [vmem:[#allocation19 + $0xc30] sm:$0xff]
          %v7684 = vld [vmem:[#allocation19 + $0xc38] sm:$0xff]
          %v7685 = vld [vmem:[#allocation19 + $0xc40] sm:$0xff]
          %v7686 = vld [vmem:[#allocation19 + $0xc48] sm:$0xff]
          %v7687 = vld [vmem:[#allocation19 + $0xc50] sm:$0xff]
          %v7688 = vld [vmem:[#allocation19 + $0xc58] sm:$0xff]
          %v7689 = vld [vmem:[#allocation19 + $0xc60] sm:$0xff]
          %v7690 = vld [vmem:[#allocation19 + $0xc68] sm:$0xff]
          %v7691 = vld [vmem:[#allocation19 + $0xc70] sm:$0xff]
          %v7692 = vld [vmem:[#allocation19 + $0xc78] sm:$0xff]
          %v7693 = vld [vmem:[#allocation19 + $0xc80] sm:$0xff]
          %v7694 = vld [vmem:[#allocation19 + $0xc88] sm:$0xff]
          %v7695 = vld [vmem:[#allocation19 + $0xc90] sm:$0xff]
          %v7696 = vld [vmem:[#allocation19 + $0xc98] sm:$0xff]
          %v7697 = vld [vmem:[#allocation19 + $0xca0] sm:$0xff]
          %v7698 = vld [vmem:[#allocation19 + $0xca8] sm:$0xff]
          %v7699 = vld [vmem:[#allocation19 + $0xcb0] sm:$0xff]
          %v7700 = vld [vmem:[#allocation19 + $0xcb8] sm:$0xff]
          %v7701 = vld [vmem:[#allocation19 + $0xcc0] sm:$0xff]
          %v7702 = vld [vmem:[#allocation19 + $0xcc8] sm:$0xff]
          %v7703 = vld [vmem:[#allocation19 + $0xcd0] sm:$0xff]
          %v7704 = vld [vmem:[#allocation19 + $0xcd8] sm:$0xff]
          %v7705 = vld [vmem:[#allocation19 + $0xce0] sm:$0xff]
          %v7706 = vld [vmem:[#allocation19 + $0xce8] sm:$0xff]
          %v7707 = vld [vmem:[#allocation19 + $0xcf0] sm:$0xff]
          %v7708 = vld [vmem:[#allocation19 + $0xcf8] sm:$0xff]
          %v7709 = vld [vmem:[#allocation19 + $0xd00] sm:$0xff]
          %v7710 = vld [vmem:[#allocation19 + $0xd08] sm:$0xff]
          %v7711 = vld [vmem:[#allocation19 + $0xd10] sm:$0xff]
          %v7712 = vld [vmem:[#allocation19 + $0xd18] sm:$0xff]
          %v7713 = vld [vmem:[#allocation19 + $0xd20] sm:$0xff]
          %v7714 = vld [vmem:[#allocation19 + $0xd28] sm:$0xff]
          %v7715 = vld [vmem:[#allocation19 + $0xd30] sm:$0xff]
          %v7716 = vld [vmem:[#allocation19 + $0xd38] sm:$0xff]
          %v7717 = vld [vmem:[#allocation19 + $0xd40] sm:$0xff]
          %v7718 = vld [vmem:[#allocation19 + $0xd48] sm:$0xff]
          %v7719 = vld [vmem:[#allocation19 + $0xd50] sm:$0xff]
          %v7720 = vld [vmem:[#allocation19 + $0xd58] sm:$0xff]
          %v7721 = vld [vmem:[#allocation19 + $0xd60] sm:$0xff]
          %v7722 = vld [vmem:[#allocation19 + $0xd68] sm:$0xff]
          %v7723 = vld [vmem:[#allocation19 + $0xd70] sm:$0xff]
          %v7724 = vld [vmem:[#allocation19 + $0xd78] sm:$0xff]
          %v7725 = vld [vmem:[#allocation19 + $0xd80] sm:$0xff]
          %v7726 = vld [vmem:[#allocation19 + $0xd88] sm:$0xff]
          %v7727 = vld [vmem:[#allocation19 + $0xd90] sm:$0xff]
          %v7728 = vld [vmem:[#allocation19 + $0xd98] sm:$0xff]
          %v7729 = vld [vmem:[#allocation19 + $0xda0] sm:$0xff]
          %v7730 = vld [vmem:[#allocation19 + $0xda8] sm:$0xff]
          %v7731 = vld [vmem:[#allocation19 + $0xdb0] sm:$0xff]
          %v7732 = vld [vmem:[#allocation19 + $0xdb8] sm:$0xff]
          %v7733 = vld [vmem:[#allocation19 + $0xdc0] sm:$0xff]
          %v7734 = vld [vmem:[#allocation19 + $0xdc8] sm:$0xff]
          %v7735 = vld [vmem:[#allocation19 + $0xdd0] sm:$0xff]
          %v7736 = vld [vmem:[#allocation19 + $0xdd8] sm:$0xff]
          %v7737 = vld [vmem:[#allocation19 + $0xde0] sm:$0xff]
          %v7738 = vld [vmem:[#allocation19 + $0xde8] sm:$0xff]
          %v7739 = vld [vmem:[#allocation19 + $0xdf0] sm:$0xff]
          %v7740 = vld [vmem:[#allocation19 + $0xdf8] sm:$0xff]
          %v7741 = vld [vmem:[#allocation19 + $0xe00] sm:$0xff]
          %v7742 = vld [vmem:[#allocation19 + $0xe08] sm:$0xff]
          %v7743 = vld [vmem:[#allocation19 + $0xe10] sm:$0xff]
          %v7744 = vld [vmem:[#allocation19 + $0xe18] sm:$0xff]
          %v7745 = vld [vmem:[#allocation19 + $0xe20] sm:$0xff]
          %v7746 = vld [vmem:[#allocation19 + $0xe28] sm:$0xff]
          %v7747 = vld [vmem:[#allocation19 + $0xe30] sm:$0xff]
          %v7748 = vld [vmem:[#allocation19 + $0xe38] sm:$0xff]
          %v7749 = vld [vmem:[#allocation19 + $0xe40] sm:$0xff]
          %v7750 = vld [vmem:[#allocation19 + $0xe48] sm:$0xff]
          %v7751 = vld [vmem:[#allocation19 + $0xe50] sm:$0xff]
          %v7752 = vld [vmem:[#allocation19 + $0xe58] sm:$0xff]
          %v7753 = vld [vmem:[#allocation19 + $0xe60] sm:$0xff]
          %v7754 = vld [vmem:[#allocation19 + $0xe68] sm:$0xff]
          %v7755 = vld [vmem:[#allocation19 + $0xe70] sm:$0xff]
          %v7756 = vld [vmem:[#allocation19 + $0xe78] sm:$0xff]
          %v7757 = vld [vmem:[#allocation19 + $0xe80] sm:$0xff]
          %v7758 = vld [vmem:[#allocation19 + $0xe88] sm:$0xff]
          %v7759 = vld [vmem:[#allocation19 + $0xe90] sm:$0xff]
          %v7760 = vld [vmem:[#allocation19 + $0xe98] sm:$0xff]
          %v7761 = vld [vmem:[#allocation19 + $0xea0] sm:$0xff]
          %v7762 = vld [vmem:[#allocation19 + $0xea8] sm:$0xff]
          %v7763 = vld [vmem:[#allocation19 + $0xeb0] sm:$0xff]
          %v7764 = vld [vmem:[#allocation19 + $0xeb8] sm:$0xff]
          %v7765 = vld [vmem:[#allocation19 + $0xec0] sm:$0xff]
          %v7766 = vld [vmem:[#allocation19 + $0xec8] sm:$0xff]
          %v7767 = vld [vmem:[#allocation19 + $0xed0] sm:$0xff]
          %v7768 = vld [vmem:[#allocation19 + $0xed8] sm:$0xff]
          %v7769 = vld [vmem:[#allocation19 + $0xee0] sm:$0xff]
          %v7770 = vld [vmem:[#allocation19 + $0xee8] sm:$0xff]
          %v7771 = vld [vmem:[#allocation19 + $0xef0] sm:$0xff]
          %v7772 = vld [vmem:[#allocation19 + $0xef8] sm:$0xff]
          %v7773 = vld [vmem:[#allocation19 + $0xf00] sm:$0xff]
          %v7774 = vld [vmem:[#allocation19 + $0xf08] sm:$0xff]
          %v7775 = vld [vmem:[#allocation19 + $0xf10] sm:$0xff]
          %v7776 = vld [vmem:[#allocation19 + $0xf18] sm:$0xff]
          %v7777 = vld [vmem:[#allocation19 + $0xf20] sm:$0xff]
          %v7778 = vld [vmem:[#allocation19 + $0xf28] sm:$0xff]
          %v7779 = vld [vmem:[#allocation19 + $0xf30] sm:$0xff]
          %v7780 = vld [vmem:[#allocation19 + $0xf38] sm:$0xff]
          %v7781 = vld [vmem:[#allocation19 + $0xf40] sm:$0xff]
          %v7782 = vld [vmem:[#allocation19 + $0xf48] sm:$0xff]
          %v7783 = vld [vmem:[#allocation19 + $0xf50] sm:$0xff]
          %v7784 = vld [vmem:[#allocation19 + $0xf58] sm:$0xff]
          %v7785 = vld [vmem:[#allocation19 + $0xf60] sm:$0xff]
          %v7786 = vld [vmem:[#allocation19 + $0xf68] sm:$0xff]
          %v7787 = vld [vmem:[#allocation19 + $0xf70] sm:$0xff]
          %v7788 = vld [vmem:[#allocation19 + $0xf78] sm:$0xff]
          %v7789 = vld [vmem:[#allocation19 + $0xf80] sm:$0xff]
          %v7790 = vld [vmem:[#allocation19 + $0xf88] sm:$0xff]
          %v7791 = vld [vmem:[#allocation19 + $0xf90] sm:$0xff]
          %v7792 = vld [vmem:[#allocation19 + $0xf98] sm:$0xff]
          %v7793 = vld [vmem:[#allocation19 + $0xfa0] sm:$0xff]
          %v7794 = vld [vmem:[#allocation19 + $0xfa8] sm:$0xff]
          %v7795 = vld [vmem:[#allocation19 + $0xfb0] sm:$0xff]
          %v7796 = vld [vmem:[#allocation19 + $0xfb8] sm:$0xff]
          %v7797 = vld [vmem:[#allocation19 + $0xfc0] sm:$0xff]
          %v7798 = vld [vmem:[#allocation19 + $0xfc8] sm:$0xff]
          %v7799 = vld [vmem:[#allocation19 + $0xfd0] sm:$0xff]
          %v7800 = vld [vmem:[#allocation19 + $0xfd8] sm:$0xff]
          %v7801 = vld [vmem:[#allocation19 + $0xfe0] sm:$0xff]
          %v7802 = vld [vmem:[#allocation19 + $0xfe8] sm:$0xff]
          %v7803 = vld [vmem:[#allocation19 + $0xff0] sm:$0xff]
          %v7804 = vld [vmem:[#allocation19 + $0xff8] sm:$0xff]
          %v7805 = vld [vmem:[#allocation20] sm:$0xff]
          %v7806 = vld [vmem:[#allocation20 + $0x8] sm:$0xff]
          %v7807 = vld [vmem:[#allocation20 + $0x10] sm:$0xff]
          %v7808 = vld [vmem:[#allocation20 + $0x18] sm:$0xff]
          %v8321 = vunpack.c.l.b16 %v7293
          %v8322 = vunpack.c.h.b16 %v7293
          %v8323 = vunpack.c.l.b16 %v7294
          %v8324 = vunpack.c.h.b16 %v7294
          %v8325 = vunpack.c.l.b16 %v7295
          %v8326 = vunpack.c.h.b16 %v7295
          %v8327 = vunpack.c.l.b16 %v7296
          %v8328 = vunpack.c.h.b16 %v7296
          %v8329 = vunpack.c.l.b16 %v7297
          %v8330 = vunpack.c.h.b16 %v7297
          %v8331 = vunpack.c.l.b16 %v7298
          %v8332 = vunpack.c.h.b16 %v7298
          %v8333 = vunpack.c.l.b16 %v7299
          %v8334 = vunpack.c.h.b16 %v7299
          %v8335 = vunpack.c.l.b16 %v7300
          %v8336 = vunpack.c.h.b16 %v7300
          %v8337 = vunpack.c.l.b16 %v7301
          %v8338 = vunpack.c.h.b16 %v7301
          %v8339 = vunpack.c.l.b16 %v7302
          %v8340 = vunpack.c.h.b16 %v7302
          %v8341 = vunpack.c.l.b16 %v7303
          %v8342 = vunpack.c.h.b16 %v7303
          %v8343 = vunpack.c.l.b16 %v7304
          %v8344 = vunpack.c.h.b16 %v7304
          %v8345 = vunpack.c.l.b16 %v7305
          %v8346 = vunpack.c.h.b16 %v7305
          %v8347 = vunpack.c.l.b16 %v7306
          %v8348 = vunpack.c.h.b16 %v7306
          %v8349 = vunpack.c.l.b16 %v7307
          %v8350 = vunpack.c.h.b16 %v7307
          %v8351 = vunpack.c.l.b16 %v7308
          %v8352 = vunpack.c.h.b16 %v7308
          %v8353 = vunpack.c.l.b16 %v7309
          %v8354 = vunpack.c.h.b16 %v7309
          %v8355 = vunpack.c.l.b16 %v7310
          %v8356 = vunpack.c.h.b16 %v7310
          %v8357 = vunpack.c.l.b16 %v7311
          %v8358 = vunpack.c.h.b16 %v7311
          %v8359 = vunpack.c.l.b16 %v7312
          %v8360 = vunpack.c.h.b16 %v7312
          %v8361 = vunpack.c.l.b16 %v7313
          %v8362 = vunpack.c.h.b16 %v7313
          %v8363 = vunpack.c.l.b16 %v7314
          %v8364 = vunpack.c.h.b16 %v7314
          %v8365 = vunpack.c.l.b16 %v7315
          %v8366 = vunpack.c.h.b16 %v7315
          %v8367 = vunpack.c.l.b16 %v7316
          %v8368 = vunpack.c.h.b16 %v7316
          %v8369 = vunpack.c.l.b16 %v7317
          %v8370 = vunpack.c.h.b16 %v7317
          %v8371 = vunpack.c.l.b16 %v7318
          %v8372 = vunpack.c.h.b16 %v7318
          %v8373 = vunpack.c.l.b16 %v7319
          %v8374 = vunpack.c.h.b16 %v7319
          %v8375 = vunpack.c.l.b16 %v7320
          %v8376 = vunpack.c.h.b16 %v7320
          %v8377 = vunpack.c.l.b16 %v7321
          %v8378 = vunpack.c.h.b16 %v7321
          %v8379 = vunpack.c.l.b16 %v7322
          %v8380 = vunpack.c.h.b16 %v7322
          %v8381 = vunpack.c.l.b16 %v7323
          %v8382 = vunpack.c.h.b16 %v7323
          %v8383 = vunpack.c.l.b16 %v7324
          %v8384 = vunpack.c.h.b16 %v7324
          %v8385 = vunpack.c.l.b16 %v7325
          %v8386 = vunpack.c.h.b16 %v7325
          %v8387 = vunpack.c.l.b16 %v7326
          %v8388 = vunpack.c.h.b16 %v7326
          %v8389 = vunpack.c.l.b16 %v7327
          %v8390 = vunpack.c.h.b16 %v7327
          %v8391 = vunpack.c.l.b16 %v7328
          %v8392 = vunpack.c.h.b16 %v7328
          %v8393 = vunpack.c.l.b16 %v7329
          %v8394 = vunpack.c.h.b16 %v7329
          %v8395 = vunpack.c.l.b16 %v7330
          %v8396 = vunpack.c.h.b16 %v7330
          %v8397 = vunpack.c.l.b16 %v7331
          %v8398 = vunpack.c.h.b16 %v7331
          %v8399 = vunpack.c.l.b16 %v7332
          %v8400 = vunpack.c.h.b16 %v7332
          %v8401 = vunpack.c.l.b16 %v7333
          %v8402 = vunpack.c.h.b16 %v7333
          %v8403 = vunpack.c.l.b16 %v7334
          %v8404 = vunpack.c.h.b16 %v7334
          %v8405 = vunpack.c.l.b16 %v7335
          %v8406 = vunpack.c.h.b16 %v7335
          %v8407 = vunpack.c.l.b16 %v7336
          %v8408 = vunpack.c.h.b16 %v7336
          %v8409 = vunpack.c.l.b16 %v7337
          %v8410 = vunpack.c.h.b16 %v7337
          %v8411 = vunpack.c.l.b16 %v7338
          %v8412 = vunpack.c.h.b16 %v7338
          %v8413 = vunpack.c.l.b16 %v7339
          %v8414 = vunpack.c.h.b16 %v7339
          %v8415 = vunpack.c.l.b16 %v7340
          %v8416 = vunpack.c.h.b16 %v7340
          %v8417 = vunpack.c.l.b16 %v7341
          %v8418 = vunpack.c.h.b16 %v7341
          %v8419 = vunpack.c.l.b16 %v7342
          %v8420 = vunpack.c.h.b16 %v7342
          %v8421 = vunpack.c.l.b16 %v7343
          %v8422 = vunpack.c.h.b16 %v7343
          %v8423 = vunpack.c.l.b16 %v7344
          %v8424 = vunpack.c.h.b16 %v7344
          %v8425 = vunpack.c.l.b16 %v7345
          %v8426 = vunpack.c.h.b16 %v7345
          %v8427 = vunpack.c.l.b16 %v7346
          %v8428 = vunpack.c.h.b16 %v7346
          %v8429 = vunpack.c.l.b16 %v7347
          %v8430 = vunpack.c.h.b16 %v7347
          %v8431 = vunpack.c.l.b16 %v7348
          %v8432 = vunpack.c.h.b16 %v7348
          %v8433 = vunpack.c.l.b16 %v7349
          %v8434 = vunpack.c.h.b16 %v7349
          %v8435 = vunpack.c.l.b16 %v7350
          %v8436 = vunpack.c.h.b16 %v7350
          %v8437 = vunpack.c.l.b16 %v7351
          %v8438 = vunpack.c.h.b16 %v7351
          %v8439 = vunpack.c.l.b16 %v7352
          %v8440 = vunpack.c.h.b16 %v7352
          %v8441 = vunpack.c.l.b16 %v7353
          %v8442 = vunpack.c.h.b16 %v7353
          %v8443 = vunpack.c.l.b16 %v7354
          %v8444 = vunpack.c.h.b16 %v7354
          %v8445 = vunpack.c.l.b16 %v7355
          %v8446 = vunpack.c.h.b16 %v7355
          %v8447 = vunpack.c.l.b16 %v7356
          %v8448 = vunpack.c.h.b16 %v7356
          %v8449 = vunpack.c.l.b16 %v7357
          %v8450 = vunpack.c.h.b16 %v7357
          %v8451 = vunpack.c.l.b16 %v7358
          %v8452 = vunpack.c.h.b16 %v7358
          %v8453 = vunpack.c.l.b16 %v7359
          %v8454 = vunpack.c.h.b16 %v7359
          %v8455 = vunpack.c.l.b16 %v7360
          %v8456 = vunpack.c.h.b16 %v7360
          %v8457 = vunpack.c.l.b16 %v7361
          %v8458 = vunpack.c.h.b16 %v7361
          %v8459 = vunpack.c.l.b16 %v7362
          %v8460 = vunpack.c.h.b16 %v7362
          %v8461 = vunpack.c.l.b16 %v7363
          %v8462 = vunpack.c.h.b16 %v7363
          %v8463 = vunpack.c.l.b16 %v7364
          %v8464 = vunpack.c.h.b16 %v7364
          %v8465 = vunpack.c.l.b16 %v7365
          %v8466 = vunpack.c.h.b16 %v7365
          %v8467 = vunpack.c.l.b16 %v7366
          %v8468 = vunpack.c.h.b16 %v7366
          %v8469 = vunpack.c.l.b16 %v7367
          %v8470 = vunpack.c.h.b16 %v7367
          %v8471 = vunpack.c.l.b16 %v7368
          %v8472 = vunpack.c.h.b16 %v7368
          %v8473 = vunpack.c.l.b16 %v7369
          %v8474 = vunpack.c.h.b16 %v7369
          %v8475 = vunpack.c.l.b16 %v7370
          %v8476 = vunpack.c.h.b16 %v7370
          %v8477 = vunpack.c.l.b16 %v7371
          %v8478 = vunpack.c.h.b16 %v7371
          %v8479 = vunpack.c.l.b16 %v7372
          %v8480 = vunpack.c.h.b16 %v7372
          %v8481 = vunpack.c.l.b16 %v7373
          %v8482 = vunpack.c.h.b16 %v7373
          %v8483 = vunpack.c.l.b16 %v7374
          %v8484 = vunpack.c.h.b16 %v7374
          %v8485 = vunpack.c.l.b16 %v7375
          %v8486 = vunpack.c.h.b16 %v7375
          %v8487 = vunpack.c.l.b16 %v7376
          %v8488 = vunpack.c.h.b16 %v7376
          %v8489 = vunpack.c.l.b16 %v7377
          %v8490 = vunpack.c.h.b16 %v7377
          %v8491 = vunpack.c.l.b16 %v7378
          %v8492 = vunpack.c.h.b16 %v7378
          %v8493 = vunpack.c.l.b16 %v7379
          %v8494 = vunpack.c.h.b16 %v7379
          %v8495 = vunpack.c.l.b16 %v7380
          %v8496 = vunpack.c.h.b16 %v7380
          %v8497 = vunpack.c.l.b16 %v7381
          %v8498 = vunpack.c.h.b16 %v7381
          %v8499 = vunpack.c.l.b16 %v7382
          %v8500 = vunpack.c.h.b16 %v7382
          %v8501 = vunpack.c.l.b16 %v7383
          %v8502 = vunpack.c.h.b16 %v7383
          %v8503 = vunpack.c.l.b16 %v7384
          %v8504 = vunpack.c.h.b16 %v7384
          %v8505 = vunpack.c.l.b16 %v7385
          %v8506 = vunpack.c.h.b16 %v7385
          %v8507 = vunpack.c.l.b16 %v7386
          %v8508 = vunpack.c.h.b16 %v7386
          %v8509 = vunpack.c.l.b16 %v7387
          %v8510 = vunpack.c.h.b16 %v7387
          %v8511 = vunpack.c.l.b16 %v7388
          %v8512 = vunpack.c.h.b16 %v7388
          %v8513 = vunpack.c.l.b16 %v7389
          %v8514 = vunpack.c.h.b16 %v7389
          %v8515 = vunpack.c.l.b16 %v7390
          %v8516 = vunpack.c.h.b16 %v7390
          %v8517 = vunpack.c.l.b16 %v7391
          %v8518 = vunpack.c.h.b16 %v7391
          %v8519 = vunpack.c.l.b16 %v7392
          %v8520 = vunpack.c.h.b16 %v7392
          %v8521 = vunpack.c.l.b16 %v7393
          %v8522 = vunpack.c.h.b16 %v7393
          %v8523 = vunpack.c.l.b16 %v7394
          %v8524 = vunpack.c.h.b16 %v7394
          %v8525 = vunpack.c.l.b16 %v7395
          %v8526 = vunpack.c.h.b16 %v7395
          %v8527 = vunpack.c.l.b16 %v7396
          %v8528 = vunpack.c.h.b16 %v7396
          %v8529 = vunpack.c.l.b16 %v7397
          %v8530 = vunpack.c.h.b16 %v7397
          %v8531 = vunpack.c.l.b16 %v7398
          %v8532 = vunpack.c.h.b16 %v7398
          %v8533 = vunpack.c.l.b16 %v7399
          %v8534 = vunpack.c.h.b16 %v7399
          %v8535 = vunpack.c.l.b16 %v7400
          %v8536 = vunpack.c.h.b16 %v7400
          %v8537 = vunpack.c.l.b16 %v7401
          %v8538 = vunpack.c.h.b16 %v7401
          %v8539 = vunpack.c.l.b16 %v7402
          %v8540 = vunpack.c.h.b16 %v7402
          %v8541 = vunpack.c.l.b16 %v7403
          %v8542 = vunpack.c.h.b16 %v7403
          %v8543 = vunpack.c.l.b16 %v7404
          %v8544 = vunpack.c.h.b16 %v7404
          %v8545 = vunpack.c.l.b16 %v7405
          %v8546 = vunpack.c.h.b16 %v7405
          %v8547 = vunpack.c.l.b16 %v7406
          %v8548 = vunpack.c.h.b16 %v7406
          %v8549 = vunpack.c.l.b16 %v7407
          %v8550 = vunpack.c.h.b16 %v7407
          %v8551 = vunpack.c.l.b16 %v7408
          %v8552 = vunpack.c.h.b16 %v7408
          %v8553 = vunpack.c.l.b16 %v7409
          %v8554 = vunpack.c.h.b16 %v7409
          %v8555 = vunpack.c.l.b16 %v7410
          %v8556 = vunpack.c.h.b16 %v7410
          %v8557 = vunpack.c.l.b16 %v7411
          %v8558 = vunpack.c.h.b16 %v7411
          %v8559 = vunpack.c.l.b16 %v7412
          %v8560 = vunpack.c.h.b16 %v7412
          %v8561 = vunpack.c.l.b16 %v7413
          %v8562 = vunpack.c.h.b16 %v7413
          %v8563 = vunpack.c.l.b16 %v7414
          %v8564 = vunpack.c.h.b16 %v7414
          %v8565 = vunpack.c.l.b16 %v7415
          %v8566 = vunpack.c.h.b16 %v7415
          %v8567 = vunpack.c.l.b16 %v7416
          %v8568 = vunpack.c.h.b16 %v7416
          %v8569 = vunpack.c.l.b16 %v7417
          %v8570 = vunpack.c.h.b16 %v7417
          %v8571 = vunpack.c.l.b16 %v7418
          %v8572 = vunpack.c.h.b16 %v7418
          %v8573 = vunpack.c.l.b16 %v7419
          %v8574 = vunpack.c.h.b16 %v7419
          %v8575 = vunpack.c.l.b16 %v7420
          %v8576 = vunpack.c.h.b16 %v7420
          %v8577 = vunpack.c.l.b16 %v7421
          %v8578 = vunpack.c.h.b16 %v7421
          %v8579 = vunpack.c.l.b16 %v7422
          %v8580 = vunpack.c.h.b16 %v7422
          %v8581 = vunpack.c.l.b16 %v7423
          %v8582 = vunpack.c.h.b16 %v7423
          %v8583 = vunpack.c.l.b16 %v7424
          %v8584 = vunpack.c.h.b16 %v7424
          %v8585 = vunpack.c.l.b16 %v7425
          %v8586 = vunpack.c.h.b16 %v7425
          %v8587 = vunpack.c.l.b16 %v7426
          %v8588 = vunpack.c.h.b16 %v7426
          %v8589 = vunpack.c.l.b16 %v7427
          %v8590 = vunpack.c.h.b16 %v7427
          %v8591 = vunpack.c.l.b16 %v7428
          %v8592 = vunpack.c.h.b16 %v7428
          %v8593 = vunpack.c.l.b16 %v7429
          %v8594 = vunpack.c.h.b16 %v7429
          %v8595 = vunpack.c.l.b16 %v7430
          %v8596 = vunpack.c.h.b16 %v7430
          %v8597 = vunpack.c.l.b16 %v7431
          %v8598 = vunpack.c.h.b16 %v7431
          %v8599 = vunpack.c.l.b16 %v7432
          %v8600 = vunpack.c.h.b16 %v7432
          %v8601 = vunpack.c.l.b16 %v7433
          %v8602 = vunpack.c.h.b16 %v7433
          %v8603 = vunpack.c.l.b16 %v7434
          %v8604 = vunpack.c.h.b16 %v7434
          %v8605 = vunpack.c.l.b16 %v7435
          %v8606 = vunpack.c.h.b16 %v7435
          %v8607 = vunpack.c.l.b16 %v7436
          %v8608 = vunpack.c.h.b16 %v7436
          %v8609 = vunpack.c.l.b16 %v7437
          %v8610 = vunpack.c.h.b16 %v7437
          %v8611 = vunpack.c.l.b16 %v7438
          %v8612 = vunpack.c.h.b16 %v7438
          %v8613 = vunpack.c.l.b16 %v7439
          %v8614 = vunpack.c.h.b16 %v7439
          %v8615 = vunpack.c.l.b16 %v7440
          %v8616 = vunpack.c.h.b16 %v7440
          %v8617 = vunpack.c.l.b16 %v7441
          %v8618 = vunpack.c.h.b16 %v7441
          %v8619 = vunpack.c.l.b16 %v7442
          %v8620 = vunpack.c.h.b16 %v7442
          %v8621 = vunpack.c.l.b16 %v7443
          %v8622 = vunpack.c.h.b16 %v7443
          %v8623 = vunpack.c.l.b16 %v7444
          %v8624 = vunpack.c.h.b16 %v7444
          %v8625 = vunpack.c.l.b16 %v7445
          %v8626 = vunpack.c.h.b16 %v7445
          %v8627 = vunpack.c.l.b16 %v7446
          %v8628 = vunpack.c.h.b16 %v7446
          %v8629 = vunpack.c.l.b16 %v7447
          %v8630 = vunpack.c.h.b16 %v7447
          %v8631 = vunpack.c.l.b16 %v7448
          %v8632 = vunpack.c.h.b16 %v7448
          %v8633 = vunpack.c.l.b16 %v7449
          %v8634 = vunpack.c.h.b16 %v7449
          %v8635 = vunpack.c.l.b16 %v7450
          %v8636 = vunpack.c.h.b16 %v7450
          %v8637 = vunpack.c.l.b16 %v7451
          %v8638 = vunpack.c.h.b16 %v7451
          %v8639 = vunpack.c.l.b16 %v7452
          %v8640 = vunpack.c.h.b16 %v7452
          %v8641 = vunpack.c.l.b16 %v7453
          %v8642 = vunpack.c.h.b16 %v7453
          %v8643 = vunpack.c.l.b16 %v7454
          %v8644 = vunpack.c.h.b16 %v7454
          %v8645 = vunpack.c.l.b16 %v7455
          %v8646 = vunpack.c.h.b16 %v7455
          %v8647 = vunpack.c.l.b16 %v7456
          %v8648 = vunpack.c.h.b16 %v7456
          %v8649 = vunpack.c.l.b16 %v7457
          %v8650 = vunpack.c.h.b16 %v7457
          %v8651 = vunpack.c.l.b16 %v7458
          %v8652 = vunpack.c.h.b16 %v7458
          %v8653 = vunpack.c.l.b16 %v7459
          %v8654 = vunpack.c.h.b16 %v7459
          %v8655 = vunpack.c.l.b16 %v7460
          %v8656 = vunpack.c.h.b16 %v7460
          %v8657 = vunpack.c.l.b16 %v7461
          %v8658 = vunpack.c.h.b16 %v7461
          %v8659 = vunpack.c.l.b16 %v7462
          %v8660 = vunpack.c.h.b16 %v7462
          %v8661 = vunpack.c.l.b16 %v7463
          %v8662 = vunpack.c.h.b16 %v7463
          %v8663 = vunpack.c.l.b16 %v7464
          %v8664 = vunpack.c.h.b16 %v7464
          %v8665 = vunpack.c.l.b16 %v7465
          %v8666 = vunpack.c.h.b16 %v7465
          %v8667 = vunpack.c.l.b16 %v7466
          %v8668 = vunpack.c.h.b16 %v7466
          %v8669 = vunpack.c.l.b16 %v7467
          %v8670 = vunpack.c.h.b16 %v7467
          %v8671 = vunpack.c.l.b16 %v7468
          %v8672 = vunpack.c.h.b16 %v7468
          %v8673 = vunpack.c.l.b16 %v7469
          %v8674 = vunpack.c.h.b16 %v7469
          %v8675 = vunpack.c.l.b16 %v7470
          %v8676 = vunpack.c.h.b16 %v7470
          %v8677 = vunpack.c.l.b16 %v7471
          %v8678 = vunpack.c.h.b16 %v7471
          %v8679 = vunpack.c.l.b16 %v7472
          %v8680 = vunpack.c.h.b16 %v7472
          %v8681 = vunpack.c.l.b16 %v7473
          %v8682 = vunpack.c.h.b16 %v7473
          %v8683 = vunpack.c.l.b16 %v7474
          %v8684 = vunpack.c.h.b16 %v7474
          %v8685 = vunpack.c.l.b16 %v7475
          %v8686 = vunpack.c.h.b16 %v7475
          %v8687 = vunpack.c.l.b16 %v7476
          %v8688 = vunpack.c.h.b16 %v7476
          %v8689 = vunpack.c.l.b16 %v7477
          %v8690 = vunpack.c.h.b16 %v7477
          %v8691 = vunpack.c.l.b16 %v7478
          %v8692 = vunpack.c.h.b16 %v7478
          %v8693 = vunpack.c.l.b16 %v7479
          %v8694 = vunpack.c.h.b16 %v7479
          %v8695 = vunpack.c.l.b16 %v7480
          %v8696 = vunpack.c.h.b16 %v7480
          %v8697 = vunpack.c.l.b16 %v7481
          %v8698 = vunpack.c.h.b16 %v7481
          %v8699 = vunpack.c.l.b16 %v7482
          %v8700 = vunpack.c.h.b16 %v7482
          %v8701 = vunpack.c.l.b16 %v7483
          %v8702 = vunpack.c.h.b16 %v7483
          %v8703 = vunpack.c.l.b16 %v7484
          %v8704 = vunpack.c.h.b16 %v7484
          %v8705 = vunpack.c.l.b16 %v7485
          %v8706 = vunpack.c.h.b16 %v7485
          %v8707 = vunpack.c.l.b16 %v7486
          %v8708 = vunpack.c.h.b16 %v7486
          %v8709 = vunpack.c.l.b16 %v7487
          %v8710 = vunpack.c.h.b16 %v7487
          %v8711 = vunpack.c.l.b16 %v7488
          %v8712 = vunpack.c.h.b16 %v7488
          %v8713 = vunpack.c.l.b16 %v7489
          %v8714 = vunpack.c.h.b16 %v7489
          %v8715 = vunpack.c.l.b16 %v7490
          %v8716 = vunpack.c.h.b16 %v7490
          %v8717 = vunpack.c.l.b16 %v7491
          %v8718 = vunpack.c.h.b16 %v7491
          %v8719 = vunpack.c.l.b16 %v7492
          %v8720 = vunpack.c.h.b16 %v7492
          %v8721 = vunpack.c.l.b16 %v7493
          %v8722 = vunpack.c.h.b16 %v7493
          %v8723 = vunpack.c.l.b16 %v7494
          %v8724 = vunpack.c.h.b16 %v7494
          %v8725 = vunpack.c.l.b16 %v7495
          %v8726 = vunpack.c.h.b16 %v7495
          %v8727 = vunpack.c.l.b16 %v7496
          %v8728 = vunpack.c.h.b16 %v7496
          %v8729 = vunpack.c.l.b16 %v7497
          %v8730 = vunpack.c.h.b16 %v7497
          %v8731 = vunpack.c.l.b16 %v7498
          %v8732 = vunpack.c.h.b16 %v7498
          %v8733 = vunpack.c.l.b16 %v7499
          %v8734 = vunpack.c.h.b16 %v7499
          %v8735 = vunpack.c.l.b16 %v7500
          %v8736 = vunpack.c.h.b16 %v7500
          %v8737 = vunpack.c.l.b16 %v7501
          %v8738 = vunpack.c.h.b16 %v7501
          %v8739 = vunpack.c.l.b16 %v7502
          %v8740 = vunpack.c.h.b16 %v7502
          %v8741 = vunpack.c.l.b16 %v7503
          %v8742 = vunpack.c.h.b16 %v7503
          %v8743 = vunpack.c.l.b16 %v7504
          %v8744 = vunpack.c.h.b16 %v7504
          %v8745 = vunpack.c.l.b16 %v7505
          %v8746 = vunpack.c.h.b16 %v7505
          %v8747 = vunpack.c.l.b16 %v7506
          %v8748 = vunpack.c.h.b16 %v7506
          %v8749 = vunpack.c.l.b16 %v7507
          %v8750 = vunpack.c.h.b16 %v7507
          %v8751 = vunpack.c.l.b16 %v7508
          %v8752 = vunpack.c.h.b16 %v7508
          %v8753 = vunpack.c.l.b16 %v7509
          %v8754 = vunpack.c.h.b16 %v7509
          %v8755 = vunpack.c.l.b16 %v7510
          %v8756 = vunpack.c.h.b16 %v7510
          %v8757 = vunpack.c.l.b16 %v7511
          %v8758 = vunpack.c.h.b16 %v7511
          %v8759 = vunpack.c.l.b16 %v7512
          %v8760 = vunpack.c.h.b16 %v7512
          %v8761 = vunpack.c.l.b16 %v7513
          %v8762 = vunpack.c.h.b16 %v7513
          %v8763 = vunpack.c.l.b16 %v7514
          %v8764 = vunpack.c.h.b16 %v7514
          %v8765 = vunpack.c.l.b16 %v7515
          %v8766 = vunpack.c.h.b16 %v7515
          %v8767 = vunpack.c.l.b16 %v7516
          %v8768 = vunpack.c.h.b16 %v7516
          %v8769 = vunpack.c.l.b16 %v7517
          %v8770 = vunpack.c.h.b16 %v7517
          %v8771 = vunpack.c.l.b16 %v7518
          %v8772 = vunpack.c.h.b16 %v7518
          %v8773 = vunpack.c.l.b16 %v7519
          %v8774 = vunpack.c.h.b16 %v7519
          %v8775 = vunpack.c.l.b16 %v7520
          %v8776 = vunpack.c.h.b16 %v7520
          %v8777 = vunpack.c.l.b16 %v7521
          %v8778 = vunpack.c.h.b16 %v7521
          %v8779 = vunpack.c.l.b16 %v7522
          %v8780 = vunpack.c.h.b16 %v7522
          %v8781 = vunpack.c.l.b16 %v7523
          %v8782 = vunpack.c.h.b16 %v7523
          %v8783 = vunpack.c.l.b16 %v7524
          %v8784 = vunpack.c.h.b16 %v7524
          %v8785 = vunpack.c.l.b16 %v7525
          %v8786 = vunpack.c.h.b16 %v7525
          %v8787 = vunpack.c.l.b16 %v7526
          %v8788 = vunpack.c.h.b16 %v7526
          %v8789 = vunpack.c.l.b16 %v7527
          %v8790 = vunpack.c.h.b16 %v7527
          %v8791 = vunpack.c.l.b16 %v7528
          %v8792 = vunpack.c.h.b16 %v7528
          %v8793 = vunpack.c.l.b16 %v7529
          %v8794 = vunpack.c.h.b16 %v7529
          %v8795 = vunpack.c.l.b16 %v7530
          %v8796 = vunpack.c.h.b16 %v7530
          %v8797 = vunpack.c.l.b16 %v7531
          %v8798 = vunpack.c.h.b16 %v7531
          %v8799 = vunpack.c.l.b16 %v7532
          %v8800 = vunpack.c.h.b16 %v7532
          %v8801 = vunpack.c.l.b16 %v7533
          %v8802 = vunpack.c.h.b16 %v7533
          %v8803 = vunpack.c.l.b16 %v7534
          %v8804 = vunpack.c.h.b16 %v7534
          %v8805 = vunpack.c.l.b16 %v7535
          %v8806 = vunpack.c.h.b16 %v7535
          %v8807 = vunpack.c.l.b16 %v7536
          %v8808 = vunpack.c.h.b16 %v7536
          %v8809 = vunpack.c.l.b16 %v7537
          %v8810 = vunpack.c.h.b16 %v7537
          %v8811 = vunpack.c.l.b16 %v7538
          %v8812 = vunpack.c.h.b16 %v7538
          %v8813 = vunpack.c.l.b16 %v7539
          %v8814 = vunpack.c.h.b16 %v7539
          %v8815 = vunpack.c.l.b16 %v7540
          %v8816 = vunpack.c.h.b16 %v7540
          %v8817 = vunpack.c.l.b16 %v7541
          %v8818 = vunpack.c.h.b16 %v7541
          %v8819 = vunpack.c.l.b16 %v7542
          %v8820 = vunpack.c.h.b16 %v7542
          %v8821 = vunpack.c.l.b16 %v7543
          %v8822 = vunpack.c.h.b16 %v7543
          %v8823 = vunpack.c.l.b16 %v7544
          %v8824 = vunpack.c.h.b16 %v7544
          %v8825 = vunpack.c.l.b16 %v7545
          %v8826 = vunpack.c.h.b16 %v7545
          %v8827 = vunpack.c.l.b16 %v7546
          %v8828 = vunpack.c.h.b16 %v7546
          %v8829 = vunpack.c.l.b16 %v7547
          %v8830 = vunpack.c.h.b16 %v7547
          %v8831 = vunpack.c.l.b16 %v7548
          %v8832 = vunpack.c.h.b16 %v7548
          %v8833 = vunpack.c.l.b16 %v7549
          %v8834 = vunpack.c.h.b16 %v7549
          %v8835 = vunpack.c.l.b16 %v7550
          %v8836 = vunpack.c.h.b16 %v7550
          %v8837 = vunpack.c.l.b16 %v7551
          %v8838 = vunpack.c.h.b16 %v7551
          %v8839 = vunpack.c.l.b16 %v7552
          %v8840 = vunpack.c.h.b16 %v7552
          %v8841 = vunpack.c.l.b16 %v7553
          %v8842 = vunpack.c.h.b16 %v7553
          %v8843 = vunpack.c.l.b16 %v7554
          %v8844 = vunpack.c.h.b16 %v7554
          %v8845 = vunpack.c.l.b16 %v7555
          %v8846 = vunpack.c.h.b16 %v7555
          %v8847 = vunpack.c.l.b16 %v7556
          %v8848 = vunpack.c.h.b16 %v7556
          %v8849 = vunpack.c.l.b16 %v7557
          %v8850 = vunpack.c.h.b16 %v7557
          %v8851 = vunpack.c.l.b16 %v7558
          %v8852 = vunpack.c.h.b16 %v7558
          %v8853 = vunpack.c.l.b16 %v7559
          %v8854 = vunpack.c.h.b16 %v7559
          %v8855 = vunpack.c.l.b16 %v7560
          %v8856 = vunpack.c.h.b16 %v7560
          %v8857 = vunpack.c.l.b16 %v7561
          %v8858 = vunpack.c.h.b16 %v7561
          %v8859 = vunpack.c.l.b16 %v7562
          %v8860 = vunpack.c.h.b16 %v7562
          %v8861 = vunpack.c.l.b16 %v7563
          %v8862 = vunpack.c.h.b16 %v7563
          %v8863 = vunpack.c.l.b16 %v7564
          %v8864 = vunpack.c.h.b16 %v7564
          %v8865 = vunpack.c.l.b16 %v7565
          %v8866 = vunpack.c.h.b16 %v7565
          %v8867 = vunpack.c.l.b16 %v7566
          %v8868 = vunpack.c.h.b16 %v7566
          %v8869 = vunpack.c.l.b16 %v7567
          %v8870 = vunpack.c.h.b16 %v7567
          %v8871 = vunpack.c.l.b16 %v7568
          %v8872 = vunpack.c.h.b16 %v7568
          %v8873 = vunpack.c.l.b16 %v7569
          %v8874 = vunpack.c.h.b16 %v7569
          %v8875 = vunpack.c.l.b16 %v7570
          %v8876 = vunpack.c.h.b16 %v7570
          %v8877 = vunpack.c.l.b16 %v7571
          %v8878 = vunpack.c.h.b16 %v7571
          %v8879 = vunpack.c.l.b16 %v7572
          %v8880 = vunpack.c.h.b16 %v7572
          %v8881 = vunpack.c.l.b16 %v7573
          %v8882 = vunpack.c.h.b16 %v7573
          %v8883 = vunpack.c.l.b16 %v7574
          %v8884 = vunpack.c.h.b16 %v7574
          %v8885 = vunpack.c.l.b16 %v7575
          %v8886 = vunpack.c.h.b16 %v7575
          %v8887 = vunpack.c.l.b16 %v7576
          %v8888 = vunpack.c.h.b16 %v7576
          %v8889 = vunpack.c.l.b16 %v7577
          %v8890 = vunpack.c.h.b16 %v7577
          %v8891 = vunpack.c.l.b16 %v7578
          %v8892 = vunpack.c.h.b16 %v7578
          %v8893 = vunpack.c.l.b16 %v7579
          %v8894 = vunpack.c.h.b16 %v7579
          %v8895 = vunpack.c.l.b16 %v7580
          %v8896 = vunpack.c.h.b16 %v7580
          %v8897 = vunpack.c.l.b16 %v7581
          %v8898 = vunpack.c.h.b16 %v7581
          %v8899 = vunpack.c.l.b16 %v7582
          %v8900 = vunpack.c.h.b16 %v7582
          %v8901 = vunpack.c.l.b16 %v7583
          %v8902 = vunpack.c.h.b16 %v7583
          %v8903 = vunpack.c.l.b16 %v7584
          %v8904 = vunpack.c.h.b16 %v7584
          %v8905 = vunpack.c.l.b16 %v7585
          %v8906 = vunpack.c.h.b16 %v7585
          %v8907 = vunpack.c.l.b16 %v7586
          %v8908 = vunpack.c.h.b16 %v7586
          %v8909 = vunpack.c.l.b16 %v7587
          %v8910 = vunpack.c.h.b16 %v7587
          %v8911 = vunpack.c.l.b16 %v7588
          %v8912 = vunpack.c.h.b16 %v7588
          %v8913 = vunpack.c.l.b16 %v7589
          %v8914 = vunpack.c.h.b16 %v7589
          %v8915 = vunpack.c.l.b16 %v7590
          %v8916 = vunpack.c.h.b16 %v7590
          %v8917 = vunpack.c.l.b16 %v7591
          %v8918 = vunpack.c.h.b16 %v7591
          %v8919 = vunpack.c.l.b16 %v7592
          %v8920 = vunpack.c.h.b16 %v7592
          %v8921 = vunpack.c.l.b16 %v7593
          %v8922 = vunpack.c.h.b16 %v7593
          %v8923 = vunpack.c.l.b16 %v7594
          %v8924 = vunpack.c.h.b16 %v7594
          %v8925 = vunpack.c.l.b16 %v7595
          %v8926 = vunpack.c.h.b16 %v7595
          %v8927 = vunpack.c.l.b16 %v7596
          %v8928 = vunpack.c.h.b16 %v7596
          %v8929 = vunpack.c.l.b16 %v7597
          %v8930 = vunpack.c.h.b16 %v7597
          %v8931 = vunpack.c.l.b16 %v7598
          %v8932 = vunpack.c.h.b16 %v7598
          %v8933 = vunpack.c.l.b16 %v7599
          %v8934 = vunpack.c.h.b16 %v7599
          %v8935 = vunpack.c.l.b16 %v7600
          %v8936 = vunpack.c.h.b16 %v7600
          %v8937 = vunpack.c.l.b16 %v7601
          %v8938 = vunpack.c.h.b16 %v7601
          %v8939 = vunpack.c.l.b16 %v7602
          %v8940 = vunpack.c.h.b16 %v7602
          %v8941 = vunpack.c.l.b16 %v7603
          %v8942 = vunpack.c.h.b16 %v7603
          %v8943 = vunpack.c.l.b16 %v7604
          %v8944 = vunpack.c.h.b16 %v7604
          %v8945 = vunpack.c.l.b16 %v7605
          %v8946 = vunpack.c.h.b16 %v7605
          %v8947 = vunpack.c.l.b16 %v7606
          %v8948 = vunpack.c.h.b16 %v7606
          %v8949 = vunpack.c.l.b16 %v7607
          %v8950 = vunpack.c.h.b16 %v7607
          %v8951 = vunpack.c.l.b16 %v7608
          %v8952 = vunpack.c.h.b16 %v7608
          %v8953 = vunpack.c.l.b16 %v7609
          %v8954 = vunpack.c.h.b16 %v7609
          %v8955 = vunpack.c.l.b16 %v7610
          %v8956 = vunpack.c.h.b16 %v7610
          %v8957 = vunpack.c.l.b16 %v7611
          %v8958 = vunpack.c.h.b16 %v7611
          %v8959 = vunpack.c.l.b16 %v7612
          %v8960 = vunpack.c.h.b16 %v7612
          %v8961 = vunpack.c.l.b16 %v7613
          %v8962 = vunpack.c.h.b16 %v7613
          %v8963 = vunpack.c.l.b16 %v7614
          %v8964 = vunpack.c.h.b16 %v7614
          %v8965 = vunpack.c.l.b16 %v7615
          %v8966 = vunpack.c.h.b16 %v7615
          %v8967 = vunpack.c.l.b16 %v7616
          %v8968 = vunpack.c.h.b16 %v7616
          %v8969 = vunpack.c.l.b16 %v7617
          %v8970 = vunpack.c.h.b16 %v7617
          %v8971 = vunpack.c.l.b16 %v7618
          %v8972 = vunpack.c.h.b16 %v7618
          %v8973 = vunpack.c.l.b16 %v7619
          %v8974 = vunpack.c.h.b16 %v7619
          %v8975 = vunpack.c.l.b16 %v7620
          %v8976 = vunpack.c.h.b16 %v7620
          %v8977 = vunpack.c.l.b16 %v7621
          %v8978 = vunpack.c.h.b16 %v7621
          %v8979 = vunpack.c.l.b16 %v7622
          %v8980 = vunpack.c.h.b16 %v7622
          %v8981 = vunpack.c.l.b16 %v7623
          %v8982 = vunpack.c.h.b16 %v7623
          %v8983 = vunpack.c.l.b16 %v7624
          %v8984 = vunpack.c.h.b16 %v7624
          %v8985 = vunpack.c.l.b16 %v7625
          %v8986 = vunpack.c.h.b16 %v7625
          %v8987 = vunpack.c.l.b16 %v7626
          %v8988 = vunpack.c.h.b16 %v7626
          %v8989 = vunpack.c.l.b16 %v7627
          %v8990 = vunpack.c.h.b16 %v7627
          %v8991 = vunpack.c.l.b16 %v7628
          %v8992 = vunpack.c.h.b16 %v7628
          %v8993 = vunpack.c.l.b16 %v7629
          %v8994 = vunpack.c.h.b16 %v7629
          %v8995 = vunpack.c.l.b16 %v7630
          %v8996 = vunpack.c.h.b16 %v7630
          %v8997 = vunpack.c.l.b16 %v7631
          %v8998 = vunpack.c.h.b16 %v7631
          %v8999 = vunpack.c.l.b16 %v7632
          %v9000 = vunpack.c.h.b16 %v7632
          %v9001 = vunpack.c.l.b16 %v7633
          %v9002 = vunpack.c.h.b16 %v7633
          %v9003 = vunpack.c.l.b16 %v7634
          %v9004 = vunpack.c.h.b16 %v7634
          %v9005 = vunpack.c.l.b16 %v7635
          %v9006 = vunpack.c.h.b16 %v7635
          %v9007 = vunpack.c.l.b16 %v7636
          %v9008 = vunpack.c.h.b16 %v7636
          %v9009 = vunpack.c.l.b16 %v7637
          %v9010 = vunpack.c.h.b16 %v7637
          %v9011 = vunpack.c.l.b16 %v7638
          %v9012 = vunpack.c.h.b16 %v7638
          %v9013 = vunpack.c.l.b16 %v7639
          %v9014 = vunpack.c.h.b16 %v7639
          %v9015 = vunpack.c.l.b16 %v7640
          %v9016 = vunpack.c.h.b16 %v7640
          %v9017 = vunpack.c.l.b16 %v7641
          %v9018 = vunpack.c.h.b16 %v7641
          %v9019 = vunpack.c.l.b16 %v7642
          %v9020 = vunpack.c.h.b16 %v7642
          %v9021 = vunpack.c.l.b16 %v7643
          %v9022 = vunpack.c.h.b16 %v7643
          %v9023 = vunpack.c.l.b16 %v7644
          %v9024 = vunpack.c.h.b16 %v7644
          %v9025 = vunpack.c.l.b16 %v7645
          %v9026 = vunpack.c.h.b16 %v7645
          %v9027 = vunpack.c.l.b16 %v7646
          %v9028 = vunpack.c.h.b16 %v7646
          %v9029 = vunpack.c.l.b16 %v7647
          %v9030 = vunpack.c.h.b16 %v7647
          %v9031 = vunpack.c.l.b16 %v7648
          %v9032 = vunpack.c.h.b16 %v7648
          %v9033 = vunpack.c.l.b16 %v7649
          %v9034 = vunpack.c.h.b16 %v7649
          %v9035 = vunpack.c.l.b16 %v7650
          %v9036 = vunpack.c.h.b16 %v7650
          %v9037 = vunpack.c.l.b16 %v7651
          %v9038 = vunpack.c.h.b16 %v7651
          %v9039 = vunpack.c.l.b16 %v7652
          %v9040 = vunpack.c.h.b16 %v7652
          %v9041 = vunpack.c.l.b16 %v7653
          %v9042 = vunpack.c.h.b16 %v7653
          %v9043 = vunpack.c.l.b16 %v7654
          %v9044 = vunpack.c.h.b16 %v7654
          %v9045 = vunpack.c.l.b16 %v7655
          %v9046 = vunpack.c.h.b16 %v7655
          %v9047 = vunpack.c.l.b16 %v7656
          %v9048 = vunpack.c.h.b16 %v7656
          %v9049 = vunpack.c.l.b16 %v7657
          %v9050 = vunpack.c.h.b16 %v7657
          %v9051 = vunpack.c.l.b16 %v7658
          %v9052 = vunpack.c.h.b16 %v7658
          %v9053 = vunpack.c.l.b16 %v7659
          %v9054 = vunpack.c.h.b16 %v7659
          %v9055 = vunpack.c.l.b16 %v7660
          %v9056 = vunpack.c.h.b16 %v7660
          %v9057 = vunpack.c.l.b16 %v7661
          %v9058 = vunpack.c.h.b16 %v7661
          %v9059 = vunpack.c.l.b16 %v7662
          %v9060 = vunpack.c.h.b16 %v7662
          %v9061 = vunpack.c.l.b16 %v7663
          %v9062 = vunpack.c.h.b16 %v7663
          %v9063 = vunpack.c.l.b16 %v7664
          %v9064 = vunpack.c.h.b16 %v7664
          %v9065 = vunpack.c.l.b16 %v7665
          %v9066 = vunpack.c.h.b16 %v7665
          %v9067 = vunpack.c.l.b16 %v7666
          %v9068 = vunpack.c.h.b16 %v7666
          %v9069 = vunpack.c.l.b16 %v7667
          %v9070 = vunpack.c.h.b16 %v7667
          %v9071 = vunpack.c.l.b16 %v7668
          %v9072 = vunpack.c.h.b16 %v7668
          %v9073 = vunpack.c.l.b16 %v7669
          %v9074 = vunpack.c.h.b16 %v7669
          %v9075 = vunpack.c.l.b16 %v7670
          %v9076 = vunpack.c.h.b16 %v7670
          %v9077 = vunpack.c.l.b16 %v7671
          %v9078 = vunpack.c.h.b16 %v7671
          %v9079 = vunpack.c.l.b16 %v7672
          %v9080 = vunpack.c.h.b16 %v7672
          %v9081 = vunpack.c.l.b16 %v7673
          %v9082 = vunpack.c.h.b16 %v7673
          %v9083 = vunpack.c.l.b16 %v7674
          %v9084 = vunpack.c.h.b16 %v7674
          %v9085 = vunpack.c.l.b16 %v7675
          %v9086 = vunpack.c.h.b16 %v7675
          %v9087 = vunpack.c.l.b16 %v7676
          %v9088 = vunpack.c.h.b16 %v7676
          %v9089 = vunpack.c.l.b16 %v7677
          %v9090 = vunpack.c.h.b16 %v7677
          %v9091 = vunpack.c.l.b16 %v7678
          %v9092 = vunpack.c.h.b16 %v7678
          %v9093 = vunpack.c.l.b16 %v7679
          %v9094 = vunpack.c.h.b16 %v7679
          %v9095 = vunpack.c.l.b16 %v7680
          %v9096 = vunpack.c.h.b16 %v7680
          %v9097 = vunpack.c.l.b16 %v7681
          %v9098 = vunpack.c.h.b16 %v7681
          %v9099 = vunpack.c.l.b16 %v7682
          %v9100 = vunpack.c.h.b16 %v7682
          %v9101 = vunpack.c.l.b16 %v7683
          %v9102 = vunpack.c.h.b16 %v7683
          %v9103 = vunpack.c.l.b16 %v7684
          %v9104 = vunpack.c.h.b16 %v7684
          %v9105 = vunpack.c.l.b16 %v7685
          %v9106 = vunpack.c.h.b16 %v7685
          %v9107 = vunpack.c.l.b16 %v7686
          %v9108 = vunpack.c.h.b16 %v7686
          %v9109 = vunpack.c.l.b16 %v7687
          %v9110 = vunpack.c.h.b16 %v7687
          %v9111 = vunpack.c.l.b16 %v7688
          %v9112 = vunpack.c.h.b16 %v7688
          %v9113 = vunpack.c.l.b16 %v7689
          %v9114 = vunpack.c.h.b16 %v7689
          %v9115 = vunpack.c.l.b16 %v7690
          %v9116 = vunpack.c.h.b16 %v7690
          %v9117 = vunpack.c.l.b16 %v7691
          %v9118 = vunpack.c.h.b16 %v7691
          %v9119 = vunpack.c.l.b16 %v7692
          %v9120 = vunpack.c.h.b16 %v7692
          %v9121 = vunpack.c.l.b16 %v7693
          %v9122 = vunpack.c.h.b16 %v7693
          %v9123 = vunpack.c.l.b16 %v7694
          %v9124 = vunpack.c.h.b16 %v7694
          %v9125 = vunpack.c.l.b16 %v7695
          %v9126 = vunpack.c.h.b16 %v7695
          %v9127 = vunpack.c.l.b16 %v7696
          %v9128 = vunpack.c.h.b16 %v7696
          %v9129 = vunpack.c.l.b16 %v7697
          %v9130 = vunpack.c.h.b16 %v7697
          %v9131 = vunpack.c.l.b16 %v7698
          %v9132 = vunpack.c.h.b16 %v7698
          %v9133 = vunpack.c.l.b16 %v7699
          %v9134 = vunpack.c.h.b16 %v7699
          %v9135 = vunpack.c.l.b16 %v7700
          %v9136 = vunpack.c.h.b16 %v7700
          %v9137 = vunpack.c.l.b16 %v7701
          %v9138 = vunpack.c.h.b16 %v7701
          %v9139 = vunpack.c.l.b16 %v7702
          %v9140 = vunpack.c.h.b16 %v7702
          %v9141 = vunpack.c.l.b16 %v7703
          %v9142 = vunpack.c.h.b16 %v7703
          %v9143 = vunpack.c.l.b16 %v7704
          %v9144 = vunpack.c.h.b16 %v7704
          %v9145 = vunpack.c.l.b16 %v7705
          %v9146 = vunpack.c.h.b16 %v7705
          %v9147 = vunpack.c.l.b16 %v7706
          %v9148 = vunpack.c.h.b16 %v7706
          %v9149 = vunpack.c.l.b16 %v7707
          %v9150 = vunpack.c.h.b16 %v7707
          %v9151 = vunpack.c.l.b16 %v7708
          %v9152 = vunpack.c.h.b16 %v7708
          %v9153 = vunpack.c.l.b16 %v7709
          %v9154 = vunpack.c.h.b16 %v7709
          %v9155 = vunpack.c.l.b16 %v7710
          %v9156 = vunpack.c.h.b16 %v7710
          %v9157 = vunpack.c.l.b16 %v7711
          %v9158 = vunpack.c.h.b16 %v7711
          %v9159 = vunpack.c.l.b16 %v7712
          %v9160 = vunpack.c.h.b16 %v7712
          %v9161 = vunpack.c.l.b16 %v7713
          %v9162 = vunpack.c.h.b16 %v7713
          %v9163 = vunpack.c.l.b16 %v7714
          %v9164 = vunpack.c.h.b16 %v7714
          %v9165 = vunpack.c.l.b16 %v7715
          %v9166 = vunpack.c.h.b16 %v7715
          %v9167 = vunpack.c.l.b16 %v7716
          %v9168 = vunpack.c.h.b16 %v7716
          %v9169 = vunpack.c.l.b16 %v7717
          %v9170 = vunpack.c.h.b16 %v7717
          %v9171 = vunpack.c.l.b16 %v7718
          %v9172 = vunpack.c.h.b16 %v7718
          %v9173 = vunpack.c.l.b16 %v7719
          %v9174 = vunpack.c.h.b16 %v7719
          %v9175 = vunpack.c.l.b16 %v7720
          %v9176 = vunpack.c.h.b16 %v7720
          %v9177 = vunpack.c.l.b16 %v7721
          %v9178 = vunpack.c.h.b16 %v7721
          %v9179 = vunpack.c.l.b16 %v7722
          %v9180 = vunpack.c.h.b16 %v7722
          %v9181 = vunpack.c.l.b16 %v7723
          %v9182 = vunpack.c.h.b16 %v7723
          %v9183 = vunpack.c.l.b16 %v7724
          %v9184 = vunpack.c.h.b16 %v7724
          %v9185 = vunpack.c.l.b16 %v7725
          %v9186 = vunpack.c.h.b16 %v7725
          %v9187 = vunpack.c.l.b16 %v7726
          %v9188 = vunpack.c.h.b16 %v7726
          %v9189 = vunpack.c.l.b16 %v7727
          %v9190 = vunpack.c.h.b16 %v7727
          %v9191 = vunpack.c.l.b16 %v7728
          %v9192 = vunpack.c.h.b16 %v7728
          %v9193 = vunpack.c.l.b16 %v7729
          %v9194 = vunpack.c.h.b16 %v7729
          %v9195 = vunpack.c.l.b16 %v7730
          %v9196 = vunpack.c.h.b16 %v7730
          %v9197 = vunpack.c.l.b16 %v7731
          %v9198 = vunpack.c.h.b16 %v7731
          %v9199 = vunpack.c.l.b16 %v7732
          %v9200 = vunpack.c.h.b16 %v7732
          %v9201 = vunpack.c.l.b16 %v7733
          %v9202 = vunpack.c.h.b16 %v7733
          %v9203 = vunpack.c.l.b16 %v7734
          %v9204 = vunpack.c.h.b16 %v7734
          %v9205 = vunpack.c.l.b16 %v7735
          %v9206 = vunpack.c.h.b16 %v7735
          %v9207 = vunpack.c.l.b16 %v7736
          %v9208 = vunpack.c.h.b16 %v7736
          %v9209 = vunpack.c.l.b16 %v7737
          %v9210 = vunpack.c.h.b16 %v7737
          %v9211 = vunpack.c.l.b16 %v7738
          %v9212 = vunpack.c.h.b16 %v7738
          %v9213 = vunpack.c.l.b16 %v7739
          %v9214 = vunpack.c.h.b16 %v7739
          %v9215 = vunpack.c.l.b16 %v7740
          %v9216 = vunpack.c.h.b16 %v7740
          %v9217 = vunpack.c.l.b16 %v7741
          %v9218 = vunpack.c.h.b16 %v7741
          %v9219 = vunpack.c.l.b16 %v7742
          %v9220 = vunpack.c.h.b16 %v7742
          %v9221 = vunpack.c.l.b16 %v7743
          %v9222 = vunpack.c.h.b16 %v7743
          %v9223 = vunpack.c.l.b16 %v7744
          %v9224 = vunpack.c.h.b16 %v7744
          %v9225 = vunpack.c.l.b16 %v7745
          %v9226 = vunpack.c.h.b16 %v7745
          %v9227 = vunpack.c.l.b16 %v7746
          %v9228 = vunpack.c.h.b16 %v7746
          %v9229 = vunpack.c.l.b16 %v7747
          %v9230 = vunpack.c.h.b16 %v7747
          %v9231 = vunpack.c.l.b16 %v7748
          %v9232 = vunpack.c.h.b16 %v7748
          %v9233 = vunpack.c.l.b16 %v7749
          %v9234 = vunpack.c.h.b16 %v7749
          %v9235 = vunpack.c.l.b16 %v7750
          %v9236 = vunpack.c.h.b16 %v7750
          %v9237 = vunpack.c.l.b16 %v7751
          %v9238 = vunpack.c.h.b16 %v7751
          %v9239 = vunpack.c.l.b16 %v7752
          %v9240 = vunpack.c.h.b16 %v7752
          %v9241 = vunpack.c.l.b16 %v7753
          %v9242 = vunpack.c.h.b16 %v7753
          %v9243 = vunpack.c.l.b16 %v7754
          %v9244 = vunpack.c.h.b16 %v7754
          %v9245 = vunpack.c.l.b16 %v7755
          %v9246 = vunpack.c.h.b16 %v7755
          %v9247 = vunpack.c.l.b16 %v7756
          %v9248 = vunpack.c.h.b16 %v7756
          %v9249 = vunpack.c.l.b16 %v7757
          %v9250 = vunpack.c.h.b16 %v7757
          %v9251 = vunpack.c.l.b16 %v7758
          %v9252 = vunpack.c.h.b16 %v7758
          %v9253 = vunpack.c.l.b16 %v7759
          %v9254 = vunpack.c.h.b16 %v7759
          %v9255 = vunpack.c.l.b16 %v7760
          %v9256 = vunpack.c.h.b16 %v7760
          %v9257 = vunpack.c.l.b16 %v7761
          %v9258 = vunpack.c.h.b16 %v7761
          %v9259 = vunpack.c.l.b16 %v7762
          %v9260 = vunpack.c.h.b16 %v7762
          %v9261 = vunpack.c.l.b16 %v7763
          %v9262 = vunpack.c.h.b16 %v7763
          %v9263 = vunpack.c.l.b16 %v7764
          %v9264 = vunpack.c.h.b16 %v7764
          %v9265 = vunpack.c.l.b16 %v7765
          %v9266 = vunpack.c.h.b16 %v7765
          %v9267 = vunpack.c.l.b16 %v7766
          %v9268 = vunpack.c.h.b16 %v7766
          %v9269 = vunpack.c.l.b16 %v7767
          %v9270 = vunpack.c.h.b16 %v7767
          %v9271 = vunpack.c.l.b16 %v7768
          %v9272 = vunpack.c.h.b16 %v7768
          %v9273 = vunpack.c.l.b16 %v7769
          %v9274 = vunpack.c.h.b16 %v7769
          %v9275 = vunpack.c.l.b16 %v7770
          %v9276 = vunpack.c.h.b16 %v7770
          %v9277 = vunpack.c.l.b16 %v7771
          %v9278 = vunpack.c.h.b16 %v7771
          %v9279 = vunpack.c.l.b16 %v7772
          %v9280 = vunpack.c.h.b16 %v7772
          %v9281 = vunpack.c.l.b16 %v7773
          %v9282 = vunpack.c.h.b16 %v7773
          %v9283 = vunpack.c.l.b16 %v7774
          %v9284 = vunpack.c.h.b16 %v7774
          %v9285 = vunpack.c.l.b16 %v7775
          %v9286 = vunpack.c.h.b16 %v7775
          %v9287 = vunpack.c.l.b16 %v7776
          %v9288 = vunpack.c.h.b16 %v7776
          %v9289 = vunpack.c.l.b16 %v7777
          %v9290 = vunpack.c.h.b16 %v7777
          %v9291 = vunpack.c.l.b16 %v7778
          %v9292 = vunpack.c.h.b16 %v7778
          %v9293 = vunpack.c.l.b16 %v7779
          %v9294 = vunpack.c.h.b16 %v7779
          %v9295 = vunpack.c.l.b16 %v7780
          %v9296 = vunpack.c.h.b16 %v7780
          %v9297 = vunpack.c.l.b16 %v7781
          %v9298 = vunpack.c.h.b16 %v7781
          %v9299 = vunpack.c.l.b16 %v7782
          %v9300 = vunpack.c.h.b16 %v7782
          %v9301 = vunpack.c.l.b16 %v7783
          %v9302 = vunpack.c.h.b16 %v7783
          %v9303 = vunpack.c.l.b16 %v7784
          %v9304 = vunpack.c.h.b16 %v7784
          %v9305 = vunpack.c.l.b16 %v7785
          %v9306 = vunpack.c.h.b16 %v7785
          %v9307 = vunpack.c.l.b16 %v7786
          %v9308 = vunpack.c.h.b16 %v7786
          %v9309 = vunpack.c.l.b16 %v7787
          %v9310 = vunpack.c.h.b16 %v7787
          %v9311 = vunpack.c.l.b16 %v7788
          %v9312 = vunpack.c.h.b16 %v7788
          %v9313 = vunpack.c.l.b16 %v7789
          %v9314 = vunpack.c.h.b16 %v7789
          %v9315 = vunpack.c.l.b16 %v7790
          %v9316 = vunpack.c.h.b16 %v7790
          %v9317 = vunpack.c.l.b16 %v7791
          %v9318 = vunpack.c.h.b16 %v7791
          %v9319 = vunpack.c.l.b16 %v7792
          %v9320 = vunpack.c.h.b16 %v7792
          %v9321 = vunpack.c.l.b16 %v7793
          %v9322 = vunpack.c.h.b16 %v7793
          %v9323 = vunpack.c.l.b16 %v7794
          %v9324 = vunpack.c.h.b16 %v7794
          %v9325 = vunpack.c.l.b16 %v7795
          %v9326 = vunpack.c.h.b16 %v7795
          %v9327 = vunpack.c.l.b16 %v7796
          %v9328 = vunpack.c.h.b16 %v7796
          %v9329 = vunpack.c.l.b16 %v7797
          %v9330 = vunpack.c.h.b16 %v7797
          %v9331 = vunpack.c.l.b16 %v7798
          %v9332 = vunpack.c.h.b16 %v7798
          %v9333 = vunpack.c.l.b16 %v7799
          %v9334 = vunpack.c.h.b16 %v7799
          %v9335 = vunpack.c.l.b16 %v7800
          %v9336 = vunpack.c.h.b16 %v7800
          %v9337 = vunpack.c.l.b16 %v7801
          %v9338 = vunpack.c.h.b16 %v7801
          %v9339 = vunpack.c.l.b16 %v7802
          %v9340 = vunpack.c.h.b16 %v7802
          %v9341 = vunpack.c.l.b16 %v7803
          %v9342 = vunpack.c.h.b16 %v7803
          %v9343 = vunpack.c.l.b16 %v7804
          %v9344 = vunpack.c.h.b16 %v7804
          %v9345 = vpack.c.b16 %v8353, %v8321
          %v9346 = vpack.c.b16 %v8354, %v8322
          %v9347 = vpack.c.b16 %v8355, %v8323
          %v9348 = vpack.c.b16 %v8356, %v8324
          %v9349 = vpack.c.b16 %v8357, %v8325
          %v9350 = vpack.c.b16 %v8358, %v8326
          %v9351 = vpack.c.b16 %v8359, %v8327
          %v9352 = vpack.c.b16 %v8360, %v8328
          %v9353 = vpack.c.b16 %v8361, %v8329
          %v9354 = vpack.c.b16 %v8362, %v8330
          %v9355 = vpack.c.b16 %v8363, %v8331
          %v9356 = vpack.c.b16 %v8364, %v8332
          %v9357 = vpack.c.b16 %v8365, %v8333
          %v9358 = vpack.c.b16 %v8366, %v8334
          %v9359 = vpack.c.b16 %v8367, %v8335
          %v9360 = vpack.c.b16 %v8368, %v8336
          %v9361 = vpack.c.b16 %v8369, %v8337
          %v9362 = vpack.c.b16 %v8370, %v8338
          %v9363 = vpack.c.b16 %v8371, %v8339
          %v9364 = vpack.c.b16 %v8372, %v8340
          %v9365 = vpack.c.b16 %v8373, %v8341
          %v9366 = vpack.c.b16 %v8374, %v8342
          %v9367 = vpack.c.b16 %v8375, %v8343
          %v9368 = vpack.c.b16 %v8376, %v8344
          %v9369 = vpack.c.b16 %v8377, %v8345
          %v9370 = vpack.c.b16 %v8378, %v8346
          %v9371 = vpack.c.b16 %v8379, %v8347
          %v9372 = vpack.c.b16 %v8380, %v8348
          %v9373 = vpack.c.b16 %v8381, %v8349
          %v9374 = vpack.c.b16 %v8382, %v8350
          %v9375 = vpack.c.b16 %v8383, %v8351
          %v9376 = vpack.c.b16 %v8384, %v8352
          %v9377 = vpack.c.b16 %v8417, %v8385
          %v9378 = vpack.c.b16 %v8418, %v8386
          %v9379 = vpack.c.b16 %v8419, %v8387
          %v9380 = vpack.c.b16 %v8420, %v8388
          %v9381 = vpack.c.b16 %v8421, %v8389
          %v9382 = vpack.c.b16 %v8422, %v8390
          %v9383 = vpack.c.b16 %v8423, %v8391
          %v9384 = vpack.c.b16 %v8424, %v8392
          %v9385 = vpack.c.b16 %v8425, %v8393
          %v9386 = vpack.c.b16 %v8426, %v8394
          %v9387 = vpack.c.b16 %v8427, %v8395
          %v9388 = vpack.c.b16 %v8428, %v8396
          %v9389 = vpack.c.b16 %v8429, %v8397
          %v9390 = vpack.c.b16 %v8430, %v8398
          %v9391 = vpack.c.b16 %v8431, %v8399
          %v9392 = vpack.c.b16 %v8432, %v8400
          %v9393 = vpack.c.b16 %v8433, %v8401
          %v9394 = vpack.c.b16 %v8434, %v8402
          %v9395 = vpack.c.b16 %v8435, %v8403
          %v9396 = vpack.c.b16 %v8436, %v8404
          %v9397 = vpack.c.b16 %v8437, %v8405
          %v9398 = vpack.c.b16 %v8438, %v8406
          %v9399 = vpack.c.b16 %v8439, %v8407
          %v9400 = vpack.c.b16 %v8440, %v8408
          %v9401 = vpack.c.b16 %v8441, %v8409
          %v9402 = vpack.c.b16 %v8442, %v8410
          %v9403 = vpack.c.b16 %v8443, %v8411
          %v9404 = vpack.c.b16 %v8444, %v8412
          %v9405 = vpack.c.b16 %v8445, %v8413
          %v9406 = vpack.c.b16 %v8446, %v8414
          %v9407 = vpack.c.b16 %v8447, %v8415
          %v9408 = vpack.c.b16 %v8448, %v8416
          %v9409 = vpack.c.b16 %v8481, %v8449
          %v9410 = vpack.c.b16 %v8482, %v8450
          %v9411 = vpack.c.b16 %v8483, %v8451
          %v9412 = vpack.c.b16 %v8484, %v8452
          %v9413 = vpack.c.b16 %v8485, %v8453
          %v9414 = vpack.c.b16 %v8486, %v8454
          %v9415 = vpack.c.b16 %v8487, %v8455
          %v9416 = vpack.c.b16 %v8488, %v8456
          %v9417 = vpack.c.b16 %v8489, %v8457
          %v9418 = vpack.c.b16 %v8490, %v8458
          %v9419 = vpack.c.b16 %v8491, %v8459
          %v9420 = vpack.c.b16 %v8492, %v8460
          %v9421 = vpack.c.b16 %v8493, %v8461
          %v9422 = vpack.c.b16 %v8494, %v8462
          %v9423 = vpack.c.b16 %v8495, %v8463
          %v9424 = vpack.c.b16 %v8496, %v8464
          %v9425 = vpack.c.b16 %v8497, %v8465
          %v9426 = vpack.c.b16 %v8498, %v8466
          %v9427 = vpack.c.b16 %v8499, %v8467
          %v9428 = vpack.c.b16 %v8500, %v8468
          %v9429 = vpack.c.b16 %v8501, %v8469
          %v9430 = vpack.c.b16 %v8502, %v8470
          %v9431 = vpack.c.b16 %v8503, %v8471
          %v9432 = vpack.c.b16 %v8504, %v8472
          %v9433 = vpack.c.b16 %v8505, %v8473
          %v9434 = vpack.c.b16 %v8506, %v8474
          %v9435 = vpack.c.b16 %v8507, %v8475
          %v9436 = vpack.c.b16 %v8508, %v8476
          %v9437 = vpack.c.b16 %v8509, %v8477
          %v9438 = vpack.c.b16 %v8510, %v8478
          %v9439 = vpack.c.b16 %v8511, %v8479
          %v9440 = vpack.c.b16 %v8512, %v8480
          %v9441 = vpack.c.b16 %v8545, %v8513
          %v9442 = vpack.c.b16 %v8546, %v8514
          %v9443 = vpack.c.b16 %v8547, %v8515
          %v9444 = vpack.c.b16 %v8548, %v8516
          %v9445 = vpack.c.b16 %v8549, %v8517
          %v9446 = vpack.c.b16 %v8550, %v8518
          %v9447 = vpack.c.b16 %v8551, %v8519
          %v9448 = vpack.c.b16 %v8552, %v8520
          %v9449 = vpack.c.b16 %v8553, %v8521
          %v9450 = vpack.c.b16 %v8554, %v8522
          %v9451 = vpack.c.b16 %v8555, %v8523
          %v9452 = vpack.c.b16 %v8556, %v8524
          %v9453 = vpack.c.b16 %v8557, %v8525
          %v9454 = vpack.c.b16 %v8558, %v8526
          %v9455 = vpack.c.b16 %v8559, %v8527
          %v9456 = vpack.c.b16 %v8560, %v8528
          %v9457 = vpack.c.b16 %v8561, %v8529
          %v9458 = vpack.c.b16 %v8562, %v8530
          %v9459 = vpack.c.b16 %v8563, %v8531
          %v9460 = vpack.c.b16 %v8564, %v8532
          %v9461 = vpack.c.b16 %v8565, %v8533
          %v9462 = vpack.c.b16 %v8566, %v8534
          %v9463 = vpack.c.b16 %v8567, %v8535
          %v9464 = vpack.c.b16 %v8568, %v8536
          %v9465 = vpack.c.b16 %v8569, %v8537
          %v9466 = vpack.c.b16 %v8570, %v8538
          %v9467 = vpack.c.b16 %v8571, %v8539
          %v9468 = vpack.c.b16 %v8572, %v8540
          %v9469 = vpack.c.b16 %v8573, %v8541
          %v9470 = vpack.c.b16 %v8574, %v8542
          %v9471 = vpack.c.b16 %v8575, %v8543
          %v9472 = vpack.c.b16 %v8576, %v8544
          %v9473 = vpack.c.b16 %v8609, %v8577
          %v9474 = vpack.c.b16 %v8610, %v8578
          %v9475 = vpack.c.b16 %v8611, %v8579
          %v9476 = vpack.c.b16 %v8612, %v8580
          %v9477 = vpack.c.b16 %v8613, %v8581
          %v9478 = vpack.c.b16 %v8614, %v8582
          %v9479 = vpack.c.b16 %v8615, %v8583
          %v9480 = vpack.c.b16 %v8616, %v8584
          %v9481 = vpack.c.b16 %v8617, %v8585
          %v9482 = vpack.c.b16 %v8618, %v8586
          %v9483 = vpack.c.b16 %v8619, %v8587
          %v9484 = vpack.c.b16 %v8620, %v8588
          %v9485 = vpack.c.b16 %v8621, %v8589
          %v9486 = vpack.c.b16 %v8622, %v8590
          %v9487 = vpack.c.b16 %v8623, %v8591
          %v9488 = vpack.c.b16 %v8624, %v8592
          %v9489 = vpack.c.b16 %v8625, %v8593
          %v9490 = vpack.c.b16 %v8626, %v8594
          %v9491 = vpack.c.b16 %v8627, %v8595
          %v9492 = vpack.c.b16 %v8628, %v8596
          %v9493 = vpack.c.b16 %v8629, %v8597
          %v9494 = vpack.c.b16 %v8630, %v8598
          %v9495 = vpack.c.b16 %v8631, %v8599
          %v9496 = vpack.c.b16 %v8632, %v8600
          %v9497 = vpack.c.b16 %v8633, %v8601
          %v9498 = vpack.c.b16 %v8634, %v8602
          %v9499 = vpack.c.b16 %v8635, %v8603
          %v9500 = vpack.c.b16 %v8636, %v8604
          %v9501 = vpack.c.b16 %v8637, %v8605
          %v9502 = vpack.c.b16 %v8638, %v8606
          %v9503 = vpack.c.b16 %v8639, %v8607
          %v9504 = vpack.c.b16 %v8640, %v8608
          %v9505 = vpack.c.b16 %v8673, %v8641
          %v9506 = vpack.c.b16 %v8674, %v8642
          %v9507 = vpack.c.b16 %v8675, %v8643
          %v9508 = vpack.c.b16 %v8676, %v8644
          %v9509 = vpack.c.b16 %v8677, %v8645
          %v9510 = vpack.c.b16 %v8678, %v8646
          %v9511 = vpack.c.b16 %v8679, %v8647
          %v9512 = vpack.c.b16 %v8680, %v8648
          %v9513 = vpack.c.b16 %v8681, %v8649
          %v9514 = vpack.c.b16 %v8682, %v8650
          %v9515 = vpack.c.b16 %v8683, %v8651
          %v9516 = vpack.c.b16 %v8684, %v8652
          %v9517 = vpack.c.b16 %v8685, %v8653
          %v9518 = vpack.c.b16 %v8686, %v8654
          %v9519 = vpack.c.b16 %v8687, %v8655
          %v9520 = vpack.c.b16 %v8688, %v8656
          %v9521 = vpack.c.b16 %v8689, %v8657
          %v9522 = vpack.c.b16 %v8690, %v8658
          %v9523 = vpack.c.b16 %v8691, %v8659
          %v9524 = vpack.c.b16 %v8692, %v8660
          %v9525 = vpack.c.b16 %v8693, %v8661
          %v9526 = vpack.c.b16 %v8694, %v8662
          %v9527 = vpack.c.b16 %v8695, %v8663
          %v9528 = vpack.c.b16 %v8696, %v8664
          %v9529 = vpack.c.b16 %v8697, %v8665
          %v9530 = vpack.c.b16 %v8698, %v8666
          %v9531 = vpack.c.b16 %v8699, %v8667
          %v9532 = vpack.c.b16 %v8700, %v8668
          %v9533 = vpack.c.b16 %v8701, %v8669
          %v9534 = vpack.c.b16 %v8702, %v8670
          %v9535 = vpack.c.b16 %v8703, %v8671
          %v9536 = vpack.c.b16 %v8704, %v8672
          %v9537 = vpack.c.b16 %v8737, %v8705
          %v9538 = vpack.c.b16 %v8738, %v8706
          %v9539 = vpack.c.b16 %v8739, %v8707
          %v9540 = vpack.c.b16 %v8740, %v8708
          %v9541 = vpack.c.b16 %v8741, %v8709
          %v9542 = vpack.c.b16 %v8742, %v8710
          %v9543 = vpack.c.b16 %v8743, %v8711
          %v9544 = vpack.c.b16 %v8744, %v8712
          %v9545 = vpack.c.b16 %v8745, %v8713
          %v9546 = vpack.c.b16 %v8746, %v8714
          %v9547 = vpack.c.b16 %v8747, %v8715
          %v9548 = vpack.c.b16 %v8748, %v8716
          %v9549 = vpack.c.b16 %v8749, %v8717
          %v9550 = vpack.c.b16 %v8750, %v8718
          %v9551 = vpack.c.b16 %v8751, %v8719
          %v9552 = vpack.c.b16 %v8752, %v8720
          %v9553 = vpack.c.b16 %v8753, %v8721
          %v9554 = vpack.c.b16 %v8754, %v8722
          %v9555 = vpack.c.b16 %v8755, %v8723
          %v9556 = vpack.c.b16 %v8756, %v8724
          %v9557 = vpack.c.b16 %v8757, %v8725
          %v9558 = vpack.c.b16 %v8758, %v8726
          %v9559 = vpack.c.b16 %v8759, %v8727
          %v9560 = vpack.c.b16 %v8760, %v8728
          %v9561 = vpack.c.b16 %v8761, %v8729
          %v9562 = vpack.c.b16 %v8762, %v8730
          %v9563 = vpack.c.b16 %v8763, %v8731
          %v9564 = vpack.c.b16 %v8764, %v8732
          %v9565 = vpack.c.b16 %v8765, %v8733
          %v9566 = vpack.c.b16 %v8766, %v8734
          %v9567 = vpack.c.b16 %v8767, %v8735
          %v9568 = vpack.c.b16 %v8768, %v8736
          %v9569 = vpack.c.b16 %v8801, %v8769
          %v9570 = vpack.c.b16 %v8802, %v8770
          %v9571 = vpack.c.b16 %v8803, %v8771
          %v9572 = vpack.c.b16 %v8804, %v8772
          %v9573 = vpack.c.b16 %v8805, %v8773
          %v9574 = vpack.c.b16 %v8806, %v8774
          %v9575 = vpack.c.b16 %v8807, %v8775
          %v9576 = vpack.c.b16 %v8808, %v8776
          %v9577 = vpack.c.b16 %v8809, %v8777
          %v9578 = vpack.c.b16 %v8810, %v8778
          %v9579 = vpack.c.b16 %v8811, %v8779
          %v9580 = vpack.c.b16 %v8812, %v8780
          %v9581 = vpack.c.b16 %v8813, %v8781
          %v9582 = vpack.c.b16 %v8814, %v8782
          %v9583 = vpack.c.b16 %v8815, %v8783
          %v9584 = vpack.c.b16 %v8816, %v8784
          %v9585 = vpack.c.b16 %v8817, %v8785
          %v9586 = vpack.c.b16 %v8818, %v8786
          %v9587 = vpack.c.b16 %v8819, %v8787
          %v9588 = vpack.c.b16 %v8820, %v8788
          %v9589 = vpack.c.b16 %v8821, %v8789
          %v9590 = vpack.c.b16 %v8822, %v8790
          %v9591 = vpack.c.b16 %v8823, %v8791
          %v9592 = vpack.c.b16 %v8824, %v8792
          %v9593 = vpack.c.b16 %v8825, %v8793
          %v9594 = vpack.c.b16 %v8826, %v8794
          %v9595 = vpack.c.b16 %v8827, %v8795
          %v9596 = vpack.c.b16 %v8828, %v8796
          %v9597 = vpack.c.b16 %v8829, %v8797
          %v9598 = vpack.c.b16 %v8830, %v8798
          %v9599 = vpack.c.b16 %v8831, %v8799
          %v9600 = vpack.c.b16 %v8832, %v8800
          %v9601 = vpack.c.b16 %v8865, %v8833
          %v9602 = vpack.c.b16 %v8866, %v8834
          %v9603 = vpack.c.b16 %v8867, %v8835
          %v9604 = vpack.c.b16 %v8868, %v8836
          %v9605 = vpack.c.b16 %v8869, %v8837
          %v9606 = vpack.c.b16 %v8870, %v8838
          %v9607 = vpack.c.b16 %v8871, %v8839
          %v9608 = vpack.c.b16 %v8872, %v8840
          %v9609 = vpack.c.b16 %v8873, %v8841
          %v9610 = vpack.c.b16 %v8874, %v8842
          %v9611 = vpack.c.b16 %v8875, %v8843
          %v9612 = vpack.c.b16 %v8876, %v8844
          %v9613 = vpack.c.b16 %v8877, %v8845
          %v9614 = vpack.c.b16 %v8878, %v8846
          %v9615 = vpack.c.b16 %v8879, %v8847
          %v9616 = vpack.c.b16 %v8880, %v8848
          %v9617 = vpack.c.b16 %v8881, %v8849
          %v9618 = vpack.c.b16 %v8882, %v8850
          %v9619 = vpack.c.b16 %v8883, %v8851
          %v9620 = vpack.c.b16 %v8884, %v8852
          %v9621 = vpack.c.b16 %v8885, %v8853
          %v9622 = vpack.c.b16 %v8886, %v8854
          %v9623 = vpack.c.b16 %v8887, %v8855
          %v9624 = vpack.c.b16 %v8888, %v8856
          %v9625 = vpack.c.b16 %v8889, %v8857
          %v9626 = vpack.c.b16 %v8890, %v8858
          %v9627 = vpack.c.b16 %v8891, %v8859
          %v9628 = vpack.c.b16 %v8892, %v8860
          %v9629 = vpack.c.b16 %v8893, %v8861
          %v9630 = vpack.c.b16 %v8894, %v8862
          %v9631 = vpack.c.b16 %v8895, %v8863
          %v9632 = vpack.c.b16 %v8896, %v8864
          %v9633 = vpack.c.b16 %v8929, %v8897
          %v9634 = vpack.c.b16 %v8930, %v8898
          %v9635 = vpack.c.b16 %v8931, %v8899
          %v9636 = vpack.c.b16 %v8932, %v8900
          %v9637 = vpack.c.b16 %v8933, %v8901
          %v9638 = vpack.c.b16 %v8934, %v8902
          %v9639 = vpack.c.b16 %v8935, %v8903
          %v9640 = vpack.c.b16 %v8936, %v8904
          %v9641 = vpack.c.b16 %v8937, %v8905
          %v9642 = vpack.c.b16 %v8938, %v8906
          %v9643 = vpack.c.b16 %v8939, %v8907
          %v9644 = vpack.c.b16 %v8940, %v8908
          %v9645 = vpack.c.b16 %v8941, %v8909
          %v9646 = vpack.c.b16 %v8942, %v8910
          %v9647 = vpack.c.b16 %v8943, %v8911
          %v9648 = vpack.c.b16 %v8944, %v8912
          %v9649 = vpack.c.b16 %v8945, %v8913
          %v9650 = vpack.c.b16 %v8946, %v8914
          %v9651 = vpack.c.b16 %v8947, %v8915
          %v9652 = vpack.c.b16 %v8948, %v8916
          %v9653 = vpack.c.b16 %v8949, %v8917
          %v9654 = vpack.c.b16 %v8950, %v8918
          %v9655 = vpack.c.b16 %v8951, %v8919
          %v9656 = vpack.c.b16 %v8952, %v8920
          %v9657 = vpack.c.b16 %v8953, %v8921
          %v9658 = vpack.c.b16 %v8954, %v8922
          %v9659 = vpack.c.b16 %v8955, %v8923
          %v9660 = vpack.c.b16 %v8956, %v8924
          %v9661 = vpack.c.b16 %v8957, %v8925
          %v9662 = vpack.c.b16 %v8958, %v8926
          %v9663 = vpack.c.b16 %v8959, %v8927
          %v9664 = vpack.c.b16 %v8960, %v8928
          %v9665 = vpack.c.b16 %v8993, %v8961
          %v9666 = vpack.c.b16 %v8994, %v8962
          %v9667 = vpack.c.b16 %v8995, %v8963
          %v9668 = vpack.c.b16 %v8996, %v8964
          %v9669 = vpack.c.b16 %v8997, %v8965
          %v9670 = vpack.c.b16 %v8998, %v8966
          %v9671 = vpack.c.b16 %v8999, %v8967
          %v9672 = vpack.c.b16 %v9000, %v8968
          %v9673 = vpack.c.b16 %v9001, %v8969
          %v9674 = vpack.c.b16 %v9002, %v8970
          %v9675 = vpack.c.b16 %v9003, %v8971
          %v9676 = vpack.c.b16 %v9004, %v8972
          %v9677 = vpack.c.b16 %v9005, %v8973
          %v9678 = vpack.c.b16 %v9006, %v8974
          %v9679 = vpack.c.b16 %v9007, %v8975
          %v9680 = vpack.c.b16 %v9008, %v8976
          %v9681 = vpack.c.b16 %v9009, %v8977
          %v9682 = vpack.c.b16 %v9010, %v8978
          %v9683 = vpack.c.b16 %v9011, %v8979
          %v9684 = vpack.c.b16 %v9012, %v8980
          %v9685 = vpack.c.b16 %v9013, %v8981
          %v9686 = vpack.c.b16 %v9014, %v8982
          %v9687 = vpack.c.b16 %v9015, %v8983
          %v9688 = vpack.c.b16 %v9016, %v8984
          %v9689 = vpack.c.b16 %v9017, %v8985
          %v9690 = vpack.c.b16 %v9018, %v8986
          %v9691 = vpack.c.b16 %v9019, %v8987
          %v9692 = vpack.c.b16 %v9020, %v8988
          %v9693 = vpack.c.b16 %v9021, %v8989
          %v9694 = vpack.c.b16 %v9022, %v8990
          %v9695 = vpack.c.b16 %v9023, %v8991
          %v9696 = vpack.c.b16 %v9024, %v8992
          %v9697 = vpack.c.b16 %v9057, %v9025
          %v9698 = vpack.c.b16 %v9058, %v9026
          %v9699 = vpack.c.b16 %v9059, %v9027
          %v9700 = vpack.c.b16 %v9060, %v9028
          %v9701 = vpack.c.b16 %v9061, %v9029
          %v9702 = vpack.c.b16 %v9062, %v9030
          %v9703 = vpack.c.b16 %v9063, %v9031
          %v9704 = vpack.c.b16 %v9064, %v9032
          %v9705 = vpack.c.b16 %v9065, %v9033
          %v9706 = vpack.c.b16 %v9066, %v9034
          %v9707 = vpack.c.b16 %v9067, %v9035
          %v9708 = vpack.c.b16 %v9068, %v9036
          %v9709 = vpack.c.b16 %v9069, %v9037
          %v9710 = vpack.c.b16 %v9070, %v9038
          %v9711 = vpack.c.b16 %v9071, %v9039
          %v9712 = vpack.c.b16 %v9072, %v9040
          %v9713 = vpack.c.b16 %v9073, %v9041
          %v9714 = vpack.c.b16 %v9074, %v9042
          %v9715 = vpack.c.b16 %v9075, %v9043
          %v9716 = vpack.c.b16 %v9076, %v9044
          %v9717 = vpack.c.b16 %v9077, %v9045
          %v9718 = vpack.c.b16 %v9078, %v9046
          %v9719 = vpack.c.b16 %v9079, %v9047
          %v9720 = vpack.c.b16 %v9080, %v9048
          %v9721 = vpack.c.b16 %v9081, %v9049
          %v9722 = vpack.c.b16 %v9082, %v9050
          %v9723 = vpack.c.b16 %v9083, %v9051
          %v9724 = vpack.c.b16 %v9084, %v9052
          %v9725 = vpack.c.b16 %v9085, %v9053
          %v9726 = vpack.c.b16 %v9086, %v9054
          %v9727 = vpack.c.b16 %v9087, %v9055
          %v9728 = vpack.c.b16 %v9088, %v9056
          %v9729 = vpack.c.b16 %v9121, %v9089
          %v9730 = vpack.c.b16 %v9122, %v9090
          %v9731 = vpack.c.b16 %v9123, %v9091
          %v9732 = vpack.c.b16 %v9124, %v9092
          %v9733 = vpack.c.b16 %v9125, %v9093
          %v9734 = vpack.c.b16 %v9126, %v9094
          %v9735 = vpack.c.b16 %v9127, %v9095
          %v9736 = vpack.c.b16 %v9128, %v9096
          %v9737 = vpack.c.b16 %v9129, %v9097
          %v9738 = vpack.c.b16 %v9130, %v9098
          %v9739 = vpack.c.b16 %v9131, %v9099
          %v9740 = vpack.c.b16 %v9132, %v9100
          %v9741 = vpack.c.b16 %v9133, %v9101
          %v9742 = vpack.c.b16 %v9134, %v9102
          %v9743 = vpack.c.b16 %v9135, %v9103
          %v9744 = vpack.c.b16 %v9136, %v9104
          %v9745 = vpack.c.b16 %v9137, %v9105
          %v9746 = vpack.c.b16 %v9138, %v9106
          %v9747 = vpack.c.b16 %v9139, %v9107
          %v9748 = vpack.c.b16 %v9140, %v9108
          %v9749 = vpack.c.b16 %v9141, %v9109
          %v9750 = vpack.c.b16 %v9142, %v9110
          %v9751 = vpack.c.b16 %v9143, %v9111
          %v9752 = vpack.c.b16 %v9144, %v9112
          %v9753 = vpack.c.b16 %v9145, %v9113
          %v9754 = vpack.c.b16 %v9146, %v9114
          %v9755 = vpack.c.b16 %v9147, %v9115
          %v9756 = vpack.c.b16 %v9148, %v9116
          %v9757 = vpack.c.b16 %v9149, %v9117
          %v9758 = vpack.c.b16 %v9150, %v9118
          %v9759 = vpack.c.b16 %v9151, %v9119
          %v9760 = vpack.c.b16 %v9152, %v9120
          %v9761 = vpack.c.b16 %v9185, %v9153
          %v9762 = vpack.c.b16 %v9186, %v9154
          %v9763 = vpack.c.b16 %v9187, %v9155
          %v9764 = vpack.c.b16 %v9188, %v9156
          %v9765 = vpack.c.b16 %v9189, %v9157
          %v9766 = vpack.c.b16 %v9190, %v9158
          %v9767 = vpack.c.b16 %v9191, %v9159
          %v9768 = vpack.c.b16 %v9192, %v9160
          %v9769 = vpack.c.b16 %v9193, %v9161
          %v9770 = vpack.c.b16 %v9194, %v9162
          %v9771 = vpack.c.b16 %v9195, %v9163
          %v9772 = vpack.c.b16 %v9196, %v9164
          %v9773 = vpack.c.b16 %v9197, %v9165
          %v9774 = vpack.c.b16 %v9198, %v9166
          %v9775 = vpack.c.b16 %v9199, %v9167
          %v9776 = vpack.c.b16 %v9200, %v9168
          %v9777 = vpack.c.b16 %v9201, %v9169
          %v9778 = vpack.c.b16 %v9202, %v9170
          %v9779 = vpack.c.b16 %v9203, %v9171
          %v9780 = vpack.c.b16 %v9204, %v9172
          %v9781 = vpack.c.b16 %v9205, %v9173
          %v9782 = vpack.c.b16 %v9206, %v9174
          %v9783 = vpack.c.b16 %v9207, %v9175
          %v9784 = vpack.c.b16 %v9208, %v9176
          %v9785 = vpack.c.b16 %v9209, %v9177
          %v9786 = vpack.c.b16 %v9210, %v9178
          %v9787 = vpack.c.b16 %v9211, %v9179
          %v9788 = vpack.c.b16 %v9212, %v9180
          %v9789 = vpack.c.b16 %v9213, %v9181
          %v9790 = vpack.c.b16 %v9214, %v9182
          %v9791 = vpack.c.b16 %v9215, %v9183
          %v9792 = vpack.c.b16 %v9216, %v9184
          %v9793 = vpack.c.b16 %v9249, %v9217
          %v9794 = vpack.c.b16 %v9250, %v9218
          %v9795 = vpack.c.b16 %v9251, %v9219
          %v9796 = vpack.c.b16 %v9252, %v9220
          %v9797 = vpack.c.b16 %v9253, %v9221
          %v9798 = vpack.c.b16 %v9254, %v9222
          %v9799 = vpack.c.b16 %v9255, %v9223
          %v9800 = vpack.c.b16 %v9256, %v9224
          %v9801 = vpack.c.b16 %v9257, %v9225
          %v9802 = vpack.c.b16 %v9258, %v9226
          %v9803 = vpack.c.b16 %v9259, %v9227
          %v9804 = vpack.c.b16 %v9260, %v9228
          %v9805 = vpack.c.b16 %v9261, %v9229
          %v9806 = vpack.c.b16 %v9262, %v9230
          %v9807 = vpack.c.b16 %v9263, %v9231
          %v9808 = vpack.c.b16 %v9264, %v9232
          %v9809 = vpack.c.b16 %v9265, %v9233
          %v9810 = vpack.c.b16 %v9266, %v9234
          %v9811 = vpack.c.b16 %v9267, %v9235
          %v9812 = vpack.c.b16 %v9268, %v9236
          %v9813 = vpack.c.b16 %v9269, %v9237
          %v9814 = vpack.c.b16 %v9270, %v9238
          %v9815 = vpack.c.b16 %v9271, %v9239
          %v9816 = vpack.c.b16 %v9272, %v9240
          %v9817 = vpack.c.b16 %v9273, %v9241
          %v9818 = vpack.c.b16 %v9274, %v9242
          %v9819 = vpack.c.b16 %v9275, %v9243
          %v9820 = vpack.c.b16 %v9276, %v9244
          %v9821 = vpack.c.b16 %v9277, %v9245
          %v9822 = vpack.c.b16 %v9278, %v9246
          %v9823 = vpack.c.b16 %v9279, %v9247
          %v9824 = vpack.c.b16 %v9280, %v9248
          %v9825 = vpack.c.b16 %v9313, %v9281
          %v9826 = vpack.c.b16 %v9314, %v9282
          %v9827 = vpack.c.b16 %v9315, %v9283
          %v9828 = vpack.c.b16 %v9316, %v9284
          %v9829 = vpack.c.b16 %v9317, %v9285
          %v9830 = vpack.c.b16 %v9318, %v9286
          %v9831 = vpack.c.b16 %v9319, %v9287
          %v9832 = vpack.c.b16 %v9320, %v9288
          %v9833 = vpack.c.b16 %v9321, %v9289
          %v9834 = vpack.c.b16 %v9322, %v9290
          %v9835 = vpack.c.b16 %v9323, %v9291
          %v9836 = vpack.c.b16 %v9324, %v9292
          %v9837 = vpack.c.b16 %v9325, %v9293
          %v9838 = vpack.c.b16 %v9326, %v9294
          %v9839 = vpack.c.b16 %v9327, %v9295
          %v9840 = vpack.c.b16 %v9328, %v9296
          %v9841 = vpack.c.b16 %v9329, %v9297
          %v9842 = vpack.c.b16 %v9330, %v9298
          %v9843 = vpack.c.b16 %v9331, %v9299
          %v9844 = vpack.c.b16 %v9332, %v9300
          %v9845 = vpack.c.b16 %v9333, %v9301
          %v9846 = vpack.c.b16 %v9334, %v9302
          %v9847 = vpack.c.b16 %v9335, %v9303
          %v9848 = vpack.c.b16 %v9336, %v9304
          %v9849 = vpack.c.b16 %v9337, %v9305
          %v9850 = vpack.c.b16 %v9338, %v9306
          %v9851 = vpack.c.b16 %v9339, %v9307
          %v9852 = vpack.c.b16 %v9340, %v9308
          %v9853 = vpack.c.b16 %v9341, %v9309
          %v9854 = vpack.c.b16 %v9342, %v9310
          %v9855 = vpack.c.b16 %v9343, %v9311
          %v9856 = vpack.c.b16 %v9344, %v9312
          %v10373 = vlaneseq
          %v10374 = vshrl.u32 %v10373, 7
          %v10375 = vsub.s32 0, %v10374
          %v10376 = vrot.slane %v7805, %v10375
          %v10377 = vlaneseq
          %v10378 = vshrl.u32 %v10377, 7
          %v10379 = vsub.s32 1, %v10378
          %v10380 = vrot.slane %v7805, %v10379
          %v10381 = vlaneseq
          %v10382 = vshrl.u32 %v10381, 7
          %v10383 = vsub.s32 2, %v10382
          %v10384 = vrot.slane %v7805, %v10383
          %v10385 = vlaneseq
          %v10386 = vshrl.u32 %v10385, 7
          %v10387 = vsub.s32 3, %v10386
          %v10388 = vrot.slane %v7805, %v10387
          %v10389 = vlaneseq
          %v10390 = vshrl.u32 %v10389, 7
          %v10391 = vsub.s32 4, %v10390
          %v10392 = vrot.slane %v7805, %v10391
          %v10393 = vlaneseq
          %v10394 = vshrl.u32 %v10393, 7
          %v10395 = vsub.s32 5, %v10394
          %v10396 = vrot.slane %v7805, %v10395
          %v10397 = vlaneseq
          %v10398 = vshrl.u32 %v10397, 7
          %v10399 = vsub.s32 6, %v10398
          %v10400 = vrot.slane %v7805, %v10399
          %v10401 = vlaneseq
          %v10402 = vshrl.u32 %v10401, 7
          %v10403 = vsub.s32 7, %v10402
          %v10404 = vrot.slane %v7805, %v10403
          %v10405 = vlaneseq
          %v10406 = vshrl.u32 %v10405, 7
          %v10407 = vsub.s32 0, %v10406
          %v10408 = vrot.slane %v7806, %v10407
          %v10409 = vlaneseq
          %v10410 = vshrl.u32 %v10409, 7
          %v10411 = vsub.s32 1, %v10410
          %v10412 = vrot.slane %v7806, %v10411
          %v10413 = vlaneseq
          %v10414 = vshrl.u32 %v10413, 7
          %v10415 = vsub.s32 2, %v10414
          %v10416 = vrot.slane %v7806, %v10415
          %v10417 = vlaneseq
          %v10418 = vshrl.u32 %v10417, 7
          %v10419 = vsub.s32 3, %v10418
          %v10420 = vrot.slane %v7806, %v10419
          %v10421 = vlaneseq
          %v10422 = vshrl.u32 %v10421, 7
          %v10423 = vsub.s32 4, %v10422
          %v10424 = vrot.slane %v7806, %v10423
          %v10425 = vlaneseq
          %v10426 = vshrl.u32 %v10425, 7
          %v10427 = vsub.s32 5, %v10426
          %v10428 = vrot.slane %v7806, %v10427
          %v10429 = vlaneseq
          %v10430 = vshrl.u32 %v10429, 7
          %v10431 = vsub.s32 6, %v10430
          %v10432 = vrot.slane %v7806, %v10431
          %v10433 = vlaneseq
          %v10434 = vshrl.u32 %v10433, 7
          %v10435 = vsub.s32 7, %v10434
          %v10436 = vrot.slane %v7806, %v10435
          %v10437 = vlaneseq
          %v10438 = vshrl.u32 %v10437, 7
          %v10439 = vsub.s32 0, %v10438
          %v10440 = vrot.slane %v7807, %v10439
          %v10441 = vlaneseq
          %v10442 = vshrl.u32 %v10441, 7
          %v10443 = vsub.s32 1, %v10442
          %v10444 = vrot.slane %v7807, %v10443
          %v10445 = vlaneseq
          %v10446 = vshrl.u32 %v10445, 7
          %v10447 = vsub.s32 2, %v10446
          %v10448 = vrot.slane %v7807, %v10447
          %v10449 = vlaneseq
          %v10450 = vshrl.u32 %v10449, 7
          %v10451 = vsub.s32 3, %v10450
          %v10452 = vrot.slane %v7807, %v10451
          %v10453 = vlaneseq
          %v10454 = vshrl.u32 %v10453, 7
          %v10455 = vsub.s32 4, %v10454
          %v10456 = vrot.slane %v7807, %v10455
          %v10457 = vlaneseq
          %v10458 = vshrl.u32 %v10457, 7
          %v10459 = vsub.s32 5, %v10458
          %v10460 = vrot.slane %v7807, %v10459
          %v10461 = vlaneseq
          %v10462 = vshrl.u32 %v10461, 7
          %v10463 = vsub.s32 6, %v10462
          %v10464 = vrot.slane %v7807, %v10463
          %v10465 = vlaneseq
          %v10466 = vshrl.u32 %v10465, 7
          %v10467 = vsub.s32 7, %v10466
          %v10468 = vrot.slane %v7807, %v10467
          %v10469 = vlaneseq
          %v10470 = vshrl.u32 %v10469, 7
          %v10471 = vsub.s32 0, %v10470
          %v10472 = vrot.slane %v7808, %v10471
          %v10473 = vlaneseq
          %v10474 = vshrl.u32 %v10473, 7
          %v10475 = vsub.s32 1, %v10474
          %v10476 = vrot.slane %v7808, %v10475
          %v10477 = vlaneseq
          %v10478 = vshrl.u32 %v10477, 7
          %v10479 = vsub.s32 2, %v10478
          %v10480 = vrot.slane %v7808, %v10479
          %v10481 = vlaneseq
          %v10482 = vshrl.u32 %v10481, 7
          %v10483 = vsub.s32 3, %v10482
          %v10484 = vrot.slane %v7808, %v10483
          %v10485 = vlaneseq
          %v10486 = vshrl.u32 %v10485, 7
          %v10487 = vsub.s32 4, %v10486
          %v10488 = vrot.slane %v7808, %v10487
          %v10489 = vlaneseq
          %v10490 = vshrl.u32 %v10489, 7
          %v10491 = vsub.s32 5, %v10490
          %v10492 = vrot.slane %v7808, %v10491
          %v10493 = vlaneseq
          %v10494 = vshrl.u32 %v10493, 7
          %v10495 = vsub.s32 6, %v10494
          %v10496 = vrot.slane %v7808, %v10495
          %v10497 = vlaneseq
          %v10498 = vshrl.u32 %v10497, 7
          %v10499 = vsub.s32 7, %v10498
          %v10500 = vrot.slane %v7808, %v10499
          %10533 = vmatprep.subr.bf16.mxu0 %v9346
          %10534 = vmatpush1.bf16.msra.mxu0 %v9345
          %10535 = vmatprep.subr.bf16.mxu0 %v9378
          %10536 = vmatpush1.bf16.msra.mxu0 %v9377
          %10537 = vmatprep.subr.bf16.mxu0 %v9410
          %10538 = vmatpush1.bf16.msra.mxu0 %v9409
          %10539 = vmatprep.subr.bf16.mxu0 %v9442
          %10540 = vmatpush1.bf16.msra.mxu0 %v9441
          %10541 = vmatprep.subr.bf16.mxu0 %v9474
          %10542 = vmatpush1.bf16.msra.mxu0 %v9473
          %10543 = vmatprep.subr.bf16.mxu0 %v9506
          %10544 = vmatpush1.bf16.msra.mxu0 %v9505
          %10545 = vmatprep.subr.bf16.mxu0 %v9538
          %10546 = vmatpush1.bf16.msra.mxu0 %v9537
          %10547 = vmatprep.subr.bf16.mxu0 %v9570
          %10548 = vmatpush1.bf16.msra.mxu0 %v9569
          %10549 = vmatprep.subr.bf16.mxu0 %v9602
          %10550 = vmatpush1.bf16.msra.mxu0 %v9601
          %10551 = vmatprep.subr.bf16.mxu0 %v9634
          %10552 = vmatpush1.bf16.msra.mxu0 %v9633
          %10553 = vmatprep.subr.bf16.mxu0 %v9666
          %10554 = vmatpush1.bf16.msra.mxu0 %v9665
          %10555 = vmatprep.subr.bf16.mxu0 %v9698
          %10556 = vmatpush1.bf16.msra.mxu0 %v9697
          %10557 = vmatprep.subr.bf16.mxu0 %v9730
          %10558 = vmatpush1.bf16.msra.mxu0 %v9729
          %10559 = vmatprep.subr.bf16.mxu0 %v9762
          %10560 = vmatpush1.bf16.msra.mxu0 %v9761
          %10561 = vmatprep.subr.bf16.mxu0 %v9794
          %10562 = vmatpush1.bf16.msra.mxu0 %v9793
          %10563 = vmatprep.subr.bf16.mxu0 %v9826
          %10564 = vmatpush1.bf16.msra.mxu0 %v9825
          %10565 = vmatprep.mubr.bf16.mxu0 %v7292
          %10566 = vmatmul.mubr.bf16.gmra.mrb[0].mxu0 %v7291
          %v10567 = vpop.f32.mrb[0].mxu0
          %v10568 = vadd.f32 %v10376, %v10567
          %v10569 = vpop.f32.mrb[0].mxu0
          %v10570 = vadd.f32 %v10380, %v10569
          %v10571 = vpop.f32.mrb[0].mxu0
          %v10572 = vpop.f32.mrb[0].mxu0
          %10573 = vdwg.mxu0
          %10574 = vmatprep.subr.bf16.mxu0 %v9348
          %10575 = vmatpush1.bf16.msra.mxu0 %v9347
          %10576 = vmatprep.subr.bf16.mxu0 %v9380
          %10577 = vmatpush1.bf16.msra.mxu0 %v9379
          %10578 = vmatprep.subr.bf16.mxu0 %v9412
          %10579 = vmatpush1.bf16.msra.mxu0 %v9411
          %10580 = vmatprep.subr.bf16.mxu0 %v9444
          %10581 = vmatpush1.bf16.msra.mxu0 %v9443
          %10582 = vmatprep.subr.bf16.mxu0 %v9476
          %10583 = vmatpush1.bf16.msra.mxu0 %v9475
          %10584 = vmatprep.subr.bf16.mxu0 %v9508
          %10585 = vmatpush1.bf16.msra.mxu0 %v9507
          %10586 = vmatprep.subr.bf16.mxu0 %v9540
          %10587 = vmatpush1.bf16.msra.mxu0 %v9539
          %10588 = vmatprep.subr.bf16.mxu0 %v9572
          %10589 = vmatpush1.bf16.msra.mxu0 %v9571
          %10590 = vmatprep.subr.bf16.mxu0 %v9604
          %10591 = vmatpush1.bf16.msra.mxu0 %v9603
          %10592 = vmatprep.subr.bf16.mxu0 %v9636
          %10593 = vmatpush1.bf16.msra.mxu0 %v9635
          %10594 = vmatprep.subr.bf16.mxu0 %v9668
          %10595 = vmatpush1.bf16.msra.mxu0 %v9667
          %10596 = vmatprep.subr.bf16.mxu0 %v9700
          %10597 = vmatpush1.bf16.msra.mxu0 %v9699
          %10598 = vmatprep.subr.bf16.mxu0 %v9732
          %10599 = vmatpush1.bf16.msra.mxu0 %v9731
          %10600 = vmatprep.subr.bf16.mxu0 %v9764
          %10601 = vmatpush1.bf16.msra.mxu0 %v9763
          %10602 = vmatprep.subr.bf16.mxu0 %v9796
          %10603 = vmatpush1.bf16.msra.mxu0 %v9795
          %10604 = vmatprep.subr.bf16.mxu0 %v9828
          %10605 = vmatpush1.bf16.msra.mxu0 %v9827
          %10606 = vmatprep.mubr.bf16.mxu0 %v7292
          %10607 = vmatmul.mubr.bf16.gmra.mrb[0].mxu0 %v7291
          %v10608 = vpop.f32.mrb[0].mxu0
          %v10609 = vadd.f32 %v10384, %v10608
          %v10610 = vpop.f32.mrb[0].mxu0
          %v10611 = vadd.f32 %v10388, %v10610
          %v10612 = vpop.f32.mrb[0].mxu0
          %v10613 = vpop.f32.mrb[0].mxu0
          %10614 = vdwg.mxu0
          %10615 = vmatprep.subr.bf16.mxu0 %v9350
          %10616 = vmatpush1.bf16.msra.mxu0 %v9349
          %10617 = vmatprep.subr.bf16.mxu0 %v9382
          %10618 = vmatpush1.bf16.msra.mxu0 %v9381
          %10619 = vmatprep.subr.bf16.mxu0 %v9414
          %10620 = vmatpush1.bf16.msra.mxu0 %v9413
          %10621 = vmatprep.subr.bf16.mxu0 %v9446
          %10622 = vmatpush1.bf16.msra.mxu0 %v9445
          %10623 = vmatprep.subr.bf16.mxu0 %v9478
          %10624 = vmatpush1.bf16.msra.mxu0 %v9477
          %10625 = vmatprep.subr.bf16.mxu0 %v9510
          %10626 = vmatpush1.bf16.msra.mxu0 %v9509
          %10627 = vmatprep.subr.bf16.mxu0 %v9542
          %10628 = vmatpush1.bf16.msra.mxu0 %v9541
          %10629 = vmatprep.subr.bf16.mxu0 %v9574
          %10630 = vmatpush1.bf16.msra.mxu0 %v9573
          %10631 = vmatprep.subr.bf16.mxu0 %v9606
          %10632 = vmatpush1.bf16.msra.mxu0 %v9605
          %10633 = vmatprep.subr.bf16.mxu0 %v9638
          %10634 = vmatpush1.bf16.msra.mxu0 %v9637
          %10635 = vmatprep.subr.bf16.mxu0 %v9670
          %10636 = vmatpush1.bf16.msra.mxu0 %v9669
          %10637 = vmatprep.subr.bf16.mxu0 %v9702
          %10638 = vmatpush1.bf16.msra.mxu0 %v9701
          %10639 = vmatprep.subr.bf16.mxu0 %v9734
          %10640 = vmatpush1.bf16.msra.mxu0 %v9733
          %10641 = vmatprep.subr.bf16.mxu0 %v9766
          %10642 = vmatpush1.bf16.msra.mxu0 %v9765
          %10643 = vmatprep.subr.bf16.mxu0 %v9798
          %10644 = vmatpush1.bf16.msra.mxu0 %v9797
          %10645 = vmatprep.subr.bf16.mxu0 %v9830
          %10646 = vmatpush1.bf16.msra.mxu0 %v9829
          %10647 = vmatprep.mubr.bf16.mxu0 %v7292
          %10648 = vmatmul.mubr.bf16.gmra.mrb[0].mxu0 %v7291
          %v10649 = vpop.f32.mrb[0].mxu0
          %v10650 = vadd.f32 %v10392, %v10649
          %v10651 = vpop.f32.mrb[0].mxu0
          %v10652 = vadd.f32 %v10396, %v10651
          %v10653 = vpop.f32.mrb[0].mxu0
          %v10654 = vpop.f32.mrb[0].mxu0
          %10655 = vdwg.mxu0
          %10656 = vmatprep.subr.bf16.mxu0 %v9352
          %10657 = vmatpush1.bf16.msra.mxu0 %v9351
          %10658 = vmatprep.subr.bf16.mxu0 %v9384
          %10659 = vmatpush1.bf16.msra.mxu0 %v9383
          %10660 = vmatprep.subr.bf16.mxu0 %v9416
          %10661 = vmatpush1.bf16.msra.mxu0 %v9415
          %10662 = vmatprep.subr.bf16.mxu0 %v9448
          %10663 = vmatpush1.bf16.msra.mxu0 %v9447
          %10664 = vmatprep.subr.bf16.mxu0 %v9480
          %10665 = vmatpush1.bf16.msra.mxu0 %v9479
          %10666 = vmatprep.subr.bf16.mxu0 %v9512
          %10667 = vmatpush1.bf16.msra.mxu0 %v9511
          %10668 = vmatprep.subr.bf16.mxu0 %v9544
          %10669 = vmatpush1.bf16.msra.mxu0 %v9543
          %10670 = vmatprep.subr.bf16.mxu0 %v9576
          %10671 = vmatpush1.bf16.msra.mxu0 %v9575
          %10672 = vmatprep.subr.bf16.mxu0 %v9608
          %10673 = vmatpush1.bf16.msra.mxu0 %v9607
          %10674 = vmatprep.subr.bf16.mxu0 %v9640
          %10675 = vmatpush1.bf16.msra.mxu0 %v9639
          %10676 = vmatprep.subr.bf16.mxu0 %v9672
          %10677 = vmatpush1.bf16.msra.mxu0 %v9671
          %10678 = vmatprep.subr.bf16.mxu0 %v9704
          %10679 = vmatpush1.bf16.msra.mxu0 %v9703
          %10680 = vmatprep.subr.bf16.mxu0 %v9736
          %10681 = vmatpush1.bf16.msra.mxu0 %v9735
          %10682 = vmatprep.subr.bf16.mxu0 %v9768
          %10683 = vmatpush1.bf16.msra.mxu0 %v9767
          %10684 = vmatprep.subr.bf16.mxu0 %v9800
          %10685 = vmatpush1.bf16.msra.mxu0 %v9799
          %10686 = vmatprep.subr.bf16.mxu0 %v9832
          %10687 = vmatpush1.bf16.msra.mxu0 %v9831
          %10688 = vmatprep.mubr.bf16.mxu0 %v7292
          %10689 = vmatmul.mubr.bf16.gmra.mrb[0].mxu0 %v7291
          %v10690 = vpop.f32.mrb[0].mxu0
          %v10691 = vadd.f32 %v10400, %v10690
          %v10692 = vpop.f32.mrb[0].mxu0
          %v10693 = vadd.f32 %v10404, %v10692
          %v10694 = vpop.f32.mrb[0].mxu0
          %v10695 = vpop.f32.mrb[0].mxu0
          %10696 = vdwg.mxu0
          %10697 = vmatprep.subr.bf16.mxu0 %v9354
          %10698 = vmatpush1.bf16.msra.mxu0 %v9353
          %10699 = vmatprep.subr.bf16.mxu0 %v9386
          %10700 = vmatpush1.bf16.msra.mxu0 %v9385
          %10701 = vmatprep.subr.bf16.mxu0 %v9418
          %10702 = vmatpush1.bf16.msra.mxu0 %v9417
          %10703 = vmatprep.subr.bf16.mxu0 %v9450
          %10704 = vmatpush1.bf16.msra.mxu0 %v9449
          %10705 = vmatprep.subr.bf16.mxu0 %v9482
          %10706 = vmatpush1.bf16.msra.mxu0 %v9481
          %10707 = vmatprep.subr.bf16.mxu0 %v9514
          %10708 = vmatpush1.bf16.msra.mxu0 %v9513
          %10709 = vmatprep.subr.bf16.mxu0 %v9546
          %10710 = vmatpush1.bf16.msra.mxu0 %v9545
          %10711 = vmatprep.subr.bf16.mxu0 %v9578
          %10712 = vmatpush1.bf16.msra.mxu0 %v9577
          %10713 = vmatprep.subr.bf16.mxu0 %v9610
          %10714 = vmatpush1.bf16.msra.mxu0 %v9609
          %10715 = vmatprep.subr.bf16.mxu0 %v9642
          %10716 = vmatpush1.bf16.msra.mxu0 %v9641
          %10717 = vmatprep.subr.bf16.mxu0 %v9674
          %10718 = vmatpush1.bf16.msra.mxu0 %v9673
          %10719 = vmatprep.subr.bf16.mxu0 %v9706
          %10720 = vmatpush1.bf16.msra.mxu0 %v9705
          %10721 = vmatprep.subr.bf16.mxu0 %v9738
          %10722 = vmatpush1.bf16.msra.mxu0 %v9737
          %10723 = vmatprep.subr.bf16.mxu0 %v9770
          %10724 = vmatpush1.bf16.msra.mxu0 %v9769
          %10725 = vmatprep.subr.bf16.mxu0 %v9802
          %10726 = vmatpush1.bf16.msra.mxu0 %v9801
          %10727 = vmatprep.subr.bf16.mxu0 %v9834
          %10728 = vmatpush1.bf16.msra.mxu0 %v9833
          %10729 = vmatprep.mubr.bf16.mxu0 %v7292
          %10730 = vmatmul.mubr.bf16.gmra.mrb[0].mxu0 %v7291
          %v10731 = vpop.f32.mrb[0].mxu0
          %v10732 = vadd.f32 %v10408, %v10731
          %v10733 = vpop.f32.mrb[0].mxu0
          %v10734 = vadd.f32 %v10412, %v10733
          %v10735 = vpop.f32.mrb[0].mxu0
          %v10736 = vpop.f32.mrb[0].mxu0
          %10737 = vdwg.mxu0
          %10738 = vmatprep.subr.bf16.mxu0 %v9356
          %10739 = vmatpush1.bf16.msra.mxu0 %v9355
          %10740 = vmatprep.subr.bf16.mxu0 %v9388
          %10741 = vmatpush1.bf16.msra.mxu0 %v9387
          %10742 = vmatprep.subr.bf16.mxu0 %v9420
          %10743 = vmatpush1.bf16.msra.mxu0 %v9419
          %10744 = vmatprep.subr.bf16.mxu0 %v9452
          %10745 = vmatpush1.bf16.msra.mxu0 %v9451
          %10746 = vmatprep.subr.bf16.mxu0 %v9484
          %10747 = vmatpush1.bf16.msra.mxu0 %v9483
          %10748 = vmatprep.subr.bf16.mxu0 %v9516
          %10749 = vmatpush1.bf16.msra.mxu0 %v9515
          %10750 = vmatprep.subr.bf16.mxu0 %v9548
          %10751 = vmatpush1.bf16.msra.mxu0 %v9547
          %10752 = vmatprep.subr.bf16.mxu0 %v9580
          %10753 = vmatpush1.bf16.msra.mxu0 %v9579
          %10754 = vmatprep.subr.bf16.mxu0 %v9612
          %10755 = vmatpush1.bf16.msra.mxu0 %v9611
          %10756 = vmatprep.subr.bf16.mxu0 %v9644
          %10757 = vmatpush1.bf16.msra.mxu0 %v9643
          %10758 = vmatprep.subr.bf16.mxu0 %v9676
          %10759 = vmatpush1.bf16.msra.mxu0 %v9675
          %10760 = vmatprep.subr.bf16.mxu0 %v9708
          %10761 = vmatpush1.bf16.msra.mxu0 %v9707
          %10762 = vmatprep.subr.bf16.mxu0 %v9740
          %10763 = vmatpush1.bf16.msra.mxu0 %v9739
          %10764 = vmatprep.subr.bf16.mxu0 %v9772
          %10765 = vmatpush1.bf16.msra.mxu0 %v9771
          %10766 = vmatprep.subr.bf16.mxu0 %v9804
          %10767 = vmatpush1.bf16.msra.mxu0 %v9803
          %10768 = vmatprep.subr.bf16.mxu0 %v9836
          %10769 = vmatpush1.bf16.msra.mxu0 %v9835
          %10770 = vmatprep.mubr.bf16.mxu0 %v7292
          %10771 = vmatmul.mubr.bf16.gmra.mrb[0].mxu0 %v7291
          %v10772 = vpop.f32.mrb[0].mxu0
          %v10773 = vadd.f32 %v10416, %v10772
          %v10774 = vpop.f32.mrb[0].mxu0
          %v10775 = vadd.f32 %v10420, %v10774
          %v10776 = vpop.f32.mrb[0].mxu0
          %v10777 = vpop.f32.mrb[0].mxu0
          %10778 = vdwg.mxu0
          %10779 = vmatprep.subr.bf16.mxu0 %v9358
          %10780 = vmatpush1.bf16.msra.mxu0 %v9357
          %10781 = vmatprep.subr.bf16.mxu0 %v9390
          %10782 = vmatpush1.bf16.msra.mxu0 %v9389
          %10783 = vmatprep.subr.bf16.mxu0 %v9422
          %10784 = vmatpush1.bf16.msra.mxu0 %v9421
          %10785 = vmatprep.subr.bf16.mxu0 %v9454
          %10786 = vmatpush1.bf16.msra.mxu0 %v9453
          %10787 = vmatprep.subr.bf16.mxu0 %v9486
          %10788 = vmatpush1.bf16.msra.mxu0 %v9485
          %10789 = vmatprep.subr.bf16.mxu0 %v9518
          %10790 = vmatpush1.bf16.msra.mxu0 %v9517
          %10791 = vmatprep.subr.bf16.mxu0 %v9550
          %10792 = vmatpush1.bf16.msra.mxu0 %v9549
          %10793 = vmatprep.subr.bf16.mxu0 %v9582
          %10794 = vmatpush1.bf16.msra.mxu0 %v9581
          %10795 = vmatprep.subr.bf16.mxu0 %v9614
          %10796 = vmatpush1.bf16.msra.mxu0 %v9613
          %10797 = vmatprep.subr.bf16.mxu0 %v9646
          %10798 = vmatpush1.bf16.msra.mxu0 %v9645
          %10799 = vmatprep.subr.bf16.mxu0 %v9678
          %10800 = vmatpush1.bf16.msra.mxu0 %v9677
          %10801 = vmatprep.subr.bf16.mxu0 %v9710
          %10802 = vmatpush1.bf16.msra.mxu0 %v9709
          %10803 = vmatprep.subr.bf16.mxu0 %v9742
          %10804 = vmatpush1.bf16.msra.mxu0 %v9741
          %10805 = vmatprep.subr.bf16.mxu0 %v9774
          %10806 = vmatpush1.bf16.msra.mxu0 %v9773
          %10807 = vmatprep.subr.bf16.mxu0 %v9806
          %10808 = vmatpush1.bf16.msra.mxu0 %v9805
          %10809 = vmatprep.subr.bf16.mxu0 %v9838
          %10810 = vmatpush1.bf16.msra.mxu0 %v9837
          %10811 = vmatprep.mubr.bf16.mxu0 %v7292
          %10812 = vmatmul.mubr.bf16.gmra.mrb[0].mxu0 %v7291
          %v10813 = vpop.f32.mrb[0].mxu0
          %v10814 = vadd.f32 %v10424, %v10813
          %v10815 = vpop.f32.mrb[0].mxu0
          %v10816 = vadd.f32 %v10428, %v10815
          %v10817 = vpop.f32.mrb[0].mxu0
          %v10818 = vpop.f32.mrb[0].mxu0
          %10819 = vdwg.mxu0
          %10820 = vmatprep.subr.bf16.mxu0 %v9360
          %10821 = vmatpush1.bf16.msra.mxu0 %v9359
          %10822 = vmatprep.subr.bf16.mxu0 %v9392
          %10823 = vmatpush1.bf16.msra.mxu0 %v9391
          %10824 = vmatprep.subr.bf16.mxu0 %v9424
          %10825 = vmatpush1.bf16.msra.mxu0 %v9423
          %10826 = vmatprep.subr.bf16.mxu0 %v9456
          %10827 = vmatpush1.bf16.msra.mxu0 %v9455
          %10828 = vmatprep.subr.bf16.mxu0 %v9488
          %10829 = vmatpush1.bf16.msra.mxu0 %v9487
          %10830 = vmatprep.subr.bf16.mxu0 %v9520
          %10831 = vmatpush1.bf16.msra.mxu0 %v9519
          %10832 = vmatprep.subr.bf16.mxu0 %v9552
          %10833 = vmatpush1.bf16.msra.mxu0 %v9551
          %10834 = vmatprep.subr.bf16.mxu0 %v9584
          %10835 = vmatpush1.bf16.msra.mxu0 %v9583
          %10836 = vmatprep.subr.bf16.mxu0 %v9616
          %10837 = vmatpush1.bf16.msra.mxu0 %v9615
          %10838 = vmatprep.subr.bf16.mxu0 %v9648
          %10839 = vmatpush1.bf16.msra.mxu0 %v9647
          %10840 = vmatprep.subr.bf16.mxu0 %v9680
          %10841 = vmatpush1.bf16.msra.mxu0 %v9679
          %10842 = vmatprep.subr.bf16.mxu0 %v9712
          %10843 = vmatpush1.bf16.msra.mxu0 %v9711
          %10844 = vmatprep.subr.bf16.mxu0 %v9744
          %10845 = vmatpush1.bf16.msra.mxu0 %v9743
          %10846 = vmatprep.subr.bf16.mxu0 %v9776
          %10847 = vmatpush1.bf16.msra.mxu0 %v9775
          %10848 = vmatprep.subr.bf16.mxu0 %v9808
          %10849 = vmatpush1.bf16.msra.mxu0 %v9807
          %10850 = vmatprep.subr.bf16.mxu0 %v9840
          %10851 = vmatpush1.bf16.msra.mxu0 %v9839
          %10852 = vmatprep.mubr.bf16.mxu0 %v7292
          %10853 = vmatmul.mubr.bf16.gmra.mrb[0].mxu0 %v7291
          %v10854 = vpop.f32.mrb[0].mxu0
          %v10855 = vadd.f32 %v10432, %v10854
          %v10856 = vpop.f32.mrb[0].mxu0
          %v10857 = vadd.f32 %v10436, %v10856
          %v10858 = vpop.f32.mrb[0].mxu0
          %v10859 = vpop.f32.mrb[0].mxu0
          %10860 = vdwg.mxu0
          %10861 = vmatprep.subr.bf16.mxu0 %v9362
          %10862 = vmatpush1.bf16.msra.mxu0 %v9361
          %10863 = vmatprep.subr.bf16.mxu0 %v9394
          %10864 = vmatpush1.bf16.msra.mxu0 %v9393
          %10865 = vmatprep.subr.bf16.mxu0 %v9426
          %10866 = vmatpush1.bf16.msra.mxu0 %v9425
          %10867 = vmatprep.subr.bf16.mxu0 %v9458
          %10868 = vmatpush1.bf16.msra.mxu0 %v9457
          %10869 = vmatprep.subr.bf16.mxu0 %v9490
          %10870 = vmatpush1.bf16.msra.mxu0 %v9489
          %10871 = vmatprep.subr.bf16.mxu0 %v9522
          %10872 = vmatpush1.bf16.msra.mxu0 %v9521
          %10873 = vmatprep.subr.bf16.mxu0 %v9554
          %10874 = vmatpush1.bf16.msra.mxu0 %v9553
          %10875 = vmatprep.subr.bf16.mxu0 %v9586
          %10876 = vmatpush1.bf16.msra.mxu0 %v9585
          %10877 = vmatprep.subr.bf16.mxu0 %v9618
          %10878 = vmatpush1.bf16.msra.mxu0 %v9617
          %10879 = vmatprep.subr.bf16.mxu0 %v9650
          %10880 = vmatpush1.bf16.msra.mxu0 %v9649
          %10881 = vmatprep.subr.bf16.mxu0 %v9682
          %10882 = vmatpush1.bf16.msra.mxu0 %v9681
          %10883 = vmatprep.subr.bf16.mxu0 %v9714
          %10884 = vmatpush1.bf16.msra.mxu0 %v9713
          %10885 = vmatprep.subr.bf16.mxu0 %v9746
          %10886 = vmatpush1.bf16.msra.mxu0 %v9745
          %10887 = vmatprep.subr.bf16.mxu0 %v9778
          %10888 = vmatpush1.bf16.msra.mxu0 %v9777
          %10889 = vmatprep.subr.bf16.mxu0 %v9810
          %10890 = vmatpush1.bf16.msra.mxu0 %v9809
          %10891 = vmatprep.subr.bf16.mxu0 %v9842
          %10892 = vmatpush1.bf16.msra.mxu0 %v9841
          %10893 = vmatprep.mubr.bf16.mxu0 %v7292
          %10894 = vmatmul.mubr.bf16.gmra.mrb[0].mxu0 %v7291
          %v10895 = vpop.f32.mrb[0].mxu0
          %v10896 = vadd.f32 %v10440, %v10895
          %v10897 = vpop.f32.mrb[0].mxu0
          %v10898 = vadd.f32 %v10444, %v10897
          %v10899 = vpop.f32.mrb[0].mxu0
          %v10900 = vpop.f32.mrb[0].mxu0
          %10901 = vdwg.mxu0
          %10902 = vmatprep.subr.bf16.mxu0 %v9364
          %10903 = vmatpush1.bf16.msra.mxu0 %v9363
          %10904 = vmatprep.subr.bf16.mxu0 %v9396
          %10905 = vmatpush1.bf16.msra.mxu0 %v9395
          %10906 = vmatprep.subr.bf16.mxu0 %v9428
          %10907 = vmatpush1.bf16.msra.mxu0 %v9427
          %10908 = vmatprep.subr.bf16.mxu0 %v9460
          %10909 = vmatpush1.bf16.msra.mxu0 %v9459
          %10910 = vmatprep.subr.bf16.mxu0 %v9492
          %10911 = vmatpush1.bf16.msra.mxu0 %v9491
          %10912 = vmatprep.subr.bf16.mxu0 %v9524
          %10913 = vmatpush1.bf16.msra.mxu0 %v9523
          %10914 = vmatprep.subr.bf16.mxu0 %v9556
          %10915 = vmatpush1.bf16.msra.mxu0 %v9555
          %10916 = vmatprep.subr.bf16.mxu0 %v9588
          %10917 = vmatpush1.bf16.msra.mxu0 %v9587
          %10918 = vmatprep.subr.bf16.mxu0 %v9620
          %10919 = vmatpush1.bf16.msra.mxu0 %v9619
          %10920 = vmatprep.subr.bf16.mxu0 %v9652
          %10921 = vmatpush1.bf16.msra.mxu0 %v9651
          %10922 = vmatprep.subr.bf16.mxu0 %v9684
          %10923 = vmatpush1.bf16.msra.mxu0 %v9683
          %10924 = vmatprep.subr.bf16.mxu0 %v9716
          %10925 = vmatpush1.bf16.msra.mxu0 %v9715
          %10926 = vmatprep.subr.bf16.mxu0 %v9748
          %10927 = vmatpush1.bf16.msra.mxu0 %v9747
          %10928 = vmatprep.subr.bf16.mxu0 %v9780
          %10929 = vmatpush1.bf16.msra.mxu0 %v9779
          %10930 = vmatprep.subr.bf16.mxu0 %v9812
          %10931 = vmatpush1.bf16.msra.mxu0 %v9811
          %10932 = vmatprep.subr.bf16.mxu0 %v9844
          %10933 = vmatpush1.bf16.msra.mxu0 %v9843
          %10934 = vmatprep.mubr.bf16.mxu0 %v7292
          %10935 = vmatmul.mubr.bf16.gmra.mrb[0].mxu0 %v7291
          %v10936 = vpop.f32.mrb[0].mxu0
          %v10937 = vadd.f32 %v10448, %v10936
          %v10938 = vpop.f32.mrb[0].mxu0
          %v10939 = vadd.f32 %v10452, %v10938
          %v10940 = vpop.f32.mrb[0].mxu0
          %v10941 = vpop.f32.mrb[0].mxu0
          %10942 = vdwg.mxu0
          %10943 = vmatprep.subr.bf16.mxu0 %v9366
          %10944 = vmatpush1.bf16.msra.mxu0 %v9365
          %10945 = vmatprep.subr.bf16.mxu0 %v9398
          %10946 = vmatpush1.bf16.msra.mxu0 %v9397
          %10947 = vmatprep.subr.bf16.mxu0 %v9430
          %10948 = vmatpush1.bf16.msra.mxu0 %v9429
          %10949 = vmatprep.subr.bf16.mxu0 %v9462
          %10950 = vmatpush1.bf16.msra.mxu0 %v9461
          %10951 = vmatprep.subr.bf16.mxu0 %v9494
          %10952 = vmatpush1.bf16.msra.mxu0 %v9493
          %10953 = vmatprep.subr.bf16.mxu0 %v9526
          %10954 = vmatpush1.bf16.msra.mxu0 %v9525
          %10955 = vmatprep.subr.bf16.mxu0 %v9558
          %10956 = vmatpush1.bf16.msra.mxu0 %v9557
          %10957 = vmatprep.subr.bf16.mxu0 %v9590
          %10958 = vmatpush1.bf16.msra.mxu0 %v9589
          %10959 = vmatprep.subr.bf16.mxu0 %v9622
          %10960 = vmatpush1.bf16.msra.mxu0 %v9621
          %10961 = vmatprep.subr.bf16.mxu0 %v9654
          %10962 = vmatpush1.bf16.msra.mxu0 %v9653
          %10963 = vmatprep.subr.bf16.mxu0 %v9686
          %10964 = vmatpush1.bf16.msra.mxu0 %v9685
          %10965 = vmatprep.subr.bf16.mxu0 %v9718
          %10966 = vmatpush1.bf16.msra.mxu0 %v9717
          %10967 = vmatprep.subr.bf16.mxu0 %v9750
          %10968 = vmatpush1.bf16.msra.mxu0 %v9749
          %10969 = vmatprep.subr.bf16.mxu0 %v9782
          %10970 = vmatpush1.bf16.msra.mxu0 %v9781
          %10971 = vmatprep.subr.bf16.mxu0 %v9814
          %10972 = vmatpush1.bf16.msra.mxu0 %v9813
          %10973 = vmatprep.subr.bf16.mxu0 %v9846
          %10974 = vmatpush1.bf16.msra.mxu0 %v9845
          %10975 = vmatprep.mubr.bf16.mxu0 %v7292
          %10976 = vmatmul.mubr.bf16.gmra.mrb[0].mxu0 %v7291
          %v10977 = vpop.f32.mrb[0].mxu0
          %v10978 = vadd.f32 %v10456, %v10977
          %v10979 = vpop.f32.mrb[0].mxu0
          %v10980 = vadd.f32 %v10460, %v10979
          %v10981 = vpop.f32.mrb[0].mxu0
          %v10982 = vpop.f32.mrb[0].mxu0
          %10983 = vdwg.mxu0
          %10984 = vmatprep.subr.bf16.mxu0 %v9368
          %10985 = vmatpush1.bf16.msra.mxu0 %v9367
          %10986 = vmatprep.subr.bf16.mxu0 %v9400
          %10987 = vmatpush1.bf16.msra.mxu0 %v9399
          %10988 = vmatprep.subr.bf16.mxu0 %v9432
          %10989 = vmatpush1.bf16.msra.mxu0 %v9431
          %10990 = vmatprep.subr.bf16.mxu0 %v9464
          %10991 = vmatpush1.bf16.msra.mxu0 %v9463
          %10992 = vmatprep.subr.bf16.mxu0 %v9496
          %10993 = vmatpush1.bf16.msra.mxu0 %v9495
          %10994 = vmatprep.subr.bf16.mxu0 %v9528
          %10995 = vmatpush1.bf16.msra.mxu0 %v9527
          %10996 = vmatprep.subr.bf16.mxu0 %v9560
          %10997 = vmatpush1.bf16.msra.mxu0 %v9559
          %10998 = vmatprep.subr.bf16.mxu0 %v9592
          %10999 = vmatpush1.bf16.msra.mxu0 %v9591
          %11000 = vmatprep.subr.bf16.mxu0 %v9624
          %11001 = vmatpush1.bf16.msra.mxu0 %v9623
          %11002 = vmatprep.subr.bf16.mxu0 %v9656
          %11003 = vmatpush1.bf16.msra.mxu0 %v9655
          %11004 = vmatprep.subr.bf16.mxu0 %v9688
          %11005 = vmatpush1.bf16.msra.mxu0 %v9687
          %11006 = vmatprep.subr.bf16.mxu0 %v9720
          %11007 = vmatpush1.bf16.msra.mxu0 %v9719
          %11008 = vmatprep.subr.bf16.mxu0 %v9752
          %11009 = vmatpush1.bf16.msra.mxu0 %v9751
          %11010 = vmatprep.subr.bf16.mxu0 %v9784
          %11011 = vmatpush1.bf16.msra.mxu0 %v9783
          %11012 = vmatprep.subr.bf16.mxu0 %v9816
          %11013 = vmatpush1.bf16.msra.mxu0 %v9815
          %11014 = vmatprep.subr.bf16.mxu0 %v9848
          %11015 = vmatpush1.bf16.msra.mxu0 %v9847
          %11016 = vmatprep.mubr.bf16.mxu0 %v7292
          %11017 = vmatmul.mubr.bf16.gmra.mrb[0].mxu0 %v7291
          %v11018 = vpop.f32.mrb[0].mxu0
          %v11019 = vadd.f32 %v10464, %v11018
          %v11020 = vpop.f32.mrb[0].mxu0
          %v11021 = vadd.f32 %v10468, %v11020
          %v11022 = vpop.f32.mrb[0].mxu0
          %v11023 = vpop.f32.mrb[0].mxu0
          %11024 = vdwg.mxu0
          %11025 = vmatprep.subr.bf16.mxu0 %v9370
          %11026 = vmatpush1.bf16.msra.mxu0 %v9369
          %11027 = vmatprep.subr.bf16.mxu0 %v9402
          %11028 = vmatpush1.bf16.msra.mxu0 %v9401
          %11029 = vmatprep.subr.bf16.mxu0 %v9434
          %11030 = vmatpush1.bf16.msra.mxu0 %v9433
          %11031 = vmatprep.subr.bf16.mxu0 %v9466
          %11032 = vmatpush1.bf16.msra.mxu0 %v9465
          %11033 = vmatprep.subr.bf16.mxu0 %v9498
          %11034 = vmatpush1.bf16.msra.mxu0 %v9497
          %11035 = vmatprep.subr.bf16.mxu0 %v9530
          %11036 = vmatpush1.bf16.msra.mxu0 %v9529
          %11037 = vmatprep.subr.bf16.mxu0 %v9562
          %11038 = vmatpush1.bf16.msra.mxu0 %v9561
          %11039 = vmatprep.subr.bf16.mxu0 %v9594
          %11040 = vmatpush1.bf16.msra.mxu0 %v9593
          %11041 = vmatprep.subr.bf16.mxu0 %v9626
          %11042 = vmatpush1.bf16.msra.mxu0 %v9625
          %11043 = vmatprep.subr.bf16.mxu0 %v9658
          %11044 = vmatpush1.bf16.msra.mxu0 %v9657
          %11045 = vmatprep.subr.bf16.mxu0 %v9690
          %11046 = vmatpush1.bf16.msra.mxu0 %v9689
          %11047 = vmatprep.subr.bf16.mxu0 %v9722
          %11048 = vmatpush1.bf16.msra.mxu0 %v9721
          %11049 = vmatprep.subr.bf16.mxu0 %v9754
          %11050 = vmatpush1.bf16.msra.mxu0 %v9753
          %11051 = vmatprep.subr.bf16.mxu0 %v9786
          %11052 = vmatpush1.bf16.msra.mxu0 %v9785
          %11053 = vmatprep.subr.bf16.mxu0 %v9818
          %11054 = vmatpush1.bf16.msra.mxu0 %v9817
          %11055 = vmatprep.subr.bf16.mxu0 %v9850
          %11056 = vmatpush1.bf16.msra.mxu0 %v9849
          %11057 = vmatprep.mubr.bf16.mxu0 %v7292
          %11058 = vmatmul.mubr.bf16.gmra.mrb[0].mxu0 %v7291
          %v11059 = vpop.f32.mrb[0].mxu0
          %v11060 = vadd.f32 %v10472, %v11059
          %v11061 = vpop.f32.mrb[0].mxu0
          %v11062 = vadd.f32 %v10476, %v11061
          %v11063 = vpop.f32.mrb[0].mxu0
          %v11064 = vpop.f32.mrb[0].mxu0
          %11065 = vdwg.mxu0
          %11066 = vmatprep.subr.bf16.mxu0 %v9372
          %11067 = vmatpush1.bf16.msra.mxu0 %v9371
          %11068 = vmatprep.subr.bf16.mxu0 %v9404
          %11069 = vmatpush1.bf16.msra.mxu0 %v9403
          %11070 = vmatprep.subr.bf16.mxu0 %v9436
          %11071 = vmatpush1.bf16.msra.mxu0 %v9435
          %11072 = vmatprep.subr.bf16.mxu0 %v9468
          %11073 = vmatpush1.bf16.msra.mxu0 %v9467
          %11074 = vmatprep.subr.bf16.mxu0 %v9500
          %11075 = vmatpush1.bf16.msra.mxu0 %v9499
          %11076 = vmatprep.subr.bf16.mxu0 %v9532
          %11077 = vmatpush1.bf16.msra.mxu0 %v9531
          %11078 = vmatprep.subr.bf16.mxu0 %v9564
          %11079 = vmatpush1.bf16.msra.mxu0 %v9563
          %11080 = vmatprep.subr.bf16.mxu0 %v9596
          %11081 = vmatpush1.bf16.msra.mxu0 %v9595
          %11082 = vmatprep.subr.bf16.mxu0 %v9628
          %11083 = vmatpush1.bf16.msra.mxu0 %v9627
          %11084 = vmatprep.subr.bf16.mxu0 %v9660
          %11085 = vmatpush1.bf16.msra.mxu0 %v9659
          %11086 = vmatprep.subr.bf16.mxu0 %v9692
          %11087 = vmatpush1.bf16.msra.mxu0 %v9691
          %11088 = vmatprep.subr.bf16.mxu0 %v9724
          %11089 = vmatpush1.bf16.msra.mxu0 %v9723
          %11090 = vmatprep.subr.bf16.mxu0 %v9756
          %11091 = vmatpush1.bf16.msra.mxu0 %v9755
          %11092 = vmatprep.subr.bf16.mxu0 %v9788
          %11093 = vmatpush1.bf16.msra.mxu0 %v9787
          %11094 = vmatprep.subr.bf16.mxu0 %v9820
          %11095 = vmatpush1.bf16.msra.mxu0 %v9819
          %11096 = vmatprep.subr.bf16.mxu0 %v9852
          %11097 = vmatpush1.bf16.msra.mxu0 %v9851
          %11098 = vmatprep.mubr.bf16.mxu0 %v7292
          %11099 = vmatmul.mubr.bf16.gmra.mrb[0].mxu0 %v7291
          %v11100 = vpop.f32.mrb[0].mxu0
          %v11101 = vadd.f32 %v10480, %v11100
          %v11102 = vpop.f32.mrb[0].mxu0
          %v11103 = vadd.f32 %v10484, %v11102
          %v11104 = vpop.f32.mrb[0].mxu0
          %v11105 = vpop.f32.mrb[0].mxu0
          %11106 = vdwg.mxu0
          %11107 = vmatprep.subr.bf16.mxu0 %v9374
          %11108 = vmatpush1.bf16.msra.mxu0 %v9373
          %11109 = vmatprep.subr.bf16.mxu0 %v9406
          %11110 = vmatpush1.bf16.msra.mxu0 %v9405
          %11111 = vmatprep.subr.bf16.mxu0 %v9438
          %11112 = vmatpush1.bf16.msra.mxu0 %v9437
          %11113 = vmatprep.subr.bf16.mxu0 %v9470
          %11114 = vmatpush1.bf16.msra.mxu0 %v9469
          %11115 = vmatprep.subr.bf16.mxu0 %v9502
          %11116 = vmatpush1.bf16.msra.mxu0 %v9501
          %11117 = vmatprep.subr.bf16.mxu0 %v9534
          %11118 = vmatpush1.bf16.msra.mxu0 %v9533
          %11119 = vmatprep.subr.bf16.mxu0 %v9566
          %11120 = vmatpush1.bf16.msra.mxu0 %v9565
          %11121 = vmatprep.subr.bf16.mxu0 %v9598
          %11122 = vmatpush1.bf16.msra.mxu0 %v9597
          %11123 = vmatprep.subr.bf16.mxu0 %v9630
          %11124 = vmatpush1.bf16.msra.mxu0 %v9629
          %11125 = vmatprep.subr.bf16.mxu0 %v9662
          %11126 = vmatpush1.bf16.msra.mxu0 %v9661
          %11127 = vmatprep.subr.bf16.mxu0 %v9694
          %11128 = vmatpush1.bf16.msra.mxu0 %v9693
          %11129 = vmatprep.subr.bf16.mxu0 %v9726
          %11130 = vmatpush1.bf16.msra.mxu0 %v9725
          %11131 = vmatprep.subr.bf16.mxu0 %v9758
          %11132 = vmatpush1.bf16.msra.mxu0 %v9757
          %11133 = vmatprep.subr.bf16.mxu0 %v9790
          %11134 = vmatpush1.bf16.msra.mxu0 %v9789
          %11135 = vmatprep.subr.bf16.mxu0 %v9822
          %11136 = vmatpush1.bf16.msra.mxu0 %v9821
          %11137 = vmatprep.subr.bf16.mxu0 %v9854
          %11138 = vmatpush1.bf16.msra.mxu0 %v9853
          %11139 = vmatprep.mubr.bf16.mxu0 %v7292
          %11140 = vmatmul.mubr.bf16.gmra.mrb[0].mxu0 %v7291
          %v11141 = vpop.f32.mrb[0].mxu0
          %v11142 = vadd.f32 %v10488, %v11141
          %v11143 = vpop.f32.mrb[0].mxu0
          %v11144 = vadd.f32 %v10492, %v11143
          %v11145 = vpop.f32.mrb[0].mxu0
          %v11146 = vpop.f32.mrb[0].mxu0
          %11147 = vdwg.mxu0
          %11148 = vmatprep.subr.bf16.mxu0 %v9376
          %11149 = vmatpush1.bf16.msra.mxu0 %v9375
          %11150 = vmatprep.subr.bf16.mxu0 %v9408
          %11151 = vmatpush1.bf16.msra.mxu0 %v9407
          %11152 = vmatprep.subr.bf16.mxu0 %v9440
          %11153 = vmatpush1.bf16.msra.mxu0 %v9439
          %11154 = vmatprep.subr.bf16.mxu0 %v9472
          %11155 = vmatpush1.bf16.msra.mxu0 %v9471
          %11156 = vmatprep.subr.bf16.mxu0 %v9504
          %11157 = vmatpush1.bf16.msra.mxu0 %v9503
          %11158 = vmatprep.subr.bf16.mxu0 %v9536
          %11159 = vmatpush1.bf16.msra.mxu0 %v9535
          %11160 = vmatprep.subr.bf16.mxu0 %v9568
          %11161 = vmatpush1.bf16.msra.mxu0 %v9567
          %11162 = vmatprep.subr.bf16.mxu0 %v9600
          %11163 = vmatpush1.bf16.msra.mxu0 %v9599
          %11164 = vmatprep.subr.bf16.mxu0 %v9632
          %11165 = vmatpush1.bf16.msra.mxu0 %v9631
          %11166 = vmatprep.subr.bf16.mxu0 %v9664
          %11167 = vmatpush1.bf16.msra.mxu0 %v9663
          %11168 = vmatprep.subr.bf16.mxu0 %v9696
          %11169 = vmatpush1.bf16.msra.mxu0 %v9695
          %11170 = vmatprep.subr.bf16.mxu0 %v9728
          %11171 = vmatpush1.bf16.msra.mxu0 %v9727
          %11172 = vmatprep.subr.bf16.mxu0 %v9760
          %11173 = vmatpush1.bf16.msra.mxu0 %v9759
          %11174 = vmatprep.subr.bf16.mxu0 %v9792
          %11175 = vmatpush1.bf16.msra.mxu0 %v9791
          %11176 = vmatprep.subr.bf16.mxu0 %v9824
          %11177 = vmatpush1.bf16.msra.mxu0 %v9823
          %11178 = vmatprep.subr.bf16.mxu0 %v9856
          %11179 = vmatpush1.bf16.msra.mxu0 %v9855
          %11180 = vmatprep.mubr.bf16.mxu0 %v7292
          %11181 = vmatmul.mubr.bf16.gmra.mrb[0].mxu0 %v7291
          %v11182 = vpop.f32.mrb[0].mxu0
          %v11183 = vadd.f32 %v10496, %v11182
          %v11184 = vpop.f32.mrb[0].mxu0
          %v11185 = vadd.f32 %v10500, %v11184
          %v11186 = vpop.f32.mrb[0].mxu0
          %v11187 = vpop.f32.mrb[0].mxu0
          %11188 = vdwg.mxu0
          %v11221 = vcombine.low %v10568, %v10570
          %v11222 = vcombine.low %v10609, %v10611
          %v11223 = vcombine.low %v10650, %v10652
          %v11224 = vcombine.low %v10691, %v10693
          %v11226 = vunpack.c.l.s4 1966171168
          %v11227 = vunpack.c.0.s8 %v11226
          %v11228 = vlaneseq
          %v11229 = vshrl.u32 %v11228, 7
          %v11230 = vsub.s32 %v11227, %v11229
          %v11231 = vrot.slane %v11221, %v11230
          %v11233 = vunpack.c.l.s4 1966171168
          %v11234 = vunpack.c.0.s8 %v11233
          %v11235 = vlaneseq
          %v11236 = vshrl.u32 %v11235, 7
          %v11237 = vsub.s32 %v11234, %v11236
          %v11238 = vrot.slane %v11222, %v11237
          %v11240 = vunpack.c.l.s4 1966171168
          %v11241 = vunpack.c.0.s8 %v11240
          %v11242 = vlaneseq
          %v11243 = vshrl.u32 %v11242, 7
          %v11244 = vsub.s32 %v11241, %v11243
          %v11245 = vrot.slane %v11223, %v11244
          %v11247 = vunpack.c.l.s4 1966171168
          %v11248 = vunpack.c.0.s8 %v11247
          %v11249 = vlaneseq
          %v11250 = vshrl.u32 %v11249, 7
          %v11251 = vsub.s32 %v11248, %v11250
          %v11252 = vrot.slane %v11224, %v11251
          %v11253 = vcombine.low %v11231, %v11238
          %v11254 = vcombine.low %v11245, %v11252
          %v11256 = vunpack.c.l.s4 1966171168
          %v11257 = vunpack.c.0.s8 %v11256
          %v11258 = vlaneseq
          %v11259 = vshrl.u32 %v11258, 7
          %v11260 = vsub.s32 %v11257, %v11259
          %v11261 = vrot.slane %v11253, %v11260
          %v11263 = vunpack.c.l.s4 1966171168
          %v11264 = vunpack.c.0.s8 %v11263
          %v11265 = vlaneseq
          %v11266 = vshrl.u32 %v11265, 7
          %v11267 = vsub.s32 %v11264, %v11266
          %v11268 = vrot.slane %v11254, %v11267
          %v11269 = vcombine.low %v11261, %v11268
          %v11270 = vcombine.low %v10732, %v10734
          %v11271 = vcombine.low %v10773, %v10775
          %v11272 = vcombine.low %v10814, %v10816
          %v11273 = vcombine.low %v10855, %v10857
          %v11275 = vunpack.c.l.s4 1966171168
          %v11276 = vunpack.c.0.s8 %v11275
          %v11277 = vlaneseq
          %v11278 = vshrl.u32 %v11277, 7
          %v11279 = vsub.s32 %v11276, %v11278
          %v11280 = vrot.slane %v11270, %v11279
          %v11282 = vunpack.c.l.s4 1966171168
          %v11283 = vunpack.c.0.s8 %v11282
          %v11284 = vlaneseq
          %v11285 = vshrl.u32 %v11284, 7
          %v11286 = vsub.s32 %v11283, %v11285
          %v11287 = vrot.slane %v11271, %v11286
          %v11289 = vunpack.c.l.s4 1966171168
          %v11290 = vunpack.c.0.s8 %v11289
          %v11291 = vlaneseq
          %v11292 = vshrl.u32 %v11291, 7
          %v11293 = vsub.s32 %v11290, %v11292
          %v11294 = vrot.slane %v11272, %v11293
          %v11296 = vunpack.c.l.s4 1966171168
          %v11297 = vunpack.c.0.s8 %v11296
          %v11298 = vlaneseq
          %v11299 = vshrl.u32 %v11298, 7
          %v11300 = vsub.s32 %v11297, %v11299
          %v11301 = vrot.slane %v11273, %v11300
          %v11302 = vcombine.low %v11280, %v11287
          %v11303 = vcombine.low %v11294, %v11301
          %v11305 = vunpack.c.l.s4 1966171168
          %v11306 = vunpack.c.0.s8 %v11305
          %v11307 = vlaneseq
          %v11308 = vshrl.u32 %v11307, 7
          %v11309 = vsub.s32 %v11306, %v11308
          %v11310 = vrot.slane %v11302, %v11309
          %v11312 = vunpack.c.l.s4 1966171168
          %v11313 = vunpack.c.0.s8 %v11312
          %v11314 = vlaneseq
          %v11315 = vshrl.u32 %v11314, 7
          %v11316 = vsub.s32 %v11313, %v11315
          %v11317 = vrot.slane %v11303, %v11316
          %v11318 = vcombine.low %v11310, %v11317
          %v11319 = vcombine.low %v10896, %v10898
          %v11320 = vcombine.low %v10937, %v10939
          %v11321 = vcombine.low %v10978, %v10980
          %v11322 = vcombine.low %v11019, %v11021
          %v11324 = vunpack.c.l.s4 1966171168
          %v11325 = vunpack.c.0.s8 %v11324
          %v11326 = vlaneseq
          %v11327 = vshrl.u32 %v11326, 7
          %v11328 = vsub.s32 %v11325, %v11327
          %v11329 = vrot.slane %v11319, %v11328
          %v11331 = vunpack.c.l.s4 1966171168
          %v11332 = vunpack.c.0.s8 %v11331
          %v11333 = vlaneseq
          %v11334 = vshrl.u32 %v11333, 7
          %v11335 = vsub.s32 %v11332, %v11334
          %v11336 = vrot.slane %v11320, %v11335
          %v11338 = vunpack.c.l.s4 1966171168
          %v11339 = vunpack.c.0.s8 %v11338
          %v11340 = vlaneseq
          %v11341 = vshrl.u32 %v11340, 7
          %v11342 = vsub.s32 %v11339, %v11341
          %v11343 = vrot.slane %v11321, %v11342
          %v11345 = vunpack.c.l.s4 1966171168
          %v11346 = vunpack.c.0.s8 %v11345
          %v11347 = vlaneseq
          %v11348 = vshrl.u32 %v11347, 7
          %v11349 = vsub.s32 %v11346, %v11348
          %v11350 = vrot.slane %v11322, %v11349
          %v11351 = vcombine.low %v11329, %v11336
          %v11352 = vcombine.low %v11343, %v11350
          %v11354 = vunpack.c.l.s4 1966171168
          %v11355 = vunpack.c.0.s8 %v11354
          %v11356 = vlaneseq
          %v11357 = vshrl.u32 %v11356, 7
          %v11358 = vsub.s32 %v11355, %v11357
          %v11359 = vrot.slane %v11351, %v11358
          %v11361 = vunpack.c.l.s4 1966171168
          %v11362 = vunpack.c.0.s8 %v11361
          %v11363 = vlaneseq
          %v11364 = vshrl.u32 %v11363, 7
          %v11365 = vsub.s32 %v11362, %v11364
          %v11366 = vrot.slane %v11352, %v11365
          %v11367 = vcombine.low %v11359, %v11366
          %v11368 = vcombine.low %v11060, %v11062
          %v11369 = vcombine.low %v11101, %v11103
          %v11370 = vcombine.low %v11142, %v11144
          %v11371 = vcombine.low %v11183, %v11185
          %v11373 = vunpack.c.l.s4 1966171168
          %v11374 = vunpack.c.0.s8 %v11373
          %v11375 = vlaneseq
          %v11376 = vshrl.u32 %v11375, 7
          %v11377 = vsub.s32 %v11374, %v11376
          %v11378 = vrot.slane %v11368, %v11377
          %v11380 = vunpack.c.l.s4 1966171168
          %v11381 = vunpack.c.0.s8 %v11380
          %v11382 = vlaneseq
          %v11383 = vshrl.u32 %v11382, 7
          %v11384 = vsub.s32 %v11381, %v11383
          %v11385 = vrot.slane %v11369, %v11384
          %v11387 = vunpack.c.l.s4 1966171168
          %v11388 = vunpack.c.0.s8 %v11387
          %v11389 = vlaneseq
          %v11390 = vshrl.u32 %v11389, 7
          %v11391 = vsub.s32 %v11388, %v11390
          %v11392 = vrot.slane %v11370, %v11391
          %v11394 = vunpack.c.l.s4 1966171168
          %v11395 = vunpack.c.0.s8 %v11394
          %v11396 = vlaneseq
          %v11397 = vshrl.u32 %v11396, 7
          %v11398 = vsub.s32 %v11395, %v11397
          %v11399 = vrot.slane %v11371, %v11398
          %v11400 = vcombine.low %v11378, %v11385
          %v11401 = vcombine.low %v11392, %v11399
          %v11403 = vunpack.c.l.s4 1966171168
          %v11404 = vunpack.c.0.s8 %v11403
          %v11405 = vlaneseq
          %v11406 = vshrl.u32 %v11405, 7
          %v11407 = vsub.s32 %v11404, %v11406
          %v11408 = vrot.slane %v11400, %v11407
          %v11410 = vunpack.c.l.s4 1966171168
          %v11411 = vunpack.c.0.s8 %v11410
          %v11412 = vlaneseq
          %v11413 = vshrl.u32 %v11412, 7
          %v11414 = vsub.s32 %v11411, %v11413
          %v11415 = vrot.slane %v11401, %v11414
          %v11416 = vcombine.low %v11408, %v11415
          %11421 = vst [vmem:[%s629] sm:$0xff] %v11269
          %11422 = vst [vmem:[%s629 + $0x8] sm:$0xff] %v11318
          %11423 = vst [vmem:[%s629 + $0x10] sm:$0xff] %v11367
          %11424 = vst [vmem:[%s629 + $0x18] sm:$0xff] %v11416
        $region128: #{stnkd_forward.1} parent=71 // pred_fallthru
          _
        %p11425 = scmp.lt.s32.totalorder %s35, 1
        %s11426 = scalar_select %p11425, %s35, 1
        %s11427 = smul.addr %s11426, 32
        %s11428 = scalar_lea.vmem %s13, %s11427
        // Predicated region
        $region129: #{stnkd_forward.1} parent=71 // pred_check
          %p11429 = pneg %p341
        $region130: #{stnkd_forward.1} parent=71 // pred_check_branch
          %11431 = sbr.rel (%p11429) target = $region132
        $region131: #{stnkd_forward.1} parent=71 // pred_region
          _
        $region132: #{stnkd_forward.1} parent=71 // pred_fallthru
          _
      $region72: #{stnkd_forward.1} parent=5 // pred_fallthru
        _
      %p11432 = scmp.le.s32.totalorder 2, %s26
      // Predicated region
      $region133: #{stnkd_forward.1} parent=5 // pred_check
        %p11433 = pneg %p11432
      $region134: #{stnkd_forward.1} parent=5 // pred_check_branch
        %11435 = sbr.rel (%p11433) target = $region136
      $region135: #{stnkd_forward.1} parent=5 // pred_region
        %s11436 = ssub.s32 %s26, 2
        // Predicated region
        $region137: #{stnkd_forward.1} parent=135 // pred_check
          %p11437 = pneg %p347
        $region138: #{stnkd_forward.1} parent=135 // pred_check_branch
          %11439 = sbr.rel (%p11437) target = $region140
        $region139: #{stnkd_forward.1} parent=135 // pred_region
          %p11440 = scmp.lt.s32.totalorder %s37, 1
          %s11441 = scalar_select %p11440, %s37, 1
          %s11442 = smul.addr %s11441, 32
          %s11443 = scalar_lea.vmem %s13, %s11442
        $region140: #{stnkd_forward.1} parent=135 // pred_fallthru
          _
      $region136: #{stnkd_forward.1} parent=5 // pred_fallthru
        _
    $region6: #{stnkd_forward.1} parent=1 // loop_footer
      %s30 = sadd.s32 1, %s26
    $region7: #{stnkd_forward.1} parent=1 // loop_footer_branch
      %25 = sbr.rel target = $region3
    $region8: #{stnkd_forward.1} parent=1 // loop_exit
      _
    %11444 = vsyncpa [#allocation4], 1
    %s11445 = scalar_lea.sflag [#allocation4], 1
    %11446 = vsyncpa %s11445, 1
    %11447 = vsyncpa [#allocation6], 1
    %11448 = vsyncpa [#allocation9], 1
    %11449 = vsyncpa [#allocation12], 1
    %11450 = vsyncpa [#allocation15], 1
    %11451 = vsyncpa [#allocation18], 1
    %11452 = vsyncpa [#allocation21], 1

</llo_original>
